<compile_context>
chip_gen: v7x
topology: tpu7x:2x2x1
jax: 0.10.0
libtpu: 0.0.40
codegen_flags: <defaults>
</compile_context>

<pallas_src>
import functools

import jax
import jax.numpy as jnp
from jax.experimental import pallas as pl
from jax.experimental.pallas import tpu as pltpu

_LN_EPS = 1e-5


def _round_up(n, m):
    return ((n + m - 1) // m) * m


def _silu(v):
    return v * jax.nn.sigmoid(v)


def _layernorm(v, gamma, beta, n_real, eps=_LN_EPS):
    """LayerNorm over the last axis, padding-aware.

    Padded feature columns of `v` are exactly zero and the padded entries of
    gamma/beta are zero, so summing over the padded width and dividing by the
    *real* feature count `n_real` gives exact statistics, and the padded
    columns stay zero after the affine transform.
    """
    inv_n = 1.0 / float(n_real)
    mu = jnp.sum(v, axis=-1, keepdims=True) * inv_n
    ms = jnp.sum(v * v, axis=-1, keepdims=True) * inv_n
    var = ms - mu * mu
    return (v - mu) * jax.lax.rsqrt(var + eps) * gamma + beta


def _scalar_gated_kernel(
    x_ref,       # (tm, Hp)      bf16 token tile
    w_up_ref,    # (Hp, 3*Hp)    bf16 up_proj weight (in, out), chunk-aligned
    g_up_ref,    # (1, 3*Hp)     f32 up LN gamma
    b_up_ref,    # (1, 3*Hp)     f32 up LN beta
    w_gate_ref,  # (Hp, Hp)      bf16 gate_proj weight
    g_gate_ref,  # (1, Hp)       f32 gate LN gamma
    b_gate_ref,  # (1, Hp)       f32 gate LN beta
    w1_ref,      # (Hp, Hp)      bf16 vec_proj linear-1 weight
    b1_ref,      # (1, Hp)       f32 vec_proj linear-1 bias
    g_v_ref,     # (1, Hp)       f32 vec LN gamma
    b_v_ref,     # (1, Hp)       f32 vec LN beta
    w2_ref,      # (1, Hp)       bf16 vec_proj linear-2 weight (as a lane row)
    b2_ref,      # (1, 1)        f32 vec_proj linear-2 bias
    o_ref,       # (1, tm)       output row (lane-dense)
    *, h_real, h_pad,
):
    x = x_ref[...]                                            # bf16

    # gate = LayerNorm_H(SiLU(x @ W_gate))
    gate = jnp.dot(x, w_gate_ref[...], preferred_element_type=jnp.float32)
    gate = _layernorm(_silu(gate), g_gate_ref[...], b_gate_ref[...], h_real)

    # vec = LayerNorm_3H(SiLU(x @ W_up))  -> (tm, 3*Hp)
    vec = jnp.dot(x, w_up_ref[...], preferred_element_type=jnp.float32)
    vec = _layernorm(_silu(vec), g_up_ref[...], b_up_ref[...], 3 * h_real)

    # view(B, L, 3, H).mean(dim=-2): mean of the three Hp-aligned chunks
    # (128-aligned static slices -> free views, no relayout).
    v3 = (vec[:, 0:h_pad] + vec[:, h_pad:2 * h_pad]
          + vec[:, 2 * h_pad:3 * h_pad]) * (1.0 / 3.0)

    # vec_proj: Linear(H->H) + SiLU + LayerNorm
    act = (v3 * gate).astype(jnp.bfloat16)
    act = jnp.dot(act, w1_ref[...], preferred_element_type=jnp.float32)
    act = act + b1_ref[...]
    act = _layernorm(_silu(act), g_v_ref[...], b_v_ref[...], h_real)

    # Final Linear(H->1) expressed as (1, Hp) . (tm, Hp)^T so the per-token
    # scalars land on the lane axis: a lane-dense (1, tm) unmasked store
    # instead of a masked (tm, 1) store.  This contraction is ~tm x smaller
    # than the main matmuls, so the extra MXU pass is negligible.
    out = jax.lax.dot_general(
        w2_ref[...], act.astype(jnp.bfloat16),
        dimension_numbers=(((1,), (1,)), ((), ())),
        preferred_element_type=jnp.float32)
    o_ref[...] = (out + b2_ref[...]).astype(o_ref.dtype)


def scalar_gated_output(x, params, *, tm=256):
    """x: (B, L, H) -> (B, L, 1).  Linear weights are pre-transposed (in, out).

    Tokens are padded to a multiple of `tm` and the hidden dim to a multiple
    of 128; zero padding is mathematically inert (see _layernorm).
    """
    B, L, H = x.shape
    M = B * L
    Hp = _round_up(H, 128)
    num_tiles = pl.cdiv(M, tm)
    Mp = num_tiles * tm

    f32, bf16 = jnp.float32, jnp.bfloat16

    # Token-major activation matrix, bf16 for the MXU, padded to (Mp, Hp).
    x2d = jnp.pad(x.reshape(M, H).astype(bf16), ((0, Mp - M), (0, Hp - H)))

    def pad2(a, rows, cols, dtype):
        r, c = a.shape
        return jnp.pad(a.astype(dtype), ((0, rows - r), (0, cols - c)))

    def pad_chunks(a, dtype):
        # (r, 3H) -> (r_pad, 3*Hp): each H-wide output chunk padded to Hp so
        # the in-kernel chunk slices stay 128-aligned.
        r = a.shape[0]
        rp = Hp if r == H else r
        a3 = a.reshape(r, 3, H)
        a3 = jnp.pad(a3.astype(dtype), ((0, rp - r), (0, 0), (0, Hp - H)))
        return a3.reshape(rp, 3 * Hp)

    w_up_p = pad_chunks(params["w_up"], bf16)                 # (Hp, 3*Hp)
    g_up_p = pad_chunks(params["g_up"], f32)                  # (1, 3*Hp)
    b_up_p = pad_chunks(params["b_up"], f32)
    w_gate_p = pad2(params["w_gate"], Hp, Hp, bf16)
    g_gate_p = pad2(params["g_gate"], 1, Hp, f32)
    b_gate_p = pad2(params["b_gate"], 1, Hp, f32)
    w1_p = pad2(params["w1"], Hp, Hp, bf16)
    b1_p = pad2(params["b1"], 1, Hp, f32)
    g_v_p = pad2(params["g_v"], 1, Hp, f32)
    b_v_p = pad2(params["b_v"], 1, Hp, f32)
    w2_row = pad2(params["w2"].reshape(1, H), 1, Hp, bf16)    # (1, Hp)
    b2_p = params["b2"].astype(f32)                           # (1, 1)

    operands = (x2d, w_up_p, g_up_p, b_up_p, w_gate_p, g_gate_p, b_gate_p,
                w1_p, b1_p, g_v_p, b_v_p, w2_row, b2_p)

    kernel = functools.partial(_scalar_gated_kernel, h_real=H, h_pad=Hp)

    # VMEM budget: weights resident (once) + x double buffer + f32 intermediates.
    param_bytes = sum(int(a.size) * a.dtype.itemsize for a in operands[1:])
    io_bytes = 2 * (tm * Hp * 2) + 2 * tm * 4
    scratch_bytes = 12 * tm * 3 * Hp * 4
    vmem_limit = 2 * param_bytes + io_bytes + scratch_bytes
    vmem_limit = int(min(max(vmem_limit, 32 * 1024 * 1024), 64 * 1024 * 1024))

    flops = 2 * Mp * Hp * (5 * Hp + 1)            # three GEMMs + final contraction
    transcendentals = Mp * (5 * Hp + 3)           # sigmoids + rsqrts
    bytes_accessed = (sum(int(a.size) * a.dtype.itemsize for a in operands)
                      + Mp * jnp.dtype(x.dtype).itemsize)

    def run(single_buffer_params):
        def param_spec(shape):
            index_map = lambda i: (0,) * len(shape)
            if single_buffer_params:
                # Constant index_map -> the block is never re-fetched, so one
                # buffer suffices (halves resident weight VMEM).
                return pl.BlockSpec(shape, index_map,
                                    pipeline_mode=pl.Buffered(1))
            return pl.BlockSpec(shape, index_map)

        in_specs = [pl.BlockSpec((tm, Hp), lambda i: (i, 0))]
        in_specs += [param_spec(a.shape) for a in operands[1:]]

        return pl.pallas_call(
            kernel,
            out_shape=jax.ShapeDtypeStruct((1, Mp), x.dtype),
            grid=(num_tiles,),
            in_specs=in_specs,
            out_specs=pl.BlockSpec((1, tm), lambda i: (0, i)),
            compiler_params=pltpu.CompilerParams(
                dimension_semantics=("parallel",),
                vmem_limit_bytes=vmem_limit),
            cost_estimate=pl.CostEstimate(
                flops=int(flops),
                transcendentals=int(transcendentals),
                bytes_accessed=int(bytes_accessed)),
        )(*operands)

    try:
        out_row = run(True)
    except Exception:
        # Fallback if this jax build rejects pipeline_mode=pl.Buffered(1);
        # identical math with default double buffering.
        out_row = run(False)

    return out_row[0, :M].reshape(B, L, 1)


def init_params(key, H):
    """Deterministic synthetic parameters (Linear weights pre-transposed to (in, out))."""
    ks = jax.random.split(key, 5)
    s = 0.02
    return {
        # up_proj: Linear(H -> 3H, bias=False) + LayerNorm(3H)
        "w_up": jax.random.normal(ks[0], (H, 3 * H), jnp.float32) * s,
        "g_up": jnp.ones((1, 3 * H), jnp.float32),
        "b_up": jnp.zeros((1, 3 * H), jnp.float32),
        # gate_proj: Linear(H -> H, bias=False) + LayerNorm(H)
        "w_gate": jax.random.normal(ks[1], (H, H), jnp.float32) * s,
        "g_gate": jnp.ones((1, H), jnp.float32),
        "b_gate": jnp.zeros((1, H), jnp.float32),
        # vec_proj: Linear(H -> H, bias) + LayerNorm(H) + Linear(H -> 1, bias)
        "w1": jax.random.normal(ks[2], (H, H), jnp.float32) * s,
        "b1": jax.random.normal(ks[3], (1, H), jnp.float32) * s,
        "g_v": jnp.ones((1, H), jnp.float32),
        "b_v": jnp.zeros((1, H), jnp.float32),
        "w2": jax.random.normal(ks[4], (H, 1), jnp.float32) * s,
        "b2": jnp.full((1, 1), 0.1, jnp.float32),
    }


def _reference(x, p):
    """Pure-JAX reference mirroring the kernel math (bf16 matmuls, f32 LN/SiLU)."""
    B, L, H = x.shape
    bf16 = jnp.bfloat16

    def ln(v, g, b):
        mu = jnp.mean(v, axis=-1, keepdims=True)
        var = jnp.mean(jnp.square(v - mu), axis=-1, keepdims=True)
        return (v - mu) * jax.lax.rsqrt(var + _LN_EPS) * g + b

    xb = x.astype(bf16)
    gate = jnp.dot(xb, p["w_gate"].astype(bf16), preferred_element_type=jnp.float32)
    gate = ln(_silu(gate), p["g_gate"][0], p["b_gate"][0])
    vec = jnp.dot(xb, p["w_up"].astype(bf16), preferred_element_type=jnp.float32)
    vec = ln(_silu(vec), p["g_up"][0], p["b_up"][0])
    v3 = vec.reshape(B, L, 3, H).mean(axis=-2)
    h = (v3 * gate).astype(bf16)
    h = jnp.dot(h, p["w1"].astype(bf16), preferred_element_type=jnp.float32) + p["b1"][0]
    h = ln(_silu(h), p["g_v"][0], p["b_v"][0])
    out = jnp.dot(h.astype(bf16), p["w2"].astype(bf16),
                  preferred_element_type=jnp.float32) + p["b2"][0]
    return out.astype(x.dtype)


if __name__ == "__main__":
    B, L, H = 2, 8, 32
    key = jax.random.PRNGKey(0)
    kx, kp = jax.random.split(key)
    x = jax.random.normal(kx, (B, L, H), jnp.float32)
    params = init_params(kp, H)

    out = scalar_gated_output(x, params)      # tm=256, H padded to 128 internally
    out = jax.block_until_ready(out)

    ref = _reference(x, params)
    assert out.shape == (B, L, 1), out.shape
    max_err = float(jnp.max(jnp.abs(out - ref)))
    assert jnp.allclose(out, ref, rtol=2e-3, atol=2e-3), max_err

    print("KERNEL_OK")
</pallas_src>

<mosaic_0001>
module attributes {stable_mosaic.version = 11 : i64} {
  func.func @_scalar_gated_kernel(%arg0: i32, %arg1: memref<256x128xbf16, #tpu.memory_space<vmem>>, %arg2: memref<128x384xbf16, #tpu.memory_space<vmem>>, %arg3: memref<1x384xf32, #tpu.memory_space<vmem>>, %arg4: memref<1x384xf32, #tpu.memory_space<vmem>>, %arg5: memref<128x128xbf16, #tpu.memory_space<vmem>>, %arg6: memref<1x128xf32, #tpu.memory_space<vmem>>, %arg7: memref<1x128xf32, #tpu.memory_space<vmem>>, %arg8: memref<128x128xbf16, #tpu.memory_space<vmem>>, %arg9: memref<1x128xf32, #tpu.memory_space<vmem>>, %arg10: memref<1x128xf32, #tpu.memory_space<vmem>>, %arg11: memref<1x128xf32, #tpu.memory_space<vmem>>, %arg12: memref<1x128xbf16, #tpu.memory_space<vmem>>, %arg13: memref<1x1xf32, #tpu.memory_space<vmem>>, %arg14: memref<1x256xf32, #tpu.memory_space<vmem>>) attributes {dimension_semantics = [#tpu.dimension_semantics<parallel>], iteration_bounds = array<i64: 1>, scalar_prefetch = 0 : i64, scratch_operands = 0 : i64, tpu.core_type = #tpu.core_type<tc>, window_params = [{transform_indices = @transform_0, window_bounds = array<i64: 256, 128>}, {pipeline_mode = #tpu.pipeline_mode<synchronous>, transform_indices = @transform_1, window_bounds = array<i64: 128, 384>}, {pipeline_mode = #tpu.pipeline_mode<synchronous>, transform_indices = @transform_2, window_bounds = array<i64: 1, 384>}, {pipeline_mode = #tpu.pipeline_mode<synchronous>, transform_indices = @transform_3, window_bounds = array<i64: 1, 384>}, {pipeline_mode = #tpu.pipeline_mode<synchronous>, transform_indices = @transform_4, window_bounds = array<i64: 128, 128>}, {pipeline_mode = #tpu.pipeline_mode<synchronous>, transform_indices = @transform_5, window_bounds = array<i64: 1, 128>}, {pipeline_mode = #tpu.pipeline_mode<synchronous>, transform_indices = @transform_6, window_bounds = array<i64: 1, 128>}, {pipeline_mode = #tpu.pipeline_mode<synchronous>, transform_indices = @transform_7, window_bounds = array<i64: 128, 128>}, {pipeline_mode = #tpu.pipeline_mode<synchronous>, transform_indices = @transform_8, window_bounds = array<i64: 1, 128>}, {pipeline_mode = #tpu.pipeline_mode<synchronous>, transform_indices = @transform_9, window_bounds = array<i64: 1, 128>}, {pipeline_mode = #tpu.pipeline_mode<synchronous>, transform_indices = @transform_10, window_bounds = array<i64: 1, 128>}, {pipeline_mode = #tpu.pipeline_mode<synchronous>, transform_indices = @transform_11, window_bounds = array<i64: 1, 128>}, {pipeline_mode = #tpu.pipeline_mode<synchronous>, transform_indices = @transform_12, window_bounds = array<i64: 1, 1>}, {transform_indices = @transform_13, window_bounds = array<i64: 1, 256>}]} {
    %c0 = arith.constant 0 : index
    %c0_0 = arith.constant 0 : index
    %0 = vector.load %arg1[%c0, %c0_0] : memref<256x128xbf16, #tpu.memory_space<vmem>>, vector<256x128xbf16>
    %c0_1 = arith.constant 0 : index
    %c0_2 = arith.constant 0 : index
    %1 = vector.load %arg5[%c0_1, %c0_2] : memref<128x128xbf16, #tpu.memory_space<vmem>>, vector<128x128xbf16>
    %cst = arith.constant dense<0.000000e+00> : vector<256x128xf32>
    %2 = tpu.matmul %0, %1, %cst {dimension_numbers = #tpu.dot_dimension_numbers<[1], [0], [0], [1], [0, 0, 1, 1], [], []>} : vector<256x128xbf16>, vector<128x128xbf16>, vector<256x128xf32> -> vector<256x128xf32>
    %3 = arith.negf %2 : vector<256x128xf32>
    %4 = math.exp %3 : vector<256x128xf32>
    %cst_3 = arith.constant 1.000000e+00 : f32
    %5 = vector.broadcast %cst_3 : f32 to vector<256x128xf32>
    %6 = arith.addf %5, %4 : vector<256x128xf32>
    %7 = arith.divf %5, %6 : vector<256x128xf32>
    %8 = arith.mulf %2, %7 : vector<256x128xf32>
    %c0_4 = arith.constant 0 : index
    %c0_5 = arith.constant 0 : index
    %9 = vector.load %arg6[%c0_4, %c0_5] : memref<1x128xf32, #tpu.memory_space<vmem>>, vector<1x128xf32>
    %c0_6 = arith.constant 0 : index
    %c0_7 = arith.constant 0 : index
    %10 = vector.load %arg7[%c0_6, %c0_7] : memref<1x128xf32, #tpu.memory_space<vmem>>, vector<1x128xf32>
    %cst_8 = arith.constant dense<0.000000e+00> : vector<256xf32>
    %11 = vector.multi_reduction <add>, %8, %cst_8 [1] : vector<256x128xf32> to vector<256xf32>
    %12 = vector.shape_cast %11 : vector<256xf32> to vector<256x1xf32>
    %cst_9 = arith.constant 3.125000e-02 : f32
    %13 = vector.broadcast %cst_9 : f32 to vector<256x1xf32>
    %14 = arith.mulf %12, %13 : vector<256x1xf32>
    %15 = arith.mulf %8, %8 : vector<256x128xf32>
    %cst_10 = arith.constant dense<0.000000e+00> : vector<256xf32>
    %16 = vector.multi_reduction <add>, %15, %cst_10 [1] : vector<256x128xf32> to vector<256xf32>
    %17 = vector.shape_cast %16 : vector<256xf32> to vector<256x1xf32>
    %cst_11 = arith.constant 3.125000e-02 : f32
    %18 = vector.broadcast %cst_11 : f32 to vector<256x1xf32>
    %19 = arith.mulf %17, %18 : vector<256x1xf32>
    %20 = arith.mulf %14, %14 : vector<256x1xf32>
    %21 = arith.subf %19, %20 : vector<256x1xf32>
    %22 = vector.broadcast %14 : vector<256x1xf32> to vector<256x128xf32>
    %23 = arith.subf %8, %22 : vector<256x128xf32>
    %cst_12 = arith.constant 9.99999974E-6 : f32
    %24 = vector.broadcast %cst_12 : f32 to vector<256x1xf32>
    %25 = arith.addf %21, %24 : vector<256x1xf32>
    %26 = math.rsqrt %25 : vector<256x1xf32>
    %27 = vector.broadcast %26 : vector<256x1xf32> to vector<256x128xf32>
    %28 = arith.mulf %23, %27 : vector<256x128xf32>
    %29 = vector.broadcast %9 : vector<1x128xf32> to vector<256x128xf32>
    %30 = arith.mulf %28, %29 : vector<256x128xf32>
    %31 = vector.broadcast %10 : vector<1x128xf32> to vector<256x128xf32>
    %32 = arith.addf %30, %31 : vector<256x128xf32>
    %c0_13 = arith.constant 0 : index
    %c0_14 = arith.constant 0 : index
    %33 = vector.load %arg2[%c0_13, %c0_14] : memref<128x384xbf16, #tpu.memory_space<vmem>>, vector<128x384xbf16>
    %cst_15 = arith.constant dense<0.000000e+00> : vector<256x384xf32>
    %34 = tpu.matmul %0, %33, %cst_15 {dimension_numbers = #tpu.dot_dimension_numbers<[1], [0], [0], [1], [0, 0, 1, 1], [], []>} : vector<256x128xbf16>, vector<128x384xbf16>, vector<256x384xf32> -> vector<256x384xf32>
    %35 = arith.negf %34 : vector<256x384xf32>
    %36 = math.exp %35 : vector<256x384xf32>
    %cst_16 = arith.constant 1.000000e+00 : f32
    %37 = vector.broadcast %cst_16 : f32 to vector<256x384xf32>
    %38 = arith.addf %37, %36 : vector<256x384xf32>
    %39 = arith.divf %37, %38 : vector<256x384xf32>
    %40 = arith.mulf %34, %39 : vector<256x384xf32>
    %c0_17 = arith.constant 0 : index
    %c0_18 = arith.constant 0 : index
    %41 = vector.load %arg3[%c0_17, %c0_18] : memref<1x384xf32, #tpu.memory_space<vmem>>, vector<1x384xf32>
    %c0_19 = arith.constant 0 : index
    %c0_20 = arith.constant 0 : index
    %42 = vector.load %arg4[%c0_19, %c0_20] : memref<1x384xf32, #tpu.memory_space<vmem>>, vector<1x384xf32>
    %cst_21 = arith.constant dense<0.000000e+00> : vector<256xf32>
    %43 = vector.multi_reduction <add>, %40, %cst_21 [1] : vector<256x384xf32> to vector<256xf32>
    %44 = vector.shape_cast %43 : vector<256xf32> to vector<256x1xf32>
    %cst_22 = arith.constant 0.010416667 : f32
    %45 = vector.broadcast %cst_22 : f32 to vector<256x1xf32>
    %46 = arith.mulf %44, %45 : vector<256x1xf32>
    %47 = arith.mulf %40, %40 : vector<256x384xf32>
    %cst_23 = arith.constant dense<0.000000e+00> : vector<256xf32>
    %48 = vector.multi_reduction <add>, %47, %cst_23 [1] : vector<256x384xf32> to vector<256xf32>
    %49 = vector.shape_cast %48 : vector<256xf32> to vector<256x1xf32>
    %cst_24 = arith.constant 0.010416667 : f32
    %50 = vector.broadcast %cst_24 : f32 to vector<256x1xf32>
    %51 = arith.mulf %49, %50 : vector<256x1xf32>
    %52 = arith.mulf %46, %46 : vector<256x1xf32>
    %53 = arith.subf %51, %52 : vector<256x1xf32>
    %54 = vector.broadcast %46 : vector<256x1xf32> to vector<256x384xf32>
    %55 = arith.subf %40, %54 : vector<256x384xf32>
    %cst_25 = arith.constant 9.99999974E-6 : f32
    %56 = vector.broadcast %cst_25 : f32 to vector<256x1xf32>
    %57 = arith.addf %53, %56 : vector<256x1xf32>
    %58 = math.rsqrt %57 : vector<256x1xf32>
    %59 = vector.broadcast %58 : vector<256x1xf32> to vector<256x384xf32>
    %60 = arith.mulf %55, %59 : vector<256x384xf32>
    %61 = vector.broadcast %41 : vector<1x384xf32> to vector<256x384xf32>
    %62 = arith.mulf %60, %61 : vector<256x384xf32>
    %63 = vector.broadcast %42 : vector<1x384xf32> to vector<256x384xf32>
    %64 = arith.addf %62, %63 : vector<256x384xf32>
    %65 = vector.extract_strided_slice %64 {offsets = [0, 0], sizes = [256, 128], strides = [1, 1]} : vector<256x384xf32> to vector<256x128xf32>
    %66 = vector.extract_strided_slice %64 {offsets = [0, 128], sizes = [256, 128], strides = [1, 1]} : vector<256x384xf32> to vector<256x128xf32>
    %67 = arith.addf %65, %66 : vector<256x128xf32>
    %68 = vector.extract_strided_slice %64 {offsets = [0, 256], sizes = [256, 128], strides = [1, 1]} : vector<256x384xf32> to vector<256x128xf32>
    %69 = arith.addf %67, %68 : vector<256x128xf32>
    %cst_26 = arith.constant 0.333333343 : f32
    %70 = vector.broadcast %cst_26 : f32 to vector<256x128xf32>
    %71 = arith.mulf %69, %70 : vector<256x128xf32>
    %72 = arith.mulf %71, %32 : vector<256x128xf32>
    %73 = arith.truncf %72 : vector<256x128xf32> to vector<256x128xbf16>
    %c0_27 = arith.constant 0 : index
    %c0_28 = arith.constant 0 : index
    %74 = vector.load %arg8[%c0_27, %c0_28] : memref<128x128xbf16, #tpu.memory_space<vmem>>, vector<128x128xbf16>
    %cst_29 = arith.constant dense<0.000000e+00> : vector<256x128xf32>
    %75 = tpu.matmul %73, %74, %cst_29 {dimension_numbers = #tpu.dot_dimension_numbers<[1], [0], [0], [1], [0, 0, 1, 1], [], []>} : vector<256x128xbf16>, vector<128x128xbf16>, vector<256x128xf32> -> vector<256x128xf32>
    %c0_30 = arith.constant 0 : index
    %c0_31 = arith.constant 0 : index
    %76 = vector.load %arg9[%c0_30, %c0_31] : memref<1x128xf32, #tpu.memory_space<vmem>>, vector<1x128xf32>
    %77 = vector.broadcast %76 : vector<1x128xf32> to vector<256x128xf32>
    %78 = arith.addf %75, %77 : vector<256x128xf32>
    %79 = arith.negf %78 : vector<256x128xf32>
    %80 = math.exp %79 : vector<256x128xf32>
    %cst_32 = arith.constant 1.000000e+00 : f32
    %81 = vector.broadcast %cst_32 : f32 to vector<256x128xf32>
    %82 = arith.addf %81, %80 : vector<256x128xf32>
    %83 = arith.divf %81, %82 : vector<256x128xf32>
    %84 = arith.mulf %78, %83 : vector<256x128xf32>
    %c0_33 = arith.constant 0 : index
    %c0_34 = arith.constant 0 : index
    %85 = vector.load %arg10[%c0_33, %c0_34] : memref<1x128xf32, #tpu.memory_space<vmem>>, vector<1x128xf32>
    %c0_35 = arith.constant 0 : index
    %c0_36 = arith.constant 0 : index
    %86 = vector.load %arg11[%c0_35, %c0_36] : memref<1x128xf32, #tpu.memory_space<vmem>>, vector<1x128xf32>
    %cst_37 = arith.constant dense<0.000000e+00> : vector<256xf32>
    %87 = vector.multi_reduction <add>, %84, %cst_37 [1] : vector<256x128xf32> to vector<256xf32>
    %88 = vector.shape_cast %87 : vector<256xf32> to vector<256x1xf32>
    %cst_38 = arith.constant 3.125000e-02 : f32
    %89 = vector.broadcast %cst_38 : f32 to vector<256x1xf32>
    %90 = arith.mulf %88, %89 : vector<256x1xf32>
    %91 = arith.mulf %84, %84 : vector<256x128xf32>
    %cst_39 = arith.constant dense<0.000000e+00> : vector<256xf32>
    %92 = vector.multi_reduction <add>, %91, %cst_39 [1] : vector<256x128xf32> to vector<256xf32>
    %93 = vector.shape_cast %92 : vector<256xf32> to vector<256x1xf32>
    %cst_40 = arith.constant 3.125000e-02 : f32
    %94 = vector.broadcast %cst_40 : f32 to vector<256x1xf32>
    %95 = arith.mulf %93, %94 : vector<256x1xf32>
    %96 = arith.mulf %90, %90 : vector<256x1xf32>
    %97 = arith.subf %95, %96 : vector<256x1xf32>
    %98 = vector.broadcast %90 : vector<256x1xf32> to vector<256x128xf32>
    %99 = arith.subf %84, %98 : vector<256x128xf32>
    %cst_41 = arith.constant 9.99999974E-6 : f32
    %100 = vector.broadcast %cst_41 : f32 to vector<256x1xf32>
    %101 = arith.addf %97, %100 : vector<256x1xf32>
    %102 = math.rsqrt %101 : vector<256x1xf32>
    %103 = vector.broadcast %102 : vector<256x1xf32> to vector<256x128xf32>
    %104 = arith.mulf %99, %103 : vector<256x128xf32>
    %105 = vector.broadcast %85 : vector<1x128xf32> to vector<256x128xf32>
    %106 = arith.mulf %104, %105 : vector<256x128xf32>
    %107 = vector.broadcast %86 : vector<1x128xf32> to vector<256x128xf32>
    %108 = arith.addf %106, %107 : vector<256x128xf32>
    %c0_42 = arith.constant 0 : index
    %c0_43 = arith.constant 0 : index
    %109 = vector.load %arg12[%c0_42, %c0_43] : memref<1x128xbf16, #tpu.memory_space<vmem>>, vector<1x128xbf16>
    %110 = arith.truncf %108 : vector<256x128xf32> to vector<256x128xbf16>
    %cst_44 = arith.constant dense<0.000000e+00> : vector<1x256xf32>
    %111 = tpu.matmul %109, %110, %cst_44 {dimension_numbers = #tpu.dot_dimension_numbers<[1], [1], [0], [0], [0, 0, 1, 0], [], []>} : vector<1x128xbf16>, vector<256x128xbf16>, vector<1x256xf32> -> vector<1x256xf32>
    %c0_45 = arith.constant 0 : index
    %c0_46 = arith.constant 0 : index
    %112 = vector.load %arg13[%c0_45, %c0_46] : memref<1x1xf32, #tpu.memory_space<vmem>>, vector<1x1xf32>
    %113 = vector.broadcast %112 : vector<1x1xf32> to vector<1x256xf32>
    %114 = arith.addf %111, %113 : vector<1x256xf32>
    %c0_47 = arith.constant 0 : index
    %c0_48 = arith.constant 0 : index
    %115 = vector.load %arg14[%c0_47, %c0_48] : memref<1x256xf32, #tpu.memory_space<vmem>>, vector<1x256xf32>
    tpu.vector_store %arg14[%c0_47, %c0_48], %114 {strides = array<i32>} : memref<1x256xf32, #tpu.memory_space<vmem>>, vector<1x256xf32>,
    return
  }
  func.func @transform_0(%arg0: i32) -> (i32, i32) {
    %c0_i32 = arith.constant 0 : i32
    %c0_i32_0 = arith.constant 0 : i32
    return %arg0, %c0_i32 : i32, i32
  }
  func.func @transform_1(%arg0: i32) -> (i32, i32) {
    %c0_i32 = arith.constant 0 : i32
    %c0_i32_0 = arith.constant 0 : i32
    %c0_i32_1 = arith.constant 0 : i32
    return %c0_i32, %c0_i32_0 : i32, i32
  }
  func.func @transform_2(%arg0: i32) -> (i32, i32) {
    %c0_i32 = arith.constant 0 : i32
    %c0_i32_0 = arith.constant 0 : i32
    %c0_i32_1 = arith.constant 0 : i32
    return %c0_i32, %c0_i32_0 : i32, i32
  }
  func.func @transform_3(%arg0: i32) -> (i32, i32) {
    %c0_i32 = arith.constant 0 : i32
    %c0_i32_0 = arith.constant 0 : i32
    %c0_i32_1 = arith.constant 0 : i32
    return %c0_i32, %c0_i32_0 : i32, i32
  }
  func.func @transform_4(%arg0: i32) -> (i32, i32) {
    %c0_i32 = arith.constant 0 : i32
    %c0_i32_0 = arith.constant 0 : i32
    %c0_i32_1 = arith.constant 0 : i32
    return %c0_i32, %c0_i32_0 : i32, i32
  }
  func.func @transform_5(%arg0: i32) -> (i32, i32) {
    %c0_i32 = arith.constant 0 : i32
    %c0_i32_0 = arith.constant 0 : i32
    %c0_i32_1 = arith.constant 0 : i32
    return %c0_i32, %c0_i32_0 : i32, i32
  }
  func.func @transform_6(%arg0: i32) -> (i32, i32) {
    %c0_i32 = arith.constant 0 : i32
    %c0_i32_0 = arith.constant 0 : i32
    %c0_i32_1 = arith.constant 0 : i32
    return %c0_i32, %c0_i32_0 : i32, i32
  }
  func.func @transform_7(%arg0: i32) -> (i32, i32) {
    %c0_i32 = arith.constant 0 : i32
    %c0_i32_0 = arith.constant 0 : i32
    %c0_i32_1 = arith.constant 0 : i32
    return %c0_i32, %c0_i32_0 : i32, i32
  }
  func.func @transform_8(%arg0: i32) -> (i32, i32) {
    %c0_i32 = arith.constant 0 : i32
    %c0_i32_0 = arith.constant 0 : i32
    %c0_i32_1 = arith.constant 0 : i32
    return %c0_i32, %c0_i32_0 : i32, i32
  }
  func.func @transform_9(%arg0: i32) -> (i32, i32) {
    %c0_i32 = arith.constant 0 : i32
    %c0_i32_0 = arith.constant 0 : i32
    %c0_i32_1 = arith.constant 0 : i32
    return %c0_i32, %c0_i32_0 : i32, i32
  }
  func.func @transform_10(%arg0: i32) -> (i32, i32) {
    %c0_i32 = arith.constant 0 : i32
    %c0_i32_0 = arith.constant 0 : i32
    %c0_i32_1 = arith.constant 0 : i32
    return %c0_i32, %c0_i32_0 : i32, i32
  }
  func.func @transform_11(%arg0: i32) -> (i32, i32) {
    %c0_i32 = arith.constant 0 : i32
    %c0_i32_0 = arith.constant 0 : i32
    %c0_i32_1 = arith.constant 0 : i32
    return %c0_i32, %c0_i32_0 : i32, i32
  }
  func.func @transform_12(%arg0: i32) -> (i32, i32) {
    %c0_i32 = arith.constant 0 : i32
    %c0_i32_0 = arith.constant 0 : i32
    %c0_i32_1 = arith.constant 0 : i32
    return %c0_i32, %c0_i32_0 : i32, i32
  }
  func.func @transform_13(%arg0: i32) -> (i32, i32) {
    %c0_i32 = arith.constant 0 : i32
    %c0_i32_0 = arith.constant 0 : i32
    return %c0_i32, %arg0 : i32, i32
  }
}

module attributes {stable_mosaic.version = 11 : i64} {
  func.func @_scalar_gated_kernel(%arg0: i32, %arg1: memref<256x128xbf16, #tpu.memory_space<vmem>>, %arg2: memref<128x384xbf16, #tpu.memory_space<vmem>>, %arg3: memref<1x384xf32, #tpu.memory_space<vmem>>, %arg4: memref<1x384xf32, #tpu.memory_space<vmem>>, %arg5: memref<128x128xbf16, #tpu.memory_space<vmem>>, %arg6: memref<1x128xf32, #tpu.memory_space<vmem>>, %arg7: memref<1x128xf32, #tpu.memory_space<vmem>>, %arg8: memref<128x128xbf16, #tpu.memory_space<vmem>>, %arg9: memref<1x128xf32, #tpu.memory_space<vmem>>, %arg10: memref<1x128xf32, #tpu.memory_space<vmem>>, %arg11: memref<1x128xf32, #tpu.memory_space<vmem>>, %arg12: memref<1x128xbf16, #tpu.memory_space<vmem>>, %arg13: memref<1x1xf32, #tpu.memory_space<vmem>>, %arg14: memref<1x256xf32, #tpu.memory_space<vmem>>) attributes {dimension_semantics = [#tpu.dimension_semantics<parallel>], iteration_bounds = array<i64: 1>, scalar_prefetch = 0 : i64, scratch_operands = 0 : i64, tpu.core_type = #tpu.core_type<tc>, window_params = [{transform_indices = @transform_0, window_bounds = array<i64: 256, 128>}, {pipeline_mode = #tpu.pipeline_mode<synchronous>, transform_indices = @transform_1, window_bounds = array<i64: 128, 384>}, {pipeline_mode = #tpu.pipeline_mode<synchronous>, transform_indices = @transform_2, window_bounds = array<i64: 1, 384>}, {pipeline_mode = #tpu.pipeline_mode<synchronous>, transform_indices = @transform_3, window_bounds = array<i64: 1, 384>}, {pipeline_mode = #tpu.pipeline_mode<synchronous>, transform_indices = @transform_4, window_bounds = array<i64: 128, 128>}, {pipeline_mode = #tpu.pipeline_mode<synchronous>, transform_indices = @transform_5, window_bounds = array<i64: 1, 128>}, {pipeline_mode = #tpu.pipeline_mode<synchronous>, transform_indices = @transform_6, window_bounds = array<i64: 1, 128>}, {pipeline_mode = #tpu.pipeline_mode<synchronous>, transform_indices = @transform_7, window_bounds = array<i64: 128, 128>}, {pipeline_mode = #tpu.pipeline_mode<synchronous>, transform_indices = @transform_8, window_bounds = array<i64: 1, 128>}, {pipeline_mode = #tpu.pipeline_mode<synchronous>, transform_indices = @transform_9, window_bounds = array<i64: 1, 128>}, {pipeline_mode = #tpu.pipeline_mode<synchronous>, transform_indices = @transform_10, window_bounds = array<i64: 1, 128>}, {pipeline_mode = #tpu.pipeline_mode<synchronous>, transform_indices = @transform_11, window_bounds = array<i64: 1, 128>}, {pipeline_mode = #tpu.pipeline_mode<synchronous>, transform_indices = @transform_12, window_bounds = array<i64: 1, 1>}, {transform_indices = @transform_13, window_bounds = array<i64: 1, 256>}]} {
    %c0 = arith.constant 0 : index
    %c0_0 = arith.constant 0 : index
    %0 = vector.load %arg1[%c0, %c0_0] : memref<256x128xbf16, #tpu.memory_space<vmem>>, vector<256x128xbf16>
    %c0_1 = arith.constant 0 : index
    %c0_2 = arith.constant 0 : index
    %1 = vector.load %arg5[%c0_1, %c0_2] : memref<128x128xbf16, #tpu.memory_space<vmem>>, vector<128x128xbf16>
    %cst = arith.constant dense<0.000000e+00> : vector<256x128xf32>
    %2 = tpu.matmul %0, %1, %cst {dimension_numbers = #tpu.dot_dimension_numbers<[1], [0], [0], [1], [0, 0, 1, 1], [], []>} : vector<256x128xbf16>, vector<128x128xbf16>, vector<256x128xf32> -> vector<256x128xf32>
    %3 = arith.negf %2 : vector<256x128xf32>
    %4 = math.exp %3 : vector<256x128xf32>
    %cst_3 = arith.constant 1.000000e+00 : f32
    %5 = vector.broadcast %cst_3 : f32 to vector<256x128xf32>
    %6 = arith.addf %5, %4 : vector<256x128xf32>
    %7 = arith.divf %5, %6 : vector<256x128xf32>
    %8 = arith.mulf %2, %7 : vector<256x128xf32>
    %c0_4 = arith.constant 0 : index
    %c0_5 = arith.constant 0 : index
    %9 = vector.load %arg6[%c0_4, %c0_5] : memref<1x128xf32, #tpu.memory_space<vmem>>, vector<1x128xf32>
    %c0_6 = arith.constant 0 : index
    %c0_7 = arith.constant 0 : index
    %10 = vector.load %arg7[%c0_6, %c0_7] : memref<1x128xf32, #tpu.memory_space<vmem>>, vector<1x128xf32>
    %cst_8 = arith.constant dense<0.000000e+00> : vector<256xf32>
    %11 = vector.multi_reduction <add>, %8, %cst_8 [1] : vector<256x128xf32> to vector<256xf32>
    %12 = vector.shape_cast %11 : vector<256xf32> to vector<256x1xf32>
    %cst_9 = arith.constant 3.125000e-02 : f32
    %13 = vector.broadcast %cst_9 : f32 to vector<256x1xf32>
    %14 = arith.mulf %12, %13 : vector<256x1xf32>
    %15 = arith.mulf %8, %8 : vector<256x128xf32>
    %cst_10 = arith.constant dense<0.000000e+00> : vector<256xf32>
    %16 = vector.multi_reduction <add>, %15, %cst_10 [1] : vector<256x128xf32> to vector<256xf32>
    %17 = vector.shape_cast %16 : vector<256xf32> to vector<256x1xf32>
    %cst_11 = arith.constant 3.125000e-02 : f32
    %18 = vector.broadcast %cst_11 : f32 to vector<256x1xf32>
    %19 = arith.mulf %17, %18 : vector<256x1xf32>
    %20 = arith.mulf %14, %14 : vector<256x1xf32>
    %21 = arith.subf %19, %20 : vector<256x1xf32>
    %22 = vector.broadcast %14 : vector<256x1xf32> to vector<256x128xf32>
    %23 = arith.subf %8, %22 : vector<256x128xf32>
    %cst_12 = arith.constant 9.99999974E-6 : f32
    %24 = vector.broadcast %cst_12 : f32 to vector<256x1xf32>
    %25 = arith.addf %21, %24 : vector<256x1xf32>
    %26 = math.rsqrt %25 : vector<256x1xf32>
    %27 = vector.broadcast %26 : vector<256x1xf32> to vector<256x128xf32>
    %28 = arith.mulf %23, %27 : vector<256x128xf32>
    %29 = vector.broadcast %9 : vector<1x128xf32> to vector<256x128xf32>
    %30 = arith.mulf %28, %29 : vector<256x128xf32>
    %31 = vector.broadcast %10 : vector<1x128xf32> to vector<256x128xf32>
    %32 = arith.addf %30, %31 : vector<256x128xf32>
    %c0_13 = arith.constant 0 : index
    %c0_14 = arith.constant 0 : index
    %33 = vector.load %arg2[%c0_13, %c0_14] : memref<128x384xbf16, #tpu.memory_space<vmem>>, vector<128x384xbf16>
    %cst_15 = arith.constant dense<0.000000e+00> : vector<256x384xf32>
    %34 = tpu.matmul %0, %33, %cst_15 {dimension_numbers = #tpu.dot_dimension_numbers<[1], [0], [0], [1], [0, 0, 1, 1], [], []>} : vector<256x128xbf16>, vector<128x384xbf16>, vector<256x384xf32> -> vector<256x384xf32>
    %35 = arith.negf %34 : vector<256x384xf32>
    %36 = math.exp %35 : vector<256x384xf32>
    %cst_16 = arith.constant 1.000000e+00 : f32
    %37 = vector.broadcast %cst_16 : f32 to vector<256x384xf32>
    %38 = arith.addf %37, %36 : vector<256x384xf32>
    %39 = arith.divf %37, %38 : vector<256x384xf32>
    %40 = arith.mulf %34, %39 : vector<256x384xf32>
    %c0_17 = arith.constant 0 : index
    %c0_18 = arith.constant 0 : index
    %41 = vector.load %arg3[%c0_17, %c0_18] : memref<1x384xf32, #tpu.memory_space<vmem>>, vector<1x384xf32>
    %c0_19 = arith.constant 0 : index
    %c0_20 = arith.constant 0 : index
    %42 = vector.load %arg4[%c0_19, %c0_20] : memref<1x384xf32, #tpu.memory_space<vmem>>, vector<1x384xf32>
    %cst_21 = arith.constant dense<0.000000e+00> : vector<256xf32>
    %43 = vector.multi_reduction <add>, %40, %cst_21 [1] : vector<256x384xf32> to vector<256xf32>
    %44 = vector.shape_cast %43 : vector<256xf32> to vector<256x1xf32>
    %cst_22 = arith.constant 0.010416667 : f32
    %45 = vector.broadcast %cst_22 : f32 to vector<256x1xf32>
    %46 = arith.mulf %44, %45 : vector<256x1xf32>
    %47 = arith.mulf %40, %40 : vector<256x384xf32>
    %cst_23 = arith.constant dense<0.000000e+00> : vector<256xf32>
    %48 = vector.multi_reduction <add>, %47, %cst_23 [1] : vector<256x384xf32> to vector<256xf32>
    %49 = vector.shape_cast %48 : vector<256xf32> to vector<256x1xf32>
    %cst_24 = arith.constant 0.010416667 : f32
    %50 = vector.broadcast %cst_24 : f32 to vector<256x1xf32>
    %51 = arith.mulf %49, %50 : vector<256x1xf32>
    %52 = arith.mulf %46, %46 : vector<256x1xf32>
    %53 = arith.subf %51, %52 : vector<256x1xf32>
    %54 = vector.broadcast %46 : vector<256x1xf32> to vector<256x384xf32>
    %55 = arith.subf %40, %54 : vector<256x384xf32>
    %cst_25 = arith.constant 9.99999974E-6 : f32
    %56 = vector.broadcast %cst_25 : f32 to vector<256x1xf32>
    %57 = arith.addf %53, %56 : vector<256x1xf32>
    %58 = math.rsqrt %57 : vector<256x1xf32>
    %59 = vector.broadcast %58 : vector<256x1xf32> to vector<256x384xf32>
    %60 = arith.mulf %55, %59 : vector<256x384xf32>
    %61 = vector.broadcast %41 : vector<1x384xf32> to vector<256x384xf32>
    %62 = arith.mulf %60, %61 : vector<256x384xf32>
    %63 = vector.broadcast %42 : vector<1x384xf32> to vector<256x384xf32>
    %64 = arith.addf %62, %63 : vector<256x384xf32>
    %65 = vector.extract_strided_slice %64 {offsets = [0, 0], sizes = [256, 128], strides = [1, 1]} : vector<256x384xf32> to vector<256x128xf32>
    %66 = vector.extract_strided_slice %64 {offsets = [0, 128], sizes = [256, 128], strides = [1, 1]} : vector<256x384xf32> to vector<256x128xf32>
    %67 = arith.addf %65, %66 : vector<256x128xf32>
    %68 = vector.extract_strided_slice %64 {offsets = [0, 256], sizes = [256, 128], strides = [1, 1]} : vector<256x384xf32> to vector<256x128xf32>
    %69 = arith.addf %67, %68 : vector<256x128xf32>
    %cst_26 = arith.constant 0.333333343 : f32
    %70 = vector.broadcast %cst_26 : f32 to vector<256x128xf32>
    %71 = arith.mulf %69, %70 : vector<256x128xf32>
    %72 = arith.mulf %71, %32 : vector<256x128xf32>
    %73 = arith.truncf %72 : vector<256x128xf32> to vector<256x128xbf16>
    %c0_27 = arith.constant 0 : index
    %c0_28 = arith.constant 0 : index
    %74 = vector.load %arg8[%c0_27, %c0_28] : memref<128x128xbf16, #tpu.memory_space<vmem>>, vector<128x128xbf16>
    %cst_29 = arith.constant dense<0.000000e+00> : vector<256x128xf32>
    %75 = tpu.matmul %73, %74, %cst_29 {dimension_numbers = #tpu.dot_dimension_numbers<[1], [0], [0], [1], [0, 0, 1, 1], [], []>} : vector<256x128xbf16>, vector<128x128xbf16>, vector<256x128xf32> -> vector<256x128xf32>
    %c0_30 = arith.constant 0 : index
    %c0_31 = arith.constant 0 : index
    %76 = vector.load %arg9[%c0_30, %c0_31] : memref<1x128xf32, #tpu.memory_space<vmem>>, vector<1x128xf32>
    %77 = vector.broadcast %76 : vector<1x128xf32> to vector<256x128xf32>
    %78 = arith.addf %75, %77 : vector<256x128xf32>
    %79 = arith.negf %78 : vector<256x128xf32>
    %80 = math.exp %79 : vector<256x128xf32>
    %cst_32 = arith.constant 1.000000e+00 : f32
    %81 = vector.broadcast %cst_32 : f32 to vector<256x128xf32>
    %82 = arith.addf %81, %80 : vector<256x128xf32>
    %83 = arith.divf %81, %82 : vector<256x128xf32>
    %84 = arith.mulf %78, %83 : vector<256x128xf32>
    %c0_33 = arith.constant 0 : index
    %c0_34 = arith.constant 0 : index
    %85 = vector.load %arg10[%c0_33, %c0_34] : memref<1x128xf32, #tpu.memory_space<vmem>>, vector<1x128xf32>
    %c0_35 = arith.constant 0 : index
    %c0_36 = arith.constant 0 : index
    %86 = vector.load %arg11[%c0_35, %c0_36] : memref<1x128xf32, #tpu.memory_space<vmem>>, vector<1x128xf32>
    %cst_37 = arith.constant dense<0.000000e+00> : vector<256xf32>
    %87 = vector.multi_reduction <add>, %84, %cst_37 [1] : vector<256x128xf32> to vector<256xf32>
    %88 = vector.shape_cast %87 : vector<256xf32> to vector<256x1xf32>
    %cst_38 = arith.constant 3.125000e-02 : f32
    %89 = vector.broadcast %cst_38 : f32 to vector<256x1xf32>
    %90 = arith.mulf %88, %89 : vector<256x1xf32>
    %91 = arith.mulf %84, %84 : vector<256x128xf32>
    %cst_39 = arith.constant dense<0.000000e+00> : vector<256xf32>
    %92 = vector.multi_reduction <add>, %91, %cst_39 [1] : vector<256x128xf32> to vector<256xf32>
    %93 = vector.shape_cast %92 : vector<256xf32> to vector<256x1xf32>
    %cst_40 = arith.constant 3.125000e-02 : f32
    %94 = vector.broadcast %cst_40 : f32 to vector<256x1xf32>
    %95 = arith.mulf %93, %94 : vector<256x1xf32>
    %96 = arith.mulf %90, %90 : vector<256x1xf32>
    %97 = arith.subf %95, %96 : vector<256x1xf32>
    %98 = vector.broadcast %90 : vector<256x1xf32> to vector<256x128xf32>
    %99 = arith.subf %84, %98 : vector<256x128xf32>
    %cst_41 = arith.constant 9.99999974E-6 : f32
    %100 = vector.broadcast %cst_41 : f32 to vector<256x1xf32>
    %101 = arith.addf %97, %100 : vector<256x1xf32>
    %102 = math.rsqrt %101 : vector<256x1xf32>
    %103 = vector.broadcast %102 : vector<256x1xf32> to vector<256x128xf32>
    %104 = arith.mulf %99, %103 : vector<256x128xf32>
    %105 = vector.broadcast %85 : vector<1x128xf32> to vector<256x128xf32>
    %106 = arith.mulf %104, %105 : vector<256x128xf32>
    %107 = vector.broadcast %86 : vector<1x128xf32> to vector<256x128xf32>
    %108 = arith.addf %106, %107 : vector<256x128xf32>
    %c0_42 = arith.constant 0 : index
    %c0_43 = arith.constant 0 : index
    %109 = vector.load %arg12[%c0_42, %c0_43] : memref<1x128xbf16, #tpu.memory_space<vmem>>, vector<1x128xbf16>
    %110 = arith.truncf %108 : vector<256x128xf32> to vector<256x128xbf16>
    %cst_44 = arith.constant dense<0.000000e+00> : vector<1x256xf32>
    %111 = tpu.matmul %109, %110, %cst_44 {dimension_numbers = #tpu.dot_dimension_numbers<[1], [1], [0], [0], [0, 0, 1, 0], [], []>} : vector<1x128xbf16>, vector<256x128xbf16>, vector<1x256xf32> -> vector<1x256xf32>
    %c0_45 = arith.constant 0 : index
    %c0_46 = arith.constant 0 : index
    %112 = vector.load %arg13[%c0_45, %c0_46] : memref<1x1xf32, #tpu.memory_space<vmem>>, vector<1x1xf32>
    %113 = vector.broadcast %112 : vector<1x1xf32> to vector<1x256xf32>
    %114 = arith.addf %111, %113 : vector<1x256xf32>
    %c0_47 = arith.constant 0 : index
    %c0_48 = arith.constant 0 : index
    %115 = vector.load %arg14[%c0_47, %c0_48] : memref<1x256xf32, #tpu.memory_space<vmem>>, vector<1x256xf32>
    tpu.vector_store %arg14[%c0_47, %c0_48], %114 {strides = array<i32>} : memref<1x256xf32, #tpu.memory_space<vmem>>, vector<1x256xf32>,
    return
  }
  func.func @transform_0(%arg0: i32) -> (i32, i32) {
    %c0_i32 = arith.constant 0 : i32
    %c0_i32_0 = arith.constant 0 : i32
    return %arg0, %c0_i32 : i32, i32
  }
  func.func @transform_1(%arg0: i32) -> (i32, i32) {
    %c0_i32 = arith.constant 0 : i32
    %c0_i32_0 = arith.constant 0 : i32
    %c0_i32_1 = arith.constant 0 : i32
    return %c0_i32, %c0_i32_0 : i32, i32
  }
  func.func @transform_2(%arg0: i32) -> (i32, i32) {
    %c0_i32 = arith.constant 0 : i32
    %c0_i32_0 = arith.constant 0 : i32
    %c0_i32_1 = arith.constant 0 : i32
    return %c0_i32, %c0_i32_0 : i32, i32
  }
  func.func @transform_3(%arg0: i32) -> (i32, i32) {
    %c0_i32 = arith.constant 0 : i32
    %c0_i32_0 = arith.constant 0 : i32
    %c0_i32_1 = arith.constant 0 : i32
    return %c0_i32, %c0_i32_0 : i32, i32
  }
  func.func @transform_4(%arg0: i32) -> (i32, i32) {
    %c0_i32 = arith.constant 0 : i32
    %c0_i32_0 = arith.constant 0 : i32
    %c0_i32_1 = arith.constant 0 : i32
    return %c0_i32, %c0_i32_0 : i32, i32
  }
  func.func @transform_5(%arg0: i32) -> (i32, i32) {
    %c0_i32 = arith.constant 0 : i32
    %c0_i32_0 = arith.constant 0 : i32
    %c0_i32_1 = arith.constant 0 : i32
    return %c0_i32, %c0_i32_0 : i32, i32
  }
  func.func @transform_6(%arg0: i32) -> (i32, i32) {
    %c0_i32 = arith.constant 0 : i32
    %c0_i32_0 = arith.constant 0 : i32
    %c0_i32_1 = arith.constant 0 : i32
    return %c0_i32, %c0_i32_0 : i32, i32
  }
  func.func @transform_7(%arg0: i32) -> (i32, i32) {
    %c0_i32 = arith.constant 0 : i32
    %c0_i32_0 = arith.constant 0 : i32
    %c0_i32_1 = arith.constant 0 : i32
    return %c0_i32, %c0_i32_0 : i32, i32
  }
  func.func @transform_8(%arg0: i32) -> (i32, i32) {
    %c0_i32 = arith.constant 0 : i32
    %c0_i32_0 = arith.constant 0 : i32
    %c0_i32_1 = arith.constant 0 : i32
    return %c0_i32, %c0_i32_0 : i32, i32
  }
  func.func @transform_9(%arg0: i32) -> (i32, i32) {
    %c0_i32 = arith.constant 0 : i32
    %c0_i32_0 = arith.constant 0 : i32
    %c0_i32_1 = arith.constant 0 : i32
    return %c0_i32, %c0_i32_0 : i32, i32
  }
  func.func @transform_10(%arg0: i32) -> (i32, i32) {
    %c0_i32 = arith.constant 0 : i32
    %c0_i32_0 = arith.constant 0 : i32
    %c0_i32_1 = arith.constant 0 : i32
    return %c0_i32, %c0_i32_0 : i32, i32
  }
  func.func @transform_11(%arg0: i32) -> (i32, i32) {
    %c0_i32 = arith.constant 0 : i32
    %c0_i32_0 = arith.constant 0 : i32
    %c0_i32_1 = arith.constant 0 : i32
    return %c0_i32, %c0_i32_0 : i32, i32
  }
  func.func @transform_12(%arg0: i32) -> (i32, i32) {
    %c0_i32 = arith.constant 0 : i32
    %c0_i32_0 = arith.constant 0 : i32
    %c0_i32_1 = arith.constant 0 : i32
    return %c0_i32, %c0_i32_0 : i32, i32
  }
  func.func @transform_13(%arg0: i32) -> (i32, i32) {
    %c0_i32 = arith.constant 0 : i32
    %c0_i32_0 = arith.constant 0 : i32
    return %c0_i32, %arg0 : i32, i32
  }
}

</mosaic_0001>

<llo_original>
// kernel: tpu_custom_call.1
$region0: #{tpu_custom_call.1}
  #allocation0 [shape = 'u32[]', space=smem, size = 0x4, offset = 0x4, fixed_abs, tag = 'smem constant byte address 0x4 - core index']
  #allocation1 [shape = 'u32[144,128]{1,0:T(1,128)}', space=vmem, size = 0x12000, scoped, tag = 'internal scratch']
  #allocation2 [shape = 'f32[1,1]{1,0:T(1,128)S(1)}', space=vmem, size = 0x200, scoped, tag = 'scoped memory for tpu_custom_call.1']
  %s0 = inlined_call_operand.hbm [shape: bf16[256,128], index: 0, kind: input, shape index: {}]
  %s1 = inlined_call_operand.hbm [shape: bf16[128,384], index: 1, kind: input, shape index: {}]
  %s2 = inlined_call_operand.vmem [shape: f32[1,384], index: 2, kind: input, shape index: {}]
  %s3 = inlined_call_operand.vmem [shape: f32[1,384], index: 3, kind: input, shape index: {}]
  %s4 = inlined_call_operand.hbm [shape: bf16[128,128], index: 4, kind: input, shape index: {}]
  %s5 = inlined_call_operand.vmem [shape: f32[1,128], index: 5, kind: input, shape index: {}]
  %s6 = inlined_call_operand.vmem [shape: f32[1,128], index: 6, kind: input, shape index: {}]
  %s7 = inlined_call_operand.hbm [shape: bf16[128,128], index: 7, kind: input, shape index: {}]
  %s8 = inlined_call_operand.vmem [shape: f32[1,128], index: 8, kind: input, shape index: {}]
  %s9 = inlined_call_operand.vmem [shape: f32[1,128], index: 9, kind: input, shape index: {}]
  %s10 = inlined_call_operand.vmem [shape: f32[1,128], index: 10, kind: input, shape index: {}]
  %s11 = inlined_call_operand.vmem [shape: bf16[1,128], index: 11, kind: input, shape index: {}]
  %s12 = inlined_call_operand.<no memory space> [shape: f32[1,1], index: 12, kind: input, shape index: {}]
  %s13 = inlined_call_operand.hbm [shape: f32[1,256], index: 13, kind: output, shape index: {}]
  %s14 = sld [smem:[#allocation0]]
  $region78: #{tpu_custom_call.1} parent=0
    _
  %s16 = ssub.s32 1, %s14
  %s17 = scalar_select 0, %s16, %s14
  %v18 = vstv %s12
  %19 = vst [vmem:[#allocation2] sm:$0x1] %v18
  $region1: #{tpu_custom_call.1} parent=0
    #allocation3 [shape = 'u8[65536]{0}', space=vmem, size = 0x10000, scoped, tag = 'input window, operand 0, single buffered']
    #allocation4 [shape = 's32[1]{0}', space=sflag, size = 0x4, scoped, tag = 'scoped memory for tpu_custom_call.1']
    #allocation5 [shape = 's32[1]{0}', space=sflag, size = 0x4, scoped, tag = 'scoped memory for tpu_custom_call.1']
    #allocation6 [shape = 'u8[98304]{0}', space=vmem, size = 0x18000, scoped, tag = 'input window, operand 1, single buffered']
    #allocation7 [shape = 's32[1]{0}', space=sflag, size = 0x4, scoped, tag = 'scoped memory for tpu_custom_call.1']
    #allocation8 [shape = 'u8[32768]{0}', space=vmem, size = 0x8000, scoped, tag = 'input window, operand 4, single buffered']
    #allocation9 [shape = 'u8[32768]{0}', space=vmem, size = 0x8000, scoped, tag = 'input window, operand 7, single buffered']
    #allocation10 [shape = 's32[1]{0}', space=sflag, size = 0x4, scoped, tag = 'scoped memory for tpu_custom_call.1']
    #allocation11 [shape = 'u8[1024]{0}', space=vmem, size = 0x400, scoped, tag = 'output window, operand 0, single buffered']
    %20 = vsyncpa [#allocation4], 0
    %21 = vsyncpa [#allocation7], 0
    %22 = vsyncpa [#allocation10], 0
    %23 = vsyncpa [#allocation5], 0
    // Predicated region
    $region2: #{tpu_custom_call.1} parent=1 // pred_check
      _
    $region3: #{tpu_custom_call.1} parent=1 // pred_check_branch
      %25 = sbr.rel (0) target = $region5
    $region4: #{tpu_custom_call.1} parent=1 // pred_region
      %s27 = ssub.s32 2048, 2048
      %28 = vsyncadd [#allocation4], %s27
      %s29 = sshll.u32 [#allocation3], 4
      %s30 = int_to_ptr.vmem [resolvable:$true] %s29
      %35 = dma.hbm_to_vmem [thread:$0]  %s0, 2048, %s30, [#allocation4], 64, 64, 4
    $region5: #{tpu_custom_call.1} parent=1 // pred_fallthru
      _
    // Predicated region
    $region6: #{tpu_custom_call.1} parent=1 // pred_check
      _
    $region7: #{tpu_custom_call.1} parent=1 // pred_check_branch
      %37 = sbr.rel (0) target = $region9
    $region8: #{tpu_custom_call.1} parent=1 // pred_region
      %s39 = ssub.s32 3072, 3072
      %40 = vsyncadd [#allocation7], %s39
      %s41 = sshll.u32 [#allocation6], 4
      %s42 = int_to_ptr.vmem [resolvable:$true] %s41
      %47 = dma.hbm_to_vmem [thread:$0]  %s1, 3072, %s42, [#allocation7], 192, 192, 12
    $region9: #{tpu_custom_call.1} parent=1 // pred_fallthru
      _
    // Predicated region
    $region10: #{tpu_custom_call.1} parent=1 // pred_check
      _
    $region11: #{tpu_custom_call.1} parent=1 // pred_check_branch
      %49 = sbr.rel (0) target = $region13
    $region12: #{tpu_custom_call.1} parent=1 // pred_region
      _
    $region13: #{tpu_custom_call.1} parent=1 // pred_fallthru
      _
    // Predicated region
    $region14: #{tpu_custom_call.1} parent=1 // pred_check
      _
    $region15: #{tpu_custom_call.1} parent=1 // pred_check_branch
      %51 = sbr.rel (0) target = $region17
    $region16: #{tpu_custom_call.1} parent=1 // pred_region
      _
    $region17: #{tpu_custom_call.1} parent=1 // pred_fallthru
      _
    // Predicated region
    $region18: #{tpu_custom_call.1} parent=1 // pred_check
      _
    $region19: #{tpu_custom_call.1} parent=1 // pred_check_branch
      %53 = sbr.rel (0) target = $region21
    $region20: #{tpu_custom_call.1} parent=1 // pred_region
      %s55 = ssub.s32 1024, 1024
      %56 = vsyncadd [#allocation7], %s55
      %s57 = sshll.u32 [#allocation8], 4
      %s58 = int_to_ptr.vmem [resolvable:$true] %s57
      %63 = dma.hbm_to_vmem [thread:$0]  %s4, 1024, %s58, [#allocation7], 64, 64, 4
    $region21: #{tpu_custom_call.1} parent=1 // pred_fallthru
      _
    // Predicated region
    $region22: #{tpu_custom_call.1} parent=1 // pred_check
      _
    $region23: #{tpu_custom_call.1} parent=1 // pred_check_branch
      %65 = sbr.rel (0) target = $region25
    $region24: #{tpu_custom_call.1} parent=1 // pred_region
      _
    $region25: #{tpu_custom_call.1} parent=1 // pred_fallthru
      _
    // Predicated region
    $region26: #{tpu_custom_call.1} parent=1 // pred_check
      _
    $region27: #{tpu_custom_call.1} parent=1 // pred_check_branch
      %67 = sbr.rel (0) target = $region29
    $region28: #{tpu_custom_call.1} parent=1 // pred_region
      _
    $region29: #{tpu_custom_call.1} parent=1 // pred_fallthru
      _
    // Predicated region
    $region30: #{tpu_custom_call.1} parent=1 // pred_check
      _
    $region31: #{tpu_custom_call.1} parent=1 // pred_check_branch
      %69 = sbr.rel (0) target = $region33
    $region32: #{tpu_custom_call.1} parent=1 // pred_region
      %s71 = ssub.s32 1024, 1024
      %72 = vsyncadd [#allocation10], %s71
      %s73 = sshll.u32 [#allocation9], 4
      %s74 = int_to_ptr.vmem [resolvable:$true] %s73
      %79 = dma.hbm_to_vmem [thread:$0]  %s7, 1024, %s74, [#allocation10], 64, 64, 4
    $region33: #{tpu_custom_call.1} parent=1 // pred_fallthru
      _
    // Predicated region
    $region34: #{tpu_custom_call.1} parent=1 // pred_check
      _
    $region35: #{tpu_custom_call.1} parent=1 // pred_check_branch
      %81 = sbr.rel (0) target = $region37
    $region36: #{tpu_custom_call.1} parent=1 // pred_region
      _
    $region37: #{tpu_custom_call.1} parent=1 // pred_fallthru
      _
    // Predicated region
    $region38: #{tpu_custom_call.1} parent=1 // pred_check
      _
    $region39: #{tpu_custom_call.1} parent=1 // pred_check_branch
      %83 = sbr.rel (0) target = $region41
    $region40: #{tpu_custom_call.1} parent=1 // pred_region
      _
    $region41: #{tpu_custom_call.1} parent=1 // pred_fallthru
      _
    // Predicated region
    $region42: #{tpu_custom_call.1} parent=1 // pred_check
      _
    $region43: #{tpu_custom_call.1} parent=1 // pred_check_branch
      %85 = sbr.rel (0) target = $region45
    $region44: #{tpu_custom_call.1} parent=1 // pred_region
      _
    $region45: #{tpu_custom_call.1} parent=1 // pred_fallthru
      _
    // Predicated region
    $region46: #{tpu_custom_call.1} parent=1 // pred_check
      _
    $region47: #{tpu_custom_call.1} parent=1 // pred_check_branch
      %87 = sbr.rel (0) target = $region49
    $region48: #{tpu_custom_call.1} parent=1 // pred_region
      _
    $region49: #{tpu_custom_call.1} parent=1 // pred_fallthru
      _
    // Predicated region
    $region50: #{tpu_custom_call.1} parent=1 // pred_check
      _
    $region51: #{tpu_custom_call.1} parent=1 // pred_check_branch
      %89 = sbr.rel (0) target = $region53
    $region52: #{tpu_custom_call.1} parent=1 // pred_region
      _
    $region53: #{tpu_custom_call.1} parent=1 // pred_fallthru
      _
    // Predicated region
    $region54: #{tpu_custom_call.1} parent=1 // pred_check
      _
    $region55: #{tpu_custom_call.1} parent=1 // pred_check_branch
      %91 = sbr.rel (0) target = $region57
    $region56: #{tpu_custom_call.1} parent=1 // pred_region
      %92 = dma.done [#allocation4], 2048
    $region57: #{tpu_custom_call.1} parent=1 // pred_fallthru
      _
    // Predicated region
    $region58: #{tpu_custom_call.1} parent=1 // pred_check
      _
    $region59: #{tpu_custom_call.1} parent=1 // pred_check_branch
      %94 = sbr.rel (0) target = $region61
    $region60: #{tpu_custom_call.1} parent=1 // pred_region
      %95 = dma.done [#allocation7], 3072
    $region61: #{tpu_custom_call.1} parent=1 // pred_fallthru
      _
    // Predicated region
    $region62: #{tpu_custom_call.1} parent=1 // pred_check
      _
    $region63: #{tpu_custom_call.1} parent=1 // pred_check_branch
      %97 = sbr.rel (0) target = $region65
    $region64: #{tpu_custom_call.1} parent=1 // pred_region
      %98 = dma.done [#allocation7], 1024
    $region65: #{tpu_custom_call.1} parent=1 // pred_fallthru
      _
    // Predicated region
    $region66: #{tpu_custom_call.1} parent=1 // pred_check
      _
    $region67: #{tpu_custom_call.1} parent=1 // pred_check_branch
      %100 = sbr.rel (0) target = $region69
    $region68: #{tpu_custom_call.1} parent=1 // pred_region
      %101 = dma.done [#allocation10], 1024
    $region69: #{tpu_custom_call.1} parent=1 // pred_fallthru
      _
    %v103 = vld [vmem:[#allocation3] sm:$0xf]
    %v104 = vld [vmem:[#allocation3 + $0x4] sm:$0xf]
    %v105 = vld [vmem:[#allocation3 + $0x8] sm:$0xf]
    %v106 = vld [vmem:[#allocation3 + $0xc] sm:$0xf]
    %v107 = vld [vmem:[#allocation3 + $0x10] sm:$0xf]
    %v108 = vld [vmem:[#allocation3 + $0x14] sm:$0xf]
    %v109 = vld [vmem:[#allocation3 + $0x18] sm:$0xf]
    %v110 = vld [vmem:[#allocation3 + $0x1c] sm:$0xf]
    %v111 = vld [vmem:[#allocation3 + $0x20] sm:$0xf]
    %v112 = vld [vmem:[#allocation3 + $0x24] sm:$0xf]
    %v113 = vld [vmem:[#allocation3 + $0x28] sm:$0xf]
    %v114 = vld [vmem:[#allocation3 + $0x2c] sm:$0xf]
    %v115 = vld [vmem:[#allocation3 + $0x30] sm:$0xf]
    %v116 = vld [vmem:[#allocation3 + $0x34] sm:$0xf]
    %v117 = vld [vmem:[#allocation3 + $0x38] sm:$0xf]
    %v118 = vld [vmem:[#allocation3 + $0x3c] sm:$0xf]
    %v119 = vld [vmem:[#allocation3 + $0x40] sm:$0xf]
    %v120 = vld [vmem:[#allocation3 + $0x44] sm:$0xf]
    %v121 = vld [vmem:[#allocation3 + $0x48] sm:$0xf]
    %v122 = vld [vmem:[#allocation3 + $0x4c] sm:$0xf]
    %v123 = vld [vmem:[#allocation3 + $0x50] sm:$0xf]
    %v124 = vld [vmem:[#allocation3 + $0x54] sm:$0xf]
    %v125 = vld [vmem:[#allocation3 + $0x58] sm:$0xf]
    %v126 = vld [vmem:[#allocation3 + $0x5c] sm:$0xf]
    %v127 = vld [vmem:[#allocation3 + $0x60] sm:$0xf]
    %v128 = vld [vmem:[#allocation3 + $0x64] sm:$0xf]
    %v129 = vld [vmem:[#allocation3 + $0x68] sm:$0xf]
    %v130 = vld [vmem:[#allocation3 + $0x6c] sm:$0xf]
    %v131 = vld [vmem:[#allocation3 + $0x70] sm:$0xf]
    %v132 = vld [vmem:[#allocation3 + $0x74] sm:$0xf]
    %v133 = vld [vmem:[#allocation3 + $0x78] sm:$0xf]
    %v134 = vld [vmem:[#allocation3 + $0x7c] sm:$0xf]
    %v135 = vld [vmem:[#allocation8] sm:$0xf]
    %v136 = vld [vmem:[#allocation8 + $0x4] sm:$0xf]
    %v137 = vld [vmem:[#allocation8 + $0x8] sm:$0xf]
    %v138 = vld [vmem:[#allocation8 + $0xc] sm:$0xf]
    %v139 = vld [vmem:[#allocation8 + $0x10] sm:$0xf]
    %v140 = vld [vmem:[#allocation8 + $0x14] sm:$0xf]
    %v141 = vld [vmem:[#allocation8 + $0x18] sm:$0xf]
    %v142 = vld [vmem:[#allocation8 + $0x1c] sm:$0xf]
    %v143 = vld [vmem:[#allocation8 + $0x20] sm:$0xf]
    %v144 = vld [vmem:[#allocation8 + $0x24] sm:$0xf]
    %v145 = vld [vmem:[#allocation8 + $0x28] sm:$0xf]
    %v146 = vld [vmem:[#allocation8 + $0x2c] sm:$0xf]
    %v147 = vld [vmem:[#allocation8 + $0x30] sm:$0xf]
    %v148 = vld [vmem:[#allocation8 + $0x34] sm:$0xf]
    %v149 = vld [vmem:[#allocation8 + $0x38] sm:$0xf]
    %v150 = vld [vmem:[#allocation8 + $0x3c] sm:$0xf]
    %v183 = vunpack.c.l.b16 %v103
    %v184 = vunpack.c.l.b16 %v104
    %v185 = vunpack.c.l.b16 %v105
    %v186 = vunpack.c.l.b16 %v106
    %v187 = vunpack.c.l.b16 %v107
    %v188 = vunpack.c.l.b16 %v108
    %v189 = vunpack.c.l.b16 %v109
    %v190 = vunpack.c.l.b16 %v110
    %v191 = vunpack.c.l.b16 %v111
    %v192 = vunpack.c.l.b16 %v112
    %v193 = vunpack.c.l.b16 %v113
    %v194 = vunpack.c.l.b16 %v114
    %v195 = vunpack.c.l.b16 %v115
    %v196 = vunpack.c.l.b16 %v116
    %v197 = vunpack.c.l.b16 %v117
    %v198 = vunpack.c.l.b16 %v118
    %v199 = vunpack.c.l.b16 %v119
    %v200 = vunpack.c.l.b16 %v120
    %v201 = vunpack.c.l.b16 %v121
    %v202 = vunpack.c.l.b16 %v122
    %v203 = vunpack.c.l.b16 %v123
    %v204 = vunpack.c.l.b16 %v124
    %v205 = vunpack.c.l.b16 %v125
    %v206 = vunpack.c.l.b16 %v126
    %v207 = vunpack.c.l.b16 %v127
    %v208 = vunpack.c.l.b16 %v128
    %v209 = vunpack.c.l.b16 %v129
    %v210 = vunpack.c.l.b16 %v130
    %v211 = vunpack.c.l.b16 %v131
    %v212 = vunpack.c.l.b16 %v132
    %v213 = vunpack.c.l.b16 %v133
    %v214 = vunpack.c.l.b16 %v134
    %v215 = vpack.c.b16 %v184, %v183
    %v216 = vpack.c.b16 %v186, %v185
    %v217 = vpack.c.b16 %v188, %v187
    %v218 = vpack.c.b16 %v190, %v189
    %v219 = vpack.c.b16 %v192, %v191
    %v220 = vpack.c.b16 %v194, %v193
    %v221 = vpack.c.b16 %v196, %v195
    %v222 = vpack.c.b16 %v198, %v197
    %v223 = vpack.c.b16 %v200, %v199
    %v224 = vpack.c.b16 %v202, %v201
    %v225 = vpack.c.b16 %v204, %v203
    %v226 = vpack.c.b16 %v206, %v205
    %v227 = vpack.c.b16 %v208, %v207
    %v228 = vpack.c.b16 %v210, %v209
    %v229 = vpack.c.b16 %v212, %v211
    %v230 = vpack.c.b16 %v214, %v213
    %v263 = vunpack.c.l.b16 %v135
    %v264 = vunpack.c.l.b16 %v136
    %v265 = vunpack.c.l.b16 %v137
    %v266 = vunpack.c.l.b16 %v138
    %v267 = vunpack.c.l.b16 %v139
    %v268 = vunpack.c.l.b16 %v140
    %v269 = vunpack.c.l.b16 %v141
    %v270 = vunpack.c.l.b16 %v142
    %v271 = vunpack.c.l.b16 %v143
    %v272 = vunpack.c.l.b16 %v144
    %v273 = vunpack.c.l.b16 %v145
    %v274 = vunpack.c.l.b16 %v146
    %v275 = vunpack.c.l.b16 %v147
    %v276 = vunpack.c.l.b16 %v148
    %v277 = vunpack.c.l.b16 %v149
    %v278 = vunpack.c.l.b16 %v150
    %v279 = vpack.c.b16 %v264, %v263
    %v280 = vpack.c.b16 %v266, %v265
    %v281 = vpack.c.b16 %v268, %v267
    %v282 = vpack.c.b16 %v270, %v269
    %v283 = vpack.c.b16 %v272, %v271
    %v284 = vpack.c.b16 %v274, %v273
    %v285 = vpack.c.b16 %v276, %v275
    %v286 = vpack.c.b16 %v278, %v277
    %295 = vmatprep.subr.bf16.mxu0 0
    %296 = vmatpush1.bf16.msra.mxu0 %v279
    %297 = vmatprep.subr.bf16.mxu0 0
    %298 = vmatpush1.bf16.msra.mxu0 %v280
    %299 = vmatprep.subr.bf16.mxu0 0
    %300 = vmatpush1.bf16.msra.mxu0 %v281
    %301 = vmatprep.subr.bf16.mxu0 0
    %302 = vmatpush1.bf16.msra.mxu0 %v282
    %303 = vmatprep.subr.bf16.mxu0 0
    %304 = vmatpush1.bf16.msra.mxu0 %v283
    %305 = vmatprep.subr.bf16.mxu0 0
    %306 = vmatpush1.bf16.msra.mxu0 %v284
    %307 = vmatprep.subr.bf16.mxu0 0
    %308 = vmatpush1.bf16.msra.mxu0 %v285
    %309 = vmatprep.subr.bf16.mxu0 0
    %310 = vmatpush1.bf16.msra.mxu0 %v286
    %311 = vmatprep.subr.bf16.mxu0 0
    %312 = vmatpush1.bf16.msra.mxu0 0
    %313 = vmatprep.subr.bf16.mxu0 0
    %314 = vmatpush1.bf16.msra.mxu0 0
    %315 = vmatprep.subr.bf16.mxu0 0
    %316 = vmatpush1.bf16.msra.mxu0 0
    %317 = vmatprep.subr.bf16.mxu0 0
    %318 = vmatpush1.bf16.msra.mxu0 0
    %319 = vmatprep.subr.bf16.mxu0 0
    %320 = vmatpush1.bf16.msra.mxu0 0
    %321 = vmatprep.subr.bf16.mxu0 0
    %322 = vmatpush1.bf16.msra.mxu0 0
    %323 = vmatprep.subr.bf16.mxu0 0
    %324 = vmatpush1.bf16.msra.mxu0 0
    %325 = vmatprep.subr.bf16.mxu0 0
    %326 = vmatpush1.bf16.msra.mxu0 0
    %327 = vmatprep.mubr.bf16.mxu0 0
    %328 = vmatmul.mubr.bf16.gmra.mrb[0].mxu0 %v215
    %v329 = vpop.f32.mrb[0].mxu0
    %v330 = vadd.f32 0.0, %v329
    %v331 = vpop.f32.mrb[0].mxu0
    %v332 = vpop.f32.mrb[0].mxu0
    %v333 = vadd.f32 0.0, %v332
    %v334 = vpop.f32.mrb[0].mxu0
    %335 = vmatprep.mubr.bf16.mxu0 0
    %336 = vmatmul.mubr.bf16.gmra.mrb[0].mxu0 %v216
    %v337 = vpop.f32.mrb[0].mxu0
    %v338 = vadd.f32 0.0, %v337
    %v339 = vpop.f32.mrb[0].mxu0
    %v340 = vpop.f32.mrb[0].mxu0
    %v341 = vadd.f32 0.0, %v340
    %v342 = vpop.f32.mrb[0].mxu0
    %343 = vmatprep.mubr.bf16.mxu0 0
    %344 = vmatmul.mubr.bf16.gmra.mrb[0].mxu0 %v217
    %v345 = vpop.f32.mrb[0].mxu0
    %v346 = vadd.f32 0.0, %v345
    %v347 = vpop.f32.mrb[0].mxu0
    %v348 = vpop.f32.mrb[0].mxu0
    %v349 = vadd.f32 0.0, %v348
    %v350 = vpop.f32.mrb[0].mxu0
    %351 = vmatprep.mubr.bf16.mxu0 0
    %352 = vmatmul.mubr.bf16.gmra.mrb[0].mxu0 %v218
    %v353 = vpop.f32.mrb[0].mxu0
    %v354 = vadd.f32 0.0, %v353
    %v355 = vpop.f32.mrb[0].mxu0
    %v356 = vpop.f32.mrb[0].mxu0
    %v357 = vadd.f32 0.0, %v356
    %v358 = vpop.f32.mrb[0].mxu0
    %359 = vmatprep.mubr.bf16.mxu0 0
    %360 = vmatmul.mubr.bf16.gmra.mrb[0].mxu0 %v219
    %v361 = vpop.f32.mrb[0].mxu0
    %v362 = vadd.f32 0.0, %v361
    %v363 = vpop.f32.mrb[0].mxu0
    %v364 = vpop.f32.mrb[0].mxu0
    %v365 = vadd.f32 0.0, %v364
    %v366 = vpop.f32.mrb[0].mxu0
    %367 = vmatprep.mubr.bf16.mxu0 0
    %368 = vmatmul.mubr.bf16.gmra.mrb[0].mxu0 %v220
    %v369 = vpop.f32.mrb[0].mxu0
    %v370 = vadd.f32 0.0, %v369
    %v371 = vpop.f32.mrb[0].mxu0
    %v372 = vpop.f32.mrb[0].mxu0
    %v373 = vadd.f32 0.0, %v372
    %v374 = vpop.f32.mrb[0].mxu0
    %375 = vmatprep.mubr.bf16.mxu0 0
    %376 = vmatmul.mubr.bf16.gmra.mrb[0].mxu0 %v221
    %v377 = vpop.f32.mrb[0].mxu0
    %v378 = vadd.f32 0.0, %v377
    %v379 = vpop.f32.mrb[0].mxu0
    %v380 = vpop.f32.mrb[0].mxu0
    %v381 = vadd.f32 0.0, %v380
    %v382 = vpop.f32.mrb[0].mxu0
    %383 = vmatprep.mubr.bf16.mxu0 0
    %384 = vmatmul.mubr.bf16.gmra.mrb[0].mxu0 %v222
    %v385 = vpop.f32.mrb[0].mxu0
    %v386 = vadd.f32 0.0, %v385
    %v387 = vpop.f32.mrb[0].mxu0
    %v388 = vpop.f32.mrb[0].mxu0
    %v389 = vadd.f32 0.0, %v388
    %v390 = vpop.f32.mrb[0].mxu0
    %391 = vmatprep.mubr.bf16.mxu0 0
    %392 = vmatmul.mubr.bf16.gmra.mrb[0].mxu0 %v223
    %v393 = vpop.f32.mrb[0].mxu0
    %v394 = vadd.f32 0.0, %v393
    %v395 = vpop.f32.mrb[0].mxu0
    %v396 = vpop.f32.mrb[0].mxu0
    %v397 = vadd.f32 0.0, %v396
    %v398 = vpop.f32.mrb[0].mxu0
    %399 = vmatprep.mubr.bf16.mxu0 0
    %400 = vmatmul.mubr.bf16.gmra.mrb[0].mxu0 %v224
    %v401 = vpop.f32.mrb[0].mxu0
    %v402 = vadd.f32 0.0, %v401
    %v403 = vpop.f32.mrb[0].mxu0
    %v404 = vpop.f32.mrb[0].mxu0
    %v405 = vadd.f32 0.0, %v404
    %v406 = vpop.f32.mrb[0].mxu0
    %407 = vmatprep.mubr.bf16.mxu0 0
    %408 = vmatmul.mubr.bf16.gmra.mrb[0].mxu0 %v225
    %v409 = vpop.f32.mrb[0].mxu0
    %v410 = vadd.f32 0.0, %v409
    %v411 = vpop.f32.mrb[0].mxu0
    %v412 = vpop.f32.mrb[0].mxu0
    %v413 = vadd.f32 0.0, %v412
    %v414 = vpop.f32.mrb[0].mxu0
    %415 = vmatprep.mubr.bf16.mxu0 0
    %416 = vmatmul.mubr.bf16.gmra.mrb[0].mxu0 %v226
    %v417 = vpop.f32.mrb[0].mxu0
    %v418 = vadd.f32 0.0, %v417
    %v419 = vpop.f32.mrb[0].mxu0
    %v420 = vpop.f32.mrb[0].mxu0
    %v421 = vadd.f32 0.0, %v420
    %v422 = vpop.f32.mrb[0].mxu0
    %423 = vmatprep.mubr.bf16.mxu0 0
    %424 = vmatmul.mubr.bf16.gmra.mrb[0].mxu0 %v227
    %v425 = vpop.f32.mrb[0].mxu0
    %v426 = vadd.f32 0.0, %v425
    %v427 = vpop.f32.mrb[0].mxu0
    %v428 = vpop.f32.mrb[0].mxu0
    %v429 = vadd.f32 0.0, %v428
    %v430 = vpop.f32.mrb[0].mxu0
    %431 = vmatprep.mubr.bf16.mxu0 0
    %432 = vmatmul.mubr.bf16.gmra.mrb[0].mxu0 %v228
    %v433 = vpop.f32.mrb[0].mxu0
    %v434 = vadd.f32 0.0, %v433
    %v435 = vpop.f32.mrb[0].mxu0
    %v436 = vpop.f32.mrb[0].mxu0
    %v437 = vadd.f32 0.0, %v436
    %v438 = vpop.f32.mrb[0].mxu0
    %439 = vmatprep.mubr.bf16.mxu0 0
    %440 = vmatmul.mubr.bf16.gmra.mrb[0].mxu0 %v229
    %v441 = vpop.f32.mrb[0].mxu0
    %v442 = vadd.f32 0.0, %v441
    %v443 = vpop.f32.mrb[0].mxu0
    %v444 = vpop.f32.mrb[0].mxu0
    %v445 = vadd.f32 0.0, %v444
    %v446 = vpop.f32.mrb[0].mxu0
    %447 = vmatprep.mubr.bf16.mxu0 0
    %448 = vmatmul.mubr.bf16.gmra.mrb[0].mxu0 %v230
    %v449 = vpop.f32.mrb[0].mxu0
    %v450 = vadd.f32 0.0, %v449
    %v451 = vpop.f32.mrb[0].mxu0
    %v452 = vpop.f32.mrb[0].mxu0
    %v453 = vadd.f32 0.0, %v452
    %v454 = vpop.f32.mrb[0].mxu0
    %455 = vdwg.mxu0
    %v456 = vxor.u32 %v330, 2147483648
    %v457 = vxor.u32 %v333, 2147483648
    %v458 = vxor.u32 %v338, 2147483648
    %v459 = vxor.u32 %v341, 2147483648
    %v460 = vxor.u32 %v346, 2147483648
    %v461 = vxor.u32 %v349, 2147483648
    %v462 = vxor.u32 %v354, 2147483648
    %v463 = vxor.u32 %v357, 2147483648
    %v464 = vxor.u32 %v362, 2147483648
    %v465 = vxor.u32 %v365, 2147483648
    %v466 = vxor.u32 %v370, 2147483648
    %v467 = vxor.u32 %v373, 2147483648
    %v468 = vxor.u32 %v378, 2147483648
    %v469 = vxor.u32 %v381, 2147483648
    %v470 = vxor.u32 %v386, 2147483648
    %v471 = vxor.u32 %v389, 2147483648
    %v472 = vxor.u32 %v394, 2147483648
    %v473 = vxor.u32 %v397, 2147483648
    %v474 = vxor.u32 %v402, 2147483648
    %v475 = vxor.u32 %v405, 2147483648
    %v476 = vxor.u32 %v410, 2147483648
    %v477 = vxor.u32 %v413, 2147483648
    %v478 = vxor.u32 %v418, 2147483648
    %v479 = vxor.u32 %v421, 2147483648
    %v480 = vxor.u32 %v426, 2147483648
    %v481 = vxor.u32 %v429, 2147483648
    %v482 = vxor.u32 %v434, 2147483648
    %v483 = vxor.u32 %v437, 2147483648
    %v484 = vxor.u32 %v442, 2147483648
    %v485 = vxor.u32 %v445, 2147483648
    %v486 = vxor.u32 %v450, 2147483648
    %v487 = vxor.u32 %v453, 2147483648
    %v488 = vmul.f32 %v456, 1.442695
    %v489 = vpow.pop %v488
    %v490 = vmul.f32 %v457, 1.442695
    %v491 = vpow.pop %v490
    %v492 = vmul.f32 %v458, 1.442695
    %v493 = vpow.pop %v492
    %v494 = vmul.f32 %v459, 1.442695
    %v495 = vpow.pop %v494
    %v496 = vmul.f32 %v460, 1.442695
    %v497 = vpow.pop %v496
    %v498 = vmul.f32 %v461, 1.442695
    %v499 = vpow.pop %v498
    %v500 = vmul.f32 %v462, 1.442695
    %v501 = vpow.pop %v500
    %v502 = vmul.f32 %v463, 1.442695
    %v503 = vpow.pop %v502
    %v504 = vmul.f32 %v464, 1.442695
    %v505 = vpow.pop %v504
    %v506 = vmul.f32 %v465, 1.442695
    %v507 = vpow.pop %v506
    %v508 = vmul.f32 %v466, 1.442695
    %v509 = vpow.pop %v508
    %v510 = vmul.f32 %v467, 1.442695
    %v511 = vpow.pop %v510
    %v512 = vmul.f32 %v468, 1.442695
    %v513 = vpow.pop %v512
    %v514 = vmul.f32 %v469, 1.442695
    %v515 = vpow.pop %v514
    %v516 = vmul.f32 %v470, 1.442695
    %v517 = vpow.pop %v516
    %v518 = vmul.f32 %v471, 1.442695
    %v519 = vpow.pop %v518
    %v520 = vmul.f32 %v472, 1.442695
    %v521 = vpow.pop %v520
    %v522 = vmul.f32 %v473, 1.442695
    %v523 = vpow.pop %v522
    %v524 = vmul.f32 %v474, 1.442695
    %v525 = vpow.pop %v524
    %v526 = vmul.f32 %v475, 1.442695
    %v527 = vpow.pop %v526
    %v528 = vmul.f32 %v476, 1.442695
    %v529 = vpow.pop %v528
    %v530 = vmul.f32 %v477, 1.442695
    %v531 = vpow.pop %v530
    %v532 = vmul.f32 %v478, 1.442695
    %v533 = vpow.pop %v532
    %v534 = vmul.f32 %v479, 1.442695
    %v535 = vpow.pop %v534
    %v536 = vmul.f32 %v480, 1.442695
    %v537 = vpow.pop %v536
    %v538 = vmul.f32 %v481, 1.442695
    %v539 = vpow.pop %v538
    %v540 = vmul.f32 %v482, 1.442695
    %v541 = vpow.pop %v540
    %v542 = vmul.f32 %v483, 1.442695
    %v543 = vpow.pop %v542
    %v544 = vmul.f32 %v484, 1.442695
    %v545 = vpow.pop %v544
    %v546 = vmul.f32 %v485, 1.442695
    %v547 = vpow.pop %v546
    %v548 = vmul.f32 %v486, 1.442695
    %v549 = vpow.pop %v548
    %v550 = vmul.f32 %v487, 1.442695
    %v551 = vpow.pop %v550
    %v552 = vadd.f32 %v489, 1.0
    %v553 = vadd.f32 %v491, 1.0
    %v554 = vadd.f32 %v493, 1.0
    %v555 = vadd.f32 %v495, 1.0
    %v556 = vadd.f32 %v497, 1.0
    %v557 = vadd.f32 %v499, 1.0
    %v558 = vadd.f32 %v501, 1.0
    %v559 = vadd.f32 %v503, 1.0
    %v560 = vadd.f32 %v505, 1.0
    %v561 = vadd.f32 %v507, 1.0
    %v562 = vadd.f32 %v509, 1.0
    %v563 = vadd.f32 %v511, 1.0
    %v564 = vadd.f32 %v513, 1.0
    %v565 = vadd.f32 %v515, 1.0
    %v566 = vadd.f32 %v517, 1.0
    %v567 = vadd.f32 %v519, 1.0
    %v568 = vadd.f32 %v521, 1.0
    %v569 = vadd.f32 %v523, 1.0
    %v570 = vadd.f32 %v525, 1.0
    %v571 = vadd.f32 %v527, 1.0
    %v572 = vadd.f32 %v529, 1.0
    %v573 = vadd.f32 %v531, 1.0
    %v574 = vadd.f32 %v533, 1.0
    %v575 = vadd.f32 %v535, 1.0
    %v576 = vadd.f32 %v537, 1.0
    %v577 = vadd.f32 %v539, 1.0
    %v578 = vadd.f32 %v541, 1.0
    %v579 = vadd.f32 %v543, 1.0
    %v580 = vadd.f32 %v545, 1.0
    %v581 = vadd.f32 %v547, 1.0
    %v582 = vadd.f32 %v549, 1.0
    %v583 = vadd.f32 %v551, 1.0
    %v584 = vrcp.pop %v552
    %v585 = vmul.f32 1.0, %v584
    %v586 = vrcp.pop %v553
    %v587 = vmul.f32 1.0, %v586
    %v588 = vrcp.pop %v554
    %v589 = vmul.f32 1.0, %v588
    %v590 = vrcp.pop %v555
    %v591 = vmul.f32 1.0, %v590
    %v592 = vrcp.pop %v556
    %v593 = vmul.f32 1.0, %v592
    %v594 = vrcp.pop %v557
    %v595 = vmul.f32 1.0, %v594
    %v596 = vrcp.pop %v558
    %v597 = vmul.f32 1.0, %v596
    %v598 = vrcp.pop %v559
    %v599 = vmul.f32 1.0, %v598
    %v600 = vrcp.pop %v560
    %v601 = vmul.f32 1.0, %v600
    %v602 = vrcp.pop %v561
    %v603 = vmul.f32 1.0, %v602
    %v604 = vrcp.pop %v562
    %v605 = vmul.f32 1.0, %v604
    %v606 = vrcp.pop %v563
    %v607 = vmul.f32 1.0, %v606
    %v608 = vrcp.pop %v564
    %v609 = vmul.f32 1.0, %v608
    %v610 = vrcp.pop %v565
    %v611 = vmul.f32 1.0, %v610
    %v612 = vrcp.pop %v566
    %v613 = vmul.f32 1.0, %v612
    %v614 = vrcp.pop %v567
    %v615 = vmul.f32 1.0, %v614
    %v616 = vrcp.pop %v568
    %v617 = vmul.f32 1.0, %v616
    %v618 = vrcp.pop %v569
    %v619 = vmul.f32 1.0, %v618
    %v620 = vrcp.pop %v570
    %v621 = vmul.f32 1.0, %v620
    %v622 = vrcp.pop %v571
    %v623 = vmul.f32 1.0, %v622
    %v624 = vrcp.pop %v572
    %v625 = vmul.f32 1.0, %v624
    %v626 = vrcp.pop %v573
    %v627 = vmul.f32 1.0, %v626
    %v628 = vrcp.pop %v574
    %v629 = vmul.f32 1.0, %v628
    %v630 = vrcp.pop %v575
    %v631 = vmul.f32 1.0, %v630
    %v632 = vrcp.pop %v576
    %v633 = vmul.f32 1.0, %v632
    %v634 = vrcp.pop %v577
    %v635 = vmul.f32 1.0, %v634
    %v636 = vrcp.pop %v578
    %v637 = vmul.f32 1.0, %v636
    %v638 = vrcp.pop %v579
    %v639 = vmul.f32 1.0, %v638
    %v640 = vrcp.pop %v580
    %v641 = vmul.f32 1.0, %v640
    %v642 = vrcp.pop %v581
    %v643 = vmul.f32 1.0, %v642
    %v644 = vrcp.pop %v582
    %v645 = vmul.f32 1.0, %v644
    %v646 = vrcp.pop %v583
    %v647 = vmul.f32 1.0, %v646
    %v648 = vmul.f32 %v330, %v585
    %v649 = vmul.f32 %v333, %v587
    %v650 = vmul.f32 %v338, %v589
    %v651 = vmul.f32 %v341, %v591
    %v652 = vmul.f32 %v346, %v593
    %v653 = vmul.f32 %v349, %v595
    %v654 = vmul.f32 %v354, %v597
    %v655 = vmul.f32 %v357, %v599
    %v656 = vmul.f32 %v362, %v601
    %v657 = vmul.f32 %v365, %v603
    %v658 = vmul.f32 %v370, %v605
    %v659 = vmul.f32 %v373, %v607
    %v660 = vmul.f32 %v378, %v609
    %v661 = vmul.f32 %v381, %v611
    %v662 = vmul.f32 %v386, %v613
    %v663 = vmul.f32 %v389, %v615
    %v664 = vmul.f32 %v394, %v617
    %v665 = vmul.f32 %v397, %v619
    %v666 = vmul.f32 %v402, %v621
    %v667 = vmul.f32 %v405, %v623
    %v668 = vmul.f32 %v410, %v625
    %v669 = vmul.f32 %v413, %v627
    %v670 = vmul.f32 %v418, %v629
    %v671 = vmul.f32 %v421, %v631
    %v672 = vmul.f32 %v426, %v633
    %v673 = vmul.f32 %v429, %v635
    %v674 = vmul.f32 %v434, %v637
    %v675 = vmul.f32 %v437, %v639
    %v676 = vmul.f32 %v442, %v641
    %v677 = vmul.f32 %v445, %v643
    %v678 = vmul.f32 %v450, %v645
    %v679 = vmul.f32 %v453, %v647
    %v680 = vld [vmem:[%s5] sm:$0x1]
    %v681 = vld [vmem:[%s6] sm:$0x1]
    %682 = vadd.xlane.f32.xlu0 %v648
    %v683 = vpop.xlane.xlu0 %682
    %684 = vadd.xlane.f32.xlu0 %v649
    %v685 = vpop.xlane.xlu0 %684
    %686 = vadd.xlane.f32.xlu0 %v650
    %v687 = vpop.xlane.xlu0 %686
    %688 = vadd.xlane.f32.xlu0 %v651
    %v689 = vpop.xlane.xlu0 %688
    %690 = vadd.xlane.f32.xlu0 %v652
    %v691 = vpop.xlane.xlu0 %690
    %692 = vadd.xlane.f32.xlu0 %v653
    %v693 = vpop.xlane.xlu0 %692
    %694 = vadd.xlane.f32.xlu0 %v654
    %v695 = vpop.xlane.xlu0 %694
    %696 = vadd.xlane.f32.xlu0 %v655
    %v697 = vpop.xlane.xlu0 %696
    %698 = vadd.xlane.f32.xlu0 %v656
    %v699 = vpop.xlane.xlu0 %698
    %700 = vadd.xlane.f32.xlu0 %v657
    %v701 = vpop.xlane.xlu0 %700
    %702 = vadd.xlane.f32.xlu0 %v658
    %v703 = vpop.xlane.xlu0 %702
    %704 = vadd.xlane.f32.xlu0 %v659
    %v705 = vpop.xlane.xlu0 %704
    %706 = vadd.xlane.f32.xlu0 %v660
    %v707 = vpop.xlane.xlu0 %706
    %708 = vadd.xlane.f32.xlu0 %v661
    %v709 = vpop.xlane.xlu0 %708
    %710 = vadd.xlane.f32.xlu0 %v662
    %v711 = vpop.xlane.xlu0 %710
    %712 = vadd.xlane.f32.xlu0 %v663
    %v713 = vpop.xlane.xlu0 %712
    %714 = vadd.xlane.f32.xlu0 %v664
    %v715 = vpop.xlane.xlu0 %714
    %716 = vadd.xlane.f32.xlu0 %v665
    %v717 = vpop.xlane.xlu0 %716
    %718 = vadd.xlane.f32.xlu0 %v666
    %v719 = vpop.xlane.xlu0 %718
    %720 = vadd.xlane.f32.xlu0 %v667
    %v721 = vpop.xlane.xlu0 %720
    %722 = vadd.xlane.f32.xlu0 %v668
    %v723 = vpop.xlane.xlu0 %722
    %724 = vadd.xlane.f32.xlu0 %v669
    %v725 = vpop.xlane.xlu0 %724
    %726 = vadd.xlane.f32.xlu0 %v670
    %v727 = vpop.xlane.xlu0 %726
    %728 = vadd.xlane.f32.xlu0 %v671
    %v729 = vpop.xlane.xlu0 %728
    %730 = vadd.xlane.f32.xlu0 %v672
    %v731 = vpop.xlane.xlu0 %730
    %732 = vadd.xlane.f32.xlu0 %v673
    %v733 = vpop.xlane.xlu0 %732
    %734 = vadd.xlane.f32.xlu0 %v674
    %v735 = vpop.xlane.xlu0 %734
    %736 = vadd.xlane.f32.xlu0 %v675
    %v737 = vpop.xlane.xlu0 %736
    %738 = vadd.xlane.f32.xlu0 %v676
    %v739 = vpop.xlane.xlu0 %738
    %740 = vadd.xlane.f32.xlu0 %v677
    %v741 = vpop.xlane.xlu0 %740
    %742 = vadd.xlane.f32.xlu0 %v678
    %v743 = vpop.xlane.xlu0 %742
    %744 = vadd.xlane.f32.xlu0 %v679
    %v745 = vpop.xlane.xlu0 %744
    %v746 = vmul.f32 %v683, 0.03125
    %v747 = vmul.f32 %v685, 0.03125
    %v748 = vmul.f32 %v687, 0.03125
    %v749 = vmul.f32 %v689, 0.03125
    %v750 = vmul.f32 %v691, 0.03125
    %v751 = vmul.f32 %v693, 0.03125
    %v752 = vmul.f32 %v695, 0.03125
    %v753 = vmul.f32 %v697, 0.03125
    %v754 = vmul.f32 %v699, 0.03125
    %v755 = vmul.f32 %v701, 0.03125
    %v756 = vmul.f32 %v703, 0.03125
    %v757 = vmul.f32 %v705, 0.03125
    %v758 = vmul.f32 %v707, 0.03125
    %v759 = vmul.f32 %v709, 0.03125
    %v760 = vmul.f32 %v711, 0.03125
    %v761 = vmul.f32 %v713, 0.03125
    %v762 = vmul.f32 %v715, 0.03125
    %v763 = vmul.f32 %v717, 0.03125
    %v764 = vmul.f32 %v719, 0.03125
    %v765 = vmul.f32 %v721, 0.03125
    %v766 = vmul.f32 %v723, 0.03125
    %v767 = vmul.f32 %v725, 0.03125
    %v768 = vmul.f32 %v727, 0.03125
    %v769 = vmul.f32 %v729, 0.03125
    %v770 = vmul.f32 %v731, 0.03125
    %v771 = vmul.f32 %v733, 0.03125
    %v772 = vmul.f32 %v735, 0.03125
    %v773 = vmul.f32 %v737, 0.03125
    %v774 = vmul.f32 %v739, 0.03125
    %v775 = vmul.f32 %v741, 0.03125
    %v776 = vmul.f32 %v743, 0.03125
    %v777 = vmul.f32 %v745, 0.03125
    %v778 = vmul.f32 %v648, %v648
    %v779 = vmul.f32 %v649, %v649
    %v780 = vmul.f32 %v650, %v650
    %v781 = vmul.f32 %v651, %v651
    %v782 = vmul.f32 %v652, %v652
    %v783 = vmul.f32 %v653, %v653
    %v784 = vmul.f32 %v654, %v654
    %v785 = vmul.f32 %v655, %v655
    %v786 = vmul.f32 %v656, %v656
    %v787 = vmul.f32 %v657, %v657
    %v788 = vmul.f32 %v658, %v658
    %v789 = vmul.f32 %v659, %v659
    %v790 = vmul.f32 %v660, %v660
    %v791 = vmul.f32 %v661, %v661
    %v792 = vmul.f32 %v662, %v662
    %v793 = vmul.f32 %v663, %v663
    %v794 = vmul.f32 %v664, %v664
    %v795 = vmul.f32 %v665, %v665
    %v796 = vmul.f32 %v666, %v666
    %v797 = vmul.f32 %v667, %v667
    %v798 = vmul.f32 %v668, %v668
    %v799 = vmul.f32 %v669, %v669
    %v800 = vmul.f32 %v670, %v670
    %v801 = vmul.f32 %v671, %v671
    %v802 = vmul.f32 %v672, %v672
    %v803 = vmul.f32 %v673, %v673
    %v804 = vmul.f32 %v674, %v674
    %v805 = vmul.f32 %v675, %v675
    %v806 = vmul.f32 %v676, %v676
    %v807 = vmul.f32 %v677, %v677
    %v808 = vmul.f32 %v678, %v678
    %v809 = vmul.f32 %v679, %v679
    %810 = vadd.xlane.f32.xlu0 %v778
    %v811 = vpop.xlane.xlu0 %810
    %812 = vadd.xlane.f32.xlu0 %v779
    %v813 = vpop.xlane.xlu0 %812
    %814 = vadd.xlane.f32.xlu0 %v780
    %v815 = vpop.xlane.xlu0 %814
    %816 = vadd.xlane.f32.xlu0 %v781
    %v817 = vpop.xlane.xlu0 %816
    %818 = vadd.xlane.f32.xlu0 %v782
    %v819 = vpop.xlane.xlu0 %818
    %820 = vadd.xlane.f32.xlu0 %v783
    %v821 = vpop.xlane.xlu0 %820
    %822 = vadd.xlane.f32.xlu0 %v784
    %v823 = vpop.xlane.xlu0 %822
    %824 = vadd.xlane.f32.xlu0 %v785
    %v825 = vpop.xlane.xlu0 %824
    %826 = vadd.xlane.f32.xlu0 %v786
    %v827 = vpop.xlane.xlu0 %826
    %828 = vadd.xlane.f32.xlu0 %v787
    %v829 = vpop.xlane.xlu0 %828
    %830 = vadd.xlane.f32.xlu0 %v788
    %v831 = vpop.xlane.xlu0 %830
    %832 = vadd.xlane.f32.xlu0 %v789
    %v833 = vpop.xlane.xlu0 %832
    %834 = vadd.xlane.f32.xlu0 %v790
    %v835 = vpop.xlane.xlu0 %834
    %836 = vadd.xlane.f32.xlu0 %v791
    %v837 = vpop.xlane.xlu0 %836
    %838 = vadd.xlane.f32.xlu0 %v792
    %v839 = vpop.xlane.xlu0 %838
    %840 = vadd.xlane.f32.xlu0 %v793
    %v841 = vpop.xlane.xlu0 %840
    %842 = vadd.xlane.f32.xlu0 %v794
    %v843 = vpop.xlane.xlu0 %842
    %844 = vadd.xlane.f32.xlu0 %v795
    %v845 = vpop.xlane.xlu0 %844
    %846 = vadd.xlane.f32.xlu0 %v796
    %v847 = vpop.xlane.xlu0 %846
    %848 = vadd.xlane.f32.xlu0 %v797
    %v849 = vpop.xlane.xlu0 %848
    %850 = vadd.xlane.f32.xlu0 %v798
    %v851 = vpop.xlane.xlu0 %850
    %852 = vadd.xlane.f32.xlu0 %v799
    %v853 = vpop.xlane.xlu0 %852
    %854 = vadd.xlane.f32.xlu0 %v800
    %v855 = vpop.xlane.xlu0 %854
    %856 = vadd.xlane.f32.xlu0 %v801
    %v857 = vpop.xlane.xlu0 %856
    %858 = vadd.xlane.f32.xlu0 %v802
    %v859 = vpop.xlane.xlu0 %858
    %860 = vadd.xlane.f32.xlu0 %v803
    %v861 = vpop.xlane.xlu0 %860
    %862 = vadd.xlane.f32.xlu0 %v804
    %v863 = vpop.xlane.xlu0 %862
    %864 = vadd.xlane.f32.xlu0 %v805
    %v865 = vpop.xlane.xlu0 %864
    %866 = vadd.xlane.f32.xlu0 %v806
    %v867 = vpop.xlane.xlu0 %866
    %868 = vadd.xlane.f32.xlu0 %v807
    %v869 = vpop.xlane.xlu0 %868
    %870 = vadd.xlane.f32.xlu0 %v808
    %v871 = vpop.xlane.xlu0 %870
    %872 = vadd.xlane.f32.xlu0 %v809
    %v873 = vpop.xlane.xlu0 %872
    %v874 = vmul.f32 %v811, 0.03125
    %v875 = vmul.f32 %v813, 0.03125
    %v876 = vmul.f32 %v815, 0.03125
    %v877 = vmul.f32 %v817, 0.03125
    %v878 = vmul.f32 %v819, 0.03125
    %v879 = vmul.f32 %v821, 0.03125
    %v880 = vmul.f32 %v823, 0.03125
    %v881 = vmul.f32 %v825, 0.03125
    %v882 = vmul.f32 %v827, 0.03125
    %v883 = vmul.f32 %v829, 0.03125
    %v884 = vmul.f32 %v831, 0.03125
    %v885 = vmul.f32 %v833, 0.03125
    %v886 = vmul.f32 %v835, 0.03125
    %v887 = vmul.f32 %v837, 0.03125
    %v888 = vmul.f32 %v839, 0.03125
    %v889 = vmul.f32 %v841, 0.03125
    %v890 = vmul.f32 %v843, 0.03125
    %v891 = vmul.f32 %v845, 0.03125
    %v892 = vmul.f32 %v847, 0.03125
    %v893 = vmul.f32 %v849, 0.03125
    %v894 = vmul.f32 %v851, 0.03125
    %v895 = vmul.f32 %v853, 0.03125
    %v896 = vmul.f32 %v855, 0.03125
    %v897 = vmul.f32 %v857, 0.03125
    %v898 = vmul.f32 %v859, 0.03125
    %v899 = vmul.f32 %v861, 0.03125
    %v900 = vmul.f32 %v863, 0.03125
    %v901 = vmul.f32 %v865, 0.03125
    %v902 = vmul.f32 %v867, 0.03125
    %v903 = vmul.f32 %v869, 0.03125
    %v904 = vmul.f32 %v871, 0.03125
    %v905 = vmul.f32 %v873, 0.03125
    %v906 = vmul.f32 %v746, %v746
    %v907 = vmul.f32 %v747, %v747
    %v908 = vmul.f32 %v748, %v748
    %v909 = vmul.f32 %v749, %v749
    %v910 = vmul.f32 %v750, %v750
    %v911 = vmul.f32 %v751, %v751
    %v912 = vmul.f32 %v752, %v752
    %v913 = vmul.f32 %v753, %v753
    %v914 = vmul.f32 %v754, %v754
    %v915 = vmul.f32 %v755, %v755
    %v916 = vmul.f32 %v756, %v756
    %v917 = vmul.f32 %v757, %v757
    %v918 = vmul.f32 %v758, %v758
    %v919 = vmul.f32 %v759, %v759
    %v920 = vmul.f32 %v760, %v760
    %v921 = vmul.f32 %v761, %v761
    %v922 = vmul.f32 %v762, %v762
    %v923 = vmul.f32 %v763, %v763
    %v924 = vmul.f32 %v764, %v764
    %v925 = vmul.f32 %v765, %v765
    %v926 = vmul.f32 %v766, %v766
    %v927 = vmul.f32 %v767, %v767
    %v928 = vmul.f32 %v768, %v768
    %v929 = vmul.f32 %v769, %v769
    %v930 = vmul.f32 %v770, %v770
    %v931 = vmul.f32 %v771, %v771
    %v932 = vmul.f32 %v772, %v772
    %v933 = vmul.f32 %v773, %v773
    %v934 = vmul.f32 %v774, %v774
    %v935 = vmul.f32 %v775, %v775
    %v936 = vmul.f32 %v776, %v776
    %v937 = vmul.f32 %v777, %v777
    %v938 = vsub.f32 %v874, %v906
    %v939 = vsub.f32 %v875, %v907
    %v940 = vsub.f32 %v876, %v908
    %v941 = vsub.f32 %v877, %v909
    %v942 = vsub.f32 %v878, %v910
    %v943 = vsub.f32 %v879, %v911
    %v944 = vsub.f32 %v880, %v912
    %v945 = vsub.f32 %v881, %v913
    %v946 = vsub.f32 %v882, %v914
    %v947 = vsub.f32 %v883, %v915
    %v948 = vsub.f32 %v884, %v916
    %v949 = vsub.f32 %v885, %v917
    %v950 = vsub.f32 %v886, %v918
    %v951 = vsub.f32 %v887, %v919
    %v952 = vsub.f32 %v888, %v920
    %v953 = vsub.f32 %v889, %v921
    %v954 = vsub.f32 %v890, %v922
    %v955 = vsub.f32 %v891, %v923
    %v956 = vsub.f32 %v892, %v924
    %v957 = vsub.f32 %v893, %v925
    %v958 = vsub.f32 %v894, %v926
    %v959 = vsub.f32 %v895, %v927
    %v960 = vsub.f32 %v896, %v928
    %v961 = vsub.f32 %v897, %v929
    %v962 = vsub.f32 %v898, %v930
    %v963 = vsub.f32 %v899, %v931
    %v964 = vsub.f32 %v900, %v932
    %v965 = vsub.f32 %v901, %v933
    %v966 = vsub.f32 %v902, %v934
    %v967 = vsub.f32 %v903, %v935
    %v968 = vsub.f32 %v904, %v936
    %v969 = vsub.f32 %v905, %v937
    %v970 = vsub.f32 %v648, %v746
    %v971 = vsub.f32 %v649, %v747
    %v972 = vsub.f32 %v650, %v748
    %v973 = vsub.f32 %v651, %v749
    %v974 = vsub.f32 %v652, %v750
    %v975 = vsub.f32 %v653, %v751
    %v976 = vsub.f32 %v654, %v752
    %v977 = vsub.f32 %v655, %v753
    %v978 = vsub.f32 %v656, %v754
    %v979 = vsub.f32 %v657, %v755
    %v980 = vsub.f32 %v658, %v756
    %v981 = vsub.f32 %v659, %v757
    %v982 = vsub.f32 %v660, %v758
    %v983 = vsub.f32 %v661, %v759
    %v984 = vsub.f32 %v662, %v760
    %v985 = vsub.f32 %v663, %v761
    %v986 = vsub.f32 %v664, %v762
    %v987 = vsub.f32 %v665, %v763
    %v988 = vsub.f32 %v666, %v764
    %v989 = vsub.f32 %v667, %v765
    %v990 = vsub.f32 %v668, %v766
    %v991 = vsub.f32 %v669, %v767
    %v992 = vsub.f32 %v670, %v768
    %v993 = vsub.f32 %v671, %v769
    %v994 = vsub.f32 %v672, %v770
    %v995 = vsub.f32 %v673, %v771
    %v996 = vsub.f32 %v674, %v772
    %v997 = vsub.f32 %v675, %v773
    %v998 = vsub.f32 %v676, %v774
    %v999 = vsub.f32 %v677, %v775
    %v1000 = vsub.f32 %v678, %v776
    %v1001 = vsub.f32 %v679, %v777
    %v1002 = vadd.f32 %v938, 1e-05
    %v1003 = vadd.f32 %v939, 1e-05
    %v1004 = vadd.f32 %v940, 1e-05
    %v1005 = vadd.f32 %v941, 1e-05
    %v1006 = vadd.f32 %v942, 1e-05
    %v1007 = vadd.f32 %v943, 1e-05
    %v1008 = vadd.f32 %v944, 1e-05
    %v1009 = vadd.f32 %v945, 1e-05
    %v1010 = vadd.f32 %v946, 1e-05
    %v1011 = vadd.f32 %v947, 1e-05
    %v1012 = vadd.f32 %v948, 1e-05
    %v1013 = vadd.f32 %v949, 1e-05
    %v1014 = vadd.f32 %v950, 1e-05
    %v1015 = vadd.f32 %v951, 1e-05
    %v1016 = vadd.f32 %v952, 1e-05
    %v1017 = vadd.f32 %v953, 1e-05
    %v1018 = vadd.f32 %v954, 1e-05
    %v1019 = vadd.f32 %v955, 1e-05
    %v1020 = vadd.f32 %v956, 1e-05
    %v1021 = vadd.f32 %v957, 1e-05
    %v1022 = vadd.f32 %v958, 1e-05
    %v1023 = vadd.f32 %v959, 1e-05
    %v1024 = vadd.f32 %v960, 1e-05
    %v1025 = vadd.f32 %v961, 1e-05
    %v1026 = vadd.f32 %v962, 1e-05
    %v1027 = vadd.f32 %v963, 1e-05
    %v1028 = vadd.f32 %v964, 1e-05
    %v1029 = vadd.f32 %v965, 1e-05
    %v1030 = vadd.f32 %v966, 1e-05
    %v1031 = vadd.f32 %v967, 1e-05
    %v1032 = vadd.f32 %v968, 1e-05
    %v1033 = vadd.f32 %v969, 1e-05
    %v1034 = vrsqrt.pop %v1002
    %v1035 = vrsqrt.pop %v1003
    %v1036 = vrsqrt.pop %v1004
    %v1037 = vrsqrt.pop %v1005
    %v1038 = vrsqrt.pop %v1006
    %v1039 = vrsqrt.pop %v1007
    %v1040 = vrsqrt.pop %v1008
    %v1041 = vrsqrt.pop %v1009
    %v1042 = vrsqrt.pop %v1010
    %v1043 = vrsqrt.pop %v1011
    %v1044 = vrsqrt.pop %v1012
    %v1045 = vrsqrt.pop %v1013
    %v1046 = vrsqrt.pop %v1014
    %v1047 = vrsqrt.pop %v1015
    %v1048 = vrsqrt.pop %v1016
    %v1049 = vrsqrt.pop %v1017
    %v1050 = vrsqrt.pop %v1018
    %v1051 = vrsqrt.pop %v1019
    %v1052 = vrsqrt.pop %v1020
    %v1053 = vrsqrt.pop %v1021
    %v1054 = vrsqrt.pop %v1022
    %v1055 = vrsqrt.pop %v1023
    %v1056 = vrsqrt.pop %v1024
    %v1057 = vrsqrt.pop %v1025
    %v1058 = vrsqrt.pop %v1026
    %v1059 = vrsqrt.pop %v1027
    %v1060 = vrsqrt.pop %v1028
    %v1061 = vrsqrt.pop %v1029
    %v1062 = vrsqrt.pop %v1030
    %v1063 = vrsqrt.pop %v1031
    %v1064 = vrsqrt.pop %v1032
    %v1065 = vrsqrt.pop %v1033
    %v1066 = vmul.f32 %v970, %v1034
    %v1067 = vmul.f32 %v971, %v1035
    %v1068 = vmul.f32 %v972, %v1036
    %v1069 = vmul.f32 %v973, %v1037
    %v1070 = vmul.f32 %v974, %v1038
    %v1071 = vmul.f32 %v975, %v1039
    %v1072 = vmul.f32 %v976, %v1040
    %v1073 = vmul.f32 %v977, %v1041
    %v1074 = vmul.f32 %v978, %v1042
    %v1075 = vmul.f32 %v979, %v1043
    %v1076 = vmul.f32 %v980, %v1044
    %v1077 = vmul.f32 %v981, %v1045
    %v1078 = vmul.f32 %v982, %v1046
    %v1079 = vmul.f32 %v983, %v1047
    %v1080 = vmul.f32 %v984, %v1048
    %v1081 = vmul.f32 %v985, %v1049
    %v1082 = vmul.f32 %v986, %v1050
    %v1083 = vmul.f32 %v987, %v1051
    %v1084 = vmul.f32 %v988, %v1052
    %v1085 = vmul.f32 %v989, %v1053
    %v1086 = vmul.f32 %v990, %v1054
    %v1087 = vmul.f32 %v991, %v1055
    %v1088 = vmul.f32 %v992, %v1056
    %v1089 = vmul.f32 %v993, %v1057
    %v1090 = vmul.f32 %v994, %v1058
    %v1091 = vmul.f32 %v995, %v1059
    %v1092 = vmul.f32 %v996, %v1060
    %v1093 = vmul.f32 %v997, %v1061
    %v1094 = vmul.f32 %v998, %v1062
    %v1095 = vmul.f32 %v999, %v1063
    %v1096 = vmul.f32 %v1000, %v1064
    %v1097 = vmul.f32 %v1001, %v1065
    %v1099 = vlaneseq
    %v1100 = vshrl.u32 %v1099, 7
    %v1101 = vsub.s32 0, %v1100
    %v1102 = vrot.slane %v680, %v1101
    %v1104 = vmul.f32 %v1066, %v1102
    %v1105 = vmul.f32 %v1067, %v1102
    %v1106 = vmul.f32 %v1068, %v1102
    %v1107 = vmul.f32 %v1069, %v1102
    %v1108 = vmul.f32 %v1070, %v1102
    %v1109 = vmul.f32 %v1071, %v1102
    %v1110 = vmul.f32 %v1072, %v1102
    %v1111 = vmul.f32 %v1073, %v1102
    %v1112 = vmul.f32 %v1074, %v1102
    %v1113 = vmul.f32 %v1075, %v1102
    %v1114 = vmul.f32 %v1076, %v1102
    %v1115 = vmul.f32 %v1077, %v1102
    %v1116 = vmul.f32 %v1078, %v1102
    %v1117 = vmul.f32 %v1079, %v1102
    %v1118 = vmul.f32 %v1080, %v1102
    %v1119 = vmul.f32 %v1081, %v1102
    %v1120 = vmul.f32 %v1082, %v1102
    %v1121 = vmul.f32 %v1083, %v1102
    %v1122 = vmul.f32 %v1084, %v1102
    %v1123 = vmul.f32 %v1085, %v1102
    %v1124 = vmul.f32 %v1086, %v1102
    %v1125 = vmul.f32 %v1087, %v1102
    %v1126 = vmul.f32 %v1088, %v1102
    %v1127 = vmul.f32 %v1089, %v1102
    %v1128 = vmul.f32 %v1090, %v1102
    %v1129 = vmul.f32 %v1091, %v1102
    %v1130 = vmul.f32 %v1092, %v1102
    %v1131 = vmul.f32 %v1093, %v1102
    %v1132 = vmul.f32 %v1094, %v1102
    %v1133 = vmul.f32 %v1095, %v1102
    %v1134 = vmul.f32 %v1096, %v1102
    %v1135 = vmul.f32 %v1097, %v1102
    %v1137 = vlaneseq
    %v1138 = vshrl.u32 %v1137, 7
    %v1139 = vsub.s32 0, %v1138
    %v1140 = vrot.slane %v681, %v1139
    %v1142 = vadd.f32 %v1104, %v1140
    %v1143 = vadd.f32 %v1105, %v1140
    %v1144 = vadd.f32 %v1106, %v1140
    %v1145 = vadd.f32 %v1107, %v1140
    %v1146 = vadd.f32 %v1108, %v1140
    %v1147 = vadd.f32 %v1109, %v1140
    %v1148 = vadd.f32 %v1110, %v1140
    %v1149 = vadd.f32 %v1111, %v1140
    %v1150 = vadd.f32 %v1112, %v1140
    %v1151 = vadd.f32 %v1113, %v1140
    %v1152 = vadd.f32 %v1114, %v1140
    %v1153 = vadd.f32 %v1115, %v1140
    %v1154 = vadd.f32 %v1116, %v1140
    %v1155 = vadd.f32 %v1117, %v1140
    %v1156 = vadd.f32 %v1118, %v1140
    %v1157 = vadd.f32 %v1119, %v1140
    %v1158 = vadd.f32 %v1120, %v1140
    %v1159 = vadd.f32 %v1121, %v1140
    %v1160 = vadd.f32 %v1122, %v1140
    %v1161 = vadd.f32 %v1123, %v1140
    %v1162 = vadd.f32 %v1124, %v1140
    %v1163 = vadd.f32 %v1125, %v1140
    %v1164 = vadd.f32 %v1126, %v1140
    %v1165 = vadd.f32 %v1127, %v1140
    %v1166 = vadd.f32 %v1128, %v1140
    %v1167 = vadd.f32 %v1129, %v1140
    %v1168 = vadd.f32 %v1130, %v1140
    %v1169 = vadd.f32 %v1131, %v1140
    %v1170 = vadd.f32 %v1132, %v1140
    %v1171 = vadd.f32 %v1133, %v1140
    %v1172 = vadd.f32 %v1134, %v1140
    %v1173 = vadd.f32 %v1135, %v1140
    %v1174 = vld [vmem:[#allocation6] sm:$0xff]
    %v1175 = vld [vmem:[#allocation6 + $0x8] sm:$0xf]
    %v1176 = vld [vmem:[#allocation6 + $0xc] sm:$0xff]
    %v1177 = vld [vmem:[#allocation6 + $0x14] sm:$0xf]
    %v1178 = vld [vmem:[#allocation6 + $0x18] sm:$0xff]
    %v1179 = vld [vmem:[#allocation6 + $0x20] sm:$0xf]
    %v1180 = vld [vmem:[#allocation6 + $0x24] sm:$0xff]
    %v1181 = vld [vmem:[#allocation6 + $0x2c] sm:$0xf]
    %v1182 = vld [vmem:[#allocation6 + $0x30] sm:$0xff]
    %v1183 = vld [vmem:[#allocation6 + $0x38] sm:$0xf]
    %v1184 = vld [vmem:[#allocation6 + $0x3c] sm:$0xff]
    %v1185 = vld [vmem:[#allocation6 + $0x44] sm:$0xf]
    %v1186 = vld [vmem:[#allocation6 + $0x48] sm:$0xff]
    %v1187 = vld [vmem:[#allocation6 + $0x50] sm:$0xf]
    %v1188 = vld [vmem:[#allocation6 + $0x54] sm:$0xff]
    %v1189 = vld [vmem:[#allocation6 + $0x5c] sm:$0xf]
    %v1190 = vld [vmem:[#allocation6 + $0x60] sm:$0xff]
    %v1191 = vld [vmem:[#allocation6 + $0x68] sm:$0xf]
    %v1192 = vld [vmem:[#allocation6 + $0x6c] sm:$0xff]
    %v1193 = vld [vmem:[#allocation6 + $0x74] sm:$0xf]
    %v1194 = vld [vmem:[#allocation6 + $0x78] sm:$0xff]
    %v1195 = vld [vmem:[#allocation6 + $0x80] sm:$0xf]
    %v1196 = vld [vmem:[#allocation6 + $0x84] sm:$0xff]
    %v1197 = vld [vmem:[#allocation6 + $0x8c] sm:$0xf]
    %v1198 = vld [vmem:[#allocation6 + $0x90] sm:$0xff]
    %v1199 = vld [vmem:[#allocation6 + $0x98] sm:$0xf]
    %v1200 = vld [vmem:[#allocation6 + $0x9c] sm:$0xff]
    %v1201 = vld [vmem:[#allocation6 + $0xa4] sm:$0xf]
    %v1202 = vld [vmem:[#allocation6 + $0xa8] sm:$0xff]
    %v1203 = vld [vmem:[#allocation6 + $0xb0] sm:$0xf]
    %v1204 = vld [vmem:[#allocation6 + $0xb4] sm:$0xff]
    %v1205 = vld [vmem:[#allocation6 + $0xbc] sm:$0xf]
    %v1238 = vunpack.c.l.b16 %v1174
    %v1239 = vunpack.c.h.b16 %v1174
    %v1240 = vunpack.c.l.b16 %v1175
    %v1241 = vunpack.c.l.b16 %v1176
    %v1242 = vunpack.c.h.b16 %v1176
    %v1243 = vunpack.c.l.b16 %v1177
    %v1244 = vunpack.c.l.b16 %v1178
    %v1245 = vunpack.c.h.b16 %v1178
    %v1246 = vunpack.c.l.b16 %v1179
    %v1247 = vunpack.c.l.b16 %v1180
    %v1248 = vunpack.c.h.b16 %v1180
    %v1249 = vunpack.c.l.b16 %v1181
    %v1250 = vunpack.c.l.b16 %v1182
    %v1251 = vunpack.c.h.b16 %v1182
    %v1252 = vunpack.c.l.b16 %v1183
    %v1253 = vunpack.c.l.b16 %v1184
    %v1254 = vunpack.c.h.b16 %v1184
    %v1255 = vunpack.c.l.b16 %v1185
    %v1256 = vunpack.c.l.b16 %v1186
    %v1257 = vunpack.c.h.b16 %v1186
    %v1258 = vunpack.c.l.b16 %v1187
    %v1259 = vunpack.c.l.b16 %v1188
    %v1260 = vunpack.c.h.b16 %v1188
    %v1261 = vunpack.c.l.b16 %v1189
    %v1262 = vunpack.c.l.b16 %v1190
    %v1263 = vunpack.c.h.b16 %v1190
    %v1264 = vunpack.c.l.b16 %v1191
    %v1265 = vunpack.c.l.b16 %v1192
    %v1266 = vunpack.c.h.b16 %v1192
    %v1267 = vunpack.c.l.b16 %v1193
    %v1268 = vunpack.c.l.b16 %v1194
    %v1269 = vunpack.c.h.b16 %v1194
    %v1270 = vunpack.c.l.b16 %v1195
    %v1271 = vunpack.c.l.b16 %v1196
    %v1272 = vunpack.c.h.b16 %v1196
    %v1273 = vunpack.c.l.b16 %v1197
    %v1274 = vunpack.c.l.b16 %v1198
    %v1275 = vunpack.c.h.b16 %v1198
    %v1276 = vunpack.c.l.b16 %v1199
    %v1277 = vunpack.c.l.b16 %v1200
    %v1278 = vunpack.c.h.b16 %v1200
    %v1279 = vunpack.c.l.b16 %v1201
    %v1280 = vunpack.c.l.b16 %v1202
    %v1281 = vunpack.c.h.b16 %v1202
    %v1282 = vunpack.c.l.b16 %v1203
    %v1283 = vunpack.c.l.b16 %v1204
    %v1284 = vunpack.c.h.b16 %v1204
    %v1285 = vunpack.c.l.b16 %v1205
    %v1286 = vpack.c.b16 %v1241, %v1238
    %v1287 = vpack.c.b16 %v1242, %v1239
    %v1288 = vpack.c.b16 %v1243, %v1240
    %v1289 = vpack.c.b16 %v1247, %v1244
    %v1290 = vpack.c.b16 %v1248, %v1245
    %v1291 = vpack.c.b16 %v1249, %v1246
    %v1292 = vpack.c.b16 %v1253, %v1250
    %v1293 = vpack.c.b16 %v1254, %v1251
    %v1294 = vpack.c.b16 %v1255, %v1252
    %v1295 = vpack.c.b16 %v1259, %v1256
    %v1296 = vpack.c.b16 %v1260, %v1257
    %v1297 = vpack.c.b16 %v1261, %v1258
    %v1298 = vpack.c.b16 %v1265, %v1262
    %v1299 = vpack.c.b16 %v1266, %v1263
    %v1300 = vpack.c.b16 %v1267, %v1264
    %v1301 = vpack.c.b16 %v1271, %v1268
    %v1302 = vpack.c.b16 %v1272, %v1269
    %v1303 = vpack.c.b16 %v1273, %v1270
    %v1304 = vpack.c.b16 %v1277, %v1274
    %v1305 = vpack.c.b16 %v1278, %v1275
    %v1306 = vpack.c.b16 %v1279, %v1276
    %v1307 = vpack.c.b16 %v1283, %v1280
    %v1308 = vpack.c.b16 %v1284, %v1281
    %v1309 = vpack.c.b16 %v1285, %v1282
    %1334 = vmatprep.subr.bf16.mxu0 %v1287
    %1335 = vmatpush1.bf16.msra.mxu0 %v1286
    %1336 = vmatprep.subr.bf16.mxu0 %v1290
    %1337 = vmatpush1.bf16.msra.mxu0 %v1289
    %1338 = vmatprep.subr.bf16.mxu0 %v1293
    %1339 = vmatpush1.bf16.msra.mxu0 %v1292
    %1340 = vmatprep.subr.bf16.mxu0 %v1296
    %1341 = vmatpush1.bf16.msra.mxu0 %v1295
    %1342 = vmatprep.subr.bf16.mxu0 %v1299
    %1343 = vmatpush1.bf16.msra.mxu0 %v1298
    %1344 = vmatprep.subr.bf16.mxu0 %v1302
    %1345 = vmatpush1.bf16.msra.mxu0 %v1301
    %1346 = vmatprep.subr.bf16.mxu0 %v1305
    %1347 = vmatpush1.bf16.msra.mxu0 %v1304
    %1348 = vmatprep.subr.bf16.mxu0 %v1308
    %1349 = vmatpush1.bf16.msra.mxu0 %v1307
    %1350 = vmatprep.subr.bf16.mxu0 0
    %1351 = vmatpush1.bf16.msra.mxu0 0
    %1352 = vmatprep.subr.bf16.mxu0 0
    %1353 = vmatpush1.bf16.msra.mxu0 0
    %1354 = vmatprep.subr.bf16.mxu0 0
    %1355 = vmatpush1.bf16.msra.mxu0 0
    %1356 = vmatprep.subr.bf16.mxu0 0
    %1357 = vmatpush1.bf16.msra.mxu0 0
    %1358 = vmatprep.subr.bf16.mxu0 0
    %1359 = vmatpush1.bf16.msra.mxu0 0
    %1360 = vmatprep.subr.bf16.mxu0 0
    %1361 = vmatpush1.bf16.msra.mxu0 0
    %1362 = vmatprep.subr.bf16.mxu0 0
    %1363 = vmatpush1.bf16.msra.mxu0 0
    %1364 = vmatprep.subr.bf16.mxu0 0
    %1365 = vmatpush1.bf16.msra.mxu0 0
    %1366 = vmatprep.mubr.bf16.mxu0 0
    %1367 = vmatmul.mubr.bf16.gmra.mrb[0].mxu0 %v215
    %v1368 = vpop.f32.mrb[0].mxu0
    %v1369 = vadd.f32 0.0, %v1368
    %v1370 = vpop.f32.mrb[0].mxu0
    %v1371 = vadd.f32 0.0, %v1370
    %v1372 = vpop.f32.mrb[0].mxu0
    %v1373 = vadd.f32 0.0, %v1372
    %v1374 = vpop.f32.mrb[0].mxu0
    %v1375 = vadd.f32 0.0, %v1374
    %1376 = vmatprep.mubr.bf16.mxu0 0
    %1377 = vmatmul.mubr.bf16.gmra.mrb[0].mxu0 %v216
    %v1378 = vpop.f32.mrb[0].mxu0
    %v1379 = vadd.f32 0.0, %v1378
    %v1380 = vpop.f32.mrb[0].mxu0
    %v1381 = vadd.f32 0.0, %v1380
    %v1382 = vpop.f32.mrb[0].mxu0
    %v1383 = vadd.f32 0.0, %v1382
    %v1384 = vpop.f32.mrb[0].mxu0
    %v1385 = vadd.f32 0.0, %v1384
    %1386 = vmatprep.mubr.bf16.mxu0 0
    %1387 = vmatmul.mubr.bf16.gmra.mrb[0].mxu0 %v217
    %v1388 = vpop.f32.mrb[0].mxu0
    %v1389 = vadd.f32 0.0, %v1388
    %v1390 = vpop.f32.mrb[0].mxu0
    %v1391 = vadd.f32 0.0, %v1390
    %v1392 = vpop.f32.mrb[0].mxu0
    %v1393 = vadd.f32 0.0, %v1392
    %v1394 = vpop.f32.mrb[0].mxu0
    %v1395 = vadd.f32 0.0, %v1394
    %1396 = vmatprep.mubr.bf16.mxu0 0
    %1397 = vmatmul.mubr.bf16.gmra.mrb[0].mxu0 %v218
    %v1398 = vpop.f32.mrb[0].mxu0
    %v1399 = vadd.f32 0.0, %v1398
    %v1400 = vpop.f32.mrb[0].mxu0
    %v1401 = vadd.f32 0.0, %v1400
    %v1402 = vpop.f32.mrb[0].mxu0
    %v1403 = vadd.f32 0.0, %v1402
    %v1404 = vpop.f32.mrb[0].mxu0
    %v1405 = vadd.f32 0.0, %v1404
    %1406 = vmatprep.mubr.bf16.mxu0 0
    %1407 = vmatmul.mubr.bf16.gmra.mrb[0].mxu0 %v219
    %v1408 = vpop.f32.mrb[0].mxu0
    %v1409 = vadd.f32 0.0, %v1408
    %v1410 = vpop.f32.mrb[0].mxu0
    %v1411 = vadd.f32 0.0, %v1410
    %v1412 = vpop.f32.mrb[0].mxu0
    %v1413 = vadd.f32 0.0, %v1412
    %v1414 = vpop.f32.mrb[0].mxu0
    %v1415 = vadd.f32 0.0, %v1414
    %1416 = vmatprep.mubr.bf16.mxu0 0
    %1417 = vmatmul.mubr.bf16.gmra.mrb[0].mxu0 %v220
    %v1418 = vpop.f32.mrb[0].mxu0
    %v1419 = vadd.f32 0.0, %v1418
    %v1420 = vpop.f32.mrb[0].mxu0
    %v1421 = vadd.f32 0.0, %v1420
    %v1422 = vpop.f32.mrb[0].mxu0
    %v1423 = vadd.f32 0.0, %v1422
    %v1424 = vpop.f32.mrb[0].mxu0
    %v1425 = vadd.f32 0.0, %v1424
    %1426 = vmatprep.mubr.bf16.mxu0 0
    %1427 = vmatmul.mubr.bf16.gmra.mrb[0].mxu0 %v221
    %v1428 = vpop.f32.mrb[0].mxu0
    %v1429 = vadd.f32 0.0, %v1428
    %v1430 = vpop.f32.mrb[0].mxu0
    %v1431 = vadd.f32 0.0, %v1430
    %v1432 = vpop.f32.mrb[0].mxu0
    %v1433 = vadd.f32 0.0, %v1432
    %v1434 = vpop.f32.mrb[0].mxu0
    %v1435 = vadd.f32 0.0, %v1434
    %1436 = vmatprep.mubr.bf16.mxu0 0
    %1437 = vmatmul.mubr.bf16.gmra.mrb[0].mxu0 %v222
    %v1438 = vpop.f32.mrb[0].mxu0
    %v1439 = vadd.f32 0.0, %v1438
    %v1440 = vpop.f32.mrb[0].mxu0
    %v1441 = vadd.f32 0.0, %v1440
    %v1442 = vpop.f32.mrb[0].mxu0
    %v1443 = vadd.f32 0.0, %v1442
    %v1444 = vpop.f32.mrb[0].mxu0
    %v1445 = vadd.f32 0.0, %v1444
    %1446 = vmatprep.mubr.bf16.mxu0 0
    %1447 = vmatmul.mubr.bf16.gmra.mrb[0].mxu0 %v223
    %v1448 = vpop.f32.mrb[0].mxu0
    %v1449 = vadd.f32 0.0, %v1448
    %v1450 = vpop.f32.mrb[0].mxu0
    %v1451 = vadd.f32 0.0, %v1450
    %v1452 = vpop.f32.mrb[0].mxu0
    %v1453 = vadd.f32 0.0, %v1452
    %v1454 = vpop.f32.mrb[0].mxu0
    %v1455 = vadd.f32 0.0, %v1454
    %1456 = vmatprep.mubr.bf16.mxu0 0
    %1457 = vmatmul.mubr.bf16.gmra.mrb[0].mxu0 %v224
    %v1458 = vpop.f32.mrb[0].mxu0
    %v1459 = vadd.f32 0.0, %v1458
    %v1460 = vpop.f32.mrb[0].mxu0
    %v1461 = vadd.f32 0.0, %v1460
    %v1462 = vpop.f32.mrb[0].mxu0
    %v1463 = vadd.f32 0.0, %v1462
    %v1464 = vpop.f32.mrb[0].mxu0
    %v1465 = vadd.f32 0.0, %v1464
    %1466 = vmatprep.mubr.bf16.mxu0 0
    %1467 = vmatmul.mubr.bf16.gmra.mrb[0].mxu0 %v225
    %v1468 = vpop.f32.mrb[0].mxu0
    %v1469 = vadd.f32 0.0, %v1468
    %v1470 = vpop.f32.mrb[0].mxu0
    %v1471 = vadd.f32 0.0, %v1470
    %v1472 = vpop.f32.mrb[0].mxu0
    %v1473 = vadd.f32 0.0, %v1472
    %v1474 = vpop.f32.mrb[0].mxu0
    %v1475 = vadd.f32 0.0, %v1474
    %1476 = vmatprep.mubr.bf16.mxu0 0
    %1477 = vmatmul.mubr.bf16.gmra.mrb[0].mxu0 %v226
    %v1478 = vpop.f32.mrb[0].mxu0
    %v1479 = vadd.f32 0.0, %v1478
    %v1480 = vpop.f32.mrb[0].mxu0
    %v1481 = vadd.f32 0.0, %v1480
    %v1482 = vpop.f32.mrb[0].mxu0
    %v1483 = vadd.f32 0.0, %v1482
    %v1484 = vpop.f32.mrb[0].mxu0
    %v1485 = vadd.f32 0.0, %v1484
    %1486 = vmatprep.mubr.bf16.mxu0 0
    %1487 = vmatmul.mubr.bf16.gmra.mrb[0].mxu0 %v227
    %v1488 = vpop.f32.mrb[0].mxu0
    %v1489 = vadd.f32 0.0, %v1488
    %v1490 = vpop.f32.mrb[0].mxu0
    %v1491 = vadd.f32 0.0, %v1490
    %v1492 = vpop.f32.mrb[0].mxu0
    %v1493 = vadd.f32 0.0, %v1492
    %v1494 = vpop.f32.mrb[0].mxu0
    %v1495 = vadd.f32 0.0, %v1494
    %1496 = vmatprep.mubr.bf16.mxu0 0
    %1497 = vmatmul.mubr.bf16.gmra.mrb[0].mxu0 %v228
    %v1498 = vpop.f32.mrb[0].mxu0
    %v1499 = vadd.f32 0.0, %v1498
    %v1500 = vpop.f32.mrb[0].mxu0
    %v1501 = vadd.f32 0.0, %v1500
    %v1502 = vpop.f32.mrb[0].mxu0
    %v1503 = vadd.f32 0.0, %v1502
    %v1504 = vpop.f32.mrb[0].mxu0
    %v1505 = vadd.f32 0.0, %v1504
    %1506 = vmatprep.mubr.bf16.mxu0 0
    %1507 = vmatmul.mubr.bf16.gmra.mrb[0].mxu0 %v229
    %v1508 = vpop.f32.mrb[0].mxu0
    %v1509 = vadd.f32 0.0, %v1508
    %v1510 = vpop.f32.mrb[0].mxu0
    %v1511 = vadd.f32 0.0, %v1510
    %v1512 = vpop.f32.mrb[0].mxu0
    %v1513 = vadd.f32 0.0, %v1512
    %v1514 = vpop.f32.mrb[0].mxu0
    %v1515 = vadd.f32 0.0, %v1514
    %1516 = vmatprep.mubr.bf16.mxu0 0
    %1517 = vmatmul.mubr.bf16.gmra.mrb[0].mxu0 %v230
    %v1518 = vpop.f32.mrb[0].mxu0
    %v1519 = vadd.f32 0.0, %v1518
    %v1520 = vpop.f32.mrb[0].mxu0
    %v1521 = vadd.f32 0.0, %v1520
    %v1522 = vpop.f32.mrb[0].mxu0
    %v1523 = vadd.f32 0.0, %v1522
    %v1524 = vpop.f32.mrb[0].mxu0
    %v1525 = vadd.f32 0.0, %v1524
    %1526 = vdwg.mxu0
    %1527 = vmatprep.subr.bf16.mxu0 0
    %1528 = vmatpush1.bf16.msra.mxu0 %v1288
    %1529 = vmatprep.subr.bf16.mxu0 0
    %1530 = vmatpush1.bf16.msra.mxu0 %v1291
    %1531 = vmatprep.subr.bf16.mxu0 0
    %1532 = vmatpush1.bf16.msra.mxu0 %v1294
    %1533 = vmatprep.subr.bf16.mxu0 0
    %1534 = vmatpush1.bf16.msra.mxu0 %v1297
    %1535 = vmatprep.subr.bf16.mxu0 0
    %1536 = vmatpush1.bf16.msra.mxu0 %v1300
    %1537 = vmatprep.subr.bf16.mxu0 0
    %1538 = vmatpush1.bf16.msra.mxu0 %v1303
    %1539 = vmatprep.subr.bf16.mxu0 0
    %1540 = vmatpush1.bf16.msra.mxu0 %v1306
    %1541 = vmatprep.subr.bf16.mxu0 0
    %1542 = vmatpush1.bf16.msra.mxu0 %v1309
    %1543 = vmatprep.subr.bf16.mxu0 0
    %1544 = vmatpush1.bf16.msra.mxu0 0
    %1545 = vmatprep.subr.bf16.mxu0 0
    %1546 = vmatpush1.bf16.msra.mxu0 0
    %1547 = vmatprep.subr.bf16.mxu0 0
    %1548 = vmatpush1.bf16.msra.mxu0 0
    %1549 = vmatprep.subr.bf16.mxu0 0
    %1550 = vmatpush1.bf16.msra.mxu0 0
    %1551 = vmatprep.subr.bf16.mxu0 0
    %1552 = vmatpush1.bf16.msra.mxu0 0
    %1553 = vmatprep.subr.bf16.mxu0 0
    %1554 = vmatpush1.bf16.msra.mxu0 0
    %1555 = vmatprep.subr.bf16.mxu0 0
    %1556 = vmatpush1.bf16.msra.mxu0 0
    %1557 = vmatprep.subr.bf16.mxu0 0
    %1558 = vmatpush1.bf16.msra.mxu0 0
    %1559 = vmatprep.mubr.bf16.mxu0 0
    %1560 = vmatmul.mubr.bf16.gmra.mrb[0].mxu0 %v215
    %v1561 = vpop.f32.mrb[0].mxu0
    %v1562 = vadd.f32 0.0, %v1561
    %v1563 = vpop.f32.mrb[0].mxu0
    %v1564 = vpop.f32.mrb[0].mxu0
    %v1565 = vadd.f32 0.0, %v1564
    %v1566 = vpop.f32.mrb[0].mxu0
    %1567 = vmatprep.mubr.bf16.mxu0 0
    %1568 = vmatmul.mubr.bf16.gmra.mrb[0].mxu0 %v216
    %v1569 = vpop.f32.mrb[0].mxu0
    %v1570 = vadd.f32 0.0, %v1569
    %v1571 = vpop.f32.mrb[0].mxu0
    %v1572 = vpop.f32.mrb[0].mxu0
    %v1573 = vadd.f32 0.0, %v1572
    %v1574 = vpop.f32.mrb[0].mxu0
    %1575 = vmatprep.mubr.bf16.mxu0 0
    %1576 = vmatmul.mubr.bf16.gmra.mrb[0].mxu0 %v217
    %v1577 = vpop.f32.mrb[0].mxu0
    %v1578 = vadd.f32 0.0, %v1577
    %v1579 = vpop.f32.mrb[0].mxu0
    %v1580 = vpop.f32.mrb[0].mxu0
    %v1581 = vadd.f32 0.0, %v1580
    %v1582 = vpop.f32.mrb[0].mxu0
    %1583 = vmatprep.mubr.bf16.mxu0 0
    %1584 = vmatmul.mubr.bf16.gmra.mrb[0].mxu0 %v218
    %v1585 = vpop.f32.mrb[0].mxu0
    %v1586 = vadd.f32 0.0, %v1585
    %v1587 = vpop.f32.mrb[0].mxu0
    %v1588 = vpop.f32.mrb[0].mxu0
    %v1589 = vadd.f32 0.0, %v1588
    %v1590 = vpop.f32.mrb[0].mxu0
    %1591 = vmatprep.mubr.bf16.mxu0 0
    %1592 = vmatmul.mubr.bf16.gmra.mrb[0].mxu0 %v219
    %v1593 = vpop.f32.mrb[0].mxu0
    %v1594 = vadd.f32 0.0, %v1593
    %v1595 = vpop.f32.mrb[0].mxu0
    %v1596 = vpop.f32.mrb[0].mxu0
    %v1597 = vadd.f32 0.0, %v1596
    %v1598 = vpop.f32.mrb[0].mxu0
    %1599 = vmatprep.mubr.bf16.mxu0 0
    %1600 = vmatmul.mubr.bf16.gmra.mrb[0].mxu0 %v220
    %v1601 = vpop.f32.mrb[0].mxu0
    %v1602 = vadd.f32 0.0, %v1601
    %v1603 = vpop.f32.mrb[0].mxu0
    %v1604 = vpop.f32.mrb[0].mxu0
    %v1605 = vadd.f32 0.0, %v1604
    %v1606 = vpop.f32.mrb[0].mxu0
    %1607 = vmatprep.mubr.bf16.mxu0 0
    %1608 = vmatmul.mubr.bf16.gmra.mrb[0].mxu0 %v221
    %v1609 = vpop.f32.mrb[0].mxu0
    %v1610 = vadd.f32 0.0, %v1609
    %v1611 = vpop.f32.mrb[0].mxu0
    %v1612 = vpop.f32.mrb[0].mxu0
    %v1613 = vadd.f32 0.0, %v1612
    %v1614 = vpop.f32.mrb[0].mxu0
    %1615 = vmatprep.mubr.bf16.mxu0 0
    %1616 = vmatmul.mubr.bf16.gmra.mrb[0].mxu0 %v222
    %v1617 = vpop.f32.mrb[0].mxu0
    %v1618 = vadd.f32 0.0, %v1617
    %v1619 = vpop.f32.mrb[0].mxu0
    %v1620 = vpop.f32.mrb[0].mxu0
    %v1621 = vadd.f32 0.0, %v1620
    %v1622 = vpop.f32.mrb[0].mxu0
    %1623 = vmatprep.mubr.bf16.mxu0 0
    %1624 = vmatmul.mubr.bf16.gmra.mrb[0].mxu0 %v223
    %v1625 = vpop.f32.mrb[0].mxu0
    %v1626 = vadd.f32 0.0, %v1625
    %v1627 = vpop.f32.mrb[0].mxu0
    %v1628 = vpop.f32.mrb[0].mxu0
    %v1629 = vadd.f32 0.0, %v1628
    %v1630 = vpop.f32.mrb[0].mxu0
    %1631 = vmatprep.mubr.bf16.mxu0 0
    %1632 = vmatmul.mubr.bf16.gmra.mrb[0].mxu0 %v224
    %v1633 = vpop.f32.mrb[0].mxu0
    %v1634 = vadd.f32 0.0, %v1633
    %v1635 = vpop.f32.mrb[0].mxu0
    %v1636 = vpop.f32.mrb[0].mxu0
    %v1637 = vadd.f32 0.0, %v1636
    %v1638 = vpop.f32.mrb[0].mxu0
    %1639 = vmatprep.mubr.bf16.mxu0 0
    %1640 = vmatmul.mubr.bf16.gmra.mrb[0].mxu0 %v225
    %v1641 = vpop.f32.mrb[0].mxu0
    %v1642 = vadd.f32 0.0, %v1641
    %v1643 = vpop.f32.mrb[0].mxu0
    %v1644 = vpop.f32.mrb[0].mxu0
    %v1645 = vadd.f32 0.0, %v1644
    %v1646 = vpop.f32.mrb[0].mxu0
    %1647 = vmatprep.mubr.bf16.mxu0 0
    %1648 = vmatmul.mubr.bf16.gmra.mrb[0].mxu0 %v226
    %v1649 = vpop.f32.mrb[0].mxu0
    %v1650 = vadd.f32 0.0, %v1649
    %v1651 = vpop.f32.mrb[0].mxu0
    %v1652 = vpop.f32.mrb[0].mxu0
    %v1653 = vadd.f32 0.0, %v1652
    %v1654 = vpop.f32.mrb[0].mxu0
    %1655 = vmatprep.mubr.bf16.mxu0 0
    %1656 = vmatmul.mubr.bf16.gmra.mrb[0].mxu0 %v227
    %v1657 = vpop.f32.mrb[0].mxu0
    %v1658 = vadd.f32 0.0, %v1657
    %v1659 = vpop.f32.mrb[0].mxu0
    %v1660 = vpop.f32.mrb[0].mxu0
    %v1661 = vadd.f32 0.0, %v1660
    %v1662 = vpop.f32.mrb[0].mxu0
    %1663 = vmatprep.mubr.bf16.mxu0 0
    %1664 = vmatmul.mubr.bf16.gmra.mrb[0].mxu0 %v228
    %v1665 = vpop.f32.mrb[0].mxu0
    %v1666 = vadd.f32 0.0, %v1665
    %v1667 = vpop.f32.mrb[0].mxu0
    %v1668 = vpop.f32.mrb[0].mxu0
    %v1669 = vadd.f32 0.0, %v1668
    %v1670 = vpop.f32.mrb[0].mxu0
    %1671 = vmatprep.mubr.bf16.mxu0 0
    %1672 = vmatmul.mubr.bf16.gmra.mrb[0].mxu0 %v229
    %v1673 = vpop.f32.mrb[0].mxu0
    %v1674 = vadd.f32 0.0, %v1673
    %v1675 = vpop.f32.mrb[0].mxu0
    %v1676 = vpop.f32.mrb[0].mxu0
    %v1677 = vadd.f32 0.0, %v1676
    %v1678 = vpop.f32.mrb[0].mxu0
    %1679 = vmatprep.mubr.bf16.mxu0 0
    %1680 = vmatmul.mubr.bf16.gmra.mrb[0].mxu0 %v230
    %v1681 = vpop.f32.mrb[0].mxu0
    %v1682 = vadd.f32 0.0, %v1681
    %v1683 = vpop.f32.mrb[0].mxu0
    %v1684 = vpop.f32.mrb[0].mxu0
    %v1685 = vadd.f32 0.0, %v1684
    %v1686 = vpop.f32.mrb[0].mxu0
    %1687 = vdwg.mxu0
    %v1688 = vxor.u32 %v1369, 2147483648
    %v1689 = vxor.u32 %v1371, 2147483648
    %v1690 = vxor.u32 %v1562, 2147483648
    %v1691 = vxor.u32 %v1373, 2147483648
    %v1692 = vxor.u32 %v1375, 2147483648
    %v1693 = vxor.u32 %v1565, 2147483648
    %v1694 = vxor.u32 %v1379, 2147483648
    %v1695 = vxor.u32 %v1381, 2147483648
    %v1696 = vxor.u32 %v1570, 2147483648
    %v1697 = vxor.u32 %v1383, 2147483648
    %v1698 = vxor.u32 %v1385, 2147483648
    %v1699 = vxor.u32 %v1573, 2147483648
    %v1700 = vxor.u32 %v1389, 2147483648
    %v1701 = vxor.u32 %v1391, 2147483648
    %v1702 = vxor.u32 %v1578, 2147483648
    %v1703 = vxor.u32 %v1393, 2147483648
    %v1704 = vxor.u32 %v1395, 2147483648
    %v1705 = vxor.u32 %v1581, 2147483648
    %v1706 = vxor.u32 %v1399, 2147483648
    %v1707 = vxor.u32 %v1401, 2147483648
    %v1708 = vxor.u32 %v1586, 2147483648
    %v1709 = vxor.u32 %v1403, 2147483648
    %v1710 = vxor.u32 %v1405, 2147483648
    %v1711 = vxor.u32 %v1589, 2147483648
    %v1712 = vxor.u32 %v1409, 2147483648
    %v1713 = vxor.u32 %v1411, 2147483648
    %v1714 = vxor.u32 %v1594, 2147483648
    %v1715 = vxor.u32 %v1413, 2147483648
    %v1716 = vxor.u32 %v1415, 2147483648
    %v1717 = vxor.u32 %v1597, 2147483648
    %v1718 = vxor.u32 %v1419, 2147483648
    %v1719 = vxor.u32 %v1421, 2147483648
    %v1720 = vxor.u32 %v1602, 2147483648
    %v1721 = vxor.u32 %v1423, 2147483648
    %v1722 = vxor.u32 %v1425, 2147483648
    %v1723 = vxor.u32 %v1605, 2147483648
    %v1724 = vxor.u32 %v1429, 2147483648
    %v1725 = vxor.u32 %v1431, 2147483648
    %v1726 = vxor.u32 %v1610, 2147483648
    %v1727 = vxor.u32 %v1433, 2147483648
    %v1728 = vxor.u32 %v1435, 2147483648
    %v1729 = vxor.u32 %v1613, 2147483648
    %v1730 = vxor.u32 %v1439, 2147483648
    %v1731 = vxor.u32 %v1441, 2147483648
    %v1732 = vxor.u32 %v1618, 2147483648
    %v1733 = vxor.u32 %v1443, 2147483648
    %v1734 = vxor.u32 %v1445, 2147483648
    %v1735 = vxor.u32 %v1621, 2147483648
    %v1736 = vxor.u32 %v1449, 2147483648
    %v1737 = vxor.u32 %v1451, 2147483648
    %v1738 = vxor.u32 %v1626, 2147483648
    %v1739 = vxor.u32 %v1453, 2147483648
    %v1740 = vxor.u32 %v1455, 2147483648
    %v1741 = vxor.u32 %v1629, 2147483648
    %v1742 = vxor.u32 %v1459, 2147483648
    %v1743 = vxor.u32 %v1461, 2147483648
    %v1744 = vxor.u32 %v1634, 2147483648
    %v1745 = vxor.u32 %v1463, 2147483648
    %v1746 = vxor.u32 %v1465, 2147483648
    %v1747 = vxor.u32 %v1637, 2147483648
    %v1748 = vxor.u32 %v1469, 2147483648
    %v1749 = vxor.u32 %v1471, 2147483648
    %v1750 = vxor.u32 %v1642, 2147483648
    %v1751 = vxor.u32 %v1473, 2147483648
    %v1752 = vxor.u32 %v1475, 2147483648
    %v1753 = vxor.u32 %v1645, 2147483648
    %v1754 = vxor.u32 %v1479, 2147483648
    %v1755 = vxor.u32 %v1481, 2147483648
    %v1756 = vxor.u32 %v1650, 2147483648
    %v1757 = vxor.u32 %v1483, 2147483648
    %v1758 = vxor.u32 %v1485, 2147483648
    %v1759 = vxor.u32 %v1653, 2147483648
    %v1760 = vxor.u32 %v1489, 2147483648
    %v1761 = vxor.u32 %v1491, 2147483648
    %v1762 = vxor.u32 %v1658, 2147483648
    %v1763 = vxor.u32 %v1493, 2147483648
    %v1764 = vxor.u32 %v1495, 2147483648
    %v1765 = vxor.u32 %v1661, 2147483648
    %v1766 = vxor.u32 %v1499, 2147483648
    %v1767 = vxor.u32 %v1501, 2147483648
    %v1768 = vxor.u32 %v1666, 2147483648
    %v1769 = vxor.u32 %v1503, 2147483648
    %v1770 = vxor.u32 %v1505, 2147483648
    %v1771 = vxor.u32 %v1669, 2147483648
    %v1772 = vxor.u32 %v1509, 2147483648
    %v1773 = vxor.u32 %v1511, 2147483648
    %v1774 = vxor.u32 %v1674, 2147483648
    %v1775 = vxor.u32 %v1513, 2147483648
    %v1776 = vxor.u32 %v1515, 2147483648
    %v1777 = vxor.u32 %v1677, 2147483648
    %v1778 = vxor.u32 %v1519, 2147483648
    %v1779 = vxor.u32 %v1521, 2147483648
    %v1780 = vxor.u32 %v1682, 2147483648
    %v1781 = vxor.u32 %v1523, 2147483648
    %v1782 = vxor.u32 %v1525, 2147483648
    %v1783 = vxor.u32 %v1685, 2147483648
    %v1784 = vmul.f32 %v1688, 1.442695
    %v1785 = vpow.pop %v1784
    %v1786 = vmul.f32 %v1689, 1.442695
    %v1787 = vpow.pop %v1786
    %v1788 = vmul.f32 %v1690, 1.442695
    %v1789 = vpow.pop %v1788
    %v1790 = vmul.f32 %v1691, 1.442695
    %v1791 = vpow.pop %v1790
    %v1792 = vmul.f32 %v1692, 1.442695
    %v1793 = vpow.pop %v1792
    %v1794 = vmul.f32 %v1693, 1.442695
    %v1795 = vpow.pop %v1794
    %v1796 = vmul.f32 %v1694, 1.442695
    %v1797 = vpow.pop %v1796
    %v1798 = vmul.f32 %v1695, 1.442695
    %v1799 = vpow.pop %v1798
    %v1800 = vmul.f32 %v1696, 1.442695
    %v1801 = vpow.pop %v1800
    %v1802 = vmul.f32 %v1697, 1.442695
    %v1803 = vpow.pop %v1802
    %v1804 = vmul.f32 %v1698, 1.442695
    %v1805 = vpow.pop %v1804
    %v1806 = vmul.f32 %v1699, 1.442695
    %v1807 = vpow.pop %v1806
    %v1808 = vmul.f32 %v1700, 1.442695
    %v1809 = vpow.pop %v1808
    %v1810 = vmul.f32 %v1701, 1.442695
    %v1811 = vpow.pop %v1810
    %v1812 = vmul.f32 %v1702, 1.442695
    %v1813 = vpow.pop %v1812
    %v1814 = vmul.f32 %v1703, 1.442695
    %v1815 = vpow.pop %v1814
    %v1816 = vmul.f32 %v1704, 1.442695
    %v1817 = vpow.pop %v1816
    %v1818 = vmul.f32 %v1705, 1.442695
    %v1819 = vpow.pop %v1818
    %v1820 = vmul.f32 %v1706, 1.442695
    %v1821 = vpow.pop %v1820
    %v1822 = vmul.f32 %v1707, 1.442695
    %v1823 = vpow.pop %v1822
    %v1824 = vmul.f32 %v1708, 1.442695
    %v1825 = vpow.pop %v1824
    %v1826 = vmul.f32 %v1709, 1.442695
    %v1827 = vpow.pop %v1826
    %v1828 = vmul.f32 %v1710, 1.442695
    %v1829 = vpow.pop %v1828
    %v1830 = vmul.f32 %v1711, 1.442695
    %v1831 = vpow.pop %v1830
    %v1832 = vmul.f32 %v1712, 1.442695
    %v1833 = vpow.pop %v1832
    %v1834 = vmul.f32 %v1713, 1.442695
    %v1835 = vpow.pop %v1834
    %v1836 = vmul.f32 %v1714, 1.442695
    %v1837 = vpow.pop %v1836
    %v1838 = vmul.f32 %v1715, 1.442695
    %v1839 = vpow.pop %v1838
    %v1840 = vmul.f32 %v1716, 1.442695
    %v1841 = vpow.pop %v1840
    %v1842 = vmul.f32 %v1717, 1.442695
    %v1843 = vpow.pop %v1842
    %v1844 = vmul.f32 %v1718, 1.442695
    %v1845 = vpow.pop %v1844
    %v1846 = vmul.f32 %v1719, 1.442695
    %v1847 = vpow.pop %v1846
    %v1848 = vmul.f32 %v1720, 1.442695
    %v1849 = vpow.pop %v1848
    %v1850 = vmul.f32 %v1721, 1.442695
    %v1851 = vpow.pop %v1850
    %v1852 = vmul.f32 %v1722, 1.442695
    %v1853 = vpow.pop %v1852
    %v1854 = vmul.f32 %v1723, 1.442695
    %v1855 = vpow.pop %v1854
    %v1856 = vmul.f32 %v1724, 1.442695
    %v1857 = vpow.pop %v1856
    %v1858 = vmul.f32 %v1725, 1.442695
    %v1859 = vpow.pop %v1858
    %v1860 = vmul.f32 %v1726, 1.442695
    %v1861 = vpow.pop %v1860
    %v1862 = vmul.f32 %v1727, 1.442695
    %v1863 = vpow.pop %v1862
    %v1864 = vmul.f32 %v1728, 1.442695
    %v1865 = vpow.pop %v1864
    %v1866 = vmul.f32 %v1729, 1.442695
    %v1867 = vpow.pop %v1866
    %v1868 = vmul.f32 %v1730, 1.442695
    %v1869 = vpow.pop %v1868
    %v1870 = vmul.f32 %v1731, 1.442695
    %v1871 = vpow.pop %v1870
    %v1872 = vmul.f32 %v1732, 1.442695
    %v1873 = vpow.pop %v1872
    %v1874 = vmul.f32 %v1733, 1.442695
    %v1875 = vpow.pop %v1874
    %v1876 = vmul.f32 %v1734, 1.442695
    %v1877 = vpow.pop %v1876
    %v1878 = vmul.f32 %v1735, 1.442695
    %v1879 = vpow.pop %v1878
    %v1880 = vmul.f32 %v1736, 1.442695
    %v1881 = vpow.pop %v1880
    %v1882 = vmul.f32 %v1737, 1.442695
    %v1883 = vpow.pop %v1882
    %v1884 = vmul.f32 %v1738, 1.442695
    %v1885 = vpow.pop %v1884
    %v1886 = vmul.f32 %v1739, 1.442695
    %v1887 = vpow.pop %v1886
    %v1888 = vmul.f32 %v1740, 1.442695
    %v1889 = vpow.pop %v1888
    %v1890 = vmul.f32 %v1741, 1.442695
    %v1891 = vpow.pop %v1890
    %v1892 = vmul.f32 %v1742, 1.442695
    %v1893 = vpow.pop %v1892
    %v1894 = vmul.f32 %v1743, 1.442695
    %v1895 = vpow.pop %v1894
    %v1896 = vmul.f32 %v1744, 1.442695
    %v1897 = vpow.pop %v1896
    %v1898 = vmul.f32 %v1745, 1.442695
    %v1899 = vpow.pop %v1898
    %v1900 = vmul.f32 %v1746, 1.442695
    %v1901 = vpow.pop %v1900
    %v1902 = vmul.f32 %v1747, 1.442695
    %v1903 = vpow.pop %v1902
    %v1904 = vmul.f32 %v1748, 1.442695
    %v1905 = vpow.pop %v1904
    %v1906 = vmul.f32 %v1749, 1.442695
    %v1907 = vpow.pop %v1906
    %v1908 = vmul.f32 %v1750, 1.442695
    %v1909 = vpow.pop %v1908
    %v1910 = vmul.f32 %v1751, 1.442695
    %v1911 = vpow.pop %v1910
    %v1912 = vmul.f32 %v1752, 1.442695
    %v1913 = vpow.pop %v1912
    %v1914 = vmul.f32 %v1753, 1.442695
    %v1915 = vpow.pop %v1914
    %v1916 = vmul.f32 %v1754, 1.442695
    %v1917 = vpow.pop %v1916
    %v1918 = vmul.f32 %v1755, 1.442695
    %v1919 = vpow.pop %v1918
    %v1920 = vmul.f32 %v1756, 1.442695
    %v1921 = vpow.pop %v1920
    %v1922 = vmul.f32 %v1757, 1.442695
    %v1923 = vpow.pop %v1922
    %v1924 = vmul.f32 %v1758, 1.442695
    %v1925 = vpow.pop %v1924
    %v1926 = vmul.f32 %v1759, 1.442695
    %v1927 = vpow.pop %v1926
    %v1928 = vmul.f32 %v1760, 1.442695
    %v1929 = vpow.pop %v1928
    %v1930 = vmul.f32 %v1761, 1.442695
    %v1931 = vpow.pop %v1930
    %v1932 = vmul.f32 %v1762, 1.442695
    %v1933 = vpow.pop %v1932
    %v1934 = vmul.f32 %v1763, 1.442695
    %v1935 = vpow.pop %v1934
    %v1936 = vmul.f32 %v1764, 1.442695
    %v1937 = vpow.pop %v1936
    %v1938 = vmul.f32 %v1765, 1.442695
    %v1939 = vpow.pop %v1938
    %v1940 = vmul.f32 %v1766, 1.442695
    %v1941 = vpow.pop %v1940
    %v1942 = vmul.f32 %v1767, 1.442695
    %v1943 = vpow.pop %v1942
    %v1944 = vmul.f32 %v1768, 1.442695
    %v1945 = vpow.pop %v1944
    %v1946 = vmul.f32 %v1769, 1.442695
    %v1947 = vpow.pop %v1946
    %v1948 = vmul.f32 %v1770, 1.442695
    %v1949 = vpow.pop %v1948
    %v1950 = vmul.f32 %v1771, 1.442695
    %v1951 = vpow.pop %v1950
    %v1952 = vmul.f32 %v1772, 1.442695
    %v1953 = vpow.pop %v1952
    %v1954 = vmul.f32 %v1773, 1.442695
    %v1955 = vpow.pop %v1954
    %v1956 = vmul.f32 %v1774, 1.442695
    %v1957 = vpow.pop %v1956
    %v1958 = vmul.f32 %v1775, 1.442695
    %v1959 = vpow.pop %v1958
    %v1960 = vmul.f32 %v1776, 1.442695
    %v1961 = vpow.pop %v1960
    %v1962 = vmul.f32 %v1777, 1.442695
    %v1963 = vpow.pop %v1962
    %v1964 = vmul.f32 %v1778, 1.442695
    %v1965 = vpow.pop %v1964
    %v1966 = vmul.f32 %v1779, 1.442695
    %v1967 = vpow.pop %v1966
    %v1968 = vmul.f32 %v1780, 1.442695
    %v1969 = vpow.pop %v1968
    %v1970 = vmul.f32 %v1781, 1.442695
    %v1971 = vpow.pop %v1970
    %v1972 = vmul.f32 %v1782, 1.442695
    %v1973 = vpow.pop %v1972
    %v1974 = vmul.f32 %v1783, 1.442695
    %v1975 = vpow.pop %v1974
    %v1976 = vadd.f32 %v1785, 1.0
    %v1977 = vadd.f32 %v1787, 1.0
    %v1978 = vadd.f32 %v1789, 1.0
    %v1979 = vadd.f32 %v1791, 1.0
    %v1980 = vadd.f32 %v1793, 1.0
    %v1981 = vadd.f32 %v1795, 1.0
    %v1982 = vadd.f32 %v1797, 1.0
    %v1983 = vadd.f32 %v1799, 1.0
    %v1984 = vadd.f32 %v1801, 1.0
    %v1985 = vadd.f32 %v1803, 1.0
    %v1986 = vadd.f32 %v1805, 1.0
    %v1987 = vadd.f32 %v1807, 1.0
    %v1988 = vadd.f32 %v1809, 1.0
    %v1989 = vadd.f32 %v1811, 1.0
    %v1990 = vadd.f32 %v1813, 1.0
    %v1991 = vadd.f32 %v1815, 1.0
    %v1992 = vadd.f32 %v1817, 1.0
    %v1993 = vadd.f32 %v1819, 1.0
    %v1994 = vadd.f32 %v1821, 1.0
    %v1995 = vadd.f32 %v1823, 1.0
    %v1996 = vadd.f32 %v1825, 1.0
    %v1997 = vadd.f32 %v1827, 1.0
    %v1998 = vadd.f32 %v1829, 1.0
    %v1999 = vadd.f32 %v1831, 1.0
    %v2000 = vadd.f32 %v1833, 1.0
    %v2001 = vadd.f32 %v1835, 1.0
    %v2002 = vadd.f32 %v1837, 1.0
    %v2003 = vadd.f32 %v1839, 1.0
    %v2004 = vadd.f32 %v1841, 1.0
    %v2005 = vadd.f32 %v1843, 1.0
    %v2006 = vadd.f32 %v1845, 1.0
    %v2007 = vadd.f32 %v1847, 1.0
    %v2008 = vadd.f32 %v1849, 1.0
    %v2009 = vadd.f32 %v1851, 1.0
    %v2010 = vadd.f32 %v1853, 1.0
    %v2011 = vadd.f32 %v1855, 1.0
    %v2012 = vadd.f32 %v1857, 1.0
    %v2013 = vadd.f32 %v1859, 1.0
    %v2014 = vadd.f32 %v1861, 1.0
    %v2015 = vadd.f32 %v1863, 1.0
    %v2016 = vadd.f32 %v1865, 1.0
    %v2017 = vadd.f32 %v1867, 1.0
    %v2018 = vadd.f32 %v1869, 1.0
    %v2019 = vadd.f32 %v1871, 1.0
    %v2020 = vadd.f32 %v1873, 1.0
    %v2021 = vadd.f32 %v1875, 1.0
    %v2022 = vadd.f32 %v1877, 1.0
    %v2023 = vadd.f32 %v1879, 1.0
    %v2024 = vadd.f32 %v1881, 1.0
    %v2025 = vadd.f32 %v1883, 1.0
    %v2026 = vadd.f32 %v1885, 1.0
    %v2027 = vadd.f32 %v1887, 1.0
    %v2028 = vadd.f32 %v1889, 1.0
    %v2029 = vadd.f32 %v1891, 1.0
    %v2030 = vadd.f32 %v1893, 1.0
    %v2031 = vadd.f32 %v1895, 1.0
    %v2032 = vadd.f32 %v1897, 1.0
    %v2033 = vadd.f32 %v1899, 1.0
    %v2034 = vadd.f32 %v1901, 1.0
    %v2035 = vadd.f32 %v1903, 1.0
    %v2036 = vadd.f32 %v1905, 1.0
    %v2037 = vadd.f32 %v1907, 1.0
    %v2038 = vadd.f32 %v1909, 1.0
    %v2039 = vadd.f32 %v1911, 1.0
    %v2040 = vadd.f32 %v1913, 1.0
    %v2041 = vadd.f32 %v1915, 1.0
    %v2042 = vadd.f32 %v1917, 1.0
    %v2043 = vadd.f32 %v1919, 1.0
    %v2044 = vadd.f32 %v1921, 1.0
    %v2045 = vadd.f32 %v1923, 1.0
    %v2046 = vadd.f32 %v1925, 1.0
    %v2047 = vadd.f32 %v1927, 1.0
    %v2048 = vadd.f32 %v1929, 1.0
    %v2049 = vadd.f32 %v1931, 1.0
    %v2050 = vadd.f32 %v1933, 1.0
    %v2051 = vadd.f32 %v1935, 1.0
    %v2052 = vadd.f32 %v1937, 1.0
    %v2053 = vadd.f32 %v1939, 1.0
    %v2054 = vadd.f32 %v1941, 1.0
    %v2055 = vadd.f32 %v1943, 1.0
    %v2056 = vadd.f32 %v1945, 1.0
    %v2057 = vadd.f32 %v1947, 1.0
    %v2058 = vadd.f32 %v1949, 1.0
    %v2059 = vadd.f32 %v1951, 1.0
    %v2060 = vadd.f32 %v1953, 1.0
    %v2061 = vadd.f32 %v1955, 1.0
    %v2062 = vadd.f32 %v1957, 1.0
    %v2063 = vadd.f32 %v1959, 1.0
    %v2064 = vadd.f32 %v1961, 1.0
    %v2065 = vadd.f32 %v1963, 1.0
    %v2066 = vadd.f32 %v1965, 1.0
    %v2067 = vadd.f32 %v1967, 1.0
    %v2068 = vadd.f32 %v1969, 1.0
    %v2069 = vadd.f32 %v1971, 1.0
    %v2070 = vadd.f32 %v1973, 1.0
    %v2071 = vadd.f32 %v1975, 1.0
    %v2072 = vrcp.pop %v1976
    %v2073 = vmul.f32 1.0, %v2072
    %v2074 = vrcp.pop %v1977
    %v2075 = vmul.f32 1.0, %v2074
    %v2076 = vrcp.pop %v1978
    %v2077 = vmul.f32 1.0, %v2076
    %v2078 = vrcp.pop %v1979
    %v2079 = vmul.f32 1.0, %v2078
    %v2080 = vrcp.pop %v1980
    %v2081 = vmul.f32 1.0, %v2080
    %v2082 = vrcp.pop %v1981
    %v2083 = vmul.f32 1.0, %v2082
    %v2084 = vrcp.pop %v1982
    %v2085 = vmul.f32 1.0, %v2084
    %v2086 = vrcp.pop %v1983
    %v2087 = vmul.f32 1.0, %v2086
    %v2088 = vrcp.pop %v1984
    %v2089 = vmul.f32 1.0, %v2088
    %v2090 = vrcp.pop %v1985
    %v2091 = vmul.f32 1.0, %v2090
    %v2092 = vrcp.pop %v1986
    %v2093 = vmul.f32 1.0, %v2092
    %v2094 = vrcp.pop %v1987
    %v2095 = vmul.f32 1.0, %v2094
    %v2096 = vrcp.pop %v1988
    %v2097 = vmul.f32 1.0, %v2096
    %v2098 = vrcp.pop %v1989
    %v2099 = vmul.f32 1.0, %v2098
    %v2100 = vrcp.pop %v1990
    %v2101 = vmul.f32 1.0, %v2100
    %v2102 = vrcp.pop %v1991
    %v2103 = vmul.f32 1.0, %v2102
    %v2104 = vrcp.pop %v1992
    %v2105 = vmul.f32 1.0, %v2104
    %v2106 = vrcp.pop %v1993
    %v2107 = vmul.f32 1.0, %v2106
    %v2108 = vrcp.pop %v1994
    %v2109 = vmul.f32 1.0, %v2108
    %v2110 = vrcp.pop %v1995
    %v2111 = vmul.f32 1.0, %v2110
    %v2112 = vrcp.pop %v1996
    %v2113 = vmul.f32 1.0, %v2112
    %v2114 = vrcp.pop %v1997
    %v2115 = vmul.f32 1.0, %v2114
    %v2116 = vrcp.pop %v1998
    %v2117 = vmul.f32 1.0, %v2116
    %v2118 = vrcp.pop %v1999
    %v2119 = vmul.f32 1.0, %v2118
    %v2120 = vrcp.pop %v2000
    %v2121 = vmul.f32 1.0, %v2120
    %v2122 = vrcp.pop %v2001
    %v2123 = vmul.f32 1.0, %v2122
    %v2124 = vrcp.pop %v2002
    %v2125 = vmul.f32 1.0, %v2124
    %v2126 = vrcp.pop %v2003
    %v2127 = vmul.f32 1.0, %v2126
    %v2128 = vrcp.pop %v2004
    %v2129 = vmul.f32 1.0, %v2128
    %v2130 = vrcp.pop %v2005
    %v2131 = vmul.f32 1.0, %v2130
    %v2132 = vrcp.pop %v2006
    %v2133 = vmul.f32 1.0, %v2132
    %v2134 = vrcp.pop %v2007
    %v2135 = vmul.f32 1.0, %v2134
    %v2136 = vrcp.pop %v2008
    %v2137 = vmul.f32 1.0, %v2136
    %v2138 = vrcp.pop %v2009
    %v2139 = vmul.f32 1.0, %v2138
    %v2140 = vrcp.pop %v2010
    %v2141 = vmul.f32 1.0, %v2140
    %v2142 = vrcp.pop %v2011
    %v2143 = vmul.f32 1.0, %v2142
    %v2144 = vrcp.pop %v2012
    %v2145 = vmul.f32 1.0, %v2144
    %v2146 = vrcp.pop %v2013
    %v2147 = vmul.f32 1.0, %v2146
    %v2148 = vrcp.pop %v2014
    %v2149 = vmul.f32 1.0, %v2148
    %v2150 = vrcp.pop %v2015
    %v2151 = vmul.f32 1.0, %v2150
    %v2152 = vrcp.pop %v2016
    %v2153 = vmul.f32 1.0, %v2152
    %v2154 = vrcp.pop %v2017
    %v2155 = vmul.f32 1.0, %v2154
    %v2156 = vrcp.pop %v2018
    %v2157 = vmul.f32 1.0, %v2156
    %v2158 = vrcp.pop %v2019
    %v2159 = vmul.f32 1.0, %v2158
    %v2160 = vrcp.pop %v2020
    %v2161 = vmul.f32 1.0, %v2160
    %v2162 = vrcp.pop %v2021
    %v2163 = vmul.f32 1.0, %v2162
    %v2164 = vrcp.pop %v2022
    %v2165 = vmul.f32 1.0, %v2164
    %v2166 = vrcp.pop %v2023
    %v2167 = vmul.f32 1.0, %v2166
    %v2168 = vrcp.pop %v2024
    %v2169 = vmul.f32 1.0, %v2168
    %v2170 = vrcp.pop %v2025
    %v2171 = vmul.f32 1.0, %v2170
    %v2172 = vrcp.pop %v2026
    %v2173 = vmul.f32 1.0, %v2172
    %v2174 = vrcp.pop %v2027
    %v2175 = vmul.f32 1.0, %v2174
    %v2176 = vrcp.pop %v2028
    %v2177 = vmul.f32 1.0, %v2176
    %v2178 = vrcp.pop %v2029
    %v2179 = vmul.f32 1.0, %v2178
    %v2180 = vrcp.pop %v2030
    %v2181 = vmul.f32 1.0, %v2180
    %v2182 = vrcp.pop %v2031
    %v2183 = vmul.f32 1.0, %v2182
    %v2184 = vrcp.pop %v2032
    %v2185 = vmul.f32 1.0, %v2184
    %v2186 = vrcp.pop %v2033
    %v2187 = vmul.f32 1.0, %v2186
    %v2188 = vrcp.pop %v2034
    %v2189 = vmul.f32 1.0, %v2188
    %v2190 = vrcp.pop %v2035
    %v2191 = vmul.f32 1.0, %v2190
    %v2192 = vrcp.pop %v2036
    %v2193 = vmul.f32 1.0, %v2192
    %v2194 = vrcp.pop %v2037
    %v2195 = vmul.f32 1.0, %v2194
    %v2196 = vrcp.pop %v2038
    %v2197 = vmul.f32 1.0, %v2196
    %v2198 = vrcp.pop %v2039
    %v2199 = vmul.f32 1.0, %v2198
    %v2200 = vrcp.pop %v2040
    %v2201 = vmul.f32 1.0, %v2200
    %v2202 = vrcp.pop %v2041
    %v2203 = vmul.f32 1.0, %v2202
    %v2204 = vrcp.pop %v2042
    %v2205 = vmul.f32 1.0, %v2204
    %v2206 = vrcp.pop %v2043
    %v2207 = vmul.f32 1.0, %v2206
    %v2208 = vrcp.pop %v2044
    %v2209 = vmul.f32 1.0, %v2208
    %v2210 = vrcp.pop %v2045
    %v2211 = vmul.f32 1.0, %v2210
    %v2212 = vrcp.pop %v2046
    %v2213 = vmul.f32 1.0, %v2212
    %v2214 = vrcp.pop %v2047
    %v2215 = vmul.f32 1.0, %v2214
    %v2216 = vrcp.pop %v2048
    %v2217 = vmul.f32 1.0, %v2216
    %v2218 = vrcp.pop %v2049
    %v2219 = vmul.f32 1.0, %v2218
    %v2220 = vrcp.pop %v2050
    %v2221 = vmul.f32 1.0, %v2220
    %v2222 = vrcp.pop %v2051
    %v2223 = vmul.f32 1.0, %v2222
    %v2224 = vrcp.pop %v2052
    %v2225 = vmul.f32 1.0, %v2224
    %v2226 = vrcp.pop %v2053
    %v2227 = vmul.f32 1.0, %v2226
    %v2228 = vrcp.pop %v2054
    %v2229 = vmul.f32 1.0, %v2228
    %v2230 = vrcp.pop %v2055
    %v2231 = vmul.f32 1.0, %v2230
    %v2232 = vrcp.pop %v2056
    %v2233 = vmul.f32 1.0, %v2232
    %v2234 = vrcp.pop %v2057
    %v2235 = vmul.f32 1.0, %v2234
    %v2236 = vrcp.pop %v2058
    %v2237 = vmul.f32 1.0, %v2236
    %v2238 = vrcp.pop %v2059
    %v2239 = vmul.f32 1.0, %v2238
    %v2240 = vrcp.pop %v2060
    %v2241 = vmul.f32 1.0, %v2240
    %v2242 = vrcp.pop %v2061
    %v2243 = vmul.f32 1.0, %v2242
    %v2244 = vrcp.pop %v2062
    %v2245 = vmul.f32 1.0, %v2244
    %v2246 = vrcp.pop %v2063
    %v2247 = vmul.f32 1.0, %v2246
    %v2248 = vrcp.pop %v2064
    %v2249 = vmul.f32 1.0, %v2248
    %v2250 = vrcp.pop %v2065
    %v2251 = vmul.f32 1.0, %v2250
    %v2252 = vrcp.pop %v2066
    %v2253 = vmul.f32 1.0, %v2252
    %v2254 = vrcp.pop %v2067
    %v2255 = vmul.f32 1.0, %v2254
    %v2256 = vrcp.pop %v2068
    %v2257 = vmul.f32 1.0, %v2256
    %v2258 = vrcp.pop %v2069
    %v2259 = vmul.f32 1.0, %v2258
    %v2260 = vrcp.pop %v2070
    %v2261 = vmul.f32 1.0, %v2260
    %v2262 = vrcp.pop %v2071
    %v2263 = vmul.f32 1.0, %v2262
    %v2264 = vmul.f32 %v1369, %v2073
    %v2265 = vmul.f32 %v1371, %v2075
    %v2266 = vmul.f32 %v1562, %v2077
    %v2267 = vmul.f32 %v1373, %v2079
    %v2268 = vmul.f32 %v1375, %v2081
    %v2269 = vmul.f32 %v1565, %v2083
    %v2270 = vmul.f32 %v1379, %v2085
    %v2271 = vmul.f32 %v1381, %v2087
    %v2272 = vmul.f32 %v1570, %v2089
    %v2273 = vmul.f32 %v1383, %v2091
    %v2274 = vmul.f32 %v1385, %v2093
    %v2275 = vmul.f32 %v1573, %v2095
    %v2276 = vmul.f32 %v1389, %v2097
    %v2277 = vmul.f32 %v1391, %v2099
    %v2278 = vmul.f32 %v1578, %v2101
    %v2279 = vmul.f32 %v1393, %v2103
    %v2280 = vmul.f32 %v1395, %v2105
    %v2281 = vmul.f32 %v1581, %v2107
    %v2282 = vmul.f32 %v1399, %v2109
    %v2283 = vmul.f32 %v1401, %v2111
    %v2284 = vmul.f32 %v1586, %v2113
    %v2285 = vmul.f32 %v1403, %v2115
    %v2286 = vmul.f32 %v1405, %v2117
    %v2287 = vmul.f32 %v1589, %v2119
    %v2288 = vmul.f32 %v1409, %v2121
    %v2289 = vmul.f32 %v1411, %v2123
    %v2290 = vmul.f32 %v1594, %v2125
    %v2291 = vmul.f32 %v1413, %v2127
    %v2292 = vmul.f32 %v1415, %v2129
    %v2293 = vmul.f32 %v1597, %v2131
    %v2294 = vmul.f32 %v1419, %v2133
    %v2295 = vmul.f32 %v1421, %v2135
    %v2296 = vmul.f32 %v1602, %v2137
    %v2297 = vmul.f32 %v1423, %v2139
    %v2298 = vmul.f32 %v1425, %v2141
    %v2299 = vmul.f32 %v1605, %v2143
    %v2300 = vmul.f32 %v1429, %v2145
    %v2301 = vmul.f32 %v1431, %v2147
    %v2302 = vmul.f32 %v1610, %v2149
    %v2303 = vmul.f32 %v1433, %v2151
    %v2304 = vmul.f32 %v1435, %v2153
    %v2305 = vmul.f32 %v1613, %v2155
    %v2306 = vmul.f32 %v1439, %v2157
    %v2307 = vmul.f32 %v1441, %v2159
    %v2308 = vmul.f32 %v1618, %v2161
    %v2309 = vmul.f32 %v1443, %v2163
    %v2310 = vmul.f32 %v1445, %v2165
    %v2311 = vmul.f32 %v1621, %v2167
    %v2312 = vmul.f32 %v1449, %v2169
    %v2313 = vmul.f32 %v1451, %v2171
    %v2314 = vmul.f32 %v1626, %v2173
    %v2315 = vmul.f32 %v1453, %v2175
    %v2316 = vmul.f32 %v1455, %v2177
    %v2317 = vmul.f32 %v1629, %v2179
    %v2318 = vmul.f32 %v1459, %v2181
    %v2319 = vmul.f32 %v1461, %v2183
    %v2320 = vmul.f32 %v1634, %v2185
    %v2321 = vmul.f32 %v1463, %v2187
    %v2322 = vmul.f32 %v1465, %v2189
    %v2323 = vmul.f32 %v1637, %v2191
    %v2324 = vmul.f32 %v1469, %v2193
    %v2325 = vmul.f32 %v1471, %v2195
    %v2326 = vmul.f32 %v1642, %v2197
    %v2327 = vmul.f32 %v1473, %v2199
    %v2328 = vmul.f32 %v1475, %v2201
    %v2329 = vmul.f32 %v1645, %v2203
    %v2330 = vmul.f32 %v1479, %v2205
    %v2331 = vmul.f32 %v1481, %v2207
    %v2332 = vmul.f32 %v1650, %v2209
    %v2333 = vmul.f32 %v1483, %v2211
    %v2334 = vmul.f32 %v1485, %v2213
    %v2335 = vmul.f32 %v1653, %v2215
    %v2336 = vmul.f32 %v1489, %v2217
    %v2337 = vmul.f32 %v1491, %v2219
    %v2338 = vmul.f32 %v1658, %v2221
    %v2339 = vmul.f32 %v1493, %v2223
    %v2340 = vmul.f32 %v1495, %v2225
    %v2341 = vmul.f32 %v1661, %v2227
    %v2342 = vmul.f32 %v1499, %v2229
    %v2343 = vmul.f32 %v1501, %v2231
    %v2344 = vmul.f32 %v1666, %v2233
    %v2345 = vmul.f32 %v1503, %v2235
    %v2346 = vmul.f32 %v1505, %v2237
    %v2347 = vmul.f32 %v1669, %v2239
    %v2348 = vmul.f32 %v1509, %v2241
    %v2349 = vmul.f32 %v1511, %v2243
    %v2350 = vmul.f32 %v1674, %v2245
    %v2351 = vmul.f32 %v1513, %v2247
    %v2352 = vmul.f32 %v1515, %v2249
    %v2353 = vmul.f32 %v1677, %v2251
    %v2354 = vmul.f32 %v1519, %v2253
    %v2355 = vmul.f32 %v1521, %v2255
    %v2356 = vmul.f32 %v1682, %v2257
    %v2357 = vmul.f32 %v1523, %v2259
    %v2358 = vmul.f32 %v1525, %v2261
    %v2359 = vmul.f32 %v1685, %v2263
    %v2360 = vld [vmem:[%s2] sm:$0x7]
    %v2361 = vld [vmem:[%s3] sm:$0x7]
    %v2362 = vadd.f32 %v2264, %v2265
    %v2363 = vadd.f32 %v2362, %v2266
    %2364 = vadd.xlane.f32.xlu0 %v2363
    %v2365 = vpop.xlane.xlu0 %2364
    %v2366 = vadd.f32 %v2267, %v2268
    %v2367 = vadd.f32 %v2366, %v2269
    %2368 = vadd.xlane.f32.xlu0 %v2367
    %v2369 = vpop.xlane.xlu0 %2368
    %v2370 = vadd.f32 %v2270, %v2271
    %v2371 = vadd.f32 %v2370, %v2272
    %2372 = vadd.xlane.f32.xlu0 %v2371
    %v2373 = vpop.xlane.xlu0 %2372
    %v2374 = vadd.f32 %v2273, %v2274
    %v2375 = vadd.f32 %v2374, %v2275
    %2376 = vadd.xlane.f32.xlu0 %v2375
    %v2377 = vpop.xlane.xlu0 %2376
    %v2378 = vadd.f32 %v2276, %v2277
    %v2379 = vadd.f32 %v2378, %v2278
    %2380 = vadd.xlane.f32.xlu0 %v2379
    %v2381 = vpop.xlane.xlu0 %2380
    %v2382 = vadd.f32 %v2279, %v2280
    %v2383 = vadd.f32 %v2382, %v2281
    %2384 = vadd.xlane.f32.xlu0 %v2383
    %v2385 = vpop.xlane.xlu0 %2384
    %v2386 = vadd.f32 %v2282, %v2283
    %v2387 = vadd.f32 %v2386, %v2284
    %2388 = vadd.xlane.f32.xlu0 %v2387
    %v2389 = vpop.xlane.xlu0 %2388
    %v2390 = vadd.f32 %v2285, %v2286
    %v2391 = vadd.f32 %v2390, %v2287
    %2392 = vadd.xlane.f32.xlu0 %v2391
    %v2393 = vpop.xlane.xlu0 %2392
    %v2394 = vadd.f32 %v2288, %v2289
    %v2395 = vadd.f32 %v2394, %v2290
    %2396 = vadd.xlane.f32.xlu0 %v2395
    %v2397 = vpop.xlane.xlu0 %2396
    %v2398 = vadd.f32 %v2291, %v2292
    %v2399 = vadd.f32 %v2398, %v2293
    %2400 = vadd.xlane.f32.xlu0 %v2399
    %v2401 = vpop.xlane.xlu0 %2400
    %v2402 = vadd.f32 %v2294, %v2295
    %v2403 = vadd.f32 %v2402, %v2296
    %2404 = vadd.xlane.f32.xlu0 %v2403
    %v2405 = vpop.xlane.xlu0 %2404
    %v2406 = vadd.f32 %v2297, %v2298
    %v2407 = vadd.f32 %v2406, %v2299
    %2408 = vadd.xlane.f32.xlu0 %v2407
    %v2409 = vpop.xlane.xlu0 %2408
    %v2410 = vadd.f32 %v2300, %v2301
    %v2411 = vadd.f32 %v2410, %v2302
    %2412 = vadd.xlane.f32.xlu0 %v2411
    %v2413 = vpop.xlane.xlu0 %2412
    %v2414 = vadd.f32 %v2303, %v2304
    %v2415 = vadd.f32 %v2414, %v2305
    %2416 = vadd.xlane.f32.xlu0 %v2415
    %v2417 = vpop.xlane.xlu0 %2416
    %v2418 = vadd.f32 %v2306, %v2307
    %v2419 = vadd.f32 %v2418, %v2308
    %2420 = vadd.xlane.f32.xlu0 %v2419
    %v2421 = vpop.xlane.xlu0 %2420
    %v2422 = vadd.f32 %v2309, %v2310
    %v2423 = vadd.f32 %v2422, %v2311
    %2424 = vadd.xlane.f32.xlu0 %v2423
    %v2425 = vpop.xlane.xlu0 %2424
    %v2426 = vadd.f32 %v2312, %v2313
    %v2427 = vadd.f32 %v2426, %v2314
    %2428 = vadd.xlane.f32.xlu0 %v2427
    %v2429 = vpop.xlane.xlu0 %2428
    %v2430 = vadd.f32 %v2315, %v2316
    %v2431 = vadd.f32 %v2430, %v2317
    %2432 = vadd.xlane.f32.xlu0 %v2431
    %v2433 = vpop.xlane.xlu0 %2432
    %v2434 = vadd.f32 %v2318, %v2319
    %v2435 = vadd.f32 %v2434, %v2320
    %2436 = vadd.xlane.f32.xlu0 %v2435
    %v2437 = vpop.xlane.xlu0 %2436
    %v2438 = vadd.f32 %v2321, %v2322
    %v2439 = vadd.f32 %v2438, %v2323
    %2440 = vadd.xlane.f32.xlu0 %v2439
    %v2441 = vpop.xlane.xlu0 %2440
    %v2442 = vadd.f32 %v2324, %v2325
    %v2443 = vadd.f32 %v2442, %v2326
    %2444 = vadd.xlane.f32.xlu0 %v2443
    %v2445 = vpop.xlane.xlu0 %2444
    %v2446 = vadd.f32 %v2327, %v2328
    %v2447 = vadd.f32 %v2446, %v2329
    %2448 = vadd.xlane.f32.xlu0 %v2447
    %v2449 = vpop.xlane.xlu0 %2448
    %v2450 = vadd.f32 %v2330, %v2331
    %v2451 = vadd.f32 %v2450, %v2332
    %2452 = vadd.xlane.f32.xlu0 %v2451
    %v2453 = vpop.xlane.xlu0 %2452
    %v2454 = vadd.f32 %v2333, %v2334
    %v2455 = vadd.f32 %v2454, %v2335
    %2456 = vadd.xlane.f32.xlu0 %v2455
    %v2457 = vpop.xlane.xlu0 %2456
    %v2458 = vadd.f32 %v2336, %v2337
    %v2459 = vadd.f32 %v2458, %v2338
    %2460 = vadd.xlane.f32.xlu0 %v2459
    %v2461 = vpop.xlane.xlu0 %2460
    %v2462 = vadd.f32 %v2339, %v2340
    %v2463 = vadd.f32 %v2462, %v2341
    %2464 = vadd.xlane.f32.xlu0 %v2463
    %v2465 = vpop.xlane.xlu0 %2464
    %v2466 = vadd.f32 %v2342, %v2343
    %v2467 = vadd.f32 %v2466, %v2344
    %2468 = vadd.xlane.f32.xlu0 %v2467
    %v2469 = vpop.xlane.xlu0 %2468
    %v2470 = vadd.f32 %v2345, %v2346
    %v2471 = vadd.f32 %v2470, %v2347
    %2472 = vadd.xlane.f32.xlu0 %v2471
    %v2473 = vpop.xlane.xlu0 %2472
    %v2474 = vadd.f32 %v2348, %v2349
    %v2475 = vadd.f32 %v2474, %v2350
    %2476 = vadd.xlane.f32.xlu0 %v2475
    %v2477 = vpop.xlane.xlu0 %2476
    %v2478 = vadd.f32 %v2351, %v2352
    %v2479 = vadd.f32 %v2478, %v2353
    %2480 = vadd.xlane.f32.xlu0 %v2479
    %v2481 = vpop.xlane.xlu0 %2480
    %v2482 = vadd.f32 %v2354, %v2355
    %v2483 = vadd.f32 %v2482, %v2356
    %2484 = vadd.xlane.f32.xlu0 %v2483
    %v2485 = vpop.xlane.xlu0 %2484
    %v2486 = vadd.f32 %v2357, %v2358
    %v2487 = vadd.f32 %v2486, %v2359
    %2488 = vadd.xlane.f32.xlu0 %v2487
    %v2489 = vpop.xlane.xlu0 %2488
    %v2490 = vmul.f32 %v2365, 0.010416667
    %v2491 = vmul.f32 %v2369, 0.010416667
    %v2492 = vmul.f32 %v2373, 0.010416667
    %v2493 = vmul.f32 %v2377, 0.010416667
    %v2494 = vmul.f32 %v2381, 0.010416667
    %v2495 = vmul.f32 %v2385, 0.010416667
    %v2496 = vmul.f32 %v2389, 0.010416667
    %v2497 = vmul.f32 %v2393, 0.010416667
    %v2498 = vmul.f32 %v2397, 0.010416667
    %v2499 = vmul.f32 %v2401, 0.010416667
    %v2500 = vmul.f32 %v2405, 0.010416667
    %v2501 = vmul.f32 %v2409, 0.010416667
    %v2502 = vmul.f32 %v2413, 0.010416667
    %v2503 = vmul.f32 %v2417, 0.010416667
    %v2504 = vmul.f32 %v2421, 0.010416667
    %v2505 = vmul.f32 %v2425, 0.010416667
    %v2506 = vmul.f32 %v2429, 0.010416667
    %v2507 = vmul.f32 %v2433, 0.010416667
    %v2508 = vmul.f32 %v2437, 0.010416667
    %v2509 = vmul.f32 %v2441, 0.010416667
    %v2510 = vmul.f32 %v2445, 0.010416667
    %v2511 = vmul.f32 %v2449, 0.010416667
    %v2512 = vmul.f32 %v2453, 0.010416667
    %v2513 = vmul.f32 %v2457, 0.010416667
    %v2514 = vmul.f32 %v2461, 0.010416667
    %v2515 = vmul.f32 %v2465, 0.010416667
    %v2516 = vmul.f32 %v2469, 0.010416667
    %v2517 = vmul.f32 %v2473, 0.010416667
    %v2518 = vmul.f32 %v2477, 0.010416667
    %v2519 = vmul.f32 %v2481, 0.010416667
    %v2520 = vmul.f32 %v2485, 0.010416667
    %v2521 = vmul.f32 %v2489, 0.010416667
    %v2522 = vmul.f32 %v2264, %v2264
    %v2523 = vmul.f32 %v2265, %v2265
    %v2524 = vmul.f32 %v2266, %v2266
    %v2525 = vmul.f32 %v2267, %v2267
    %v2526 = vmul.f32 %v2268, %v2268
    %v2527 = vmul.f32 %v2269, %v2269
    %v2528 = vmul.f32 %v2270, %v2270
    %v2529 = vmul.f32 %v2271, %v2271
    %v2530 = vmul.f32 %v2272, %v2272
    %v2531 = vmul.f32 %v2273, %v2273
    %v2532 = vmul.f32 %v2274, %v2274
    %v2533 = vmul.f32 %v2275, %v2275
    %v2534 = vmul.f32 %v2276, %v2276
    %v2535 = vmul.f32 %v2277, %v2277
    %v2536 = vmul.f32 %v2278, %v2278
    %v2537 = vmul.f32 %v2279, %v2279
    %v2538 = vmul.f32 %v2280, %v2280
    %v2539 = vmul.f32 %v2281, %v2281
    %v2540 = vmul.f32 %v2282, %v2282
    %v2541 = vmul.f32 %v2283, %v2283
    %v2542 = vmul.f32 %v2284, %v2284
    %v2543 = vmul.f32 %v2285, %v2285
    %v2544 = vmul.f32 %v2286, %v2286
    %v2545 = vmul.f32 %v2287, %v2287
    %v2546 = vmul.f32 %v2288, %v2288
    %v2547 = vmul.f32 %v2289, %v2289
    %v2548 = vmul.f32 %v2290, %v2290
    %v2549 = vmul.f32 %v2291, %v2291
    %v2550 = vmul.f32 %v2292, %v2292
    %v2551 = vmul.f32 %v2293, %v2293
    %v2552 = vmul.f32 %v2294, %v2294
    %v2553 = vmul.f32 %v2295, %v2295
    %v2554 = vmul.f32 %v2296, %v2296
    %v2555 = vmul.f32 %v2297, %v2297
    %v2556 = vmul.f32 %v2298, %v2298
    %v2557 = vmul.f32 %v2299, %v2299
    %v2558 = vmul.f32 %v2300, %v2300
    %v2559 = vmul.f32 %v2301, %v2301
    %v2560 = vmul.f32 %v2302, %v2302
    %v2561 = vmul.f32 %v2303, %v2303
    %v2562 = vmul.f32 %v2304, %v2304
    %v2563 = vmul.f32 %v2305, %v2305
    %v2564 = vmul.f32 %v2306, %v2306
    %v2565 = vmul.f32 %v2307, %v2307
    %v2566 = vmul.f32 %v2308, %v2308
    %v2567 = vmul.f32 %v2309, %v2309
    %v2568 = vmul.f32 %v2310, %v2310
    %v2569 = vmul.f32 %v2311, %v2311
    %v2570 = vmul.f32 %v2312, %v2312
    %v2571 = vmul.f32 %v2313, %v2313
    %v2572 = vmul.f32 %v2314, %v2314
    %v2573 = vmul.f32 %v2315, %v2315
    %v2574 = vmul.f32 %v2316, %v2316
    %v2575 = vmul.f32 %v2317, %v2317
    %v2576 = vmul.f32 %v2318, %v2318
    %v2577 = vmul.f32 %v2319, %v2319
    %v2578 = vmul.f32 %v2320, %v2320
    %v2579 = vmul.f32 %v2321, %v2321
    %v2580 = vmul.f32 %v2322, %v2322
    %v2581 = vmul.f32 %v2323, %v2323
    %v2582 = vmul.f32 %v2324, %v2324
    %v2583 = vmul.f32 %v2325, %v2325
    %v2584 = vmul.f32 %v2326, %v2326
    %v2585 = vmul.f32 %v2327, %v2327
    %v2586 = vmul.f32 %v2328, %v2328
    %v2587 = vmul.f32 %v2329, %v2329
    %v2588 = vmul.f32 %v2330, %v2330
    %v2589 = vmul.f32 %v2331, %v2331
    %v2590 = vmul.f32 %v2332, %v2332
    %v2591 = vmul.f32 %v2333, %v2333
    %v2592 = vmul.f32 %v2334, %v2334
    %v2593 = vmul.f32 %v2335, %v2335
    %v2594 = vmul.f32 %v2336, %v2336
    %v2595 = vmul.f32 %v2337, %v2337
    %v2596 = vmul.f32 %v2338, %v2338
    %v2597 = vmul.f32 %v2339, %v2339
    %v2598 = vmul.f32 %v2340, %v2340
    %v2599 = vmul.f32 %v2341, %v2341
    %v2600 = vmul.f32 %v2342, %v2342
    %v2601 = vmul.f32 %v2343, %v2343
    %v2602 = vmul.f32 %v2344, %v2344
    %v2603 = vmul.f32 %v2345, %v2345
    %v2604 = vmul.f32 %v2346, %v2346
    %v2605 = vmul.f32 %v2347, %v2347
    %v2606 = vmul.f32 %v2348, %v2348
    %v2607 = vmul.f32 %v2349, %v2349
    %v2608 = vmul.f32 %v2350, %v2350
    %v2609 = vmul.f32 %v2351, %v2351
    %v2610 = vmul.f32 %v2352, %v2352
    %v2611 = vmul.f32 %v2353, %v2353
    %v2612 = vmul.f32 %v2354, %v2354
    %v2613 = vmul.f32 %v2355, %v2355
    %v2614 = vmul.f32 %v2356, %v2356
    %v2615 = vmul.f32 %v2357, %v2357
    %v2616 = vmul.f32 %v2358, %v2358
    %v2617 = vmul.f32 %v2359, %v2359
    %v2618 = vadd.f32 %v2522, %v2523
    %v2619 = vadd.f32 %v2618, %v2524
    %2620 = vadd.xlane.f32.xlu0 %v2619
    %v2621 = vpop.xlane.xlu0 %2620
    %v2622 = vadd.f32 %v2525, %v2526
    %v2623 = vadd.f32 %v2622, %v2527
    %2624 = vadd.xlane.f32.xlu0 %v2623
    %v2625 = vpop.xlane.xlu0 %2624
    %v2626 = vadd.f32 %v2528, %v2529
    %v2627 = vadd.f32 %v2626, %v2530
    %2628 = vadd.xlane.f32.xlu0 %v2627
    %v2629 = vpop.xlane.xlu0 %2628
    %v2630 = vadd.f32 %v2531, %v2532
    %v2631 = vadd.f32 %v2630, %v2533
    %2632 = vadd.xlane.f32.xlu0 %v2631
    %v2633 = vpop.xlane.xlu0 %2632
    %v2634 = vadd.f32 %v2534, %v2535
    %v2635 = vadd.f32 %v2634, %v2536
    %2636 = vadd.xlane.f32.xlu0 %v2635
    %v2637 = vpop.xlane.xlu0 %2636
    %v2638 = vadd.f32 %v2537, %v2538
    %v2639 = vadd.f32 %v2638, %v2539
    %2640 = vadd.xlane.f32.xlu0 %v2639
    %v2641 = vpop.xlane.xlu0 %2640
    %v2642 = vadd.f32 %v2540, %v2541
    %v2643 = vadd.f32 %v2642, %v2542
    %2644 = vadd.xlane.f32.xlu0 %v2643
    %v2645 = vpop.xlane.xlu0 %2644
    %v2646 = vadd.f32 %v2543, %v2544
    %v2647 = vadd.f32 %v2646, %v2545
    %2648 = vadd.xlane.f32.xlu0 %v2647
    %v2649 = vpop.xlane.xlu0 %2648
    %v2650 = vadd.f32 %v2546, %v2547
    %v2651 = vadd.f32 %v2650, %v2548
    %2652 = vadd.xlane.f32.xlu0 %v2651
    %v2653 = vpop.xlane.xlu0 %2652
    %v2654 = vadd.f32 %v2549, %v2550
    %v2655 = vadd.f32 %v2654, %v2551
    %2656 = vadd.xlane.f32.xlu0 %v2655
    %v2657 = vpop.xlane.xlu0 %2656
    %v2658 = vadd.f32 %v2552, %v2553
    %v2659 = vadd.f32 %v2658, %v2554
    %2660 = vadd.xlane.f32.xlu0 %v2659
    %v2661 = vpop.xlane.xlu0 %2660
    %v2662 = vadd.f32 %v2555, %v2556
    %v2663 = vadd.f32 %v2662, %v2557
    %2664 = vadd.xlane.f32.xlu0 %v2663
    %v2665 = vpop.xlane.xlu0 %2664
    %v2666 = vadd.f32 %v2558, %v2559
    %v2667 = vadd.f32 %v2666, %v2560
    %2668 = vadd.xlane.f32.xlu0 %v2667
    %v2669 = vpop.xlane.xlu0 %2668
    %v2670 = vadd.f32 %v2561, %v2562
    %v2671 = vadd.f32 %v2670, %v2563
    %2672 = vadd.xlane.f32.xlu0 %v2671
    %v2673 = vpop.xlane.xlu0 %2672
    %v2674 = vadd.f32 %v2564, %v2565
    %v2675 = vadd.f32 %v2674, %v2566
    %2676 = vadd.xlane.f32.xlu0 %v2675
    %v2677 = vpop.xlane.xlu0 %2676
    %v2678 = vadd.f32 %v2567, %v2568
    %v2679 = vadd.f32 %v2678, %v2569
    %2680 = vadd.xlane.f32.xlu0 %v2679
    %v2681 = vpop.xlane.xlu0 %2680
    %v2682 = vadd.f32 %v2570, %v2571
    %v2683 = vadd.f32 %v2682, %v2572
    %2684 = vadd.xlane.f32.xlu0 %v2683
    %v2685 = vpop.xlane.xlu0 %2684
    %v2686 = vadd.f32 %v2573, %v2574
    %v2687 = vadd.f32 %v2686, %v2575
    %2688 = vadd.xlane.f32.xlu0 %v2687
    %v2689 = vpop.xlane.xlu0 %2688
    %v2690 = vadd.f32 %v2576, %v2577
    %v2691 = vadd.f32 %v2690, %v2578
    %2692 = vadd.xlane.f32.xlu0 %v2691
    %v2693 = vpop.xlane.xlu0 %2692
    %v2694 = vadd.f32 %v2579, %v2580
    %v2695 = vadd.f32 %v2694, %v2581
    %2696 = vadd.xlane.f32.xlu0 %v2695
    %v2697 = vpop.xlane.xlu0 %2696
    %v2698 = vadd.f32 %v2582, %v2583
    %v2699 = vadd.f32 %v2698, %v2584
    %2700 = vadd.xlane.f32.xlu0 %v2699
    %v2701 = vpop.xlane.xlu0 %2700
    %v2702 = vadd.f32 %v2585, %v2586
    %v2703 = vadd.f32 %v2702, %v2587
    %2704 = vadd.xlane.f32.xlu0 %v2703
    %v2705 = vpop.xlane.xlu0 %2704
    %v2706 = vadd.f32 %v2588, %v2589
    %v2707 = vadd.f32 %v2706, %v2590
    %2708 = vadd.xlane.f32.xlu0 %v2707
    %v2709 = vpop.xlane.xlu0 %2708
    %v2710 = vadd.f32 %v2591, %v2592
    %v2711 = vadd.f32 %v2710, %v2593
    %2712 = vadd.xlane.f32.xlu0 %v2711
    %v2713 = vpop.xlane.xlu0 %2712
    %v2714 = vadd.f32 %v2594, %v2595
    %v2715 = vadd.f32 %v2714, %v2596
    %2716 = vadd.xlane.f32.xlu0 %v2715
    %v2717 = vpop.xlane.xlu0 %2716
    %v2718 = vadd.f32 %v2597, %v2598
    %v2719 = vadd.f32 %v2718, %v2599
    %2720 = vadd.xlane.f32.xlu0 %v2719
    %v2721 = vpop.xlane.xlu0 %2720
    %v2722 = vadd.f32 %v2600, %v2601
    %v2723 = vadd.f32 %v2722, %v2602
    %2724 = vadd.xlane.f32.xlu0 %v2723
    %v2725 = vpop.xlane.xlu0 %2724
    %v2726 = vadd.f32 %v2603, %v2604
    %v2727 = vadd.f32 %v2726, %v2605
    %2728 = vadd.xlane.f32.xlu0 %v2727
    %v2729 = vpop.xlane.xlu0 %2728
    %v2730 = vadd.f32 %v2606, %v2607
    %v2731 = vadd.f32 %v2730, %v2608
    %2732 = vadd.xlane.f32.xlu0 %v2731
    %v2733 = vpop.xlane.xlu0 %2732
    %v2734 = vadd.f32 %v2609, %v2610
    %v2735 = vadd.f32 %v2734, %v2611
    %2736 = vadd.xlane.f32.xlu0 %v2735
    %v2737 = vpop.xlane.xlu0 %2736
    %v2738 = vadd.f32 %v2612, %v2613
    %v2739 = vadd.f32 %v2738, %v2614
    %2740 = vadd.xlane.f32.xlu0 %v2739
    %v2741 = vpop.xlane.xlu0 %2740
    %v2742 = vadd.f32 %v2615, %v2616
    %v2743 = vadd.f32 %v2742, %v2617
    %2744 = vadd.xlane.f32.xlu0 %v2743
    %v2745 = vpop.xlane.xlu0 %2744
    %v2746 = vmul.f32 %v2621, 0.010416667
    %v2747 = vmul.f32 %v2625, 0.010416667
    %v2748 = vmul.f32 %v2629, 0.010416667
    %v2749 = vmul.f32 %v2633, 0.010416667
    %v2750 = vmul.f32 %v2637, 0.010416667
    %v2751 = vmul.f32 %v2641, 0.010416667
    %v2752 = vmul.f32 %v2645, 0.010416667
    %v2753 = vmul.f32 %v2649, 0.010416667
    %v2754 = vmul.f32 %v2653, 0.010416667
    %v2755 = vmul.f32 %v2657, 0.010416667
    %v2756 = vmul.f32 %v2661, 0.010416667
    %v2757 = vmul.f32 %v2665, 0.010416667
    %v2758 = vmul.f32 %v2669, 0.010416667
    %v2759 = vmul.f32 %v2673, 0.010416667
    %v2760 = vmul.f32 %v2677, 0.010416667
    %v2761 = vmul.f32 %v2681, 0.010416667
    %v2762 = vmul.f32 %v2685, 0.010416667
    %v2763 = vmul.f32 %v2689, 0.010416667
    %v2764 = vmul.f32 %v2693, 0.010416667
    %v2765 = vmul.f32 %v2697, 0.010416667
    %v2766 = vmul.f32 %v2701, 0.010416667
    %v2767 = vmul.f32 %v2705, 0.010416667
    %v2768 = vmul.f32 %v2709, 0.010416667
    %v2769 = vmul.f32 %v2713, 0.010416667
    %v2770 = vmul.f32 %v2717, 0.010416667
    %v2771 = vmul.f32 %v2721, 0.010416667
    %v2772 = vmul.f32 %v2725, 0.010416667
    %v2773 = vmul.f32 %v2729, 0.010416667
    %v2774 = vmul.f32 %v2733, 0.010416667
    %v2775 = vmul.f32 %v2737, 0.010416667
    %v2776 = vmul.f32 %v2741, 0.010416667
    %v2777 = vmul.f32 %v2745, 0.010416667
    %v2778 = vmul.f32 %v2490, %v2490
    %v2779 = vmul.f32 %v2491, %v2491
    %v2780 = vmul.f32 %v2492, %v2492
    %v2781 = vmul.f32 %v2493, %v2493
    %v2782 = vmul.f32 %v2494, %v2494
    %v2783 = vmul.f32 %v2495, %v2495
    %v2784 = vmul.f32 %v2496, %v2496
    %v2785 = vmul.f32 %v2497, %v2497
    %v2786 = vmul.f32 %v2498, %v2498
    %v2787 = vmul.f32 %v2499, %v2499
    %v2788 = vmul.f32 %v2500, %v2500
    %v2789 = vmul.f32 %v2501, %v2501
    %v2790 = vmul.f32 %v2502, %v2502
    %v2791 = vmul.f32 %v2503, %v2503
    %v2792 = vmul.f32 %v2504, %v2504
    %v2793 = vmul.f32 %v2505, %v2505
    %v2794 = vmul.f32 %v2506, %v2506
    %v2795 = vmul.f32 %v2507, %v2507
    %v2796 = vmul.f32 %v2508, %v2508
    %v2797 = vmul.f32 %v2509, %v2509
    %v2798 = vmul.f32 %v2510, %v2510
    %v2799 = vmul.f32 %v2511, %v2511
    %v2800 = vmul.f32 %v2512, %v2512
    %v2801 = vmul.f32 %v2513, %v2513
    %v2802 = vmul.f32 %v2514, %v2514
    %v2803 = vmul.f32 %v2515, %v2515
    %v2804 = vmul.f32 %v2516, %v2516
    %v2805 = vmul.f32 %v2517, %v2517
    %v2806 = vmul.f32 %v2518, %v2518
    %v2807 = vmul.f32 %v2519, %v2519
    %v2808 = vmul.f32 %v2520, %v2520
    %v2809 = vmul.f32 %v2521, %v2521
    %v2810 = vsub.f32 %v2746, %v2778
    %v2811 = vsub.f32 %v2747, %v2779
    %v2812 = vsub.f32 %v2748, %v2780
    %v2813 = vsub.f32 %v2749, %v2781
    %v2814 = vsub.f32 %v2750, %v2782
    %v2815 = vsub.f32 %v2751, %v2783
    %v2816 = vsub.f32 %v2752, %v2784
    %v2817 = vsub.f32 %v2753, %v2785
    %v2818 = vsub.f32 %v2754, %v2786
    %v2819 = vsub.f32 %v2755, %v2787
    %v2820 = vsub.f32 %v2756, %v2788
    %v2821 = vsub.f32 %v2757, %v2789
    %v2822 = vsub.f32 %v2758, %v2790
    %v2823 = vsub.f32 %v2759, %v2791
    %v2824 = vsub.f32 %v2760, %v2792
    %v2825 = vsub.f32 %v2761, %v2793
    %v2826 = vsub.f32 %v2762, %v2794
    %v2827 = vsub.f32 %v2763, %v2795
    %v2828 = vsub.f32 %v2764, %v2796
    %v2829 = vsub.f32 %v2765, %v2797
    %v2830 = vsub.f32 %v2766, %v2798
    %v2831 = vsub.f32 %v2767, %v2799
    %v2832 = vsub.f32 %v2768, %v2800
    %v2833 = vsub.f32 %v2769, %v2801
    %v2834 = vsub.f32 %v2770, %v2802
    %v2835 = vsub.f32 %v2771, %v2803
    %v2836 = vsub.f32 %v2772, %v2804
    %v2837 = vsub.f32 %v2773, %v2805
    %v2838 = vsub.f32 %v2774, %v2806
    %v2839 = vsub.f32 %v2775, %v2807
    %v2840 = vsub.f32 %v2776, %v2808
    %v2841 = vsub.f32 %v2777, %v2809
    %v2842 = vsub.f32 %v2264, %v2490
    %v2843 = vsub.f32 %v2265, %v2490
    %v2844 = vsub.f32 %v2266, %v2490
    %v2845 = vsub.f32 %v2267, %v2491
    %v2846 = vsub.f32 %v2268, %v2491
    %v2847 = vsub.f32 %v2269, %v2491
    %v2848 = vsub.f32 %v2270, %v2492
    %v2849 = vsub.f32 %v2271, %v2492
    %v2850 = vsub.f32 %v2272, %v2492
    %v2851 = vsub.f32 %v2273, %v2493
    %v2852 = vsub.f32 %v2274, %v2493
    %v2853 = vsub.f32 %v2275, %v2493
    %v2854 = vsub.f32 %v2276, %v2494
    %v2855 = vsub.f32 %v2277, %v2494
    %v2856 = vsub.f32 %v2278, %v2494
    %v2857 = vsub.f32 %v2279, %v2495
    %v2858 = vsub.f32 %v2280, %v2495
    %v2859 = vsub.f32 %v2281, %v2495
    %v2860 = vsub.f32 %v2282, %v2496
    %v2861 = vsub.f32 %v2283, %v2496
    %v2862 = vsub.f32 %v2284, %v2496
    %v2863 = vsub.f32 %v2285, %v2497
    %v2864 = vsub.f32 %v2286, %v2497
    %v2865 = vsub.f32 %v2287, %v2497
    %v2866 = vsub.f32 %v2288, %v2498
    %v2867 = vsub.f32 %v2289, %v2498
    %v2868 = vsub.f32 %v2290, %v2498
    %v2869 = vsub.f32 %v2291, %v2499
    %v2870 = vsub.f32 %v2292, %v2499
    %v2871 = vsub.f32 %v2293, %v2499
    %v2872 = vsub.f32 %v2294, %v2500
    %v2873 = vsub.f32 %v2295, %v2500
    %v2874 = vsub.f32 %v2296, %v2500
    %v2875 = vsub.f32 %v2297, %v2501
    %v2876 = vsub.f32 %v2298, %v2501
    %v2877 = vsub.f32 %v2299, %v2501
    %v2878 = vsub.f32 %v2300, %v2502
    %v2879 = vsub.f32 %v2301, %v2502
    %v2880 = vsub.f32 %v2302, %v2502
    %v2881 = vsub.f32 %v2303, %v2503
    %v2882 = vsub.f32 %v2304, %v2503
    %v2883 = vsub.f32 %v2305, %v2503
    %v2884 = vsub.f32 %v2306, %v2504
    %v2885 = vsub.f32 %v2307, %v2504
    %v2886 = vsub.f32 %v2308, %v2504
    %v2887 = vsub.f32 %v2309, %v2505
    %v2888 = vsub.f32 %v2310, %v2505
    %v2889 = vsub.f32 %v2311, %v2505
    %v2890 = vsub.f32 %v2312, %v2506
    %v2891 = vsub.f32 %v2313, %v2506
    %v2892 = vsub.f32 %v2314, %v2506
    %v2893 = vsub.f32 %v2315, %v2507
    %v2894 = vsub.f32 %v2316, %v2507
    %v2895 = vsub.f32 %v2317, %v2507
    %v2896 = vsub.f32 %v2318, %v2508
    %v2897 = vsub.f32 %v2319, %v2508
    %v2898 = vsub.f32 %v2320, %v2508
    %v2899 = vsub.f32 %v2321, %v2509
    %v2900 = vsub.f32 %v2322, %v2509
    %v2901 = vsub.f32 %v2323, %v2509
    %v2902 = vsub.f32 %v2324, %v2510
    %v2903 = vsub.f32 %v2325, %v2510
    %v2904 = vsub.f32 %v2326, %v2510
    %v2905 = vsub.f32 %v2327, %v2511
    %v2906 = vsub.f32 %v2328, %v2511
    %v2907 = vsub.f32 %v2329, %v2511
    %v2908 = vsub.f32 %v2330, %v2512
    %v2909 = vsub.f32 %v2331, %v2512
    %v2910 = vsub.f32 %v2332, %v2512
    %v2911 = vsub.f32 %v2333, %v2513
    %v2912 = vsub.f32 %v2334, %v2513
    %v2913 = vsub.f32 %v2335, %v2513
    %v2914 = vsub.f32 %v2336, %v2514
    %v2915 = vsub.f32 %v2337, %v2514
    %v2916 = vsub.f32 %v2338, %v2514
    %v2917 = vsub.f32 %v2339, %v2515
    %v2918 = vsub.f32 %v2340, %v2515
    %v2919 = vsub.f32 %v2341, %v2515
    %v2920 = vsub.f32 %v2342, %v2516
    %v2921 = vsub.f32 %v2343, %v2516
    %v2922 = vsub.f32 %v2344, %v2516
    %v2923 = vsub.f32 %v2345, %v2517
    %v2924 = vsub.f32 %v2346, %v2517
    %v2925 = vsub.f32 %v2347, %v2517
    %v2926 = vsub.f32 %v2348, %v2518
    %v2927 = vsub.f32 %v2349, %v2518
    %v2928 = vsub.f32 %v2350, %v2518
    %v2929 = vsub.f32 %v2351, %v2519
    %v2930 = vsub.f32 %v2352, %v2519
    %v2931 = vsub.f32 %v2353, %v2519
    %v2932 = vsub.f32 %v2354, %v2520
    %v2933 = vsub.f32 %v2355, %v2520
    %v2934 = vsub.f32 %v2356, %v2520
    %v2935 = vsub.f32 %v2357, %v2521
    %v2936 = vsub.f32 %v2358, %v2521
    %v2937 = vsub.f32 %v2359, %v2521
    %v2938 = vadd.f32 %v2810, 1e-05
    %v2939 = vadd.f32 %v2811, 1e-05
    %v2940 = vadd.f32 %v2812, 1e-05
    %v2941 = vadd.f32 %v2813, 1e-05
    %v2942 = vadd.f32 %v2814, 1e-05
    %v2943 = vadd.f32 %v2815, 1e-05
    %v2944 = vadd.f32 %v2816, 1e-05
    %v2945 = vadd.f32 %v2817, 1e-05
    %v2946 = vadd.f32 %v2818, 1e-05
    %v2947 = vadd.f32 %v2819, 1e-05
    %v2948 = vadd.f32 %v2820, 1e-05
    %v2949 = vadd.f32 %v2821, 1e-05
    %v2950 = vadd.f32 %v2822, 1e-05
    %v2951 = vadd.f32 %v2823, 1e-05
    %v2952 = vadd.f32 %v2824, 1e-05
    %v2953 = vadd.f32 %v2825, 1e-05
    %v2954 = vadd.f32 %v2826, 1e-05
    %v2955 = vadd.f32 %v2827, 1e-05
    %v2956 = vadd.f32 %v2828, 1e-05
    %v2957 = vadd.f32 %v2829, 1e-05
    %v2958 = vadd.f32 %v2830, 1e-05
    %v2959 = vadd.f32 %v2831, 1e-05
    %v2960 = vadd.f32 %v2832, 1e-05
    %v2961 = vadd.f32 %v2833, 1e-05
    %v2962 = vadd.f32 %v2834, 1e-05
    %v2963 = vadd.f32 %v2835, 1e-05
    %v2964 = vadd.f32 %v2836, 1e-05
    %v2965 = vadd.f32 %v2837, 1e-05
    %v2966 = vadd.f32 %v2838, 1e-05
    %v2967 = vadd.f32 %v2839, 1e-05
    %v2968 = vadd.f32 %v2840, 1e-05
    %v2969 = vadd.f32 %v2841, 1e-05
    %v2970 = vrsqrt.pop %v2938
    %v2971 = vrsqrt.pop %v2939
    %v2972 = vrsqrt.pop %v2940
    %v2973 = vrsqrt.pop %v2941
    %v2974 = vrsqrt.pop %v2942
    %v2975 = vrsqrt.pop %v2943
    %v2976 = vrsqrt.pop %v2944
    %v2977 = vrsqrt.pop %v2945
    %v2978 = vrsqrt.pop %v2946
    %v2979 = vrsqrt.pop %v2947
    %v2980 = vrsqrt.pop %v2948
    %v2981 = vrsqrt.pop %v2949
    %v2982 = vrsqrt.pop %v2950
    %v2983 = vrsqrt.pop %v2951
    %v2984 = vrsqrt.pop %v2952
    %v2985 = vrsqrt.pop %v2953
    %v2986 = vrsqrt.pop %v2954
    %v2987 = vrsqrt.pop %v2955
    %v2988 = vrsqrt.pop %v2956
    %v2989 = vrsqrt.pop %v2957
    %v2990 = vrsqrt.pop %v2958
    %v2991 = vrsqrt.pop %v2959
    %v2992 = vrsqrt.pop %v2960
    %v2993 = vrsqrt.pop %v2961
    %v2994 = vrsqrt.pop %v2962
    %v2995 = vrsqrt.pop %v2963
    %v2996 = vrsqrt.pop %v2964
    %v2997 = vrsqrt.pop %v2965
    %v2998 = vrsqrt.pop %v2966
    %v2999 = vrsqrt.pop %v2967
    %v3000 = vrsqrt.pop %v2968
    %v3001 = vrsqrt.pop %v2969
    %v3002 = vmul.f32 %v2842, %v2970
    %v3003 = vmul.f32 %v2843, %v2970
    %v3004 = vmul.f32 %v2844, %v2970
    %v3005 = vmul.f32 %v2845, %v2971
    %v3006 = vmul.f32 %v2846, %v2971
    %v3007 = vmul.f32 %v2847, %v2971
    %v3008 = vmul.f32 %v2848, %v2972
    %v3009 = vmul.f32 %v2849, %v2972
    %v3010 = vmul.f32 %v2850, %v2972
    %v3011 = vmul.f32 %v2851, %v2973
    %v3012 = vmul.f32 %v2852, %v2973
    %v3013 = vmul.f32 %v2853, %v2973
    %v3014 = vmul.f32 %v2854, %v2974
    %v3015 = vmul.f32 %v2855, %v2974
    %v3016 = vmul.f32 %v2856, %v2974
    %v3017 = vmul.f32 %v2857, %v2975
    %v3018 = vmul.f32 %v2858, %v2975
    %v3019 = vmul.f32 %v2859, %v2975
    %v3020 = vmul.f32 %v2860, %v2976
    %v3021 = vmul.f32 %v2861, %v2976
    %v3022 = vmul.f32 %v2862, %v2976
    %v3023 = vmul.f32 %v2863, %v2977
    %v3024 = vmul.f32 %v2864, %v2977
    %v3025 = vmul.f32 %v2865, %v2977
    %v3026 = vmul.f32 %v2866, %v2978
    %v3027 = vmul.f32 %v2867, %v2978
    %v3028 = vmul.f32 %v2868, %v2978
    %v3029 = vmul.f32 %v2869, %v2979
    %v3030 = vmul.f32 %v2870, %v2979
    %v3031 = vmul.f32 %v2871, %v2979
    %v3032 = vmul.f32 %v2872, %v2980
    %v3033 = vmul.f32 %v2873, %v2980
    %v3034 = vmul.f32 %v2874, %v2980
    %v3035 = vmul.f32 %v2875, %v2981
    %v3036 = vmul.f32 %v2876, %v2981
    %v3037 = vmul.f32 %v2877, %v2981
    %v3038 = vmul.f32 %v2878, %v2982
    %v3039 = vmul.f32 %v2879, %v2982
    %v3040 = vmul.f32 %v2880, %v2982
    %v3041 = vmul.f32 %v2881, %v2983
    %v3042 = vmul.f32 %v2882, %v2983
    %v3043 = vmul.f32 %v2883, %v2983
    %v3044 = vmul.f32 %v2884, %v2984
    %v3045 = vmul.f32 %v2885, %v2984
    %v3046 = vmul.f32 %v2886, %v2984
    %v3047 = vmul.f32 %v2887, %v2985
    %v3048 = vmul.f32 %v2888, %v2985
    %v3049 = vmul.f32 %v2889, %v2985
    %v3050 = vmul.f32 %v2890, %v2986
    %v3051 = vmul.f32 %v2891, %v2986
    %v3052 = vmul.f32 %v2892, %v2986
    %v3053 = vmul.f32 %v2893, %v2987
    %v3054 = vmul.f32 %v2894, %v2987
    %v3055 = vmul.f32 %v2895, %v2987
    %v3056 = vmul.f32 %v2896, %v2988
    %v3057 = vmul.f32 %v2897, %v2988
    %v3058 = vmul.f32 %v2898, %v2988
    %v3059 = vmul.f32 %v2899, %v2989
    %v3060 = vmul.f32 %v2900, %v2989
    %v3061 = vmul.f32 %v2901, %v2989
    %v3062 = vmul.f32 %v2902, %v2990
    %v3063 = vmul.f32 %v2903, %v2990
    %v3064 = vmul.f32 %v2904, %v2990
    %v3065 = vmul.f32 %v2905, %v2991
    %v3066 = vmul.f32 %v2906, %v2991
    %v3067 = vmul.f32 %v2907, %v2991
    %v3068 = vmul.f32 %v2908, %v2992
    %v3069 = vmul.f32 %v2909, %v2992
    %v3070 = vmul.f32 %v2910, %v2992
    %v3071 = vmul.f32 %v2911, %v2993
    %v3072 = vmul.f32 %v2912, %v2993
    %v3073 = vmul.f32 %v2913, %v2993
    %v3074 = vmul.f32 %v2914, %v2994
    %v3075 = vmul.f32 %v2915, %v2994
    %v3076 = vmul.f32 %v2916, %v2994
    %v3077 = vmul.f32 %v2917, %v2995
    %v3078 = vmul.f32 %v2918, %v2995
    %v3079 = vmul.f32 %v2919, %v2995
    %v3080 = vmul.f32 %v2920, %v2996
    %v3081 = vmul.f32 %v2921, %v2996
    %v3082 = vmul.f32 %v2922, %v2996
    %v3083 = vmul.f32 %v2923, %v2997
    %v3084 = vmul.f32 %v2924, %v2997
    %v3085 = vmul.f32 %v2925, %v2997
    %v3086 = vmul.f32 %v2926, %v2998
    %v3087 = vmul.f32 %v2927, %v2998
    %v3088 = vmul.f32 %v2928, %v2998
    %v3089 = vmul.f32 %v2929, %v2999
    %v3090 = vmul.f32 %v2930, %v2999
    %v3091 = vmul.f32 %v2931, %v2999
    %v3092 = vmul.f32 %v2932, %v3000
    %v3093 = vmul.f32 %v2933, %v3000
    %v3094 = vmul.f32 %v2934, %v3000
    %v3095 = vmul.f32 %v2935, %v3001
    %v3096 = vmul.f32 %v2936, %v3001
    %v3097 = vmul.f32 %v2937, %v3001
    %v3099 = vlaneseq
    %v3100 = vshrl.u32 %v3099, 7
    %v3101 = vsub.s32 0, %v3100
    %v3102 = vrot.slane %v2360, %v3101
    %v3103 = vlaneseq
    %v3104 = vshrl.u32 %v3103, 7
    %v3105 = vsub.s32 1, %v3104
    %v3106 = vrot.slane %v2360, %v3105
    %v3107 = vlaneseq
    %v3108 = vshrl.u32 %v3107, 7
    %v3109 = vsub.s32 2, %v3108
    %v3110 = vrot.slane %v2360, %v3109
    %v3114 = vmul.f32 %v3002, %v3102
    %v3115 = vmul.f32 %v3003, %v3106
    %v3116 = vmul.f32 %v3004, %v3110
    %v3117 = vmul.f32 %v3005, %v3102
    %v3118 = vmul.f32 %v3006, %v3106
    %v3119 = vmul.f32 %v3007, %v3110
    %v3120 = vmul.f32 %v3008, %v3102
    %v3121 = vmul.f32 %v3009, %v3106
    %v3122 = vmul.f32 %v3010, %v3110
    %v3123 = vmul.f32 %v3011, %v3102
    %v3124 = vmul.f32 %v3012, %v3106
    %v3125 = vmul.f32 %v3013, %v3110
    %v3126 = vmul.f32 %v3014, %v3102
    %v3127 = vmul.f32 %v3015, %v3106
    %v3128 = vmul.f32 %v3016, %v3110
    %v3129 = vmul.f32 %v3017, %v3102
    %v3130 = vmul.f32 %v3018, %v3106
    %v3131 = vmul.f32 %v3019, %v3110
    %v3132 = vmul.f32 %v3020, %v3102
    %v3133 = vmul.f32 %v3021, %v3106
    %v3134 = vmul.f32 %v3022, %v3110
    %v3135 = vmul.f32 %v3023, %v3102
    %v3136 = vmul.f32 %v3024, %v3106
    %v3137 = vmul.f32 %v3025, %v3110
    %v3138 = vmul.f32 %v3026, %v3102
    %v3139 = vmul.f32 %v3027, %v3106
    %v3140 = vmul.f32 %v3028, %v3110
    %v3141 = vmul.f32 %v3029, %v3102
    %v3142 = vmul.f32 %v3030, %v3106
    %v3143 = vmul.f32 %v3031, %v3110
    %v3144 = vmul.f32 %v3032, %v3102
    %v3145 = vmul.f32 %v3033, %v3106
    %v3146 = vmul.f32 %v3034, %v3110
    %v3147 = vmul.f32 %v3035, %v3102
    %v3148 = vmul.f32 %v3036, %v3106
    %v3149 = vmul.f32 %v3037, %v3110
    %v3150 = vmul.f32 %v3038, %v3102
    %v3151 = vmul.f32 %v3039, %v3106
    %v3152 = vmul.f32 %v3040, %v3110
    %v3153 = vmul.f32 %v3041, %v3102
    %v3154 = vmul.f32 %v3042, %v3106
    %v3155 = vmul.f32 %v3043, %v3110
    %v3156 = vmul.f32 %v3044, %v3102
    %v3157 = vmul.f32 %v3045, %v3106
    %v3158 = vmul.f32 %v3046, %v3110
    %v3159 = vmul.f32 %v3047, %v3102
    %v3160 = vmul.f32 %v3048, %v3106
    %v3161 = vmul.f32 %v3049, %v3110
    %v3162 = vmul.f32 %v3050, %v3102
    %v3163 = vmul.f32 %v3051, %v3106
    %v3164 = vmul.f32 %v3052, %v3110
    %v3165 = vmul.f32 %v3053, %v3102
    %v3166 = vmul.f32 %v3054, %v3106
    %v3167 = vmul.f32 %v3055, %v3110
    %v3168 = vmul.f32 %v3056, %v3102
    %v3169 = vmul.f32 %v3057, %v3106
    %v3170 = vmul.f32 %v3058, %v3110
    %v3171 = vmul.f32 %v3059, %v3102
    %v3172 = vmul.f32 %v3060, %v3106
    %v3173 = vmul.f32 %v3061, %v3110
    %v3174 = vmul.f32 %v3062, %v3102
    %v3175 = vmul.f32 %v3063, %v3106
    %v3176 = vmul.f32 %v3064, %v3110
    %v3177 = vmul.f32 %v3065, %v3102
    %v3178 = vmul.f32 %v3066, %v3106
    %v3179 = vmul.f32 %v3067, %v3110
    %v3180 = vmul.f32 %v3068, %v3102
    %v3181 = vmul.f32 %v3069, %v3106
    %v3182 = vmul.f32 %v3070, %v3110
    %v3183 = vmul.f32 %v3071, %v3102
    %v3184 = vmul.f32 %v3072, %v3106
    %v3185 = vmul.f32 %v3073, %v3110
    %v3186 = vmul.f32 %v3074, %v3102
    %v3187 = vmul.f32 %v3075, %v3106
    %v3188 = vmul.f32 %v3076, %v3110
    %v3189 = vmul.f32 %v3077, %v3102
    %v3190 = vmul.f32 %v3078, %v3106
    %v3191 = vmul.f32 %v3079, %v3110
    %v3192 = vmul.f32 %v3080, %v3102
    %v3193 = vmul.f32 %v3081, %v3106
    %v3194 = vmul.f32 %v3082, %v3110
    %v3195 = vmul.f32 %v3083, %v3102
    %v3196 = vmul.f32 %v3084, %v3106
    %v3197 = vmul.f32 %v3085, %v3110
    %v3198 = vmul.f32 %v3086, %v3102
    %v3199 = vmul.f32 %v3087, %v3106
    %v3200 = vmul.f32 %v3088, %v3110
    %v3201 = vmul.f32 %v3089, %v3102
    %v3202 = vmul.f32 %v3090, %v3106
    %v3203 = vmul.f32 %v3091, %v3110
    %v3204 = vmul.f32 %v3092, %v3102
    %v3205 = vmul.f32 %v3093, %v3106
    %v3206 = vmul.f32 %v3094, %v3110
    %v3207 = vmul.f32 %v3095, %v3102
    %v3208 = vmul.f32 %v3096, %v3106
    %v3209 = vmul.f32 %v3097, %v3110
    %v3211 = vlaneseq
    %v3212 = vshrl.u32 %v3211, 7
    %v3213 = vsub.s32 0, %v3212
    %v3214 = vrot.slane %v2361, %v3213
    %v3215 = vlaneseq
    %v3216 = vshrl.u32 %v3215, 7
    %v3217 = vsub.s32 1, %v3216
    %v3218 = vrot.slane %v2361, %v3217
    %v3219 = vlaneseq
    %v3220 = vshrl.u32 %v3219, 7
    %v3221 = vsub.s32 2, %v3220
    %v3222 = vrot.slane %v2361, %v3221
    %v3226 = vadd.f32 %v3114, %v3214
    %v3227 = vadd.f32 %v3115, %v3218
    %v3228 = vadd.f32 %v3116, %v3222
    %v3229 = vadd.f32 %v3117, %v3214
    %v3230 = vadd.f32 %v3118, %v3218
    %v3231 = vadd.f32 %v3119, %v3222
    %v3232 = vadd.f32 %v3120, %v3214
    %v3233 = vadd.f32 %v3121, %v3218
    %v3234 = vadd.f32 %v3122, %v3222
    %v3235 = vadd.f32 %v3123, %v3214
    %v3236 = vadd.f32 %v3124, %v3218
    %v3237 = vadd.f32 %v3125, %v3222
    %v3238 = vadd.f32 %v3126, %v3214
    %v3239 = vadd.f32 %v3127, %v3218
    %v3240 = vadd.f32 %v3128, %v3222
    %v3241 = vadd.f32 %v3129, %v3214
    %v3242 = vadd.f32 %v3130, %v3218
    %v3243 = vadd.f32 %v3131, %v3222
    %v3244 = vadd.f32 %v3132, %v3214
    %v3245 = vadd.f32 %v3133, %v3218
    %v3246 = vadd.f32 %v3134, %v3222
    %v3247 = vadd.f32 %v3135, %v3214
    %v3248 = vadd.f32 %v3136, %v3218
    %v3249 = vadd.f32 %v3137, %v3222
    %v3250 = vadd.f32 %v3138, %v3214
    %v3251 = vadd.f32 %v3139, %v3218
    %v3252 = vadd.f32 %v3140, %v3222
    %v3253 = vadd.f32 %v3141, %v3214
    %v3254 = vadd.f32 %v3142, %v3218
    %v3255 = vadd.f32 %v3143, %v3222
    %v3256 = vadd.f32 %v3144, %v3214
    %v3257 = vadd.f32 %v3145, %v3218
    %v3258 = vadd.f32 %v3146, %v3222
    %v3259 = vadd.f32 %v3147, %v3214
    %v3260 = vadd.f32 %v3148, %v3218
    %v3261 = vadd.f32 %v3149, %v3222
    %v3262 = vadd.f32 %v3150, %v3214
    %v3263 = vadd.f32 %v3151, %v3218
    %v3264 = vadd.f32 %v3152, %v3222
    %v3265 = vadd.f32 %v3153, %v3214
    %v3266 = vadd.f32 %v3154, %v3218
    %v3267 = vadd.f32 %v3155, %v3222
    %v3268 = vadd.f32 %v3156, %v3214
    %v3269 = vadd.f32 %v3157, %v3218
    %v3270 = vadd.f32 %v3158, %v3222
    %v3271 = vadd.f32 %v3159, %v3214
    %v3272 = vadd.f32 %v3160, %v3218
    %v3273 = vadd.f32 %v3161, %v3222
    %v3274 = vadd.f32 %v3162, %v3214
    %v3275 = vadd.f32 %v3163, %v3218
    %v3276 = vadd.f32 %v3164, %v3222
    %v3277 = vadd.f32 %v3165, %v3214
    %v3278 = vadd.f32 %v3166, %v3218
    %v3279 = vadd.f32 %v3167, %v3222
    %v3280 = vadd.f32 %v3168, %v3214
    %v3281 = vadd.f32 %v3169, %v3218
    %v3282 = vadd.f32 %v3170, %v3222
    %v3283 = vadd.f32 %v3171, %v3214
    %v3284 = vadd.f32 %v3172, %v3218
    %v3285 = vadd.f32 %v3173, %v3222
    %v3286 = vadd.f32 %v3174, %v3214
    %v3287 = vadd.f32 %v3175, %v3218
    %v3288 = vadd.f32 %v3176, %v3222
    %v3289 = vadd.f32 %v3177, %v3214
    %v3290 = vadd.f32 %v3178, %v3218
    %v3291 = vadd.f32 %v3179, %v3222
    %v3292 = vadd.f32 %v3180, %v3214
    %v3293 = vadd.f32 %v3181, %v3218
    %v3294 = vadd.f32 %v3182, %v3222
    %v3295 = vadd.f32 %v3183, %v3214
    %v3296 = vadd.f32 %v3184, %v3218
    %v3297 = vadd.f32 %v3185, %v3222
    %v3298 = vadd.f32 %v3186, %v3214
    %v3299 = vadd.f32 %v3187, %v3218
    %v3300 = vadd.f32 %v3188, %v3222
    %v3301 = vadd.f32 %v3189, %v3214
    %v3302 = vadd.f32 %v3190, %v3218
    %v3303 = vadd.f32 %v3191, %v3222
    %v3304 = vadd.f32 %v3192, %v3214
    %v3305 = vadd.f32 %v3193, %v3218
    %v3306 = vadd.f32 %v3194, %v3222
    %v3307 = vadd.f32 %v3195, %v3214
    %v3308 = vadd.f32 %v3196, %v3218
    %v3309 = vadd.f32 %v3197, %v3222
    %v3310 = vadd.f32 %v3198, %v3214
    %v3311 = vadd.f32 %v3199, %v3218
    %v3312 = vadd.f32 %v3200, %v3222
    %v3313 = vadd.f32 %v3201, %v3214
    %v3314 = vadd.f32 %v3202, %v3218
    %v3315 = vadd.f32 %v3203, %v3222
    %v3316 = vadd.f32 %v3204, %v3214
    %v3317 = vadd.f32 %v3205, %v3218
    %v3318 = vadd.f32 %v3206, %v3222
    %v3319 = vadd.f32 %v3207, %v3214
    %v3320 = vadd.f32 %v3208, %v3218
    %v3321 = vadd.f32 %v3209, %v3222
    %v3322 = vadd.f32 %v3226, %v3227
    %v3323 = vadd.f32 %v3229, %v3230
    %v3324 = vadd.f32 %v3232, %v3233
    %v3325 = vadd.f32 %v3235, %v3236
    %v3326 = vadd.f32 %v3238, %v3239
    %v3327 = vadd.f32 %v3241, %v3242
    %v3328 = vadd.f32 %v3244, %v3245
    %v3329 = vadd.f32 %v3247, %v3248
    %v3330 = vadd.f32 %v3250, %v3251
    %v3331 = vadd.f32 %v3253, %v3254
    %v3332 = vadd.f32 %v3256, %v3257
    %v3333 = vadd.f32 %v3259, %v3260
    %v3334 = vadd.f32 %v3262, %v3263
    %v3335 = vadd.f32 %v3265, %v3266
    %v3336 = vadd.f32 %v3268, %v3269
    %v3337 = vadd.f32 %v3271, %v3272
    %v3338 = vadd.f32 %v3274, %v3275
    %v3339 = vadd.f32 %v3277, %v3278
    %v3340 = vadd.f32 %v3280, %v3281
    %v3341 = vadd.f32 %v3283, %v3284
    %v3342 = vadd.f32 %v3286, %v3287
    %v3343 = vadd.f32 %v3289, %v3290
    %v3344 = vadd.f32 %v3292, %v3293
    %v3345 = vadd.f32 %v3295, %v3296
    %v3346 = vadd.f32 %v3298, %v3299
    %v3347 = vadd.f32 %v3301, %v3302
    %v3348 = vadd.f32 %v3304, %v3305
    %v3349 = vadd.f32 %v3307, %v3308
    %v3350 = vadd.f32 %v3310, %v3311
    %v3351 = vadd.f32 %v3313, %v3314
    %v3352 = vadd.f32 %v3316, %v3317
    %v3353 = vadd.f32 %v3319, %v3320
    %v3354 = vadd.f32 %v3322, %v3228
    %v3355 = vadd.f32 %v3323, %v3231
    %v3356 = vadd.f32 %v3324, %v3234
    %v3357 = vadd.f32 %v3325, %v3237
    %v3358 = vadd.f32 %v3326, %v3240
    %v3359 = vadd.f32 %v3327, %v3243
    %v3360 = vadd.f32 %v3328, %v3246
    %v3361 = vadd.f32 %v3329, %v3249
    %v3362 = vadd.f32 %v3330, %v3252
    %v3363 = vadd.f32 %v3331, %v3255
    %v3364 = vadd.f32 %v3332, %v3258
    %v3365 = vadd.f32 %v3333, %v3261
    %v3366 = vadd.f32 %v3334, %v3264
    %v3367 = vadd.f32 %v3335, %v3267
    %v3368 = vadd.f32 %v3336, %v3270
    %v3369 = vadd.f32 %v3337, %v3273
    %v3370 = vadd.f32 %v3338, %v3276
    %v3371 = vadd.f32 %v3339, %v3279
    %v3372 = vadd.f32 %v3340, %v3282
    %v3373 = vadd.f32 %v3341, %v3285
    %v3374 = vadd.f32 %v3342, %v3288
    %v3375 = vadd.f32 %v3343, %v3291
    %v3376 = vadd.f32 %v3344, %v3294
    %v3377 = vadd.f32 %v3345, %v3297
    %v3378 = vadd.f32 %v3346, %v3300
    %v3379 = vadd.f32 %v3347, %v3303
    %v3380 = vadd.f32 %v3348, %v3306
    %v3381 = vadd.f32 %v3349, %v3309
    %v3382 = vadd.f32 %v3350, %v3312
    %v3383 = vadd.f32 %v3351, %v3315
    %v3384 = vadd.f32 %v3352, %v3318
    %v3385 = vadd.f32 %v3353, %v3321
    %v3386 = vmul.f32 %v3354, 0.33333334
    %v3387 = vmul.f32 %v3355, 0.33333334
    %v3388 = vmul.f32 %v3356, 0.33333334
    %v3389 = vmul.f32 %v3357, 0.33333334
    %v3390 = vmul.f32 %v3358, 0.33333334
    %v3391 = vmul.f32 %v3359, 0.33333334
    %v3392 = vmul.f32 %v3360, 0.33333334
    %v3393 = vmul.f32 %v3361, 0.33333334
    %v3394 = vmul.f32 %v3362, 0.33333334
    %v3395 = vmul.f32 %v3363, 0.33333334
    %v3396 = vmul.f32 %v3364, 0.33333334
    %v3397 = vmul.f32 %v3365, 0.33333334
    %v3398 = vmul.f32 %v3366, 0.33333334
    %v3399 = vmul.f32 %v3367, 0.33333334
    %v3400 = vmul.f32 %v3368, 0.33333334
    %v3401 = vmul.f32 %v3369, 0.33333334
    %v3402 = vmul.f32 %v3370, 0.33333334
    %v3403 = vmul.f32 %v3371, 0.33333334
    %v3404 = vmul.f32 %v3372, 0.33333334
    %v3405 = vmul.f32 %v3373, 0.33333334
    %v3406 = vmul.f32 %v3374, 0.33333334
    %v3407 = vmul.f32 %v3375, 0.33333334
    %v3408 = vmul.f32 %v3376, 0.33333334
    %v3409 = vmul.f32 %v3377, 0.33333334
    %v3410 = vmul.f32 %v3378, 0.33333334
    %v3411 = vmul.f32 %v3379, 0.33333334
    %v3412 = vmul.f32 %v3380, 0.33333334
    %v3413 = vmul.f32 %v3381, 0.33333334
    %v3414 = vmul.f32 %v3382, 0.33333334
    %v3415 = vmul.f32 %v3383, 0.33333334
    %v3416 = vmul.f32 %v3384, 0.33333334
    %v3417 = vmul.f32 %v3385, 0.33333334
    %v3418 = vmul.f32 %v3386, %v1142
    %v3419 = vmul.f32 %v3387, %v1143
    %v3420 = vmul.f32 %v3388, %v1144
    %v3421 = vmul.f32 %v3389, %v1145
    %v3422 = vmul.f32 %v3390, %v1146
    %v3423 = vmul.f32 %v3391, %v1147
    %v3424 = vmul.f32 %v3392, %v1148
    %v3425 = vmul.f32 %v3393, %v1149
    %v3426 = vmul.f32 %v3394, %v1150
    %v3427 = vmul.f32 %v3395, %v1151
    %v3428 = vmul.f32 %v3396, %v1152
    %v3429 = vmul.f32 %v3397, %v1153
    %v3430 = vmul.f32 %v3398, %v1154
    %v3431 = vmul.f32 %v3399, %v1155
    %v3432 = vmul.f32 %v3400, %v1156
    %v3433 = vmul.f32 %v3401, %v1157
    %v3434 = vmul.f32 %v3402, %v1158
    %v3435 = vmul.f32 %v3403, %v1159
    %v3436 = vmul.f32 %v3404, %v1160
    %v3437 = vmul.f32 %v3405, %v1161
    %v3438 = vmul.f32 %v3406, %v1162
    %v3439 = vmul.f32 %v3407, %v1163
    %v3440 = vmul.f32 %v3408, %v1164
    %v3441 = vmul.f32 %v3409, %v1165
    %v3442 = vmul.f32 %v3410, %v1166
    %v3443 = vmul.f32 %v3411, %v1167
    %v3444 = vmul.f32 %v3412, %v1168
    %v3445 = vmul.f32 %v3413, %v1169
    %v3446 = vmul.f32 %v3414, %v1170
    %v3447 = vmul.f32 %v3415, %v1171
    %v3448 = vmul.f32 %v3416, %v1172
    %v3449 = vmul.f32 %v3417, %v1173
    %v3450 = vpack.c.bf16 %v3419, %v3418
    %v3451 = vpack.c.bf16 %v3421, %v3420
    %v3452 = vpack.c.bf16 %v3423, %v3422
    %v3453 = vpack.c.bf16 %v3425, %v3424
    %v3454 = vpack.c.bf16 %v3427, %v3426
    %v3455 = vpack.c.bf16 %v3429, %v3428
    %v3456 = vpack.c.bf16 %v3431, %v3430
    %v3457 = vpack.c.bf16 %v3433, %v3432
    %v3458 = vpack.c.bf16 %v3435, %v3434
    %v3459 = vpack.c.bf16 %v3437, %v3436
    %v3460 = vpack.c.bf16 %v3439, %v3438
    %v3461 = vpack.c.bf16 %v3441, %v3440
    %v3462 = vpack.c.bf16 %v3443, %v3442
    %v3463 = vpack.c.bf16 %v3445, %v3444
    %v3464 = vpack.c.bf16 %v3447, %v3446
    %v3465 = vpack.c.bf16 %v3449, %v3448
    %v3466 = vld [vmem:[#allocation9] sm:$0xf]
    %v3467 = vld [vmem:[#allocation9 + $0x4] sm:$0xf]
    %v3468 = vld [vmem:[#allocation9 + $0x8] sm:$0xf]
    %v3469 = vld [vmem:[#allocation9 + $0xc] sm:$0xf]
    %v3470 = vld [vmem:[#allocation9 + $0x10] sm:$0xf]
    %v3471 = vld [vmem:[#allocation9 + $0x14] sm:$0xf]
    %v3472 = vld [vmem:[#allocation9 + $0x18] sm:$0xf]
    %v3473 = vld [vmem:[#allocation9 + $0x1c] sm:$0xf]
    %v3474 = vld [vmem:[#allocation9 + $0x20] sm:$0xf]
    %v3475 = vld [vmem:[#allocation9 + $0x24] sm:$0xf]
    %v3476 = vld [vmem:[#allocation9 + $0x28] sm:$0xf]
    %v3477 = vld [vmem:[#allocation9 + $0x2c] sm:$0xf]
    %v3478 = vld [vmem:[#allocation9 + $0x30] sm:$0xf]
    %v3479 = vld [vmem:[#allocation9 + $0x34] sm:$0xf]
    %v3480 = vld [vmem:[#allocation9 + $0x38] sm:$0xf]
    %v3481 = vld [vmem:[#allocation9 + $0x3c] sm:$0xf]
    %v3482 = vld [vmem:[%s8] sm:$0x1]
    %v3484 = vlaneseq
    %v3485 = vshrl.u32 %v3484, 7
    %v3486 = vsub.s32 0, %v3485
    %v3487 = vrot.slane %v3482, %v3486
    %v3505 = vunpack.c.l.b16 %v3466
    %v3506 = vunpack.c.l.b16 %v3467
    %v3507 = vunpack.c.l.b16 %v3468
    %v3508 = vunpack.c.l.b16 %v3469
    %v3509 = vunpack.c.l.b16 %v3470
    %v3510 = vunpack.c.l.b16 %v3471
    %v3511 = vunpack.c.l.b16 %v3472
    %v3512 = vunpack.c.l.b16 %v3473
    %v3513 = vunpack.c.l.b16 %v3474
    %v3514 = vunpack.c.l.b16 %v3475
    %v3515 = vunpack.c.l.b16 %v3476
    %v3516 = vunpack.c.l.b16 %v3477
    %v3517 = vunpack.c.l.b16 %v3478
    %v3518 = vunpack.c.l.b16 %v3479
    %v3519 = vunpack.c.l.b16 %v3480
    %v3520 = vunpack.c.l.b16 %v3481
    %v3521 = vpack.c.b16 %v3506, %v3505
    %v3522 = vpack.c.b16 %v3508, %v3507
    %v3523 = vpack.c.b16 %v3510, %v3509
    %v3524 = vpack.c.b16 %v3512, %v3511
    %v3525 = vpack.c.b16 %v3514, %v3513
    %v3526 = vpack.c.b16 %v3516, %v3515
    %v3527 = vpack.c.b16 %v3518, %v3517
    %v3528 = vpack.c.b16 %v3520, %v3519
    %3537 = vmatprep.subr.bf16.mxu0 0
    %3538 = vmatpush1.bf16.msra.mxu0 %v3521
    %3539 = vmatprep.subr.bf16.mxu0 0
    %3540 = vmatpush1.bf16.msra.mxu0 %v3522
    %3541 = vmatprep.subr.bf16.mxu0 0
    %3542 = vmatpush1.bf16.msra.mxu0 %v3523
    %3543 = vmatprep.subr.bf16.mxu0 0
    %3544 = vmatpush1.bf16.msra.mxu0 %v3524
    %3545 = vmatprep.subr.bf16.mxu0 0
    %3546 = vmatpush1.bf16.msra.mxu0 %v3525
    %3547 = vmatprep.subr.bf16.mxu0 0
    %3548 = vmatpush1.bf16.msra.mxu0 %v3526
    %3549 = vmatprep.subr.bf16.mxu0 0
    %3550 = vmatpush1.bf16.msra.mxu0 %v3527
    %3551 = vmatprep.subr.bf16.mxu0 0
    %3552 = vmatpush1.bf16.msra.mxu0 %v3528
    %3553 = vmatprep.subr.bf16.mxu0 0
    %3554 = vmatpush1.bf16.msra.mxu0 0
    %3555 = vmatprep.subr.bf16.mxu0 0
    %3556 = vmatpush1.bf16.msra.mxu0 0
    %3557 = vmatprep.subr.bf16.mxu0 0
    %3558 = vmatpush1.bf16.msra.mxu0 0
    %3559 = vmatprep.subr.bf16.mxu0 0
    %3560 = vmatpush1.bf16.msra.mxu0 0
    %3561 = vmatprep.subr.bf16.mxu0 0
    %3562 = vmatpush1.bf16.msra.mxu0 0
    %3563 = vmatprep.subr.bf16.mxu0 0
    %3564 = vmatpush1.bf16.msra.mxu0 0
    %3565 = vmatprep.subr.bf16.mxu0 0
    %3566 = vmatpush1.bf16.msra.mxu0 0
    %3567 = vmatprep.subr.bf16.mxu0 0
    %3568 = vmatpush1.bf16.msra.mxu0 0
    %3569 = vmatprep.mubr.bf16.mxu0 0
    %3570 = vmatmul.mubr.bf16.gmra.mrb[0].mxu0 %v3450
    %v3571 = vpop.f32.mrb[0].mxu0
    %v3572 = vadd.f32 %v3487, %v3571
    %v3573 = vpop.f32.mrb[0].mxu0
    %v3574 = vpop.f32.mrb[0].mxu0
    %v3575 = vadd.f32 %v3487, %v3574
    %v3576 = vpop.f32.mrb[0].mxu0
    %3577 = vmatprep.mubr.bf16.mxu0 0
    %3578 = vmatmul.mubr.bf16.gmra.mrb[0].mxu0 %v3451
    %v3579 = vpop.f32.mrb[0].mxu0
    %v3580 = vadd.f32 %v3487, %v3579
    %v3581 = vpop.f32.mrb[0].mxu0
    %v3582 = vpop.f32.mrb[0].mxu0
    %v3583 = vadd.f32 %v3487, %v3582
    %v3584 = vpop.f32.mrb[0].mxu0
    %3585 = vmatprep.mubr.bf16.mxu0 0
    %3586 = vmatmul.mubr.bf16.gmra.mrb[0].mxu0 %v3452
    %v3587 = vpop.f32.mrb[0].mxu0
    %v3588 = vadd.f32 %v3487, %v3587
    %v3589 = vpop.f32.mrb[0].mxu0
    %v3590 = vpop.f32.mrb[0].mxu0
    %v3591 = vadd.f32 %v3487, %v3590
    %v3592 = vpop.f32.mrb[0].mxu0
    %3593 = vmatprep.mubr.bf16.mxu0 0
    %3594 = vmatmul.mubr.bf16.gmra.mrb[0].mxu0 %v3453
    %v3595 = vpop.f32.mrb[0].mxu0
    %v3596 = vadd.f32 %v3487, %v3595
    %v3597 = vpop.f32.mrb[0].mxu0
    %v3598 = vpop.f32.mrb[0].mxu0
    %v3599 = vadd.f32 %v3487, %v3598
    %v3600 = vpop.f32.mrb[0].mxu0
    %3601 = vmatprep.mubr.bf16.mxu0 0
    %3602 = vmatmul.mubr.bf16.gmra.mrb[0].mxu0 %v3454
    %v3603 = vpop.f32.mrb[0].mxu0
    %v3604 = vadd.f32 %v3487, %v3603
    %v3605 = vpop.f32.mrb[0].mxu0
    %v3606 = vpop.f32.mrb[0].mxu0
    %v3607 = vadd.f32 %v3487, %v3606
    %v3608 = vpop.f32.mrb[0].mxu0
    %3609 = vmatprep.mubr.bf16.mxu0 0
    %3610 = vmatmul.mubr.bf16.gmra.mrb[0].mxu0 %v3455
    %v3611 = vpop.f32.mrb[0].mxu0
    %v3612 = vadd.f32 %v3487, %v3611
    %v3613 = vpop.f32.mrb[0].mxu0
    %v3614 = vpop.f32.mrb[0].mxu0
    %v3615 = vadd.f32 %v3487, %v3614
    %v3616 = vpop.f32.mrb[0].mxu0
    %3617 = vmatprep.mubr.bf16.mxu0 0
    %3618 = vmatmul.mubr.bf16.gmra.mrb[0].mxu0 %v3456
    %v3619 = vpop.f32.mrb[0].mxu0
    %v3620 = vadd.f32 %v3487, %v3619
    %v3621 = vpop.f32.mrb[0].mxu0
    %v3622 = vpop.f32.mrb[0].mxu0
    %v3623 = vadd.f32 %v3487, %v3622
    %v3624 = vpop.f32.mrb[0].mxu0
    %3625 = vmatprep.mubr.bf16.mxu0 0
    %3626 = vmatmul.mubr.bf16.gmra.mrb[0].mxu0 %v3457
    %v3627 = vpop.f32.mrb[0].mxu0
    %v3628 = vadd.f32 %v3487, %v3627
    %v3629 = vpop.f32.mrb[0].mxu0
    %v3630 = vpop.f32.mrb[0].mxu0
    %v3631 = vadd.f32 %v3487, %v3630
    %v3632 = vpop.f32.mrb[0].mxu0
    %3633 = vmatprep.mubr.bf16.mxu0 0
    %3634 = vmatmul.mubr.bf16.gmra.mrb[0].mxu0 %v3458
    %v3635 = vpop.f32.mrb[0].mxu0
    %v3636 = vadd.f32 %v3487, %v3635
    %v3637 = vpop.f32.mrb[0].mxu0
    %v3638 = vpop.f32.mrb[0].mxu0
    %v3639 = vadd.f32 %v3487, %v3638
    %v3640 = vpop.f32.mrb[0].mxu0
    %3641 = vmatprep.mubr.bf16.mxu0 0
    %3642 = vmatmul.mubr.bf16.gmra.mrb[0].mxu0 %v3459
    %v3643 = vpop.f32.mrb[0].mxu0
    %v3644 = vadd.f32 %v3487, %v3643
    %v3645 = vpop.f32.mrb[0].mxu0
    %v3646 = vpop.f32.mrb[0].mxu0
    %v3647 = vadd.f32 %v3487, %v3646
    %v3648 = vpop.f32.mrb[0].mxu0
    %3649 = vmatprep.mubr.bf16.mxu0 0
    %3650 = vmatmul.mubr.bf16.gmra.mrb[0].mxu0 %v3460
    %v3651 = vpop.f32.mrb[0].mxu0
    %v3652 = vadd.f32 %v3487, %v3651
    %v3653 = vpop.f32.mrb[0].mxu0
    %v3654 = vpop.f32.mrb[0].mxu0
    %v3655 = vadd.f32 %v3487, %v3654
    %v3656 = vpop.f32.mrb[0].mxu0
    %3657 = vmatprep.mubr.bf16.mxu0 0
    %3658 = vmatmul.mubr.bf16.gmra.mrb[0].mxu0 %v3461
    %v3659 = vpop.f32.mrb[0].mxu0
    %v3660 = vadd.f32 %v3487, %v3659
    %v3661 = vpop.f32.mrb[0].mxu0
    %v3662 = vpop.f32.mrb[0].mxu0
    %v3663 = vadd.f32 %v3487, %v3662
    %v3664 = vpop.f32.mrb[0].mxu0
    %3665 = vmatprep.mubr.bf16.mxu0 0
    %3666 = vmatmul.mubr.bf16.gmra.mrb[0].mxu0 %v3462
    %v3667 = vpop.f32.mrb[0].mxu0
    %v3668 = vadd.f32 %v3487, %v3667
    %v3669 = vpop.f32.mrb[0].mxu0
    %v3670 = vpop.f32.mrb[0].mxu0
    %v3671 = vadd.f32 %v3487, %v3670
    %v3672 = vpop.f32.mrb[0].mxu0
    %3673 = vmatprep.mubr.bf16.mxu0 0
    %3674 = vmatmul.mubr.bf16.gmra.mrb[0].mxu0 %v3463
    %v3675 = vpop.f32.mrb[0].mxu0
    %v3676 = vadd.f32 %v3487, %v3675
    %v3677 = vpop.f32.mrb[0].mxu0
    %v3678 = vpop.f32.mrb[0].mxu0
    %v3679 = vadd.f32 %v3487, %v3678
    %v3680 = vpop.f32.mrb[0].mxu0
    %3681 = vmatprep.mubr.bf16.mxu0 0
    %3682 = vmatmul.mubr.bf16.gmra.mrb[0].mxu0 %v3464
    %v3683 = vpop.f32.mrb[0].mxu0
    %v3684 = vadd.f32 %v3487, %v3683
    %v3685 = vpop.f32.mrb[0].mxu0
    %v3686 = vpop.f32.mrb[0].mxu0
    %v3687 = vadd.f32 %v3487, %v3686
    %v3688 = vpop.f32.mrb[0].mxu0
    %3689 = vmatprep.mubr.bf16.mxu0 0
    %3690 = vmatmul.mubr.bf16.gmra.mrb[0].mxu0 %v3465
    %v3691 = vpop.f32.mrb[0].mxu0
    %v3692 = vadd.f32 %v3487, %v3691
    %v3693 = vpop.f32.mrb[0].mxu0
    %v3694 = vpop.f32.mrb[0].mxu0
    %v3695 = vadd.f32 %v3487, %v3694
    %v3696 = vpop.f32.mrb[0].mxu0
    %3697 = vdwg.mxu0
    %v3698 = vxor.u32 %v3572, 2147483648
    %v3699 = vxor.u32 %v3575, 2147483648
    %v3700 = vxor.u32 %v3580, 2147483648
    %v3701 = vxor.u32 %v3583, 2147483648
    %v3702 = vxor.u32 %v3588, 2147483648
    %v3703 = vxor.u32 %v3591, 2147483648
    %v3704 = vxor.u32 %v3596, 2147483648
    %v3705 = vxor.u32 %v3599, 2147483648
    %v3706 = vxor.u32 %v3604, 2147483648
    %v3707 = vxor.u32 %v3607, 2147483648
    %v3708 = vxor.u32 %v3612, 2147483648
    %v3709 = vxor.u32 %v3615, 2147483648
    %v3710 = vxor.u32 %v3620, 2147483648
    %v3711 = vxor.u32 %v3623, 2147483648
    %v3712 = vxor.u32 %v3628, 2147483648
    %v3713 = vxor.u32 %v3631, 2147483648
    %v3714 = vxor.u32 %v3636, 2147483648
    %v3715 = vxor.u32 %v3639, 2147483648
    %v3716 = vxor.u32 %v3644, 2147483648
    %v3717 = vxor.u32 %v3647, 2147483648
    %v3718 = vxor.u32 %v3652, 2147483648
    %v3719 = vxor.u32 %v3655, 2147483648
    %v3720 = vxor.u32 %v3660, 2147483648
    %v3721 = vxor.u32 %v3663, 2147483648
    %v3722 = vxor.u32 %v3668, 2147483648
    %v3723 = vxor.u32 %v3671, 2147483648
    %v3724 = vxor.u32 %v3676, 2147483648
    %v3725 = vxor.u32 %v3679, 2147483648
    %v3726 = vxor.u32 %v3684, 2147483648
    %v3727 = vxor.u32 %v3687, 2147483648
    %v3728 = vxor.u32 %v3692, 2147483648
    %v3729 = vxor.u32 %v3695, 2147483648
    %v3730 = vmul.f32 %v3698, 1.442695
    %v3731 = vpow.pop %v3730
    %v3732 = vmul.f32 %v3699, 1.442695
    %v3733 = vpow.pop %v3732
    %v3734 = vmul.f32 %v3700, 1.442695
    %v3735 = vpow.pop %v3734
    %v3736 = vmul.f32 %v3701, 1.442695
    %v3737 = vpow.pop %v3736
    %v3738 = vmul.f32 %v3702, 1.442695
    %v3739 = vpow.pop %v3738
    %v3740 = vmul.f32 %v3703, 1.442695
    %v3741 = vpow.pop %v3740
    %v3742 = vmul.f32 %v3704, 1.442695
    %v3743 = vpow.pop %v3742
    %v3744 = vmul.f32 %v3705, 1.442695
    %v3745 = vpow.pop %v3744
    %v3746 = vmul.f32 %v3706, 1.442695
    %v3747 = vpow.pop %v3746
    %v3748 = vmul.f32 %v3707, 1.442695
    %v3749 = vpow.pop %v3748
    %v3750 = vmul.f32 %v3708, 1.442695
    %v3751 = vpow.pop %v3750
    %v3752 = vmul.f32 %v3709, 1.442695
    %v3753 = vpow.pop %v3752
    %v3754 = vmul.f32 %v3710, 1.442695
    %v3755 = vpow.pop %v3754
    %v3756 = vmul.f32 %v3711, 1.442695
    %v3757 = vpow.pop %v3756
    %v3758 = vmul.f32 %v3712, 1.442695
    %v3759 = vpow.pop %v3758
    %v3760 = vmul.f32 %v3713, 1.442695
    %v3761 = vpow.pop %v3760
    %v3762 = vmul.f32 %v3714, 1.442695
    %v3763 = vpow.pop %v3762
    %v3764 = vmul.f32 %v3715, 1.442695
    %v3765 = vpow.pop %v3764
    %v3766 = vmul.f32 %v3716, 1.442695
    %v3767 = vpow.pop %v3766
    %v3768 = vmul.f32 %v3717, 1.442695
    %v3769 = vpow.pop %v3768
    %v3770 = vmul.f32 %v3718, 1.442695
    %v3771 = vpow.pop %v3770
    %v3772 = vmul.f32 %v3719, 1.442695
    %v3773 = vpow.pop %v3772
    %v3774 = vmul.f32 %v3720, 1.442695
    %v3775 = vpow.pop %v3774
    %v3776 = vmul.f32 %v3721, 1.442695
    %v3777 = vpow.pop %v3776
    %v3778 = vmul.f32 %v3722, 1.442695
    %v3779 = vpow.pop %v3778
    %v3780 = vmul.f32 %v3723, 1.442695
    %v3781 = vpow.pop %v3780
    %v3782 = vmul.f32 %v3724, 1.442695
    %v3783 = vpow.pop %v3782
    %v3784 = vmul.f32 %v3725, 1.442695
    %v3785 = vpow.pop %v3784
    %v3786 = vmul.f32 %v3726, 1.442695
    %v3787 = vpow.pop %v3786
    %v3788 = vmul.f32 %v3727, 1.442695
    %v3789 = vpow.pop %v3788
    %v3790 = vmul.f32 %v3728, 1.442695
    %v3791 = vpow.pop %v3790
    %v3792 = vmul.f32 %v3729, 1.442695
    %v3793 = vpow.pop %v3792
    %v3794 = vadd.f32 %v3731, 1.0
    %v3795 = vadd.f32 %v3733, 1.0
    %v3796 = vadd.f32 %v3735, 1.0
    %v3797 = vadd.f32 %v3737, 1.0
    %v3798 = vadd.f32 %v3739, 1.0
    %v3799 = vadd.f32 %v3741, 1.0
    %v3800 = vadd.f32 %v3743, 1.0
    %v3801 = vadd.f32 %v3745, 1.0
    %v3802 = vadd.f32 %v3747, 1.0
    %v3803 = vadd.f32 %v3749, 1.0
    %v3804 = vadd.f32 %v3751, 1.0
    %v3805 = vadd.f32 %v3753, 1.0
    %v3806 = vadd.f32 %v3755, 1.0
    %v3807 = vadd.f32 %v3757, 1.0
    %v3808 = vadd.f32 %v3759, 1.0
    %v3809 = vadd.f32 %v3761, 1.0
    %v3810 = vadd.f32 %v3763, 1.0
    %v3811 = vadd.f32 %v3765, 1.0
    %v3812 = vadd.f32 %v3767, 1.0
    %v3813 = vadd.f32 %v3769, 1.0
    %v3814 = vadd.f32 %v3771, 1.0
    %v3815 = vadd.f32 %v3773, 1.0
    %v3816 = vadd.f32 %v3775, 1.0
    %v3817 = vadd.f32 %v3777, 1.0
    %v3818 = vadd.f32 %v3779, 1.0
    %v3819 = vadd.f32 %v3781, 1.0
    %v3820 = vadd.f32 %v3783, 1.0
    %v3821 = vadd.f32 %v3785, 1.0
    %v3822 = vadd.f32 %v3787, 1.0
    %v3823 = vadd.f32 %v3789, 1.0
    %v3824 = vadd.f32 %v3791, 1.0
    %v3825 = vadd.f32 %v3793, 1.0
    %v3826 = vrcp.pop %v3794
    %v3827 = vmul.f32 1.0, %v3826
    %v3828 = vrcp.pop %v3795
    %v3829 = vmul.f32 1.0, %v3828
    %v3830 = vrcp.pop %v3796
    %v3831 = vmul.f32 1.0, %v3830
    %v3832 = vrcp.pop %v3797
    %v3833 = vmul.f32 1.0, %v3832
    %v3834 = vrcp.pop %v3798
    %v3835 = vmul.f32 1.0, %v3834
    %v3836 = vrcp.pop %v3799
    %v3837 = vmul.f32 1.0, %v3836
    %v3838 = vrcp.pop %v3800
    %v3839 = vmul.f32 1.0, %v3838
    %v3840 = vrcp.pop %v3801
    %v3841 = vmul.f32 1.0, %v3840
    %v3842 = vrcp.pop %v3802
    %v3843 = vmul.f32 1.0, %v3842
    %v3844 = vrcp.pop %v3803
    %v3845 = vmul.f32 1.0, %v3844
    %v3846 = vrcp.pop %v3804
    %v3847 = vmul.f32 1.0, %v3846
    %v3848 = vrcp.pop %v3805
    %v3849 = vmul.f32 1.0, %v3848
    %v3850 = vrcp.pop %v3806
    %v3851 = vmul.f32 1.0, %v3850
    %v3852 = vrcp.pop %v3807
    %v3853 = vmul.f32 1.0, %v3852
    %v3854 = vrcp.pop %v3808
    %v3855 = vmul.f32 1.0, %v3854
    %v3856 = vrcp.pop %v3809
    %v3857 = vmul.f32 1.0, %v3856
    %v3858 = vrcp.pop %v3810
    %v3859 = vmul.f32 1.0, %v3858
    %v3860 = vrcp.pop %v3811
    %v3861 = vmul.f32 1.0, %v3860
    %v3862 = vrcp.pop %v3812
    %v3863 = vmul.f32 1.0, %v3862
    %v3864 = vrcp.pop %v3813
    %v3865 = vmul.f32 1.0, %v3864
    %v3866 = vrcp.pop %v3814
    %v3867 = vmul.f32 1.0, %v3866
    %v3868 = vrcp.pop %v3815
    %v3869 = vmul.f32 1.0, %v3868
    %v3870 = vrcp.pop %v3816
    %v3871 = vmul.f32 1.0, %v3870
    %v3872 = vrcp.pop %v3817
    %v3873 = vmul.f32 1.0, %v3872
    %v3874 = vrcp.pop %v3818
    %v3875 = vmul.f32 1.0, %v3874
    %v3876 = vrcp.pop %v3819
    %v3877 = vmul.f32 1.0, %v3876
    %v3878 = vrcp.pop %v3820
    %v3879 = vmul.f32 1.0, %v3878
    %v3880 = vrcp.pop %v3821
    %v3881 = vmul.f32 1.0, %v3880
    %v3882 = vrcp.pop %v3822
    %v3883 = vmul.f32 1.0, %v3882
    %v3884 = vrcp.pop %v3823
    %v3885 = vmul.f32 1.0, %v3884
    %v3886 = vrcp.pop %v3824
    %v3887 = vmul.f32 1.0, %v3886
    %v3888 = vrcp.pop %v3825
    %v3889 = vmul.f32 1.0, %v3888
    %v3890 = vmul.f32 %v3572, %v3827
    %v3891 = vmul.f32 %v3575, %v3829
    %v3892 = vmul.f32 %v3580, %v3831
    %v3893 = vmul.f32 %v3583, %v3833
    %v3894 = vmul.f32 %v3588, %v3835
    %v3895 = vmul.f32 %v3591, %v3837
    %v3896 = vmul.f32 %v3596, %v3839
    %v3897 = vmul.f32 %v3599, %v3841
    %v3898 = vmul.f32 %v3604, %v3843
    %v3899 = vmul.f32 %v3607, %v3845
    %v3900 = vmul.f32 %v3612, %v3847
    %v3901 = vmul.f32 %v3615, %v3849
    %v3902 = vmul.f32 %v3620, %v3851
    %v3903 = vmul.f32 %v3623, %v3853
    %v3904 = vmul.f32 %v3628, %v3855
    %v3905 = vmul.f32 %v3631, %v3857
    %v3906 = vmul.f32 %v3636, %v3859
    %v3907 = vmul.f32 %v3639, %v3861
    %v3908 = vmul.f32 %v3644, %v3863
    %v3909 = vmul.f32 %v3647, %v3865
    %v3910 = vmul.f32 %v3652, %v3867
    %v3911 = vmul.f32 %v3655, %v3869
    %v3912 = vmul.f32 %v3660, %v3871
    %v3913 = vmul.f32 %v3663, %v3873
    %v3914 = vmul.f32 %v3668, %v3875
    %v3915 = vmul.f32 %v3671, %v3877
    %v3916 = vmul.f32 %v3676, %v3879
    %v3917 = vmul.f32 %v3679, %v3881
    %v3918 = vmul.f32 %v3684, %v3883
    %v3919 = vmul.f32 %v3687, %v3885
    %v3920 = vmul.f32 %v3692, %v3887
    %v3921 = vmul.f32 %v3695, %v3889
    %v3922 = vld [vmem:[%s9] sm:$0x1]
    %v3923 = vld [vmem:[%s10] sm:$0x1]
    %3924 = vadd.xlane.f32.xlu0 %v3890
    %v3925 = vpop.xlane.xlu0 %3924
    %3926 = vadd.xlane.f32.xlu0 %v3891
    %v3927 = vpop.xlane.xlu0 %3926
    %3928 = vadd.xlane.f32.xlu0 %v3892
    %v3929 = vpop.xlane.xlu0 %3928
    %3930 = vadd.xlane.f32.xlu0 %v3893
    %v3931 = vpop.xlane.xlu0 %3930
    %3932 = vadd.xlane.f32.xlu0 %v3894
    %v3933 = vpop.xlane.xlu0 %3932
    %3934 = vadd.xlane.f32.xlu0 %v3895
    %v3935 = vpop.xlane.xlu0 %3934
    %3936 = vadd.xlane.f32.xlu0 %v3896
    %v3937 = vpop.xlane.xlu0 %3936
    %3938 = vadd.xlane.f32.xlu0 %v3897
    %v3939 = vpop.xlane.xlu0 %3938
    %3940 = vadd.xlane.f32.xlu0 %v3898
    %v3941 = vpop.xlane.xlu0 %3940
    %3942 = vadd.xlane.f32.xlu0 %v3899
    %v3943 = vpop.xlane.xlu0 %3942
    %3944 = vadd.xlane.f32.xlu0 %v3900
    %v3945 = vpop.xlane.xlu0 %3944
    %3946 = vadd.xlane.f32.xlu0 %v3901
    %v3947 = vpop.xlane.xlu0 %3946
    %3948 = vadd.xlane.f32.xlu0 %v3902
    %v3949 = vpop.xlane.xlu0 %3948
    %3950 = vadd.xlane.f32.xlu0 %v3903
    %v3951 = vpop.xlane.xlu0 %3950
    %3952 = vadd.xlane.f32.xlu0 %v3904
    %v3953 = vpop.xlane.xlu0 %3952
    %3954 = vadd.xlane.f32.xlu0 %v3905
    %v3955 = vpop.xlane.xlu0 %3954
    %3956 = vadd.xlane.f32.xlu0 %v3906
    %v3957 = vpop.xlane.xlu0 %3956
    %3958 = vadd.xlane.f32.xlu0 %v3907
    %v3959 = vpop.xlane.xlu0 %3958
    %3960 = vadd.xlane.f32.xlu0 %v3908
    %v3961 = vpop.xlane.xlu0 %3960
    %3962 = vadd.xlane.f32.xlu0 %v3909
    %v3963 = vpop.xlane.xlu0 %3962
    %3964 = vadd.xlane.f32.xlu0 %v3910
    %v3965 = vpop.xlane.xlu0 %3964
    %3966 = vadd.xlane.f32.xlu0 %v3911
    %v3967 = vpop.xlane.xlu0 %3966
    %3968 = vadd.xlane.f32.xlu0 %v3912
    %v3969 = vpop.xlane.xlu0 %3968
    %3970 = vadd.xlane.f32.xlu0 %v3913
    %v3971 = vpop.xlane.xlu0 %3970
    %3972 = vadd.xlane.f32.xlu0 %v3914
    %v3973 = vpop.xlane.xlu0 %3972
    %3974 = vadd.xlane.f32.xlu0 %v3915
    %v3975 = vpop.xlane.xlu0 %3974
    %3976 = vadd.xlane.f32.xlu0 %v3916
    %v3977 = vpop.xlane.xlu0 %3976
    %3978 = vadd.xlane.f32.xlu0 %v3917
    %v3979 = vpop.xlane.xlu0 %3978
    %3980 = vadd.xlane.f32.xlu0 %v3918
    %v3981 = vpop.xlane.xlu0 %3980
    %3982 = vadd.xlane.f32.xlu0 %v3919
    %v3983 = vpop.xlane.xlu0 %3982
    %3984 = vadd.xlane.f32.xlu0 %v3920
    %v3985 = vpop.xlane.xlu0 %3984
    %3986 = vadd.xlane.f32.xlu0 %v3921
    %v3987 = vpop.xlane.xlu0 %3986
    %v3988 = vmul.f32 %v3925, 0.03125
    %v3989 = vmul.f32 %v3927, 0.03125
    %v3990 = vmul.f32 %v3929, 0.03125
    %v3991 = vmul.f32 %v3931, 0.03125
    %v3992 = vmul.f32 %v3933, 0.03125
    %v3993 = vmul.f32 %v3935, 0.03125
    %v3994 = vmul.f32 %v3937, 0.03125
    %v3995 = vmul.f32 %v3939, 0.03125
    %v3996 = vmul.f32 %v3941, 0.03125
    %v3997 = vmul.f32 %v3943, 0.03125
    %v3998 = vmul.f32 %v3945, 0.03125
    %v3999 = vmul.f32 %v3947, 0.03125
    %v4000 = vmul.f32 %v3949, 0.03125
    %v4001 = vmul.f32 %v3951, 0.03125
    %v4002 = vmul.f32 %v3953, 0.03125
    %v4003 = vmul.f32 %v3955, 0.03125
    %v4004 = vmul.f32 %v3957, 0.03125
    %v4005 = vmul.f32 %v3959, 0.03125
    %v4006 = vmul.f32 %v3961, 0.03125
    %v4007 = vmul.f32 %v3963, 0.03125
    %v4008 = vmul.f32 %v3965, 0.03125
    %v4009 = vmul.f32 %v3967, 0.03125
    %v4010 = vmul.f32 %v3969, 0.03125
    %v4011 = vmul.f32 %v3971, 0.03125
    %v4012 = vmul.f32 %v3973, 0.03125
    %v4013 = vmul.f32 %v3975, 0.03125
    %v4014 = vmul.f32 %v3977, 0.03125
    %v4015 = vmul.f32 %v3979, 0.03125
    %v4016 = vmul.f32 %v3981, 0.03125
    %v4017 = vmul.f32 %v3983, 0.03125
    %v4018 = vmul.f32 %v3985, 0.03125
    %v4019 = vmul.f32 %v3987, 0.03125
    %v4020 = vmul.f32 %v3890, %v3890
    %v4021 = vmul.f32 %v3891, %v3891
    %v4022 = vmul.f32 %v3892, %v3892
    %v4023 = vmul.f32 %v3893, %v3893
    %v4024 = vmul.f32 %v3894, %v3894
    %v4025 = vmul.f32 %v3895, %v3895
    %v4026 = vmul.f32 %v3896, %v3896
    %v4027 = vmul.f32 %v3897, %v3897
    %v4028 = vmul.f32 %v3898, %v3898
    %v4029 = vmul.f32 %v3899, %v3899
    %v4030 = vmul.f32 %v3900, %v3900
    %v4031 = vmul.f32 %v3901, %v3901
    %v4032 = vmul.f32 %v3902, %v3902
    %v4033 = vmul.f32 %v3903, %v3903
    %v4034 = vmul.f32 %v3904, %v3904
    %v4035 = vmul.f32 %v3905, %v3905
    %v4036 = vmul.f32 %v3906, %v3906
    %v4037 = vmul.f32 %v3907, %v3907
    %v4038 = vmul.f32 %v3908, %v3908
    %v4039 = vmul.f32 %v3909, %v3909
    %v4040 = vmul.f32 %v3910, %v3910
    %v4041 = vmul.f32 %v3911, %v3911
    %v4042 = vmul.f32 %v3912, %v3912
    %v4043 = vmul.f32 %v3913, %v3913
    %v4044 = vmul.f32 %v3914, %v3914
    %v4045 = vmul.f32 %v3915, %v3915
    %v4046 = vmul.f32 %v3916, %v3916
    %v4047 = vmul.f32 %v3917, %v3917
    %v4048 = vmul.f32 %v3918, %v3918
    %v4049 = vmul.f32 %v3919, %v3919
    %v4050 = vmul.f32 %v3920, %v3920
    %v4051 = vmul.f32 %v3921, %v3921
    %4052 = vadd.xlane.f32.xlu0 %v4020
    %v4053 = vpop.xlane.xlu0 %4052
    %4054 = vadd.xlane.f32.xlu0 %v4021
    %v4055 = vpop.xlane.xlu0 %4054
    %4056 = vadd.xlane.f32.xlu0 %v4022
    %v4057 = vpop.xlane.xlu0 %4056
    %4058 = vadd.xlane.f32.xlu0 %v4023
    %v4059 = vpop.xlane.xlu0 %4058
    %4060 = vadd.xlane.f32.xlu0 %v4024
    %v4061 = vpop.xlane.xlu0 %4060
    %4062 = vadd.xlane.f32.xlu0 %v4025
    %v4063 = vpop.xlane.xlu0 %4062
    %4064 = vadd.xlane.f32.xlu0 %v4026
    %v4065 = vpop.xlane.xlu0 %4064
    %4066 = vadd.xlane.f32.xlu0 %v4027
    %v4067 = vpop.xlane.xlu0 %4066
    %4068 = vadd.xlane.f32.xlu0 %v4028
    %v4069 = vpop.xlane.xlu0 %4068
    %4070 = vadd.xlane.f32.xlu0 %v4029
    %v4071 = vpop.xlane.xlu0 %4070
    %4072 = vadd.xlane.f32.xlu0 %v4030
    %v4073 = vpop.xlane.xlu0 %4072
    %4074 = vadd.xlane.f32.xlu0 %v4031
    %v4075 = vpop.xlane.xlu0 %4074
    %4076 = vadd.xlane.f32.xlu0 %v4032
    %v4077 = vpop.xlane.xlu0 %4076
    %4078 = vadd.xlane.f32.xlu0 %v4033
    %v4079 = vpop.xlane.xlu0 %4078
    %4080 = vadd.xlane.f32.xlu0 %v4034
    %v4081 = vpop.xlane.xlu0 %4080
    %4082 = vadd.xlane.f32.xlu0 %v4035
    %v4083 = vpop.xlane.xlu0 %4082
    %4084 = vadd.xlane.f32.xlu0 %v4036
    %v4085 = vpop.xlane.xlu0 %4084
    %4086 = vadd.xlane.f32.xlu0 %v4037
    %v4087 = vpop.xlane.xlu0 %4086
    %4088 = vadd.xlane.f32.xlu0 %v4038
    %v4089 = vpop.xlane.xlu0 %4088
    %4090 = vadd.xlane.f32.xlu0 %v4039
    %v4091 = vpop.xlane.xlu0 %4090
    %4092 = vadd.xlane.f32.xlu0 %v4040
    %v4093 = vpop.xlane.xlu0 %4092
    %4094 = vadd.xlane.f32.xlu0 %v4041
    %v4095 = vpop.xlane.xlu0 %4094
    %4096 = vadd.xlane.f32.xlu0 %v4042
    %v4097 = vpop.xlane.xlu0 %4096
    %4098 = vadd.xlane.f32.xlu0 %v4043
    %v4099 = vpop.xlane.xlu0 %4098
    %4100 = vadd.xlane.f32.xlu0 %v4044
    %v4101 = vpop.xlane.xlu0 %4100
    %4102 = vadd.xlane.f32.xlu0 %v4045
    %v4103 = vpop.xlane.xlu0 %4102
    %4104 = vadd.xlane.f32.xlu0 %v4046
    %v4105 = vpop.xlane.xlu0 %4104
    %4106 = vadd.xlane.f32.xlu0 %v4047
    %v4107 = vpop.xlane.xlu0 %4106
    %4108 = vadd.xlane.f32.xlu0 %v4048
    %v4109 = vpop.xlane.xlu0 %4108
    %4110 = vadd.xlane.f32.xlu0 %v4049
    %v4111 = vpop.xlane.xlu0 %4110
    %4112 = vadd.xlane.f32.xlu0 %v4050
    %v4113 = vpop.xlane.xlu0 %4112
    %4114 = vadd.xlane.f32.xlu0 %v4051
    %v4115 = vpop.xlane.xlu0 %4114
    %v4116 = vmul.f32 %v4053, 0.03125
    %v4117 = vmul.f32 %v4055, 0.03125
    %v4118 = vmul.f32 %v4057, 0.03125
    %v4119 = vmul.f32 %v4059, 0.03125
    %v4120 = vmul.f32 %v4061, 0.03125
    %v4121 = vmul.f32 %v4063, 0.03125
    %v4122 = vmul.f32 %v4065, 0.03125
    %v4123 = vmul.f32 %v4067, 0.03125
    %v4124 = vmul.f32 %v4069, 0.03125
    %v4125 = vmul.f32 %v4071, 0.03125
    %v4126 = vmul.f32 %v4073, 0.03125
    %v4127 = vmul.f32 %v4075, 0.03125
    %v4128 = vmul.f32 %v4077, 0.03125
    %v4129 = vmul.f32 %v4079, 0.03125
    %v4130 = vmul.f32 %v4081, 0.03125
    %v4131 = vmul.f32 %v4083, 0.03125
    %v4132 = vmul.f32 %v4085, 0.03125
    %v4133 = vmul.f32 %v4087, 0.03125
    %v4134 = vmul.f32 %v4089, 0.03125
    %v4135 = vmul.f32 %v4091, 0.03125
    %v4136 = vmul.f32 %v4093, 0.03125
    %v4137 = vmul.f32 %v4095, 0.03125
    %v4138 = vmul.f32 %v4097, 0.03125
    %v4139 = vmul.f32 %v4099, 0.03125
    %v4140 = vmul.f32 %v4101, 0.03125
    %v4141 = vmul.f32 %v4103, 0.03125
    %v4142 = vmul.f32 %v4105, 0.03125
    %v4143 = vmul.f32 %v4107, 0.03125
    %v4144 = vmul.f32 %v4109, 0.03125
    %v4145 = vmul.f32 %v4111, 0.03125
    %v4146 = vmul.f32 %v4113, 0.03125
    %v4147 = vmul.f32 %v4115, 0.03125
    %v4148 = vmul.f32 %v3988, %v3988
    %v4149 = vmul.f32 %v3989, %v3989
    %v4150 = vmul.f32 %v3990, %v3990
    %v4151 = vmul.f32 %v3991, %v3991
    %v4152 = vmul.f32 %v3992, %v3992
    %v4153 = vmul.f32 %v3993, %v3993
    %v4154 = vmul.f32 %v3994, %v3994
    %v4155 = vmul.f32 %v3995, %v3995
    %v4156 = vmul.f32 %v3996, %v3996
    %v4157 = vmul.f32 %v3997, %v3997
    %v4158 = vmul.f32 %v3998, %v3998
    %v4159 = vmul.f32 %v3999, %v3999
    %v4160 = vmul.f32 %v4000, %v4000
    %v4161 = vmul.f32 %v4001, %v4001
    %v4162 = vmul.f32 %v4002, %v4002
    %v4163 = vmul.f32 %v4003, %v4003
    %v4164 = vmul.f32 %v4004, %v4004
    %v4165 = vmul.f32 %v4005, %v4005
    %v4166 = vmul.f32 %v4006, %v4006
    %v4167 = vmul.f32 %v4007, %v4007
    %v4168 = vmul.f32 %v4008, %v4008
    %v4169 = vmul.f32 %v4009, %v4009
    %v4170 = vmul.f32 %v4010, %v4010
    %v4171 = vmul.f32 %v4011, %v4011
    %v4172 = vmul.f32 %v4012, %v4012
    %v4173 = vmul.f32 %v4013, %v4013
    %v4174 = vmul.f32 %v4014, %v4014
    %v4175 = vmul.f32 %v4015, %v4015
    %v4176 = vmul.f32 %v4016, %v4016
    %v4177 = vmul.f32 %v4017, %v4017
    %v4178 = vmul.f32 %v4018, %v4018
    %v4179 = vmul.f32 %v4019, %v4019
    %v4180 = vsub.f32 %v4116, %v4148
    %v4181 = vsub.f32 %v4117, %v4149
    %v4182 = vsub.f32 %v4118, %v4150
    %v4183 = vsub.f32 %v4119, %v4151
    %v4184 = vsub.f32 %v4120, %v4152
    %v4185 = vsub.f32 %v4121, %v4153
    %v4186 = vsub.f32 %v4122, %v4154
    %v4187 = vsub.f32 %v4123, %v4155
    %v4188 = vsub.f32 %v4124, %v4156
    %v4189 = vsub.f32 %v4125, %v4157
    %v4190 = vsub.f32 %v4126, %v4158
    %v4191 = vsub.f32 %v4127, %v4159
    %v4192 = vsub.f32 %v4128, %v4160
    %v4193 = vsub.f32 %v4129, %v4161
    %v4194 = vsub.f32 %v4130, %v4162
    %v4195 = vsub.f32 %v4131, %v4163
    %v4196 = vsub.f32 %v4132, %v4164
    %v4197 = vsub.f32 %v4133, %v4165
    %v4198 = vsub.f32 %v4134, %v4166
    %v4199 = vsub.f32 %v4135, %v4167
    %v4200 = vsub.f32 %v4136, %v4168
    %v4201 = vsub.f32 %v4137, %v4169
    %v4202 = vsub.f32 %v4138, %v4170
    %v4203 = vsub.f32 %v4139, %v4171
    %v4204 = vsub.f32 %v4140, %v4172
    %v4205 = vsub.f32 %v4141, %v4173
    %v4206 = vsub.f32 %v4142, %v4174
    %v4207 = vsub.f32 %v4143, %v4175
    %v4208 = vsub.f32 %v4144, %v4176
    %v4209 = vsub.f32 %v4145, %v4177
    %v4210 = vsub.f32 %v4146, %v4178
    %v4211 = vsub.f32 %v4147, %v4179
    %v4212 = vsub.f32 %v3890, %v3988
    %v4213 = vsub.f32 %v3891, %v3989
    %v4214 = vsub.f32 %v3892, %v3990
    %v4215 = vsub.f32 %v3893, %v3991
    %v4216 = vsub.f32 %v3894, %v3992
    %v4217 = vsub.f32 %v3895, %v3993
    %v4218 = vsub.f32 %v3896, %v3994
    %v4219 = vsub.f32 %v3897, %v3995
    %v4220 = vsub.f32 %v3898, %v3996
    %v4221 = vsub.f32 %v3899, %v3997
    %v4222 = vsub.f32 %v3900, %v3998
    %v4223 = vsub.f32 %v3901, %v3999
    %v4224 = vsub.f32 %v3902, %v4000
    %v4225 = vsub.f32 %v3903, %v4001
    %v4226 = vsub.f32 %v3904, %v4002
    %v4227 = vsub.f32 %v3905, %v4003
    %v4228 = vsub.f32 %v3906, %v4004
    %v4229 = vsub.f32 %v3907, %v4005
    %v4230 = vsub.f32 %v3908, %v4006
    %v4231 = vsub.f32 %v3909, %v4007
    %v4232 = vsub.f32 %v3910, %v4008
    %v4233 = vsub.f32 %v3911, %v4009
    %v4234 = vsub.f32 %v3912, %v4010
    %v4235 = vsub.f32 %v3913, %v4011
    %v4236 = vsub.f32 %v3914, %v4012
    %v4237 = vsub.f32 %v3915, %v4013
    %v4238 = vsub.f32 %v3916, %v4014
    %v4239 = vsub.f32 %v3917, %v4015
    %v4240 = vsub.f32 %v3918, %v4016
    %v4241 = vsub.f32 %v3919, %v4017
    %v4242 = vsub.f32 %v3920, %v4018
    %v4243 = vsub.f32 %v3921, %v4019
    %v4244 = vadd.f32 %v4180, 1e-05
    %v4245 = vadd.f32 %v4181, 1e-05
    %v4246 = vadd.f32 %v4182, 1e-05
    %v4247 = vadd.f32 %v4183, 1e-05
    %v4248 = vadd.f32 %v4184, 1e-05
    %v4249 = vadd.f32 %v4185, 1e-05
    %v4250 = vadd.f32 %v4186, 1e-05
    %v4251 = vadd.f32 %v4187, 1e-05
    %v4252 = vadd.f32 %v4188, 1e-05
    %v4253 = vadd.f32 %v4189, 1e-05
    %v4254 = vadd.f32 %v4190, 1e-05
    %v4255 = vadd.f32 %v4191, 1e-05
    %v4256 = vadd.f32 %v4192, 1e-05
    %v4257 = vadd.f32 %v4193, 1e-05
    %v4258 = vadd.f32 %v4194, 1e-05
    %v4259 = vadd.f32 %v4195, 1e-05
    %v4260 = vadd.f32 %v4196, 1e-05
    %v4261 = vadd.f32 %v4197, 1e-05
    %v4262 = vadd.f32 %v4198, 1e-05
    %v4263 = vadd.f32 %v4199, 1e-05
    %v4264 = vadd.f32 %v4200, 1e-05
    %v4265 = vadd.f32 %v4201, 1e-05
    %v4266 = vadd.f32 %v4202, 1e-05
    %v4267 = vadd.f32 %v4203, 1e-05
    %v4268 = vadd.f32 %v4204, 1e-05
    %v4269 = vadd.f32 %v4205, 1e-05
    %v4270 = vadd.f32 %v4206, 1e-05
    %v4271 = vadd.f32 %v4207, 1e-05
    %v4272 = vadd.f32 %v4208, 1e-05
    %v4273 = vadd.f32 %v4209, 1e-05
    %v4274 = vadd.f32 %v4210, 1e-05
    %v4275 = vadd.f32 %v4211, 1e-05
    %v4276 = vrsqrt.pop %v4244
    %v4277 = vrsqrt.pop %v4245
    %v4278 = vrsqrt.pop %v4246
    %v4279 = vrsqrt.pop %v4247
    %v4280 = vrsqrt.pop %v4248
    %v4281 = vrsqrt.pop %v4249
    %v4282 = vrsqrt.pop %v4250
    %v4283 = vrsqrt.pop %v4251
    %v4284 = vrsqrt.pop %v4252
    %v4285 = vrsqrt.pop %v4253
    %v4286 = vrsqrt.pop %v4254
    %v4287 = vrsqrt.pop %v4255
    %v4288 = vrsqrt.pop %v4256
    %v4289 = vrsqrt.pop %v4257
    %v4290 = vrsqrt.pop %v4258
    %v4291 = vrsqrt.pop %v4259
    %v4292 = vrsqrt.pop %v4260
    %v4293 = vrsqrt.pop %v4261
    %v4294 = vrsqrt.pop %v4262
    %v4295 = vrsqrt.pop %v4263
    %v4296 = vrsqrt.pop %v4264
    %v4297 = vrsqrt.pop %v4265
    %v4298 = vrsqrt.pop %v4266
    %v4299 = vrsqrt.pop %v4267
    %v4300 = vrsqrt.pop %v4268
    %v4301 = vrsqrt.pop %v4269
    %v4302 = vrsqrt.pop %v4270
    %v4303 = vrsqrt.pop %v4271
    %v4304 = vrsqrt.pop %v4272
    %v4305 = vrsqrt.pop %v4273
    %v4306 = vrsqrt.pop %v4274
    %v4307 = vrsqrt.pop %v4275
    %v4308 = vmul.f32 %v4212, %v4276
    %v4309 = vmul.f32 %v4213, %v4277
    %v4310 = vmul.f32 %v4214, %v4278
    %v4311 = vmul.f32 %v4215, %v4279
    %v4312 = vmul.f32 %v4216, %v4280
    %v4313 = vmul.f32 %v4217, %v4281
    %v4314 = vmul.f32 %v4218, %v4282
    %v4315 = vmul.f32 %v4219, %v4283
    %v4316 = vmul.f32 %v4220, %v4284
    %v4317 = vmul.f32 %v4221, %v4285
    %v4318 = vmul.f32 %v4222, %v4286
    %v4319 = vmul.f32 %v4223, %v4287
    %v4320 = vmul.f32 %v4224, %v4288
    %v4321 = vmul.f32 %v4225, %v4289
    %v4322 = vmul.f32 %v4226, %v4290
    %v4323 = vmul.f32 %v4227, %v4291
    %v4324 = vmul.f32 %v4228, %v4292
    %v4325 = vmul.f32 %v4229, %v4293
    %v4326 = vmul.f32 %v4230, %v4294
    %v4327 = vmul.f32 %v4231, %v4295
    %v4328 = vmul.f32 %v4232, %v4296
    %v4329 = vmul.f32 %v4233, %v4297
    %v4330 = vmul.f32 %v4234, %v4298
    %v4331 = vmul.f32 %v4235, %v4299
    %v4332 = vmul.f32 %v4236, %v4300
    %v4333 = vmul.f32 %v4237, %v4301
    %v4334 = vmul.f32 %v4238, %v4302
    %v4335 = vmul.f32 %v4239, %v4303
    %v4336 = vmul.f32 %v4240, %v4304
    %v4337 = vmul.f32 %v4241, %v4305
    %v4338 = vmul.f32 %v4242, %v4306
    %v4339 = vmul.f32 %v4243, %v4307
    %v4341 = vlaneseq
    %v4342 = vshrl.u32 %v4341, 7
    %v4343 = vsub.s32 0, %v4342
    %v4344 = vrot.slane %v3922, %v4343
    %v4346 = vmul.f32 %v4308, %v4344
    %v4347 = vmul.f32 %v4309, %v4344
    %v4348 = vmul.f32 %v4310, %v4344
    %v4349 = vmul.f32 %v4311, %v4344
    %v4350 = vmul.f32 %v4312, %v4344
    %v4351 = vmul.f32 %v4313, %v4344
    %v4352 = vmul.f32 %v4314, %v4344
    %v4353 = vmul.f32 %v4315, %v4344
    %v4354 = vmul.f32 %v4316, %v4344
    %v4355 = vmul.f32 %v4317, %v4344
    %v4356 = vmul.f32 %v4318, %v4344
    %v4357 = vmul.f32 %v4319, %v4344
    %v4358 = vmul.f32 %v4320, %v4344
    %v4359 = vmul.f32 %v4321, %v4344
    %v4360 = vmul.f32 %v4322, %v4344
    %v4361 = vmul.f32 %v4323, %v4344
    %v4362 = vmul.f32 %v4324, %v4344
    %v4363 = vmul.f32 %v4325, %v4344
    %v4364 = vmul.f32 %v4326, %v4344
    %v4365 = vmul.f32 %v4327, %v4344
    %v4366 = vmul.f32 %v4328, %v4344
    %v4367 = vmul.f32 %v4329, %v4344
    %v4368 = vmul.f32 %v4330, %v4344
    %v4369 = vmul.f32 %v4331, %v4344
    %v4370 = vmul.f32 %v4332, %v4344
    %v4371 = vmul.f32 %v4333, %v4344
    %v4372 = vmul.f32 %v4334, %v4344
    %v4373 = vmul.f32 %v4335, %v4344
    %v4374 = vmul.f32 %v4336, %v4344
    %v4375 = vmul.f32 %v4337, %v4344
    %v4376 = vmul.f32 %v4338, %v4344
    %v4377 = vmul.f32 %v4339, %v4344
    %v4379 = vlaneseq
    %v4380 = vshrl.u32 %v4379, 7
    %v4381 = vsub.s32 0, %v4380
    %v4382 = vrot.slane %v3923, %v4381
    %v4384 = vadd.f32 %v4346, %v4382
    %v4385 = vadd.f32 %v4347, %v4382
    %v4386 = vadd.f32 %v4348, %v4382
    %v4387 = vadd.f32 %v4349, %v4382
    %v4388 = vadd.f32 %v4350, %v4382
    %v4389 = vadd.f32 %v4351, %v4382
    %v4390 = vadd.f32 %v4352, %v4382
    %v4391 = vadd.f32 %v4353, %v4382
    %v4392 = vadd.f32 %v4354, %v4382
    %v4393 = vadd.f32 %v4355, %v4382
    %v4394 = vadd.f32 %v4356, %v4382
    %v4395 = vadd.f32 %v4357, %v4382
    %v4396 = vadd.f32 %v4358, %v4382
    %v4397 = vadd.f32 %v4359, %v4382
    %v4398 = vadd.f32 %v4360, %v4382
    %v4399 = vadd.f32 %v4361, %v4382
    %v4400 = vadd.f32 %v4362, %v4382
    %v4401 = vadd.f32 %v4363, %v4382
    %v4402 = vadd.f32 %v4364, %v4382
    %v4403 = vadd.f32 %v4365, %v4382
    %v4404 = vadd.f32 %v4366, %v4382
    %v4405 = vadd.f32 %v4367, %v4382
    %v4406 = vadd.f32 %v4368, %v4382
    %v4407 = vadd.f32 %v4369, %v4382
    %v4408 = vadd.f32 %v4370, %v4382
    %v4409 = vadd.f32 %v4371, %v4382
    %v4410 = vadd.f32 %v4372, %v4382
    %v4411 = vadd.f32 %v4373, %v4382
    %v4412 = vadd.f32 %v4374, %v4382
    %v4413 = vadd.f32 %v4375, %v4382
    %v4414 = vadd.f32 %v4376, %v4382
    %v4415 = vadd.f32 %v4377, %v4382
    %v4416 = vld [vmem:[%s11] sm:$0x1]
    %v4417 = vpack.c.bf16 %v4385, %v4384
    %v4418 = vpack.c.bf16 %v4387, %v4386
    %v4419 = vpack.c.bf16 %v4389, %v4388
    %v4420 = vpack.c.bf16 %v4391, %v4390
    %v4421 = vpack.c.bf16 %v4393, %v4392
    %v4422 = vpack.c.bf16 %v4395, %v4394
    %v4423 = vpack.c.bf16 %v4397, %v4396
    %v4424 = vpack.c.bf16 %v4399, %v4398
    %v4425 = vpack.c.bf16 %v4401, %v4400
    %v4426 = vpack.c.bf16 %v4403, %v4402
    %v4427 = vpack.c.bf16 %v4405, %v4404
    %v4428 = vpack.c.bf16 %v4407, %v4406
    %v4429 = vpack.c.bf16 %v4409, %v4408
    %v4430 = vpack.c.bf16 %v4411, %v4410
    %v4431 = vpack.c.bf16 %v4413, %v4412
    %v4432 = vpack.c.bf16 %v4415, %v4414
    %v4433 = vld [vmem:[#allocation2] sm:$0x1]
    %4435 = vset.pattern.permute.xlu0 0
    %4436 = vperm.xlu0 %4435, %v4433
    %v4437 = vpop.permute.xlu0 %4436
    %v4439 = vlaneseq
    %v4440 = vshrl.u32 %v4439, 7
    %v4441 = vsub.s32 0, %v4440
    %v4442 = vrot.slane %v4437, %v4441
    %4443 = vmatprep.subr.bf16.mxu0 0
    %4444 = vmatpush1.bf16.xpose.msra.mxu0 %v4417
    %4445 = vmatprep.subr.bf16.mxu0 0
    %4446 = vmatpush1.bf16.xpose.msra.mxu0 %v4418
    %4447 = vmatprep.subr.bf16.mxu0 0
    %4448 = vmatpush1.bf16.xpose.msra.mxu0 %v4419
    %4449 = vmatprep.subr.bf16.mxu0 0
    %4450 = vmatpush1.bf16.xpose.msra.mxu0 %v4420
    %4451 = vmatprep.subr.bf16.mxu0 0
    %4452 = vmatpush1.bf16.xpose.msra.mxu0 %v4421
    %4453 = vmatprep.subr.bf16.mxu0 0
    %4454 = vmatpush1.bf16.xpose.msra.mxu0 %v4422
    %4455 = vmatprep.subr.bf16.mxu0 0
    %4456 = vmatpush1.bf16.xpose.msra.mxu0 %v4423
    %4457 = vmatprep.subr.bf16.mxu0 0
    %4458 = vmatpush1.bf16.xpose.msra.mxu0 %v4424
    %4459 = vmatprep.subr.bf16.mxu0 0
    %4460 = vmatpush1.bf16.xpose.msra.mxu0 %v4425
    %4461 = vmatprep.subr.bf16.mxu0 0
    %4462 = vmatpush1.bf16.xpose.msra.mxu0 %v4426
    %4463 = vmatprep.subr.bf16.mxu0 0
    %4464 = vmatpush1.bf16.xpose.msra.mxu0 %v4427
    %4465 = vmatprep.subr.bf16.mxu0 0
    %4466 = vmatpush1.bf16.xpose.msra.mxu0 %v4428
    %4467 = vmatprep.subr.bf16.mxu0 0
    %4468 = vmatpush1.bf16.xpose.msra.mxu0 %v4429
    %4469 = vmatprep.subr.bf16.mxu0 0
    %4470 = vmatpush1.bf16.xpose.msra.mxu0 %v4430
    %4471 = vmatprep.subr.bf16.mxu0 0
    %4472 = vmatpush1.bf16.xpose.msra.mxu0 %v4431
    %4473 = vmatprep.subr.bf16.mxu0 0
    %4474 = vmatpush1.bf16.xpose.msra.mxu0 %v4432
    %4475 = vmatprep.mubr.bf16.mxu0 0
    %4476 = vmatmul.mubr.bf16.gmra.mrb[0].mxu0 %v4416
    %v4477 = vpop.f32.mrb[0].mxu0
    %v4478 = vadd.f32 %v4442, %v4477
    %v4479 = vpop.f32.mrb[0].mxu0
    %v4480 = vadd.f32 %v4442, %v4479
    %v4481 = vpop.f32.mrb[0].mxu0
    %v4482 = vpop.f32.mrb[0].mxu0
    %4483 = vdwg.mxu0
    %v4486 = vcombine.low %v4478, %v4480
    %v4488 = vunpack.c.l.s4 1966171168
    %v4489 = vunpack.c.0.s8 %v4488
    %v4490 = vlaneseq
    %v4491 = vshrl.u32 %v4490, 7
    %v4492 = vsub.s32 %v4489, %v4491
    %v4493 = vrot.slane %v4486, %v4492
    %v4495 = vunpack.c.l.s4 1966171168
    %v4496 = vunpack.c.0.s8 %v4495
    %v4497 = vlaneseq
    %v4498 = vshrl.u32 %v4497, 7
    %v4499 = vsub.s32 %v4496, %v4498
    %v4500 = vrot.slane %v4493, %v4499
    %v4502 = vlaneseq
    %vm4503 = vcmp.ge.s32.totalorder %v4502, 0
    %vm4504 = vcmp.lt.s32.totalorder %v4502, 256
    %vm4505 = vmand %vm4503, %vm4504
    %4506 = vst.msk [vmem:[#allocation11] sm:$0x3] %vm4505, %v4500
    // Predicated region
    $region70: #{tpu_custom_call.1} parent=1 // pred_check
      _
    $region71: #{tpu_custom_call.1} parent=1 // pred_check_branch
      %4508 = sbr.rel (0) target = $region73
    $region72: #{tpu_custom_call.1} parent=1 // pred_region
      %s4510 = ssub.s32 32, 32
      %4511 = vsyncadd [#allocation5], %s4510
      %s4513 = sshll.u32 [#allocation11], 4
      %s4514 = int_to_ptr.vmem [resolvable:$true] %s4513
      %4516 = dma.vmem_to_hbm [thread:$0]  %s4514, 32, %s13, [#allocation5]
    $region73: #{tpu_custom_call.1} parent=1 // pred_fallthru
      _
    // Predicated region
    $region74: #{tpu_custom_call.1} parent=1 // pred_check
      _
    $region75: #{tpu_custom_call.1} parent=1 // pred_check_branch
      %4518 = sbr.rel (0) target = $region77
    $region76: #{tpu_custom_call.1} parent=1 // pred_region
      %4519 = dma.done [#allocation5], 32
    $region77: #{tpu_custom_call.1} parent=1 // pred_fallthru
      _
    %4520 = vsyncpa [#allocation4], 1
    %4521 = vsyncpa [#allocation7], 1
    %4522 = vsyncpa [#allocation10], 1
    %4523 = vsyncpa [#allocation5], 1

// kernel: tpu_custom_call.1
$region0: #{tpu_custom_call.1}
  #allocation0 [shape = 'u32[]', space=smem, size = 0x4, offset = 0x4, fixed_abs, tag = 'smem constant byte address 0x4 - core index']
  #allocation1 [shape = 'u32[144,128]{1,0:T(1,128)}', space=vmem, size = 0x12000, scoped, tag = 'internal scratch']
  #allocation2 [shape = 'f32[1,1]{1,0:T(1,128)S(1)}', space=vmem, size = 0x200, scoped, tag = 'scoped memory for tpu_custom_call.1']
  %s0 = inlined_call_operand.hbm [shape: bf16[256,128], index: 0, kind: input, shape index: {}]
  %s1 = inlined_call_operand.hbm [shape: bf16[128,384], index: 1, kind: input, shape index: {}]
  %s2 = inlined_call_operand.vmem [shape: f32[1,384], index: 2, kind: input, shape index: {}]
  %s3 = inlined_call_operand.vmem [shape: f32[1,384], index: 3, kind: input, shape index: {}]
  %s4 = inlined_call_operand.hbm [shape: bf16[128,128], index: 4, kind: input, shape index: {}]
  %s5 = inlined_call_operand.vmem [shape: f32[1,128], index: 5, kind: input, shape index: {}]
  %s6 = inlined_call_operand.vmem [shape: f32[1,128], index: 6, kind: input, shape index: {}]
  %s7 = inlined_call_operand.hbm [shape: bf16[128,128], index: 7, kind: input, shape index: {}]
  %s8 = inlined_call_operand.vmem [shape: f32[1,128], index: 8, kind: input, shape index: {}]
  %s9 = inlined_call_operand.vmem [shape: f32[1,128], index: 9, kind: input, shape index: {}]
  %s10 = inlined_call_operand.vmem [shape: f32[1,128], index: 10, kind: input, shape index: {}]
  %s11 = inlined_call_operand.vmem [shape: bf16[1,128], index: 11, kind: input, shape index: {}]
  %s12 = inlined_call_operand.<no memory space> [shape: f32[1,1], index: 12, kind: input, shape index: {}]
  %s13 = inlined_call_operand.hbm [shape: f32[1,256], index: 13, kind: output, shape index: {}]
  %s14 = sld [smem:[#allocation0]]
  $region78: #{tpu_custom_call.1} parent=0
    _
  %s16 = ssub.s32 1, %s14
  %s17 = scalar_select 0, %s16, %s14
  %v18 = vstv %s12
  %19 = vst [vmem:[#allocation2] sm:$0x1] %v18
  $region1: #{tpu_custom_call.1} parent=0
    #allocation3 [shape = 'u8[65536]{0}', space=vmem, size = 0x10000, scoped, tag = 'input window, operand 0, single buffered']
    #allocation4 [shape = 's32[1]{0}', space=sflag, size = 0x4, scoped, tag = 'scoped memory for tpu_custom_call.1']
    #allocation5 [shape = 's32[1]{0}', space=sflag, size = 0x4, scoped, tag = 'scoped memory for tpu_custom_call.1']
    #allocation6 [shape = 'u8[98304]{0}', space=vmem, size = 0x18000, scoped, tag = 'input window, operand 1, single buffered']
    #allocation7 [shape = 's32[1]{0}', space=sflag, size = 0x4, scoped, tag = 'scoped memory for tpu_custom_call.1']
    #allocation8 [shape = 'u8[32768]{0}', space=vmem, size = 0x8000, scoped, tag = 'input window, operand 4, single buffered']
    #allocation9 [shape = 'u8[32768]{0}', space=vmem, size = 0x8000, scoped, tag = 'input window, operand 7, single buffered']
    #allocation10 [shape = 's32[1]{0}', space=sflag, size = 0x4, scoped, tag = 'scoped memory for tpu_custom_call.1']
    #allocation11 [shape = 'u8[1024]{0}', space=vmem, size = 0x400, scoped, tag = 'output window, operand 0, single buffered']
    %20 = vsyncpa [#allocation4], 0
    %21 = vsyncpa [#allocation7], 0
    %22 = vsyncpa [#allocation10], 0
    %23 = vsyncpa [#allocation5], 0
    // Predicated region
    $region2: #{tpu_custom_call.1} parent=1 // pred_check
      _
    $region3: #{tpu_custom_call.1} parent=1 // pred_check_branch
      %25 = sbr.rel (0) target = $region5
    $region4: #{tpu_custom_call.1} parent=1 // pred_region
      %s27 = ssub.s32 2048, 2048
      %28 = vsyncadd [#allocation4], %s27
      %s29 = sshll.u32 [#allocation3], 4
      %s30 = int_to_ptr.vmem [resolvable:$true] %s29
      %35 = dma.hbm_to_vmem [thread:$0]  %s0, 2048, %s30, [#allocation4], 64, 64, 4
    $region5: #{tpu_custom_call.1} parent=1 // pred_fallthru
      _
    // Predicated region
    $region6: #{tpu_custom_call.1} parent=1 // pred_check
      _
    $region7: #{tpu_custom_call.1} parent=1 // pred_check_branch
      %37 = sbr.rel (0) target = $region9
    $region8: #{tpu_custom_call.1} parent=1 // pred_region
      %s39 = ssub.s32 3072, 3072
      %40 = vsyncadd [#allocation7], %s39
      %s41 = sshll.u32 [#allocation6], 4
      %s42 = int_to_ptr.vmem [resolvable:$true] %s41
      %47 = dma.hbm_to_vmem [thread:$0]  %s1, 3072, %s42, [#allocation7], 192, 192, 12
    $region9: #{tpu_custom_call.1} parent=1 // pred_fallthru
      _
    // Predicated region
    $region10: #{tpu_custom_call.1} parent=1 // pred_check
      _
    $region11: #{tpu_custom_call.1} parent=1 // pred_check_branch
      %49 = sbr.rel (0) target = $region13
    $region12: #{tpu_custom_call.1} parent=1 // pred_region
      _
    $region13: #{tpu_custom_call.1} parent=1 // pred_fallthru
      _
    // Predicated region
    $region14: #{tpu_custom_call.1} parent=1 // pred_check
      _
    $region15: #{tpu_custom_call.1} parent=1 // pred_check_branch
      %51 = sbr.rel (0) target = $region17
    $region16: #{tpu_custom_call.1} parent=1 // pred_region
      _
    $region17: #{tpu_custom_call.1} parent=1 // pred_fallthru
      _
    // Predicated region
    $region18: #{tpu_custom_call.1} parent=1 // pred_check
      _
    $region19: #{tpu_custom_call.1} parent=1 // pred_check_branch
      %53 = sbr.rel (0) target = $region21
    $region20: #{tpu_custom_call.1} parent=1 // pred_region
      %s55 = ssub.s32 1024, 1024
      %56 = vsyncadd [#allocation7], %s55
      %s57 = sshll.u32 [#allocation8], 4
      %s58 = int_to_ptr.vmem [resolvable:$true] %s57
      %63 = dma.hbm_to_vmem [thread:$0]  %s4, 1024, %s58, [#allocation7], 64, 64, 4
    $region21: #{tpu_custom_call.1} parent=1 // pred_fallthru
      _
    // Predicated region
    $region22: #{tpu_custom_call.1} parent=1 // pred_check
      _
    $region23: #{tpu_custom_call.1} parent=1 // pred_check_branch
      %65 = sbr.rel (0) target = $region25
    $region24: #{tpu_custom_call.1} parent=1 // pred_region
      _
    $region25: #{tpu_custom_call.1} parent=1 // pred_fallthru
      _
    // Predicated region
    $region26: #{tpu_custom_call.1} parent=1 // pred_check
      _
    $region27: #{tpu_custom_call.1} parent=1 // pred_check_branch
      %67 = sbr.rel (0) target = $region29
    $region28: #{tpu_custom_call.1} parent=1 // pred_region
      _
    $region29: #{tpu_custom_call.1} parent=1 // pred_fallthru
      _
    // Predicated region
    $region30: #{tpu_custom_call.1} parent=1 // pred_check
      _
    $region31: #{tpu_custom_call.1} parent=1 // pred_check_branch
      %69 = sbr.rel (0) target = $region33
    $region32: #{tpu_custom_call.1} parent=1 // pred_region
      %s71 = ssub.s32 1024, 1024
      %72 = vsyncadd [#allocation10], %s71
      %s73 = sshll.u32 [#allocation9], 4
      %s74 = int_to_ptr.vmem [resolvable:$true] %s73
      %79 = dma.hbm_to_vmem [thread:$0]  %s7, 1024, %s74, [#allocation10], 64, 64, 4
    $region33: #{tpu_custom_call.1} parent=1 // pred_fallthru
      _
    // Predicated region
    $region34: #{tpu_custom_call.1} parent=1 // pred_check
      _
    $region35: #{tpu_custom_call.1} parent=1 // pred_check_branch
      %81 = sbr.rel (0) target = $region37
    $region36: #{tpu_custom_call.1} parent=1 // pred_region
      _
    $region37: #{tpu_custom_call.1} parent=1 // pred_fallthru
      _
    // Predicated region
    $region38: #{tpu_custom_call.1} parent=1 // pred_check
      _
    $region39: #{tpu_custom_call.1} parent=1 // pred_check_branch
      %83 = sbr.rel (0) target = $region41
    $region40: #{tpu_custom_call.1} parent=1 // pred_region
      _
    $region41: #{tpu_custom_call.1} parent=1 // pred_fallthru
      _
    // Predicated region
    $region42: #{tpu_custom_call.1} parent=1 // pred_check
      _
    $region43: #{tpu_custom_call.1} parent=1 // pred_check_branch
      %85 = sbr.rel (0) target = $region45
    $region44: #{tpu_custom_call.1} parent=1 // pred_region
      _
    $region45: #{tpu_custom_call.1} parent=1 // pred_fallthru
      _
    // Predicated region
    $region46: #{tpu_custom_call.1} parent=1 // pred_check
      _
    $region47: #{tpu_custom_call.1} parent=1 // pred_check_branch
      %87 = sbr.rel (0) target = $region49
    $region48: #{tpu_custom_call.1} parent=1 // pred_region
      _
    $region49: #{tpu_custom_call.1} parent=1 // pred_fallthru
      _
    // Predicated region
    $region50: #{tpu_custom_call.1} parent=1 // pred_check
      _
    $region51: #{tpu_custom_call.1} parent=1 // pred_check_branch
      %89 = sbr.rel (0) target = $region53
    $region52: #{tpu_custom_call.1} parent=1 // pred_region
      _
    $region53: #{tpu_custom_call.1} parent=1 // pred_fallthru
      _
    // Predicated region
    $region54: #{tpu_custom_call.1} parent=1 // pred_check
      _
    $region55: #{tpu_custom_call.1} parent=1 // pred_check_branch
      %91 = sbr.rel (0) target = $region57
    $region56: #{tpu_custom_call.1} parent=1 // pred_region
      %92 = dma.done [#allocation4], 2048
    $region57: #{tpu_custom_call.1} parent=1 // pred_fallthru
      _
    // Predicated region
    $region58: #{tpu_custom_call.1} parent=1 // pred_check
      _
    $region59: #{tpu_custom_call.1} parent=1 // pred_check_branch
      %94 = sbr.rel (0) target = $region61
    $region60: #{tpu_custom_call.1} parent=1 // pred_region
      %95 = dma.done [#allocation7], 3072
    $region61: #{tpu_custom_call.1} parent=1 // pred_fallthru
      _
    // Predicated region
    $region62: #{tpu_custom_call.1} parent=1 // pred_check
      _
    $region63: #{tpu_custom_call.1} parent=1 // pred_check_branch
      %97 = sbr.rel (0) target = $region65
    $region64: #{tpu_custom_call.1} parent=1 // pred_region
      %98 = dma.done [#allocation7], 1024
    $region65: #{tpu_custom_call.1} parent=1 // pred_fallthru
      _
    // Predicated region
    $region66: #{tpu_custom_call.1} parent=1 // pred_check
      _
    $region67: #{tpu_custom_call.1} parent=1 // pred_check_branch
      %100 = sbr.rel (0) target = $region69
    $region68: #{tpu_custom_call.1} parent=1 // pred_region
      %101 = dma.done [#allocation10], 1024
    $region69: #{tpu_custom_call.1} parent=1 // pred_fallthru
      _
    %v103 = vld [vmem:[#allocation3] sm:$0xf]
    %v104 = vld [vmem:[#allocation3 + $0x4] sm:$0xf]
    %v105 = vld [vmem:[#allocation3 + $0x8] sm:$0xf]
    %v106 = vld [vmem:[#allocation3 + $0xc] sm:$0xf]
    %v107 = vld [vmem:[#allocation3 + $0x10] sm:$0xf]
    %v108 = vld [vmem:[#allocation3 + $0x14] sm:$0xf]
    %v109 = vld [vmem:[#allocation3 + $0x18] sm:$0xf]
    %v110 = vld [vmem:[#allocation3 + $0x1c] sm:$0xf]
    %v111 = vld [vmem:[#allocation3 + $0x20] sm:$0xf]
    %v112 = vld [vmem:[#allocation3 + $0x24] sm:$0xf]
    %v113 = vld [vmem:[#allocation3 + $0x28] sm:$0xf]
    %v114 = vld [vmem:[#allocation3 + $0x2c] sm:$0xf]
    %v115 = vld [vmem:[#allocation3 + $0x30] sm:$0xf]
    %v116 = vld [vmem:[#allocation3 + $0x34] sm:$0xf]
    %v117 = vld [vmem:[#allocation3 + $0x38] sm:$0xf]
    %v118 = vld [vmem:[#allocation3 + $0x3c] sm:$0xf]
    %v119 = vld [vmem:[#allocation3 + $0x40] sm:$0xf]
    %v120 = vld [vmem:[#allocation3 + $0x44] sm:$0xf]
    %v121 = vld [vmem:[#allocation3 + $0x48] sm:$0xf]
    %v122 = vld [vmem:[#allocation3 + $0x4c] sm:$0xf]
    %v123 = vld [vmem:[#allocation3 + $0x50] sm:$0xf]
    %v124 = vld [vmem:[#allocation3 + $0x54] sm:$0xf]
    %v125 = vld [vmem:[#allocation3 + $0x58] sm:$0xf]
    %v126 = vld [vmem:[#allocation3 + $0x5c] sm:$0xf]
    %v127 = vld [vmem:[#allocation3 + $0x60] sm:$0xf]
    %v128 = vld [vmem:[#allocation3 + $0x64] sm:$0xf]
    %v129 = vld [vmem:[#allocation3 + $0x68] sm:$0xf]
    %v130 = vld [vmem:[#allocation3 + $0x6c] sm:$0xf]
    %v131 = vld [vmem:[#allocation3 + $0x70] sm:$0xf]
    %v132 = vld [vmem:[#allocation3 + $0x74] sm:$0xf]
    %v133 = vld [vmem:[#allocation3 + $0x78] sm:$0xf]
    %v134 = vld [vmem:[#allocation3 + $0x7c] sm:$0xf]
    %v135 = vld [vmem:[#allocation8] sm:$0xf]
    %v136 = vld [vmem:[#allocation8 + $0x4] sm:$0xf]
    %v137 = vld [vmem:[#allocation8 + $0x8] sm:$0xf]
    %v138 = vld [vmem:[#allocation8 + $0xc] sm:$0xf]
    %v139 = vld [vmem:[#allocation8 + $0x10] sm:$0xf]
    %v140 = vld [vmem:[#allocation8 + $0x14] sm:$0xf]
    %v141 = vld [vmem:[#allocation8 + $0x18] sm:$0xf]
    %v142 = vld [vmem:[#allocation8 + $0x1c] sm:$0xf]
    %v143 = vld [vmem:[#allocation8 + $0x20] sm:$0xf]
    %v144 = vld [vmem:[#allocation8 + $0x24] sm:$0xf]
    %v145 = vld [vmem:[#allocation8 + $0x28] sm:$0xf]
    %v146 = vld [vmem:[#allocation8 + $0x2c] sm:$0xf]
    %v147 = vld [vmem:[#allocation8 + $0x30] sm:$0xf]
    %v148 = vld [vmem:[#allocation8 + $0x34] sm:$0xf]
    %v149 = vld [vmem:[#allocation8 + $0x38] sm:$0xf]
    %v150 = vld [vmem:[#allocation8 + $0x3c] sm:$0xf]
    %v183 = vunpack.c.l.b16 %v103
    %v184 = vunpack.c.l.b16 %v104
    %v185 = vunpack.c.l.b16 %v105
    %v186 = vunpack.c.l.b16 %v106
    %v187 = vunpack.c.l.b16 %v107
    %v188 = vunpack.c.l.b16 %v108
    %v189 = vunpack.c.l.b16 %v109
    %v190 = vunpack.c.l.b16 %v110
    %v191 = vunpack.c.l.b16 %v111
    %v192 = vunpack.c.l.b16 %v112
    %v193 = vunpack.c.l.b16 %v113
    %v194 = vunpack.c.l.b16 %v114
    %v195 = vunpack.c.l.b16 %v115
    %v196 = vunpack.c.l.b16 %v116
    %v197 = vunpack.c.l.b16 %v117
    %v198 = vunpack.c.l.b16 %v118
    %v199 = vunpack.c.l.b16 %v119
    %v200 = vunpack.c.l.b16 %v120
    %v201 = vunpack.c.l.b16 %v121
    %v202 = vunpack.c.l.b16 %v122
    %v203 = vunpack.c.l.b16 %v123
    %v204 = vunpack.c.l.b16 %v124
    %v205 = vunpack.c.l.b16 %v125
    %v206 = vunpack.c.l.b16 %v126
    %v207 = vunpack.c.l.b16 %v127
    %v208 = vunpack.c.l.b16 %v128
    %v209 = vunpack.c.l.b16 %v129
    %v210 = vunpack.c.l.b16 %v130
    %v211 = vunpack.c.l.b16 %v131
    %v212 = vunpack.c.l.b16 %v132
    %v213 = vunpack.c.l.b16 %v133
    %v214 = vunpack.c.l.b16 %v134
    %v215 = vpack.c.b16 %v184, %v183
    %v216 = vpack.c.b16 %v186, %v185
    %v217 = vpack.c.b16 %v188, %v187
    %v218 = vpack.c.b16 %v190, %v189
    %v219 = vpack.c.b16 %v192, %v191
    %v220 = vpack.c.b16 %v194, %v193
    %v221 = vpack.c.b16 %v196, %v195
    %v222 = vpack.c.b16 %v198, %v197
    %v223 = vpack.c.b16 %v200, %v199
    %v224 = vpack.c.b16 %v202, %v201
    %v225 = vpack.c.b16 %v204, %v203
    %v226 = vpack.c.b16 %v206, %v205
    %v227 = vpack.c.b16 %v208, %v207
    %v228 = vpack.c.b16 %v210, %v209
    %v229 = vpack.c.b16 %v212, %v211
    %v230 = vpack.c.b16 %v214, %v213
    %v263 = vunpack.c.l.b16 %v135
    %v264 = vunpack.c.l.b16 %v136
    %v265 = vunpack.c.l.b16 %v137
    %v266 = vunpack.c.l.b16 %v138
    %v267 = vunpack.c.l.b16 %v139
    %v268 = vunpack.c.l.b16 %v140
    %v269 = vunpack.c.l.b16 %v141
    %v270 = vunpack.c.l.b16 %v142
    %v271 = vunpack.c.l.b16 %v143
    %v272 = vunpack.c.l.b16 %v144
    %v273 = vunpack.c.l.b16 %v145
    %v274 = vunpack.c.l.b16 %v146
    %v275 = vunpack.c.l.b16 %v147
    %v276 = vunpack.c.l.b16 %v148
    %v277 = vunpack.c.l.b16 %v149
    %v278 = vunpack.c.l.b16 %v150
    %v279 = vpack.c.b16 %v264, %v263
    %v280 = vpack.c.b16 %v266, %v265
    %v281 = vpack.c.b16 %v268, %v267
    %v282 = vpack.c.b16 %v270, %v269
    %v283 = vpack.c.b16 %v272, %v271
    %v284 = vpack.c.b16 %v274, %v273
    %v285 = vpack.c.b16 %v276, %v275
    %v286 = vpack.c.b16 %v278, %v277
    %295 = vmatprep.subr.bf16.mxu0 0
    %296 = vmatpush1.bf16.msra.mxu0 %v279
    %297 = vmatprep.subr.bf16.mxu0 0
    %298 = vmatpush1.bf16.msra.mxu0 %v280
    %299 = vmatprep.subr.bf16.mxu0 0
    %300 = vmatpush1.bf16.msra.mxu0 %v281
    %301 = vmatprep.subr.bf16.mxu0 0
    %302 = vmatpush1.bf16.msra.mxu0 %v282
    %303 = vmatprep.subr.bf16.mxu0 0
    %304 = vmatpush1.bf16.msra.mxu0 %v283
    %305 = vmatprep.subr.bf16.mxu0 0
    %306 = vmatpush1.bf16.msra.mxu0 %v284
    %307 = vmatprep.subr.bf16.mxu0 0
    %308 = vmatpush1.bf16.msra.mxu0 %v285
    %309 = vmatprep.subr.bf16.mxu0 0
    %310 = vmatpush1.bf16.msra.mxu0 %v286
    %311 = vmatprep.subr.bf16.mxu0 0
    %312 = vmatpush1.bf16.msra.mxu0 0
    %313 = vmatprep.subr.bf16.mxu0 0
    %314 = vmatpush1.bf16.msra.mxu0 0
    %315 = vmatprep.subr.bf16.mxu0 0
    %316 = vmatpush1.bf16.msra.mxu0 0
    %317 = vmatprep.subr.bf16.mxu0 0
    %318 = vmatpush1.bf16.msra.mxu0 0
    %319 = vmatprep.subr.bf16.mxu0 0
    %320 = vmatpush1.bf16.msra.mxu0 0
    %321 = vmatprep.subr.bf16.mxu0 0
    %322 = vmatpush1.bf16.msra.mxu0 0
    %323 = vmatprep.subr.bf16.mxu0 0
    %324 = vmatpush1.bf16.msra.mxu0 0
    %325 = vmatprep.subr.bf16.mxu0 0
    %326 = vmatpush1.bf16.msra.mxu0 0
    %327 = vmatprep.mubr.bf16.mxu0 0
    %328 = vmatmul.mubr.bf16.gmra.mrb[0].mxu0 %v215
    %v329 = vpop.f32.mrb[0].mxu0
    %v330 = vadd.f32 0.0, %v329
    %v331 = vpop.f32.mrb[0].mxu0
    %v332 = vpop.f32.mrb[0].mxu0
    %v333 = vadd.f32 0.0, %v332
    %v334 = vpop.f32.mrb[0].mxu0
    %335 = vmatprep.mubr.bf16.mxu0 0
    %336 = vmatmul.mubr.bf16.gmra.mrb[0].mxu0 %v216
    %v337 = vpop.f32.mrb[0].mxu0
    %v338 = vadd.f32 0.0, %v337
    %v339 = vpop.f32.mrb[0].mxu0
    %v340 = vpop.f32.mrb[0].mxu0
    %v341 = vadd.f32 0.0, %v340
    %v342 = vpop.f32.mrb[0].mxu0
    %343 = vmatprep.mubr.bf16.mxu0 0
    %344 = vmatmul.mubr.bf16.gmra.mrb[0].mxu0 %v217
    %v345 = vpop.f32.mrb[0].mxu0
    %v346 = vadd.f32 0.0, %v345
    %v347 = vpop.f32.mrb[0].mxu0
    %v348 = vpop.f32.mrb[0].mxu0
    %v349 = vadd.f32 0.0, %v348
    %v350 = vpop.f32.mrb[0].mxu0
    %351 = vmatprep.mubr.bf16.mxu0 0
    %352 = vmatmul.mubr.bf16.gmra.mrb[0].mxu0 %v218
    %v353 = vpop.f32.mrb[0].mxu0
    %v354 = vadd.f32 0.0, %v353
    %v355 = vpop.f32.mrb[0].mxu0
    %v356 = vpop.f32.mrb[0].mxu0
    %v357 = vadd.f32 0.0, %v356
    %v358 = vpop.f32.mrb[0].mxu0
    %359 = vmatprep.mubr.bf16.mxu0 0
    %360 = vmatmul.mubr.bf16.gmra.mrb[0].mxu0 %v219
    %v361 = vpop.f32.mrb[0].mxu0
    %v362 = vadd.f32 0.0, %v361
    %v363 = vpop.f32.mrb[0].mxu0
    %v364 = vpop.f32.mrb[0].mxu0
    %v365 = vadd.f32 0.0, %v364
    %v366 = vpop.f32.mrb[0].mxu0
    %367 = vmatprep.mubr.bf16.mxu0 0
    %368 = vmatmul.mubr.bf16.gmra.mrb[0].mxu0 %v220
    %v369 = vpop.f32.mrb[0].mxu0
    %v370 = vadd.f32 0.0, %v369
    %v371 = vpop.f32.mrb[0].mxu0
    %v372 = vpop.f32.mrb[0].mxu0
    %v373 = vadd.f32 0.0, %v372
    %v374 = vpop.f32.mrb[0].mxu0
    %375 = vmatprep.mubr.bf16.mxu0 0
    %376 = vmatmul.mubr.bf16.gmra.mrb[0].mxu0 %v221
    %v377 = vpop.f32.mrb[0].mxu0
    %v378 = vadd.f32 0.0, %v377
    %v379 = vpop.f32.mrb[0].mxu0
    %v380 = vpop.f32.mrb[0].mxu0
    %v381 = vadd.f32 0.0, %v380
    %v382 = vpop.f32.mrb[0].mxu0
    %383 = vmatprep.mubr.bf16.mxu0 0
    %384 = vmatmul.mubr.bf16.gmra.mrb[0].mxu0 %v222
    %v385 = vpop.f32.mrb[0].mxu0
    %v386 = vadd.f32 0.0, %v385
    %v387 = vpop.f32.mrb[0].mxu0
    %v388 = vpop.f32.mrb[0].mxu0
    %v389 = vadd.f32 0.0, %v388
    %v390 = vpop.f32.mrb[0].mxu0
    %391 = vmatprep.mubr.bf16.mxu0 0
    %392 = vmatmul.mubr.bf16.gmra.mrb[0].mxu0 %v223
    %v393 = vpop.f32.mrb[0].mxu0
    %v394 = vadd.f32 0.0, %v393
    %v395 = vpop.f32.mrb[0].mxu0
    %v396 = vpop.f32.mrb[0].mxu0
    %v397 = vadd.f32 0.0, %v396
    %v398 = vpop.f32.mrb[0].mxu0
    %399 = vmatprep.mubr.bf16.mxu0 0
    %400 = vmatmul.mubr.bf16.gmra.mrb[0].mxu0 %v224
    %v401 = vpop.f32.mrb[0].mxu0
    %v402 = vadd.f32 0.0, %v401
    %v403 = vpop.f32.mrb[0].mxu0
    %v404 = vpop.f32.mrb[0].mxu0
    %v405 = vadd.f32 0.0, %v404
    %v406 = vpop.f32.mrb[0].mxu0
    %407 = vmatprep.mubr.bf16.mxu0 0
    %408 = vmatmul.mubr.bf16.gmra.mrb[0].mxu0 %v225
    %v409 = vpop.f32.mrb[0].mxu0
    %v410 = vadd.f32 0.0, %v409
    %v411 = vpop.f32.mrb[0].mxu0
    %v412 = vpop.f32.mrb[0].mxu0
    %v413 = vadd.f32 0.0, %v412
    %v414 = vpop.f32.mrb[0].mxu0
    %415 = vmatprep.mubr.bf16.mxu0 0
    %416 = vmatmul.mubr.bf16.gmra.mrb[0].mxu0 %v226
    %v417 = vpop.f32.mrb[0].mxu0
    %v418 = vadd.f32 0.0, %v417
    %v419 = vpop.f32.mrb[0].mxu0
    %v420 = vpop.f32.mrb[0].mxu0
    %v421 = vadd.f32 0.0, %v420
    %v422 = vpop.f32.mrb[0].mxu0
    %423 = vmatprep.mubr.bf16.mxu0 0
    %424 = vmatmul.mubr.bf16.gmra.mrb[0].mxu0 %v227
    %v425 = vpop.f32.mrb[0].mxu0
    %v426 = vadd.f32 0.0, %v425
    %v427 = vpop.f32.mrb[0].mxu0
    %v428 = vpop.f32.mrb[0].mxu0
    %v429 = vadd.f32 0.0, %v428
    %v430 = vpop.f32.mrb[0].mxu0
    %431 = vmatprep.mubr.bf16.mxu0 0
    %432 = vmatmul.mubr.bf16.gmra.mrb[0].mxu0 %v228
    %v433 = vpop.f32.mrb[0].mxu0
    %v434 = vadd.f32 0.0, %v433
    %v435 = vpop.f32.mrb[0].mxu0
    %v436 = vpop.f32.mrb[0].mxu0
    %v437 = vadd.f32 0.0, %v436
    %v438 = vpop.f32.mrb[0].mxu0
    %439 = vmatprep.mubr.bf16.mxu0 0
    %440 = vmatmul.mubr.bf16.gmra.mrb[0].mxu0 %v229
    %v441 = vpop.f32.mrb[0].mxu0
    %v442 = vadd.f32 0.0, %v441
    %v443 = vpop.f32.mrb[0].mxu0
    %v444 = vpop.f32.mrb[0].mxu0
    %v445 = vadd.f32 0.0, %v444
    %v446 = vpop.f32.mrb[0].mxu0
    %447 = vmatprep.mubr.bf16.mxu0 0
    %448 = vmatmul.mubr.bf16.gmra.mrb[0].mxu0 %v230
    %v449 = vpop.f32.mrb[0].mxu0
    %v450 = vadd.f32 0.0, %v449
    %v451 = vpop.f32.mrb[0].mxu0
    %v452 = vpop.f32.mrb[0].mxu0
    %v453 = vadd.f32 0.0, %v452
    %v454 = vpop.f32.mrb[0].mxu0
    %455 = vdwg.mxu0
    %v456 = vxor.u32 %v330, 2147483648
    %v457 = vxor.u32 %v333, 2147483648
    %v458 = vxor.u32 %v338, 2147483648
    %v459 = vxor.u32 %v341, 2147483648
    %v460 = vxor.u32 %v346, 2147483648
    %v461 = vxor.u32 %v349, 2147483648
    %v462 = vxor.u32 %v354, 2147483648
    %v463 = vxor.u32 %v357, 2147483648
    %v464 = vxor.u32 %v362, 2147483648
    %v465 = vxor.u32 %v365, 2147483648
    %v466 = vxor.u32 %v370, 2147483648
    %v467 = vxor.u32 %v373, 2147483648
    %v468 = vxor.u32 %v378, 2147483648
    %v469 = vxor.u32 %v381, 2147483648
    %v470 = vxor.u32 %v386, 2147483648
    %v471 = vxor.u32 %v389, 2147483648
    %v472 = vxor.u32 %v394, 2147483648
    %v473 = vxor.u32 %v397, 2147483648
    %v474 = vxor.u32 %v402, 2147483648
    %v475 = vxor.u32 %v405, 2147483648
    %v476 = vxor.u32 %v410, 2147483648
    %v477 = vxor.u32 %v413, 2147483648
    %v478 = vxor.u32 %v418, 2147483648
    %v479 = vxor.u32 %v421, 2147483648
    %v480 = vxor.u32 %v426, 2147483648
    %v481 = vxor.u32 %v429, 2147483648
    %v482 = vxor.u32 %v434, 2147483648
    %v483 = vxor.u32 %v437, 2147483648
    %v484 = vxor.u32 %v442, 2147483648
    %v485 = vxor.u32 %v445, 2147483648
    %v486 = vxor.u32 %v450, 2147483648
    %v487 = vxor.u32 %v453, 2147483648
    %v488 = vmul.f32 %v456, 1.442695
    %v489 = vpow.pop %v488
    %v490 = vmul.f32 %v457, 1.442695
    %v491 = vpow.pop %v490
    %v492 = vmul.f32 %v458, 1.442695
    %v493 = vpow.pop %v492
    %v494 = vmul.f32 %v459, 1.442695
    %v495 = vpow.pop %v494
    %v496 = vmul.f32 %v460, 1.442695
    %v497 = vpow.pop %v496
    %v498 = vmul.f32 %v461, 1.442695
    %v499 = vpow.pop %v498
    %v500 = vmul.f32 %v462, 1.442695
    %v501 = vpow.pop %v500
    %v502 = vmul.f32 %v463, 1.442695
    %v503 = vpow.pop %v502
    %v504 = vmul.f32 %v464, 1.442695
    %v505 = vpow.pop %v504
    %v506 = vmul.f32 %v465, 1.442695
    %v507 = vpow.pop %v506
    %v508 = vmul.f32 %v466, 1.442695
    %v509 = vpow.pop %v508
    %v510 = vmul.f32 %v467, 1.442695
    %v511 = vpow.pop %v510
    %v512 = vmul.f32 %v468, 1.442695
    %v513 = vpow.pop %v512
    %v514 = vmul.f32 %v469, 1.442695
    %v515 = vpow.pop %v514
    %v516 = vmul.f32 %v470, 1.442695
    %v517 = vpow.pop %v516
    %v518 = vmul.f32 %v471, 1.442695
    %v519 = vpow.pop %v518
    %v520 = vmul.f32 %v472, 1.442695
    %v521 = vpow.pop %v520
    %v522 = vmul.f32 %v473, 1.442695
    %v523 = vpow.pop %v522
    %v524 = vmul.f32 %v474, 1.442695
    %v525 = vpow.pop %v524
    %v526 = vmul.f32 %v475, 1.442695
    %v527 = vpow.pop %v526
    %v528 = vmul.f32 %v476, 1.442695
    %v529 = vpow.pop %v528
    %v530 = vmul.f32 %v477, 1.442695
    %v531 = vpow.pop %v530
    %v532 = vmul.f32 %v478, 1.442695
    %v533 = vpow.pop %v532
    %v534 = vmul.f32 %v479, 1.442695
    %v535 = vpow.pop %v534
    %v536 = vmul.f32 %v480, 1.442695
    %v537 = vpow.pop %v536
    %v538 = vmul.f32 %v481, 1.442695
    %v539 = vpow.pop %v538
    %v540 = vmul.f32 %v482, 1.442695
    %v541 = vpow.pop %v540
    %v542 = vmul.f32 %v483, 1.442695
    %v543 = vpow.pop %v542
    %v544 = vmul.f32 %v484, 1.442695
    %v545 = vpow.pop %v544
    %v546 = vmul.f32 %v485, 1.442695
    %v547 = vpow.pop %v546
    %v548 = vmul.f32 %v486, 1.442695
    %v549 = vpow.pop %v548
    %v550 = vmul.f32 %v487, 1.442695
    %v551 = vpow.pop %v550
    %v552 = vadd.f32 %v489, 1.0
    %v553 = vadd.f32 %v491, 1.0
    %v554 = vadd.f32 %v493, 1.0
    %v555 = vadd.f32 %v495, 1.0
    %v556 = vadd.f32 %v497, 1.0
    %v557 = vadd.f32 %v499, 1.0
    %v558 = vadd.f32 %v501, 1.0
    %v559 = vadd.f32 %v503, 1.0
    %v560 = vadd.f32 %v505, 1.0
    %v561 = vadd.f32 %v507, 1.0
    %v562 = vadd.f32 %v509, 1.0
    %v563 = vadd.f32 %v511, 1.0
    %v564 = vadd.f32 %v513, 1.0
    %v565 = vadd.f32 %v515, 1.0
    %v566 = vadd.f32 %v517, 1.0
    %v567 = vadd.f32 %v519, 1.0
    %v568 = vadd.f32 %v521, 1.0
    %v569 = vadd.f32 %v523, 1.0
    %v570 = vadd.f32 %v525, 1.0
    %v571 = vadd.f32 %v527, 1.0
    %v572 = vadd.f32 %v529, 1.0
    %v573 = vadd.f32 %v531, 1.0
    %v574 = vadd.f32 %v533, 1.0
    %v575 = vadd.f32 %v535, 1.0
    %v576 = vadd.f32 %v537, 1.0
    %v577 = vadd.f32 %v539, 1.0
    %v578 = vadd.f32 %v541, 1.0
    %v579 = vadd.f32 %v543, 1.0
    %v580 = vadd.f32 %v545, 1.0
    %v581 = vadd.f32 %v547, 1.0
    %v582 = vadd.f32 %v549, 1.0
    %v583 = vadd.f32 %v551, 1.0
    %v584 = vrcp.pop %v552
    %v585 = vmul.f32 1.0, %v584
    %v586 = vrcp.pop %v553
    %v587 = vmul.f32 1.0, %v586
    %v588 = vrcp.pop %v554
    %v589 = vmul.f32 1.0, %v588
    %v590 = vrcp.pop %v555
    %v591 = vmul.f32 1.0, %v590
    %v592 = vrcp.pop %v556
    %v593 = vmul.f32 1.0, %v592
    %v594 = vrcp.pop %v557
    %v595 = vmul.f32 1.0, %v594
    %v596 = vrcp.pop %v558
    %v597 = vmul.f32 1.0, %v596
    %v598 = vrcp.pop %v559
    %v599 = vmul.f32 1.0, %v598
    %v600 = vrcp.pop %v560
    %v601 = vmul.f32 1.0, %v600
    %v602 = vrcp.pop %v561
    %v603 = vmul.f32 1.0, %v602
    %v604 = vrcp.pop %v562
    %v605 = vmul.f32 1.0, %v604
    %v606 = vrcp.pop %v563
    %v607 = vmul.f32 1.0, %v606
    %v608 = vrcp.pop %v564
    %v609 = vmul.f32 1.0, %v608
    %v610 = vrcp.pop %v565
    %v611 = vmul.f32 1.0, %v610
    %v612 = vrcp.pop %v566
    %v613 = vmul.f32 1.0, %v612
    %v614 = vrcp.pop %v567
    %v615 = vmul.f32 1.0, %v614
    %v616 = vrcp.pop %v568
    %v617 = vmul.f32 1.0, %v616
    %v618 = vrcp.pop %v569
    %v619 = vmul.f32 1.0, %v618
    %v620 = vrcp.pop %v570
    %v621 = vmul.f32 1.0, %v620
    %v622 = vrcp.pop %v571
    %v623 = vmul.f32 1.0, %v622
    %v624 = vrcp.pop %v572
    %v625 = vmul.f32 1.0, %v624
    %v626 = vrcp.pop %v573
    %v627 = vmul.f32 1.0, %v626
    %v628 = vrcp.pop %v574
    %v629 = vmul.f32 1.0, %v628
    %v630 = vrcp.pop %v575
    %v631 = vmul.f32 1.0, %v630
    %v632 = vrcp.pop %v576
    %v633 = vmul.f32 1.0, %v632
    %v634 = vrcp.pop %v577
    %v635 = vmul.f32 1.0, %v634
    %v636 = vrcp.pop %v578
    %v637 = vmul.f32 1.0, %v636
    %v638 = vrcp.pop %v579
    %v639 = vmul.f32 1.0, %v638
    %v640 = vrcp.pop %v580
    %v641 = vmul.f32 1.0, %v640
    %v642 = vrcp.pop %v581
    %v643 = vmul.f32 1.0, %v642
    %v644 = vrcp.pop %v582
    %v645 = vmul.f32 1.0, %v644
    %v646 = vrcp.pop %v583
    %v647 = vmul.f32 1.0, %v646
    %v648 = vmul.f32 %v330, %v585
    %v649 = vmul.f32 %v333, %v587
    %v650 = vmul.f32 %v338, %v589
    %v651 = vmul.f32 %v341, %v591
    %v652 = vmul.f32 %v346, %v593
    %v653 = vmul.f32 %v349, %v595
    %v654 = vmul.f32 %v354, %v597
    %v655 = vmul.f32 %v357, %v599
    %v656 = vmul.f32 %v362, %v601
    %v657 = vmul.f32 %v365, %v603
    %v658 = vmul.f32 %v370, %v605
    %v659 = vmul.f32 %v373, %v607
    %v660 = vmul.f32 %v378, %v609
    %v661 = vmul.f32 %v381, %v611
    %v662 = vmul.f32 %v386, %v613
    %v663 = vmul.f32 %v389, %v615
    %v664 = vmul.f32 %v394, %v617
    %v665 = vmul.f32 %v397, %v619
    %v666 = vmul.f32 %v402, %v621
    %v667 = vmul.f32 %v405, %v623
    %v668 = vmul.f32 %v410, %v625
    %v669 = vmul.f32 %v413, %v627
    %v670 = vmul.f32 %v418, %v629
    %v671 = vmul.f32 %v421, %v631
    %v672 = vmul.f32 %v426, %v633
    %v673 = vmul.f32 %v429, %v635
    %v674 = vmul.f32 %v434, %v637
    %v675 = vmul.f32 %v437, %v639
    %v676 = vmul.f32 %v442, %v641
    %v677 = vmul.f32 %v445, %v643
    %v678 = vmul.f32 %v450, %v645
    %v679 = vmul.f32 %v453, %v647
    %v680 = vld [vmem:[%s5] sm:$0x1]
    %v681 = vld [vmem:[%s6] sm:$0x1]
    %682 = vadd.xlane.f32.xlu0 %v648
    %v683 = vpop.xlane.xlu0 %682
    %684 = vadd.xlane.f32.xlu0 %v649
    %v685 = vpop.xlane.xlu0 %684
    %686 = vadd.xlane.f32.xlu0 %v650
    %v687 = vpop.xlane.xlu0 %686
    %688 = vadd.xlane.f32.xlu0 %v651
    %v689 = vpop.xlane.xlu0 %688
    %690 = vadd.xlane.f32.xlu0 %v652
    %v691 = vpop.xlane.xlu0 %690
    %692 = vadd.xlane.f32.xlu0 %v653
    %v693 = vpop.xlane.xlu0 %692
    %694 = vadd.xlane.f32.xlu0 %v654
    %v695 = vpop.xlane.xlu0 %694
    %696 = vadd.xlane.f32.xlu0 %v655
    %v697 = vpop.xlane.xlu0 %696
    %698 = vadd.xlane.f32.xlu0 %v656
    %v699 = vpop.xlane.xlu0 %698
    %700 = vadd.xlane.f32.xlu0 %v657
    %v701 = vpop.xlane.xlu0 %700
    %702 = vadd.xlane.f32.xlu0 %v658
    %v703 = vpop.xlane.xlu0 %702
    %704 = vadd.xlane.f32.xlu0 %v659
    %v705 = vpop.xlane.xlu0 %704
    %706 = vadd.xlane.f32.xlu0 %v660
    %v707 = vpop.xlane.xlu0 %706
    %708 = vadd.xlane.f32.xlu0 %v661
    %v709 = vpop.xlane.xlu0 %708
    %710 = vadd.xlane.f32.xlu0 %v662
    %v711 = vpop.xlane.xlu0 %710
    %712 = vadd.xlane.f32.xlu0 %v663
    %v713 = vpop.xlane.xlu0 %712
    %714 = vadd.xlane.f32.xlu0 %v664
    %v715 = vpop.xlane.xlu0 %714
    %716 = vadd.xlane.f32.xlu0 %v665
    %v717 = vpop.xlane.xlu0 %716
    %718 = vadd.xlane.f32.xlu0 %v666
    %v719 = vpop.xlane.xlu0 %718
    %720 = vadd.xlane.f32.xlu0 %v667
    %v721 = vpop.xlane.xlu0 %720
    %722 = vadd.xlane.f32.xlu0 %v668
    %v723 = vpop.xlane.xlu0 %722
    %724 = vadd.xlane.f32.xlu0 %v669
    %v725 = vpop.xlane.xlu0 %724
    %726 = vadd.xlane.f32.xlu0 %v670
    %v727 = vpop.xlane.xlu0 %726
    %728 = vadd.xlane.f32.xlu0 %v671
    %v729 = vpop.xlane.xlu0 %728
    %730 = vadd.xlane.f32.xlu0 %v672
    %v731 = vpop.xlane.xlu0 %730
    %732 = vadd.xlane.f32.xlu0 %v673
    %v733 = vpop.xlane.xlu0 %732
    %734 = vadd.xlane.f32.xlu0 %v674
    %v735 = vpop.xlane.xlu0 %734
    %736 = vadd.xlane.f32.xlu0 %v675
    %v737 = vpop.xlane.xlu0 %736
    %738 = vadd.xlane.f32.xlu0 %v676
    %v739 = vpop.xlane.xlu0 %738
    %740 = vadd.xlane.f32.xlu0 %v677
    %v741 = vpop.xlane.xlu0 %740
    %742 = vadd.xlane.f32.xlu0 %v678
    %v743 = vpop.xlane.xlu0 %742
    %744 = vadd.xlane.f32.xlu0 %v679
    %v745 = vpop.xlane.xlu0 %744
    %v746 = vmul.f32 %v683, 0.03125
    %v747 = vmul.f32 %v685, 0.03125
    %v748 = vmul.f32 %v687, 0.03125
    %v749 = vmul.f32 %v689, 0.03125
    %v750 = vmul.f32 %v691, 0.03125
    %v751 = vmul.f32 %v693, 0.03125
    %v752 = vmul.f32 %v695, 0.03125
    %v753 = vmul.f32 %v697, 0.03125
    %v754 = vmul.f32 %v699, 0.03125
    %v755 = vmul.f32 %v701, 0.03125
    %v756 = vmul.f32 %v703, 0.03125
    %v757 = vmul.f32 %v705, 0.03125
    %v758 = vmul.f32 %v707, 0.03125
    %v759 = vmul.f32 %v709, 0.03125
    %v760 = vmul.f32 %v711, 0.03125
    %v761 = vmul.f32 %v713, 0.03125
    %v762 = vmul.f32 %v715, 0.03125
    %v763 = vmul.f32 %v717, 0.03125
    %v764 = vmul.f32 %v719, 0.03125
    %v765 = vmul.f32 %v721, 0.03125
    %v766 = vmul.f32 %v723, 0.03125
    %v767 = vmul.f32 %v725, 0.03125
    %v768 = vmul.f32 %v727, 0.03125
    %v769 = vmul.f32 %v729, 0.03125
    %v770 = vmul.f32 %v731, 0.03125
    %v771 = vmul.f32 %v733, 0.03125
    %v772 = vmul.f32 %v735, 0.03125
    %v773 = vmul.f32 %v737, 0.03125
    %v774 = vmul.f32 %v739, 0.03125
    %v775 = vmul.f32 %v741, 0.03125
    %v776 = vmul.f32 %v743, 0.03125
    %v777 = vmul.f32 %v745, 0.03125
    %v778 = vmul.f32 %v648, %v648
    %v779 = vmul.f32 %v649, %v649
    %v780 = vmul.f32 %v650, %v650
    %v781 = vmul.f32 %v651, %v651
    %v782 = vmul.f32 %v652, %v652
    %v783 = vmul.f32 %v653, %v653
    %v784 = vmul.f32 %v654, %v654
    %v785 = vmul.f32 %v655, %v655
    %v786 = vmul.f32 %v656, %v656
    %v787 = vmul.f32 %v657, %v657
    %v788 = vmul.f32 %v658, %v658
    %v789 = vmul.f32 %v659, %v659
    %v790 = vmul.f32 %v660, %v660
    %v791 = vmul.f32 %v661, %v661
    %v792 = vmul.f32 %v662, %v662
    %v793 = vmul.f32 %v663, %v663
    %v794 = vmul.f32 %v664, %v664
    %v795 = vmul.f32 %v665, %v665
    %v796 = vmul.f32 %v666, %v666
    %v797 = vmul.f32 %v667, %v667
    %v798 = vmul.f32 %v668, %v668
    %v799 = vmul.f32 %v669, %v669
    %v800 = vmul.f32 %v670, %v670
    %v801 = vmul.f32 %v671, %v671
    %v802 = vmul.f32 %v672, %v672
    %v803 = vmul.f32 %v673, %v673
    %v804 = vmul.f32 %v674, %v674
    %v805 = vmul.f32 %v675, %v675
    %v806 = vmul.f32 %v676, %v676
    %v807 = vmul.f32 %v677, %v677
    %v808 = vmul.f32 %v678, %v678
    %v809 = vmul.f32 %v679, %v679
    %810 = vadd.xlane.f32.xlu0 %v778
    %v811 = vpop.xlane.xlu0 %810
    %812 = vadd.xlane.f32.xlu0 %v779
    %v813 = vpop.xlane.xlu0 %812
    %814 = vadd.xlane.f32.xlu0 %v780
    %v815 = vpop.xlane.xlu0 %814
    %816 = vadd.xlane.f32.xlu0 %v781
    %v817 = vpop.xlane.xlu0 %816
    %818 = vadd.xlane.f32.xlu0 %v782
    %v819 = vpop.xlane.xlu0 %818
    %820 = vadd.xlane.f32.xlu0 %v783
    %v821 = vpop.xlane.xlu0 %820
    %822 = vadd.xlane.f32.xlu0 %v784
    %v823 = vpop.xlane.xlu0 %822
    %824 = vadd.xlane.f32.xlu0 %v785
    %v825 = vpop.xlane.xlu0 %824
    %826 = vadd.xlane.f32.xlu0 %v786
    %v827 = vpop.xlane.xlu0 %826
    %828 = vadd.xlane.f32.xlu0 %v787
    %v829 = vpop.xlane.xlu0 %828
    %830 = vadd.xlane.f32.xlu0 %v788
    %v831 = vpop.xlane.xlu0 %830
    %832 = vadd.xlane.f32.xlu0 %v789
    %v833 = vpop.xlane.xlu0 %832
    %834 = vadd.xlane.f32.xlu0 %v790
    %v835 = vpop.xlane.xlu0 %834
    %836 = vadd.xlane.f32.xlu0 %v791
    %v837 = vpop.xlane.xlu0 %836
    %838 = vadd.xlane.f32.xlu0 %v792
    %v839 = vpop.xlane.xlu0 %838
    %840 = vadd.xlane.f32.xlu0 %v793
    %v841 = vpop.xlane.xlu0 %840
    %842 = vadd.xlane.f32.xlu0 %v794
    %v843 = vpop.xlane.xlu0 %842
    %844 = vadd.xlane.f32.xlu0 %v795
    %v845 = vpop.xlane.xlu0 %844
    %846 = vadd.xlane.f32.xlu0 %v796
    %v847 = vpop.xlane.xlu0 %846
    %848 = vadd.xlane.f32.xlu0 %v797
    %v849 = vpop.xlane.xlu0 %848
    %850 = vadd.xlane.f32.xlu0 %v798
    %v851 = vpop.xlane.xlu0 %850
    %852 = vadd.xlane.f32.xlu0 %v799
    %v853 = vpop.xlane.xlu0 %852
    %854 = vadd.xlane.f32.xlu0 %v800
    %v855 = vpop.xlane.xlu0 %854
    %856 = vadd.xlane.f32.xlu0 %v801
    %v857 = vpop.xlane.xlu0 %856
    %858 = vadd.xlane.f32.xlu0 %v802
    %v859 = vpop.xlane.xlu0 %858
    %860 = vadd.xlane.f32.xlu0 %v803
    %v861 = vpop.xlane.xlu0 %860
    %862 = vadd.xlane.f32.xlu0 %v804
    %v863 = vpop.xlane.xlu0 %862
    %864 = vadd.xlane.f32.xlu0 %v805
    %v865 = vpop.xlane.xlu0 %864
    %866 = vadd.xlane.f32.xlu0 %v806
    %v867 = vpop.xlane.xlu0 %866
    %868 = vadd.xlane.f32.xlu0 %v807
    %v869 = vpop.xlane.xlu0 %868
    %870 = vadd.xlane.f32.xlu0 %v808
    %v871 = vpop.xlane.xlu0 %870
    %872 = vadd.xlane.f32.xlu0 %v809
    %v873 = vpop.xlane.xlu0 %872
    %v874 = vmul.f32 %v811, 0.03125
    %v875 = vmul.f32 %v813, 0.03125
    %v876 = vmul.f32 %v815, 0.03125
    %v877 = vmul.f32 %v817, 0.03125
    %v878 = vmul.f32 %v819, 0.03125
    %v879 = vmul.f32 %v821, 0.03125
    %v880 = vmul.f32 %v823, 0.03125
    %v881 = vmul.f32 %v825, 0.03125
    %v882 = vmul.f32 %v827, 0.03125
    %v883 = vmul.f32 %v829, 0.03125
    %v884 = vmul.f32 %v831, 0.03125
    %v885 = vmul.f32 %v833, 0.03125
    %v886 = vmul.f32 %v835, 0.03125
    %v887 = vmul.f32 %v837, 0.03125
    %v888 = vmul.f32 %v839, 0.03125
    %v889 = vmul.f32 %v841, 0.03125
    %v890 = vmul.f32 %v843, 0.03125
    %v891 = vmul.f32 %v845, 0.03125
    %v892 = vmul.f32 %v847, 0.03125
    %v893 = vmul.f32 %v849, 0.03125
    %v894 = vmul.f32 %v851, 0.03125
    %v895 = vmul.f32 %v853, 0.03125
    %v896 = vmul.f32 %v855, 0.03125
    %v897 = vmul.f32 %v857, 0.03125
    %v898 = vmul.f32 %v859, 0.03125
    %v899 = vmul.f32 %v861, 0.03125
    %v900 = vmul.f32 %v863, 0.03125
    %v901 = vmul.f32 %v865, 0.03125
    %v902 = vmul.f32 %v867, 0.03125
    %v903 = vmul.f32 %v869, 0.03125
    %v904 = vmul.f32 %v871, 0.03125
    %v905 = vmul.f32 %v873, 0.03125
    %v906 = vmul.f32 %v746, %v746
    %v907 = vmul.f32 %v747, %v747
    %v908 = vmul.f32 %v748, %v748
    %v909 = vmul.f32 %v749, %v749
    %v910 = vmul.f32 %v750, %v750
    %v911 = vmul.f32 %v751, %v751
    %v912 = vmul.f32 %v752, %v752
    %v913 = vmul.f32 %v753, %v753
    %v914 = vmul.f32 %v754, %v754
    %v915 = vmul.f32 %v755, %v755
    %v916 = vmul.f32 %v756, %v756
    %v917 = vmul.f32 %v757, %v757
    %v918 = vmul.f32 %v758, %v758
    %v919 = vmul.f32 %v759, %v759
    %v920 = vmul.f32 %v760, %v760
    %v921 = vmul.f32 %v761, %v761
    %v922 = vmul.f32 %v762, %v762
    %v923 = vmul.f32 %v763, %v763
    %v924 = vmul.f32 %v764, %v764
    %v925 = vmul.f32 %v765, %v765
    %v926 = vmul.f32 %v766, %v766
    %v927 = vmul.f32 %v767, %v767
    %v928 = vmul.f32 %v768, %v768
    %v929 = vmul.f32 %v769, %v769
    %v930 = vmul.f32 %v770, %v770
    %v931 = vmul.f32 %v771, %v771
    %v932 = vmul.f32 %v772, %v772
    %v933 = vmul.f32 %v773, %v773
    %v934 = vmul.f32 %v774, %v774
    %v935 = vmul.f32 %v775, %v775
    %v936 = vmul.f32 %v776, %v776
    %v937 = vmul.f32 %v777, %v777
    %v938 = vsub.f32 %v874, %v906
    %v939 = vsub.f32 %v875, %v907
    %v940 = vsub.f32 %v876, %v908
    %v941 = vsub.f32 %v877, %v909
    %v942 = vsub.f32 %v878, %v910
    %v943 = vsub.f32 %v879, %v911
    %v944 = vsub.f32 %v880, %v912
    %v945 = vsub.f32 %v881, %v913
    %v946 = vsub.f32 %v882, %v914
    %v947 = vsub.f32 %v883, %v915
    %v948 = vsub.f32 %v884, %v916
    %v949 = vsub.f32 %v885, %v917
    %v950 = vsub.f32 %v886, %v918
    %v951 = vsub.f32 %v887, %v919
    %v952 = vsub.f32 %v888, %v920
    %v953 = vsub.f32 %v889, %v921
    %v954 = vsub.f32 %v890, %v922
    %v955 = vsub.f32 %v891, %v923
    %v956 = vsub.f32 %v892, %v924
    %v957 = vsub.f32 %v893, %v925
    %v958 = vsub.f32 %v894, %v926
    %v959 = vsub.f32 %v895, %v927
    %v960 = vsub.f32 %v896, %v928
    %v961 = vsub.f32 %v897, %v929
    %v962 = vsub.f32 %v898, %v930
    %v963 = vsub.f32 %v899, %v931
    %v964 = vsub.f32 %v900, %v932
    %v965 = vsub.f32 %v901, %v933
    %v966 = vsub.f32 %v902, %v934
    %v967 = vsub.f32 %v903, %v935
    %v968 = vsub.f32 %v904, %v936
    %v969 = vsub.f32 %v905, %v937
    %v970 = vsub.f32 %v648, %v746
    %v971 = vsub.f32 %v649, %v747
    %v972 = vsub.f32 %v650, %v748
    %v973 = vsub.f32 %v651, %v749
    %v974 = vsub.f32 %v652, %v750
    %v975 = vsub.f32 %v653, %v751
    %v976 = vsub.f32 %v654, %v752
    %v977 = vsub.f32 %v655, %v753
    %v978 = vsub.f32 %v656, %v754
    %v979 = vsub.f32 %v657, %v755
    %v980 = vsub.f32 %v658, %v756
    %v981 = vsub.f32 %v659, %v757
    %v982 = vsub.f32 %v660, %v758
    %v983 = vsub.f32 %v661, %v759
    %v984 = vsub.f32 %v662, %v760
    %v985 = vsub.f32 %v663, %v761
    %v986 = vsub.f32 %v664, %v762
    %v987 = vsub.f32 %v665, %v763
    %v988 = vsub.f32 %v666, %v764
    %v989 = vsub.f32 %v667, %v765
    %v990 = vsub.f32 %v668, %v766
    %v991 = vsub.f32 %v669, %v767
    %v992 = vsub.f32 %v670, %v768
    %v993 = vsub.f32 %v671, %v769
    %v994 = vsub.f32 %v672, %v770
    %v995 = vsub.f32 %v673, %v771
    %v996 = vsub.f32 %v674, %v772
    %v997 = vsub.f32 %v675, %v773
    %v998 = vsub.f32 %v676, %v774
    %v999 = vsub.f32 %v677, %v775
    %v1000 = vsub.f32 %v678, %v776
    %v1001 = vsub.f32 %v679, %v777
    %v1002 = vadd.f32 %v938, 1e-05
    %v1003 = vadd.f32 %v939, 1e-05
    %v1004 = vadd.f32 %v940, 1e-05
    %v1005 = vadd.f32 %v941, 1e-05
    %v1006 = vadd.f32 %v942, 1e-05
    %v1007 = vadd.f32 %v943, 1e-05
    %v1008 = vadd.f32 %v944, 1e-05
    %v1009 = vadd.f32 %v945, 1e-05
    %v1010 = vadd.f32 %v946, 1e-05
    %v1011 = vadd.f32 %v947, 1e-05
    %v1012 = vadd.f32 %v948, 1e-05
    %v1013 = vadd.f32 %v949, 1e-05
    %v1014 = vadd.f32 %v950, 1e-05
    %v1015 = vadd.f32 %v951, 1e-05
    %v1016 = vadd.f32 %v952, 1e-05
    %v1017 = vadd.f32 %v953, 1e-05
    %v1018 = vadd.f32 %v954, 1e-05
    %v1019 = vadd.f32 %v955, 1e-05
    %v1020 = vadd.f32 %v956, 1e-05
    %v1021 = vadd.f32 %v957, 1e-05
    %v1022 = vadd.f32 %v958, 1e-05
    %v1023 = vadd.f32 %v959, 1e-05
    %v1024 = vadd.f32 %v960, 1e-05
    %v1025 = vadd.f32 %v961, 1e-05
    %v1026 = vadd.f32 %v962, 1e-05
    %v1027 = vadd.f32 %v963, 1e-05
    %v1028 = vadd.f32 %v964, 1e-05
    %v1029 = vadd.f32 %v965, 1e-05
    %v1030 = vadd.f32 %v966, 1e-05
    %v1031 = vadd.f32 %v967, 1e-05
    %v1032 = vadd.f32 %v968, 1e-05
    %v1033 = vadd.f32 %v969, 1e-05
    %v1034 = vrsqrt.pop %v1002
    %v1035 = vrsqrt.pop %v1003
    %v1036 = vrsqrt.pop %v1004
    %v1037 = vrsqrt.pop %v1005
    %v1038 = vrsqrt.pop %v1006
    %v1039 = vrsqrt.pop %v1007
    %v1040 = vrsqrt.pop %v1008
    %v1041 = vrsqrt.pop %v1009
    %v1042 = vrsqrt.pop %v1010
    %v1043 = vrsqrt.pop %v1011
    %v1044 = vrsqrt.pop %v1012
    %v1045 = vrsqrt.pop %v1013
    %v1046 = vrsqrt.pop %v1014
    %v1047 = vrsqrt.pop %v1015
    %v1048 = vrsqrt.pop %v1016
    %v1049 = vrsqrt.pop %v1017
    %v1050 = vrsqrt.pop %v1018
    %v1051 = vrsqrt.pop %v1019
    %v1052 = vrsqrt.pop %v1020
    %v1053 = vrsqrt.pop %v1021
    %v1054 = vrsqrt.pop %v1022
    %v1055 = vrsqrt.pop %v1023
    %v1056 = vrsqrt.pop %v1024
    %v1057 = vrsqrt.pop %v1025
    %v1058 = vrsqrt.pop %v1026
    %v1059 = vrsqrt.pop %v1027
    %v1060 = vrsqrt.pop %v1028
    %v1061 = vrsqrt.pop %v1029
    %v1062 = vrsqrt.pop %v1030
    %v1063 = vrsqrt.pop %v1031
    %v1064 = vrsqrt.pop %v1032
    %v1065 = vrsqrt.pop %v1033
    %v1066 = vmul.f32 %v970, %v1034
    %v1067 = vmul.f32 %v971, %v1035
    %v1068 = vmul.f32 %v972, %v1036
    %v1069 = vmul.f32 %v973, %v1037
    %v1070 = vmul.f32 %v974, %v1038
    %v1071 = vmul.f32 %v975, %v1039
    %v1072 = vmul.f32 %v976, %v1040
    %v1073 = vmul.f32 %v977, %v1041
    %v1074 = vmul.f32 %v978, %v1042
    %v1075 = vmul.f32 %v979, %v1043
    %v1076 = vmul.f32 %v980, %v1044
    %v1077 = vmul.f32 %v981, %v1045
    %v1078 = vmul.f32 %v982, %v1046
    %v1079 = vmul.f32 %v983, %v1047
    %v1080 = vmul.f32 %v984, %v1048
    %v1081 = vmul.f32 %v985, %v1049
    %v1082 = vmul.f32 %v986, %v1050
    %v1083 = vmul.f32 %v987, %v1051
    %v1084 = vmul.f32 %v988, %v1052
    %v1085 = vmul.f32 %v989, %v1053
    %v1086 = vmul.f32 %v990, %v1054
    %v1087 = vmul.f32 %v991, %v1055
    %v1088 = vmul.f32 %v992, %v1056
    %v1089 = vmul.f32 %v993, %v1057
    %v1090 = vmul.f32 %v994, %v1058
    %v1091 = vmul.f32 %v995, %v1059
    %v1092 = vmul.f32 %v996, %v1060
    %v1093 = vmul.f32 %v997, %v1061
    %v1094 = vmul.f32 %v998, %v1062
    %v1095 = vmul.f32 %v999, %v1063
    %v1096 = vmul.f32 %v1000, %v1064
    %v1097 = vmul.f32 %v1001, %v1065
    %v1099 = vlaneseq
    %v1100 = vshrl.u32 %v1099, 7
    %v1101 = vsub.s32 0, %v1100
    %v1102 = vrot.slane %v680, %v1101
    %v1104 = vmul.f32 %v1066, %v1102
    %v1105 = vmul.f32 %v1067, %v1102
    %v1106 = vmul.f32 %v1068, %v1102
    %v1107 = vmul.f32 %v1069, %v1102
    %v1108 = vmul.f32 %v1070, %v1102
    %v1109 = vmul.f32 %v1071, %v1102
    %v1110 = vmul.f32 %v1072, %v1102
    %v1111 = vmul.f32 %v1073, %v1102
    %v1112 = vmul.f32 %v1074, %v1102
    %v1113 = vmul.f32 %v1075, %v1102
    %v1114 = vmul.f32 %v1076, %v1102
    %v1115 = vmul.f32 %v1077, %v1102
    %v1116 = vmul.f32 %v1078, %v1102
    %v1117 = vmul.f32 %v1079, %v1102
    %v1118 = vmul.f32 %v1080, %v1102
    %v1119 = vmul.f32 %v1081, %v1102
    %v1120 = vmul.f32 %v1082, %v1102
    %v1121 = vmul.f32 %v1083, %v1102
    %v1122 = vmul.f32 %v1084, %v1102
    %v1123 = vmul.f32 %v1085, %v1102
    %v1124 = vmul.f32 %v1086, %v1102
    %v1125 = vmul.f32 %v1087, %v1102
    %v1126 = vmul.f32 %v1088, %v1102
    %v1127 = vmul.f32 %v1089, %v1102
    %v1128 = vmul.f32 %v1090, %v1102
    %v1129 = vmul.f32 %v1091, %v1102
    %v1130 = vmul.f32 %v1092, %v1102
    %v1131 = vmul.f32 %v1093, %v1102
    %v1132 = vmul.f32 %v1094, %v1102
    %v1133 = vmul.f32 %v1095, %v1102
    %v1134 = vmul.f32 %v1096, %v1102
    %v1135 = vmul.f32 %v1097, %v1102
    %v1137 = vlaneseq
    %v1138 = vshrl.u32 %v1137, 7
    %v1139 = vsub.s32 0, %v1138
    %v1140 = vrot.slane %v681, %v1139
    %v1142 = vadd.f32 %v1104, %v1140
    %v1143 = vadd.f32 %v1105, %v1140
    %v1144 = vadd.f32 %v1106, %v1140
    %v1145 = vadd.f32 %v1107, %v1140
    %v1146 = vadd.f32 %v1108, %v1140
    %v1147 = vadd.f32 %v1109, %v1140
    %v1148 = vadd.f32 %v1110, %v1140
    %v1149 = vadd.f32 %v1111, %v1140
    %v1150 = vadd.f32 %v1112, %v1140
    %v1151 = vadd.f32 %v1113, %v1140
    %v1152 = vadd.f32 %v1114, %v1140
    %v1153 = vadd.f32 %v1115, %v1140
    %v1154 = vadd.f32 %v1116, %v1140
    %v1155 = vadd.f32 %v1117, %v1140
    %v1156 = vadd.f32 %v1118, %v1140
    %v1157 = vadd.f32 %v1119, %v1140
    %v1158 = vadd.f32 %v1120, %v1140
    %v1159 = vadd.f32 %v1121, %v1140
    %v1160 = vadd.f32 %v1122, %v1140
    %v1161 = vadd.f32 %v1123, %v1140
    %v1162 = vadd.f32 %v1124, %v1140
    %v1163 = vadd.f32 %v1125, %v1140
    %v1164 = vadd.f32 %v1126, %v1140
    %v1165 = vadd.f32 %v1127, %v1140
    %v1166 = vadd.f32 %v1128, %v1140
    %v1167 = vadd.f32 %v1129, %v1140
    %v1168 = vadd.f32 %v1130, %v1140
    %v1169 = vadd.f32 %v1131, %v1140
    %v1170 = vadd.f32 %v1132, %v1140
    %v1171 = vadd.f32 %v1133, %v1140
    %v1172 = vadd.f32 %v1134, %v1140
    %v1173 = vadd.f32 %v1135, %v1140
    %v1174 = vld [vmem:[#allocation6] sm:$0xff]
    %v1175 = vld [vmem:[#allocation6 + $0x8] sm:$0xf]
    %v1176 = vld [vmem:[#allocation6 + $0xc] sm:$0xff]
    %v1177 = vld [vmem:[#allocation6 + $0x14] sm:$0xf]
    %v1178 = vld [vmem:[#allocation6 + $0x18] sm:$0xff]
    %v1179 = vld [vmem:[#allocation6 + $0x20] sm:$0xf]
    %v1180 = vld [vmem:[#allocation6 + $0x24] sm:$0xff]
    %v1181 = vld [vmem:[#allocation6 + $0x2c] sm:$0xf]
    %v1182 = vld [vmem:[#allocation6 + $0x30] sm:$0xff]
    %v1183 = vld [vmem:[#allocation6 + $0x38] sm:$0xf]
    %v1184 = vld [vmem:[#allocation6 + $0x3c] sm:$0xff]
    %v1185 = vld [vmem:[#allocation6 + $0x44] sm:$0xf]
    %v1186 = vld [vmem:[#allocation6 + $0x48] sm:$0xff]
    %v1187 = vld [vmem:[#allocation6 + $0x50] sm:$0xf]
    %v1188 = vld [vmem:[#allocation6 + $0x54] sm:$0xff]
    %v1189 = vld [vmem:[#allocation6 + $0x5c] sm:$0xf]
    %v1190 = vld [vmem:[#allocation6 + $0x60] sm:$0xff]
    %v1191 = vld [vmem:[#allocation6 + $0x68] sm:$0xf]
    %v1192 = vld [vmem:[#allocation6 + $0x6c] sm:$0xff]
    %v1193 = vld [vmem:[#allocation6 + $0x74] sm:$0xf]
    %v1194 = vld [vmem:[#allocation6 + $0x78] sm:$0xff]
    %v1195 = vld [vmem:[#allocation6 + $0x80] sm:$0xf]
    %v1196 = vld [vmem:[#allocation6 + $0x84] sm:$0xff]
    %v1197 = vld [vmem:[#allocation6 + $0x8c] sm:$0xf]
    %v1198 = vld [vmem:[#allocation6 + $0x90] sm:$0xff]
    %v1199 = vld [vmem:[#allocation6 + $0x98] sm:$0xf]
    %v1200 = vld [vmem:[#allocation6 + $0x9c] sm:$0xff]
    %v1201 = vld [vmem:[#allocation6 + $0xa4] sm:$0xf]
    %v1202 = vld [vmem:[#allocation6 + $0xa8] sm:$0xff]
    %v1203 = vld [vmem:[#allocation6 + $0xb0] sm:$0xf]
    %v1204 = vld [vmem:[#allocation6 + $0xb4] sm:$0xff]
    %v1205 = vld [vmem:[#allocation6 + $0xbc] sm:$0xf]
    %v1238 = vunpack.c.l.b16 %v1174
    %v1239 = vunpack.c.h.b16 %v1174
    %v1240 = vunpack.c.l.b16 %v1175
    %v1241 = vunpack.c.l.b16 %v1176
    %v1242 = vunpack.c.h.b16 %v1176
    %v1243 = vunpack.c.l.b16 %v1177
    %v1244 = vunpack.c.l.b16 %v1178
    %v1245 = vunpack.c.h.b16 %v1178
    %v1246 = vunpack.c.l.b16 %v1179
    %v1247 = vunpack.c.l.b16 %v1180
    %v1248 = vunpack.c.h.b16 %v1180
    %v1249 = vunpack.c.l.b16 %v1181
    %v1250 = vunpack.c.l.b16 %v1182
    %v1251 = vunpack.c.h.b16 %v1182
    %v1252 = vunpack.c.l.b16 %v1183
    %v1253 = vunpack.c.l.b16 %v1184
    %v1254 = vunpack.c.h.b16 %v1184
    %v1255 = vunpack.c.l.b16 %v1185
    %v1256 = vunpack.c.l.b16 %v1186
    %v1257 = vunpack.c.h.b16 %v1186
    %v1258 = vunpack.c.l.b16 %v1187
    %v1259 = vunpack.c.l.b16 %v1188
    %v1260 = vunpack.c.h.b16 %v1188
    %v1261 = vunpack.c.l.b16 %v1189
    %v1262 = vunpack.c.l.b16 %v1190
    %v1263 = vunpack.c.h.b16 %v1190
    %v1264 = vunpack.c.l.b16 %v1191
    %v1265 = vunpack.c.l.b16 %v1192
    %v1266 = vunpack.c.h.b16 %v1192
    %v1267 = vunpack.c.l.b16 %v1193
    %v1268 = vunpack.c.l.b16 %v1194
    %v1269 = vunpack.c.h.b16 %v1194
    %v1270 = vunpack.c.l.b16 %v1195
    %v1271 = vunpack.c.l.b16 %v1196
    %v1272 = vunpack.c.h.b16 %v1196
    %v1273 = vunpack.c.l.b16 %v1197
    %v1274 = vunpack.c.l.b16 %v1198
    %v1275 = vunpack.c.h.b16 %v1198
    %v1276 = vunpack.c.l.b16 %v1199
    %v1277 = vunpack.c.l.b16 %v1200
    %v1278 = vunpack.c.h.b16 %v1200
    %v1279 = vunpack.c.l.b16 %v1201
    %v1280 = vunpack.c.l.b16 %v1202
    %v1281 = vunpack.c.h.b16 %v1202
    %v1282 = vunpack.c.l.b16 %v1203
    %v1283 = vunpack.c.l.b16 %v1204
    %v1284 = vunpack.c.h.b16 %v1204
    %v1285 = vunpack.c.l.b16 %v1205
    %v1286 = vpack.c.b16 %v1241, %v1238
    %v1287 = vpack.c.b16 %v1242, %v1239
    %v1288 = vpack.c.b16 %v1243, %v1240
    %v1289 = vpack.c.b16 %v1247, %v1244
    %v1290 = vpack.c.b16 %v1248, %v1245
    %v1291 = vpack.c.b16 %v1249, %v1246
    %v1292 = vpack.c.b16 %v1253, %v1250
    %v1293 = vpack.c.b16 %v1254, %v1251
    %v1294 = vpack.c.b16 %v1255, %v1252
    %v1295 = vpack.c.b16 %v1259, %v1256
    %v1296 = vpack.c.b16 %v1260, %v1257
    %v1297 = vpack.c.b16 %v1261, %v1258
    %v1298 = vpack.c.b16 %v1265, %v1262
    %v1299 = vpack.c.b16 %v1266, %v1263
    %v1300 = vpack.c.b16 %v1267, %v1264
    %v1301 = vpack.c.b16 %v1271, %v1268
    %v1302 = vpack.c.b16 %v1272, %v1269
    %v1303 = vpack.c.b16 %v1273, %v1270
    %v1304 = vpack.c.b16 %v1277, %v1274
    %v1305 = vpack.c.b16 %v1278, %v1275
    %v1306 = vpack.c.b16 %v1279, %v1276
    %v1307 = vpack.c.b16 %v1283, %v1280
    %v1308 = vpack.c.b16 %v1284, %v1281
    %v1309 = vpack.c.b16 %v1285, %v1282
    %1334 = vmatprep.subr.bf16.mxu0 %v1287
    %1335 = vmatpush1.bf16.msra.mxu0 %v1286
    %1336 = vmatprep.subr.bf16.mxu0 %v1290
    %1337 = vmatpush1.bf16.msra.mxu0 %v1289
    %1338 = vmatprep.subr.bf16.mxu0 %v1293
    %1339 = vmatpush1.bf16.msra.mxu0 %v1292
    %1340 = vmatprep.subr.bf16.mxu0 %v1296
    %1341 = vmatpush1.bf16.msra.mxu0 %v1295
    %1342 = vmatprep.subr.bf16.mxu0 %v1299
    %1343 = vmatpush1.bf16.msra.mxu0 %v1298
    %1344 = vmatprep.subr.bf16.mxu0 %v1302
    %1345 = vmatpush1.bf16.msra.mxu0 %v1301
    %1346 = vmatprep.subr.bf16.mxu0 %v1305
    %1347 = vmatpush1.bf16.msra.mxu0 %v1304
    %1348 = vmatprep.subr.bf16.mxu0 %v1308
    %1349 = vmatpush1.bf16.msra.mxu0 %v1307
    %1350 = vmatprep.subr.bf16.mxu0 0
    %1351 = vmatpush1.bf16.msra.mxu0 0
    %1352 = vmatprep.subr.bf16.mxu0 0
    %1353 = vmatpush1.bf16.msra.mxu0 0
    %1354 = vmatprep.subr.bf16.mxu0 0
    %1355 = vmatpush1.bf16.msra.mxu0 0
    %1356 = vmatprep.subr.bf16.mxu0 0
    %1357 = vmatpush1.bf16.msra.mxu0 0
    %1358 = vmatprep.subr.bf16.mxu0 0
    %1359 = vmatpush1.bf16.msra.mxu0 0
    %1360 = vmatprep.subr.bf16.mxu0 0
    %1361 = vmatpush1.bf16.msra.mxu0 0
    %1362 = vmatprep.subr.bf16.mxu0 0
    %1363 = vmatpush1.bf16.msra.mxu0 0
    %1364 = vmatprep.subr.bf16.mxu0 0
    %1365 = vmatpush1.bf16.msra.mxu0 0
    %1366 = vmatprep.mubr.bf16.mxu0 0
    %1367 = vmatmul.mubr.bf16.gmra.mrb[0].mxu0 %v215
    %v1368 = vpop.f32.mrb[0].mxu0
    %v1369 = vadd.f32 0.0, %v1368
    %v1370 = vpop.f32.mrb[0].mxu0
    %v1371 = vadd.f32 0.0, %v1370
    %v1372 = vpop.f32.mrb[0].mxu0
    %v1373 = vadd.f32 0.0, %v1372
    %v1374 = vpop.f32.mrb[0].mxu0
    %v1375 = vadd.f32 0.0, %v1374
    %1376 = vmatprep.mubr.bf16.mxu0 0
    %1377 = vmatmul.mubr.bf16.gmra.mrb[0].mxu0 %v216
    %v1378 = vpop.f32.mrb[0].mxu0
    %v1379 = vadd.f32 0.0, %v1378
    %v1380 = vpop.f32.mrb[0].mxu0
    %v1381 = vadd.f32 0.0, %v1380
    %v1382 = vpop.f32.mrb[0].mxu0
    %v1383 = vadd.f32 0.0, %v1382
    %v1384 = vpop.f32.mrb[0].mxu0
    %v1385 = vadd.f32 0.0, %v1384
    %1386 = vmatprep.mubr.bf16.mxu0 0
    %1387 = vmatmul.mubr.bf16.gmra.mrb[0].mxu0 %v217
    %v1388 = vpop.f32.mrb[0].mxu0
    %v1389 = vadd.f32 0.0, %v1388
    %v1390 = vpop.f32.mrb[0].mxu0
    %v1391 = vadd.f32 0.0, %v1390
    %v1392 = vpop.f32.mrb[0].mxu0
    %v1393 = vadd.f32 0.0, %v1392
    %v1394 = vpop.f32.mrb[0].mxu0
    %v1395 = vadd.f32 0.0, %v1394
    %1396 = vmatprep.mubr.bf16.mxu0 0
    %1397 = vmatmul.mubr.bf16.gmra.mrb[0].mxu0 %v218
    %v1398 = vpop.f32.mrb[0].mxu0
    %v1399 = vadd.f32 0.0, %v1398
    %v1400 = vpop.f32.mrb[0].mxu0
    %v1401 = vadd.f32 0.0, %v1400
    %v1402 = vpop.f32.mrb[0].mxu0
    %v1403 = vadd.f32 0.0, %v1402
    %v1404 = vpop.f32.mrb[0].mxu0
    %v1405 = vadd.f32 0.0, %v1404
    %1406 = vmatprep.mubr.bf16.mxu0 0
    %1407 = vmatmul.mubr.bf16.gmra.mrb[0].mxu0 %v219
    %v1408 = vpop.f32.mrb[0].mxu0
    %v1409 = vadd.f32 0.0, %v1408
    %v1410 = vpop.f32.mrb[0].mxu0
    %v1411 = vadd.f32 0.0, %v1410
    %v1412 = vpop.f32.mrb[0].mxu0
    %v1413 = vadd.f32 0.0, %v1412
    %v1414 = vpop.f32.mrb[0].mxu0
    %v1415 = vadd.f32 0.0, %v1414
    %1416 = vmatprep.mubr.bf16.mxu0 0
    %1417 = vmatmul.mubr.bf16.gmra.mrb[0].mxu0 %v220
    %v1418 = vpop.f32.mrb[0].mxu0
    %v1419 = vadd.f32 0.0, %v1418
    %v1420 = vpop.f32.mrb[0].mxu0
    %v1421 = vadd.f32 0.0, %v1420
    %v1422 = vpop.f32.mrb[0].mxu0
    %v1423 = vadd.f32 0.0, %v1422
    %v1424 = vpop.f32.mrb[0].mxu0
    %v1425 = vadd.f32 0.0, %v1424
    %1426 = vmatprep.mubr.bf16.mxu0 0
    %1427 = vmatmul.mubr.bf16.gmra.mrb[0].mxu0 %v221
    %v1428 = vpop.f32.mrb[0].mxu0
    %v1429 = vadd.f32 0.0, %v1428
    %v1430 = vpop.f32.mrb[0].mxu0
    %v1431 = vadd.f32 0.0, %v1430
    %v1432 = vpop.f32.mrb[0].mxu0
    %v1433 = vadd.f32 0.0, %v1432
    %v1434 = vpop.f32.mrb[0].mxu0
    %v1435 = vadd.f32 0.0, %v1434
    %1436 = vmatprep.mubr.bf16.mxu0 0
    %1437 = vmatmul.mubr.bf16.gmra.mrb[0].mxu0 %v222
    %v1438 = vpop.f32.mrb[0].mxu0
    %v1439 = vadd.f32 0.0, %v1438
    %v1440 = vpop.f32.mrb[0].mxu0
    %v1441 = vadd.f32 0.0, %v1440
    %v1442 = vpop.f32.mrb[0].mxu0
    %v1443 = vadd.f32 0.0, %v1442
    %v1444 = vpop.f32.mrb[0].mxu0
    %v1445 = vadd.f32 0.0, %v1444
    %1446 = vmatprep.mubr.bf16.mxu0 0
    %1447 = vmatmul.mubr.bf16.gmra.mrb[0].mxu0 %v223
    %v1448 = vpop.f32.mrb[0].mxu0
    %v1449 = vadd.f32 0.0, %v1448
    %v1450 = vpop.f32.mrb[0].mxu0
    %v1451 = vadd.f32 0.0, %v1450
    %v1452 = vpop.f32.mrb[0].mxu0
    %v1453 = vadd.f32 0.0, %v1452
    %v1454 = vpop.f32.mrb[0].mxu0
    %v1455 = vadd.f32 0.0, %v1454
    %1456 = vmatprep.mubr.bf16.mxu0 0
    %1457 = vmatmul.mubr.bf16.gmra.mrb[0].mxu0 %v224
    %v1458 = vpop.f32.mrb[0].mxu0
    %v1459 = vadd.f32 0.0, %v1458
    %v1460 = vpop.f32.mrb[0].mxu0
    %v1461 = vadd.f32 0.0, %v1460
    %v1462 = vpop.f32.mrb[0].mxu0
    %v1463 = vadd.f32 0.0, %v1462
    %v1464 = vpop.f32.mrb[0].mxu0
    %v1465 = vadd.f32 0.0, %v1464
    %1466 = vmatprep.mubr.bf16.mxu0 0
    %1467 = vmatmul.mubr.bf16.gmra.mrb[0].mxu0 %v225
    %v1468 = vpop.f32.mrb[0].mxu0
    %v1469 = vadd.f32 0.0, %v1468
    %v1470 = vpop.f32.mrb[0].mxu0
    %v1471 = vadd.f32 0.0, %v1470
    %v1472 = vpop.f32.mrb[0].mxu0
    %v1473 = vadd.f32 0.0, %v1472
    %v1474 = vpop.f32.mrb[0].mxu0
    %v1475 = vadd.f32 0.0, %v1474
    %1476 = vmatprep.mubr.bf16.mxu0 0
    %1477 = vmatmul.mubr.bf16.gmra.mrb[0].mxu0 %v226
    %v1478 = vpop.f32.mrb[0].mxu0
    %v1479 = vadd.f32 0.0, %v1478
    %v1480 = vpop.f32.mrb[0].mxu0
    %v1481 = vadd.f32 0.0, %v1480
    %v1482 = vpop.f32.mrb[0].mxu0
    %v1483 = vadd.f32 0.0, %v1482
    %v1484 = vpop.f32.mrb[0].mxu0
    %v1485 = vadd.f32 0.0, %v1484
    %1486 = vmatprep.mubr.bf16.mxu0 0
    %1487 = vmatmul.mubr.bf16.gmra.mrb[0].mxu0 %v227
    %v1488 = vpop.f32.mrb[0].mxu0
    %v1489 = vadd.f32 0.0, %v1488
    %v1490 = vpop.f32.mrb[0].mxu0
    %v1491 = vadd.f32 0.0, %v1490
    %v1492 = vpop.f32.mrb[0].mxu0
    %v1493 = vadd.f32 0.0, %v1492
    %v1494 = vpop.f32.mrb[0].mxu0
    %v1495 = vadd.f32 0.0, %v1494
    %1496 = vmatprep.mubr.bf16.mxu0 0
    %1497 = vmatmul.mubr.bf16.gmra.mrb[0].mxu0 %v228
    %v1498 = vpop.f32.mrb[0].mxu0
    %v1499 = vadd.f32 0.0, %v1498
    %v1500 = vpop.f32.mrb[0].mxu0
    %v1501 = vadd.f32 0.0, %v1500
    %v1502 = vpop.f32.mrb[0].mxu0
    %v1503 = vadd.f32 0.0, %v1502
    %v1504 = vpop.f32.mrb[0].mxu0
    %v1505 = vadd.f32 0.0, %v1504
    %1506 = vmatprep.mubr.bf16.mxu0 0
    %1507 = vmatmul.mubr.bf16.gmra.mrb[0].mxu0 %v229
    %v1508 = vpop.f32.mrb[0].mxu0
    %v1509 = vadd.f32 0.0, %v1508
    %v1510 = vpop.f32.mrb[0].mxu0
    %v1511 = vadd.f32 0.0, %v1510
    %v1512 = vpop.f32.mrb[0].mxu0
    %v1513 = vadd.f32 0.0, %v1512
    %v1514 = vpop.f32.mrb[0].mxu0
    %v1515 = vadd.f32 0.0, %v1514
    %1516 = vmatprep.mubr.bf16.mxu0 0
    %1517 = vmatmul.mubr.bf16.gmra.mrb[0].mxu0 %v230
    %v1518 = vpop.f32.mrb[0].mxu0
    %v1519 = vadd.f32 0.0, %v1518
    %v1520 = vpop.f32.mrb[0].mxu0
    %v1521 = vadd.f32 0.0, %v1520
    %v1522 = vpop.f32.mrb[0].mxu0
    %v1523 = vadd.f32 0.0, %v1522
    %v1524 = vpop.f32.mrb[0].mxu0
    %v1525 = vadd.f32 0.0, %v1524
    %1526 = vdwg.mxu0
    %1527 = vmatprep.subr.bf16.mxu0 0
    %1528 = vmatpush1.bf16.msra.mxu0 %v1288
    %1529 = vmatprep.subr.bf16.mxu0 0
    %1530 = vmatpush1.bf16.msra.mxu0 %v1291
    %1531 = vmatprep.subr.bf16.mxu0 0
    %1532 = vmatpush1.bf16.msra.mxu0 %v1294
    %1533 = vmatprep.subr.bf16.mxu0 0
    %1534 = vmatpush1.bf16.msra.mxu0 %v1297
    %1535 = vmatprep.subr.bf16.mxu0 0
    %1536 = vmatpush1.bf16.msra.mxu0 %v1300
    %1537 = vmatprep.subr.bf16.mxu0 0
    %1538 = vmatpush1.bf16.msra.mxu0 %v1303
    %1539 = vmatprep.subr.bf16.mxu0 0
    %1540 = vmatpush1.bf16.msra.mxu0 %v1306
    %1541 = vmatprep.subr.bf16.mxu0 0
    %1542 = vmatpush1.bf16.msra.mxu0 %v1309
    %1543 = vmatprep.subr.bf16.mxu0 0
    %1544 = vmatpush1.bf16.msra.mxu0 0
    %1545 = vmatprep.subr.bf16.mxu0 0
    %1546 = vmatpush1.bf16.msra.mxu0 0
    %1547 = vmatprep.subr.bf16.mxu0 0
    %1548 = vmatpush1.bf16.msra.mxu0 0
    %1549 = vmatprep.subr.bf16.mxu0 0
    %1550 = vmatpush1.bf16.msra.mxu0 0
    %1551 = vmatprep.subr.bf16.mxu0 0
    %1552 = vmatpush1.bf16.msra.mxu0 0
    %1553 = vmatprep.subr.bf16.mxu0 0
    %1554 = vmatpush1.bf16.msra.mxu0 0
    %1555 = vmatprep.subr.bf16.mxu0 0
    %1556 = vmatpush1.bf16.msra.mxu0 0
    %1557 = vmatprep.subr.bf16.mxu0 0
    %1558 = vmatpush1.bf16.msra.mxu0 0
    %1559 = vmatprep.mubr.bf16.mxu0 0
    %1560 = vmatmul.mubr.bf16.gmra.mrb[0].mxu0 %v215
    %v1561 = vpop.f32.mrb[0].mxu0
    %v1562 = vadd.f32 0.0, %v1561
    %v1563 = vpop.f32.mrb[0].mxu0
    %v1564 = vpop.f32.mrb[0].mxu0
    %v1565 = vadd.f32 0.0, %v1564
    %v1566 = vpop.f32.mrb[0].mxu0
    %1567 = vmatprep.mubr.bf16.mxu0 0
    %1568 = vmatmul.mubr.bf16.gmra.mrb[0].mxu0 %v216
    %v1569 = vpop.f32.mrb[0].mxu0
    %v1570 = vadd.f32 0.0, %v1569
    %v1571 = vpop.f32.mrb[0].mxu0
    %v1572 = vpop.f32.mrb[0].mxu0
    %v1573 = vadd.f32 0.0, %v1572
    %v1574 = vpop.f32.mrb[0].mxu0
    %1575 = vmatprep.mubr.bf16.mxu0 0
    %1576 = vmatmul.mubr.bf16.gmra.mrb[0].mxu0 %v217
    %v1577 = vpop.f32.mrb[0].mxu0
    %v1578 = vadd.f32 0.0, %v1577
    %v1579 = vpop.f32.mrb[0].mxu0
    %v1580 = vpop.f32.mrb[0].mxu0
    %v1581 = vadd.f32 0.0, %v1580
    %v1582 = vpop.f32.mrb[0].mxu0
    %1583 = vmatprep.mubr.bf16.mxu0 0
    %1584 = vmatmul.mubr.bf16.gmra.mrb[0].mxu0 %v218
    %v1585 = vpop.f32.mrb[0].mxu0
    %v1586 = vadd.f32 0.0, %v1585
    %v1587 = vpop.f32.mrb[0].mxu0
    %v1588 = vpop.f32.mrb[0].mxu0
    %v1589 = vadd.f32 0.0, %v1588
    %v1590 = vpop.f32.mrb[0].mxu0
    %1591 = vmatprep.mubr.bf16.mxu0 0
    %1592 = vmatmul.mubr.bf16.gmra.mrb[0].mxu0 %v219
    %v1593 = vpop.f32.mrb[0].mxu0
    %v1594 = vadd.f32 0.0, %v1593
    %v1595 = vpop.f32.mrb[0].mxu0
    %v1596 = vpop.f32.mrb[0].mxu0
    %v1597 = vadd.f32 0.0, %v1596
    %v1598 = vpop.f32.mrb[0].mxu0
    %1599 = vmatprep.mubr.bf16.mxu0 0
    %1600 = vmatmul.mubr.bf16.gmra.mrb[0].mxu0 %v220
    %v1601 = vpop.f32.mrb[0].mxu0
    %v1602 = vadd.f32 0.0, %v1601
    %v1603 = vpop.f32.mrb[0].mxu0
    %v1604 = vpop.f32.mrb[0].mxu0
    %v1605 = vadd.f32 0.0, %v1604
    %v1606 = vpop.f32.mrb[0].mxu0
    %1607 = vmatprep.mubr.bf16.mxu0 0
    %1608 = vmatmul.mubr.bf16.gmra.mrb[0].mxu0 %v221
    %v1609 = vpop.f32.mrb[0].mxu0
    %v1610 = vadd.f32 0.0, %v1609
    %v1611 = vpop.f32.mrb[0].mxu0
    %v1612 = vpop.f32.mrb[0].mxu0
    %v1613 = vadd.f32 0.0, %v1612
    %v1614 = vpop.f32.mrb[0].mxu0
    %1615 = vmatprep.mubr.bf16.mxu0 0
    %1616 = vmatmul.mubr.bf16.gmra.mrb[0].mxu0 %v222
    %v1617 = vpop.f32.mrb[0].mxu0
    %v1618 = vadd.f32 0.0, %v1617
    %v1619 = vpop.f32.mrb[0].mxu0
    %v1620 = vpop.f32.mrb[0].mxu0
    %v1621 = vadd.f32 0.0, %v1620
    %v1622 = vpop.f32.mrb[0].mxu0
    %1623 = vmatprep.mubr.bf16.mxu0 0
    %1624 = vmatmul.mubr.bf16.gmra.mrb[0].mxu0 %v223
    %v1625 = vpop.f32.mrb[0].mxu0
    %v1626 = vadd.f32 0.0, %v1625
    %v1627 = vpop.f32.mrb[0].mxu0
    %v1628 = vpop.f32.mrb[0].mxu0
    %v1629 = vadd.f32 0.0, %v1628
    %v1630 = vpop.f32.mrb[0].mxu0
    %1631 = vmatprep.mubr.bf16.mxu0 0
    %1632 = vmatmul.mubr.bf16.gmra.mrb[0].mxu0 %v224
    %v1633 = vpop.f32.mrb[0].mxu0
    %v1634 = vadd.f32 0.0, %v1633
    %v1635 = vpop.f32.mrb[0].mxu0
    %v1636 = vpop.f32.mrb[0].mxu0
    %v1637 = vadd.f32 0.0, %v1636
    %v1638 = vpop.f32.mrb[0].mxu0
    %1639 = vmatprep.mubr.bf16.mxu0 0
    %1640 = vmatmul.mubr.bf16.gmra.mrb[0].mxu0 %v225
    %v1641 = vpop.f32.mrb[0].mxu0
    %v1642 = vadd.f32 0.0, %v1641
    %v1643 = vpop.f32.mrb[0].mxu0
    %v1644 = vpop.f32.mrb[0].mxu0
    %v1645 = vadd.f32 0.0, %v1644
    %v1646 = vpop.f32.mrb[0].mxu0
    %1647 = vmatprep.mubr.bf16.mxu0 0
    %1648 = vmatmul.mubr.bf16.gmra.mrb[0].mxu0 %v226
    %v1649 = vpop.f32.mrb[0].mxu0
    %v1650 = vadd.f32 0.0, %v1649
    %v1651 = vpop.f32.mrb[0].mxu0
    %v1652 = vpop.f32.mrb[0].mxu0
    %v1653 = vadd.f32 0.0, %v1652
    %v1654 = vpop.f32.mrb[0].mxu0
    %1655 = vmatprep.mubr.bf16.mxu0 0
    %1656 = vmatmul.mubr.bf16.gmra.mrb[0].mxu0 %v227
    %v1657 = vpop.f32.mrb[0].mxu0
    %v1658 = vadd.f32 0.0, %v1657
    %v1659 = vpop.f32.mrb[0].mxu0
    %v1660 = vpop.f32.mrb[0].mxu0
    %v1661 = vadd.f32 0.0, %v1660
    %v1662 = vpop.f32.mrb[0].mxu0
    %1663 = vmatprep.mubr.bf16.mxu0 0
    %1664 = vmatmul.mubr.bf16.gmra.mrb[0].mxu0 %v228
    %v1665 = vpop.f32.mrb[0].mxu0
    %v1666 = vadd.f32 0.0, %v1665
    %v1667 = vpop.f32.mrb[0].mxu0
    %v1668 = vpop.f32.mrb[0].mxu0
    %v1669 = vadd.f32 0.0, %v1668
    %v1670 = vpop.f32.mrb[0].mxu0
    %1671 = vmatprep.mubr.bf16.mxu0 0
    %1672 = vmatmul.mubr.bf16.gmra.mrb[0].mxu0 %v229
    %v1673 = vpop.f32.mrb[0].mxu0
    %v1674 = vadd.f32 0.0, %v1673
    %v1675 = vpop.f32.mrb[0].mxu0
    %v1676 = vpop.f32.mrb[0].mxu0
    %v1677 = vadd.f32 0.0, %v1676
    %v1678 = vpop.f32.mrb[0].mxu0
    %1679 = vmatprep.mubr.bf16.mxu0 0
    %1680 = vmatmul.mubr.bf16.gmra.mrb[0].mxu0 %v230
    %v1681 = vpop.f32.mrb[0].mxu0
    %v1682 = vadd.f32 0.0, %v1681
    %v1683 = vpop.f32.mrb[0].mxu0
    %v1684 = vpop.f32.mrb[0].mxu0
    %v1685 = vadd.f32 0.0, %v1684
    %v1686 = vpop.f32.mrb[0].mxu0
    %1687 = vdwg.mxu0
    %v1688 = vxor.u32 %v1369, 2147483648
    %v1689 = vxor.u32 %v1371, 2147483648
    %v1690 = vxor.u32 %v1562, 2147483648
    %v1691 = vxor.u32 %v1373, 2147483648
    %v1692 = vxor.u32 %v1375, 2147483648
    %v1693 = vxor.u32 %v1565, 2147483648
    %v1694 = vxor.u32 %v1379, 2147483648
    %v1695 = vxor.u32 %v1381, 2147483648
    %v1696 = vxor.u32 %v1570, 2147483648
    %v1697 = vxor.u32 %v1383, 2147483648
    %v1698 = vxor.u32 %v1385, 2147483648
    %v1699 = vxor.u32 %v1573, 2147483648
    %v1700 = vxor.u32 %v1389, 2147483648
    %v1701 = vxor.u32 %v1391, 2147483648
    %v1702 = vxor.u32 %v1578, 2147483648
    %v1703 = vxor.u32 %v1393, 2147483648
    %v1704 = vxor.u32 %v1395, 2147483648
    %v1705 = vxor.u32 %v1581, 2147483648
    %v1706 = vxor.u32 %v1399, 2147483648
    %v1707 = vxor.u32 %v1401, 2147483648
    %v1708 = vxor.u32 %v1586, 2147483648
    %v1709 = vxor.u32 %v1403, 2147483648
    %v1710 = vxor.u32 %v1405, 2147483648
    %v1711 = vxor.u32 %v1589, 2147483648
    %v1712 = vxor.u32 %v1409, 2147483648
    %v1713 = vxor.u32 %v1411, 2147483648
    %v1714 = vxor.u32 %v1594, 2147483648
    %v1715 = vxor.u32 %v1413, 2147483648
    %v1716 = vxor.u32 %v1415, 2147483648
    %v1717 = vxor.u32 %v1597, 2147483648
    %v1718 = vxor.u32 %v1419, 2147483648
    %v1719 = vxor.u32 %v1421, 2147483648
    %v1720 = vxor.u32 %v1602, 2147483648
    %v1721 = vxor.u32 %v1423, 2147483648
    %v1722 = vxor.u32 %v1425, 2147483648
    %v1723 = vxor.u32 %v1605, 2147483648
    %v1724 = vxor.u32 %v1429, 2147483648
    %v1725 = vxor.u32 %v1431, 2147483648
    %v1726 = vxor.u32 %v1610, 2147483648
    %v1727 = vxor.u32 %v1433, 2147483648
    %v1728 = vxor.u32 %v1435, 2147483648
    %v1729 = vxor.u32 %v1613, 2147483648
    %v1730 = vxor.u32 %v1439, 2147483648
    %v1731 = vxor.u32 %v1441, 2147483648
    %v1732 = vxor.u32 %v1618, 2147483648
    %v1733 = vxor.u32 %v1443, 2147483648
    %v1734 = vxor.u32 %v1445, 2147483648
    %v1735 = vxor.u32 %v1621, 2147483648
    %v1736 = vxor.u32 %v1449, 2147483648
    %v1737 = vxor.u32 %v1451, 2147483648
    %v1738 = vxor.u32 %v1626, 2147483648
    %v1739 = vxor.u32 %v1453, 2147483648
    %v1740 = vxor.u32 %v1455, 2147483648
    %v1741 = vxor.u32 %v1629, 2147483648
    %v1742 = vxor.u32 %v1459, 2147483648
    %v1743 = vxor.u32 %v1461, 2147483648
    %v1744 = vxor.u32 %v1634, 2147483648
    %v1745 = vxor.u32 %v1463, 2147483648
    %v1746 = vxor.u32 %v1465, 2147483648
    %v1747 = vxor.u32 %v1637, 2147483648
    %v1748 = vxor.u32 %v1469, 2147483648
    %v1749 = vxor.u32 %v1471, 2147483648
    %v1750 = vxor.u32 %v1642, 2147483648
    %v1751 = vxor.u32 %v1473, 2147483648
    %v1752 = vxor.u32 %v1475, 2147483648
    %v1753 = vxor.u32 %v1645, 2147483648
    %v1754 = vxor.u32 %v1479, 2147483648
    %v1755 = vxor.u32 %v1481, 2147483648
    %v1756 = vxor.u32 %v1650, 2147483648
    %v1757 = vxor.u32 %v1483, 2147483648
    %v1758 = vxor.u32 %v1485, 2147483648
    %v1759 = vxor.u32 %v1653, 2147483648
    %v1760 = vxor.u32 %v1489, 2147483648
    %v1761 = vxor.u32 %v1491, 2147483648
    %v1762 = vxor.u32 %v1658, 2147483648
    %v1763 = vxor.u32 %v1493, 2147483648
    %v1764 = vxor.u32 %v1495, 2147483648
    %v1765 = vxor.u32 %v1661, 2147483648
    %v1766 = vxor.u32 %v1499, 2147483648
    %v1767 = vxor.u32 %v1501, 2147483648
    %v1768 = vxor.u32 %v1666, 2147483648
    %v1769 = vxor.u32 %v1503, 2147483648
    %v1770 = vxor.u32 %v1505, 2147483648
    %v1771 = vxor.u32 %v1669, 2147483648
    %v1772 = vxor.u32 %v1509, 2147483648
    %v1773 = vxor.u32 %v1511, 2147483648
    %v1774 = vxor.u32 %v1674, 2147483648
    %v1775 = vxor.u32 %v1513, 2147483648
    %v1776 = vxor.u32 %v1515, 2147483648
    %v1777 = vxor.u32 %v1677, 2147483648
    %v1778 = vxor.u32 %v1519, 2147483648
    %v1779 = vxor.u32 %v1521, 2147483648
    %v1780 = vxor.u32 %v1682, 2147483648
    %v1781 = vxor.u32 %v1523, 2147483648
    %v1782 = vxor.u32 %v1525, 2147483648
    %v1783 = vxor.u32 %v1685, 2147483648
    %v1784 = vmul.f32 %v1688, 1.442695
    %v1785 = vpow.pop %v1784
    %v1786 = vmul.f32 %v1689, 1.442695
    %v1787 = vpow.pop %v1786
    %v1788 = vmul.f32 %v1690, 1.442695
    %v1789 = vpow.pop %v1788
    %v1790 = vmul.f32 %v1691, 1.442695
    %v1791 = vpow.pop %v1790
    %v1792 = vmul.f32 %v1692, 1.442695
    %v1793 = vpow.pop %v1792
    %v1794 = vmul.f32 %v1693, 1.442695
    %v1795 = vpow.pop %v1794
    %v1796 = vmul.f32 %v1694, 1.442695
    %v1797 = vpow.pop %v1796
    %v1798 = vmul.f32 %v1695, 1.442695
    %v1799 = vpow.pop %v1798
    %v1800 = vmul.f32 %v1696, 1.442695
    %v1801 = vpow.pop %v1800
    %v1802 = vmul.f32 %v1697, 1.442695
    %v1803 = vpow.pop %v1802
    %v1804 = vmul.f32 %v1698, 1.442695
    %v1805 = vpow.pop %v1804
    %v1806 = vmul.f32 %v1699, 1.442695
    %v1807 = vpow.pop %v1806
    %v1808 = vmul.f32 %v1700, 1.442695
    %v1809 = vpow.pop %v1808
    %v1810 = vmul.f32 %v1701, 1.442695
    %v1811 = vpow.pop %v1810
    %v1812 = vmul.f32 %v1702, 1.442695
    %v1813 = vpow.pop %v1812
    %v1814 = vmul.f32 %v1703, 1.442695
    %v1815 = vpow.pop %v1814
    %v1816 = vmul.f32 %v1704, 1.442695
    %v1817 = vpow.pop %v1816
    %v1818 = vmul.f32 %v1705, 1.442695
    %v1819 = vpow.pop %v1818
    %v1820 = vmul.f32 %v1706, 1.442695
    %v1821 = vpow.pop %v1820
    %v1822 = vmul.f32 %v1707, 1.442695
    %v1823 = vpow.pop %v1822
    %v1824 = vmul.f32 %v1708, 1.442695
    %v1825 = vpow.pop %v1824
    %v1826 = vmul.f32 %v1709, 1.442695
    %v1827 = vpow.pop %v1826
    %v1828 = vmul.f32 %v1710, 1.442695
    %v1829 = vpow.pop %v1828
    %v1830 = vmul.f32 %v1711, 1.442695
    %v1831 = vpow.pop %v1830
    %v1832 = vmul.f32 %v1712, 1.442695
    %v1833 = vpow.pop %v1832
    %v1834 = vmul.f32 %v1713, 1.442695
    %v1835 = vpow.pop %v1834
    %v1836 = vmul.f32 %v1714, 1.442695
    %v1837 = vpow.pop %v1836
    %v1838 = vmul.f32 %v1715, 1.442695
    %v1839 = vpow.pop %v1838
    %v1840 = vmul.f32 %v1716, 1.442695
    %v1841 = vpow.pop %v1840
    %v1842 = vmul.f32 %v1717, 1.442695
    %v1843 = vpow.pop %v1842
    %v1844 = vmul.f32 %v1718, 1.442695
    %v1845 = vpow.pop %v1844
    %v1846 = vmul.f32 %v1719, 1.442695
    %v1847 = vpow.pop %v1846
    %v1848 = vmul.f32 %v1720, 1.442695
    %v1849 = vpow.pop %v1848
    %v1850 = vmul.f32 %v1721, 1.442695
    %v1851 = vpow.pop %v1850
    %v1852 = vmul.f32 %v1722, 1.442695
    %v1853 = vpow.pop %v1852
    %v1854 = vmul.f32 %v1723, 1.442695
    %v1855 = vpow.pop %v1854
    %v1856 = vmul.f32 %v1724, 1.442695
    %v1857 = vpow.pop %v1856
    %v1858 = vmul.f32 %v1725, 1.442695
    %v1859 = vpow.pop %v1858
    %v1860 = vmul.f32 %v1726, 1.442695
    %v1861 = vpow.pop %v1860
    %v1862 = vmul.f32 %v1727, 1.442695
    %v1863 = vpow.pop %v1862
    %v1864 = vmul.f32 %v1728, 1.442695
    %v1865 = vpow.pop %v1864
    %v1866 = vmul.f32 %v1729, 1.442695
    %v1867 = vpow.pop %v1866
    %v1868 = vmul.f32 %v1730, 1.442695
    %v1869 = vpow.pop %v1868
    %v1870 = vmul.f32 %v1731, 1.442695
    %v1871 = vpow.pop %v1870
    %v1872 = vmul.f32 %v1732, 1.442695
    %v1873 = vpow.pop %v1872
    %v1874 = vmul.f32 %v1733, 1.442695
    %v1875 = vpow.pop %v1874
    %v1876 = vmul.f32 %v1734, 1.442695
    %v1877 = vpow.pop %v1876
    %v1878 = vmul.f32 %v1735, 1.442695
    %v1879 = vpow.pop %v1878
    %v1880 = vmul.f32 %v1736, 1.442695
    %v1881 = vpow.pop %v1880
    %v1882 = vmul.f32 %v1737, 1.442695
    %v1883 = vpow.pop %v1882
    %v1884 = vmul.f32 %v1738, 1.442695
    %v1885 = vpow.pop %v1884
    %v1886 = vmul.f32 %v1739, 1.442695
    %v1887 = vpow.pop %v1886
    %v1888 = vmul.f32 %v1740, 1.442695
    %v1889 = vpow.pop %v1888
    %v1890 = vmul.f32 %v1741, 1.442695
    %v1891 = vpow.pop %v1890
    %v1892 = vmul.f32 %v1742, 1.442695
    %v1893 = vpow.pop %v1892
    %v1894 = vmul.f32 %v1743, 1.442695
    %v1895 = vpow.pop %v1894
    %v1896 = vmul.f32 %v1744, 1.442695
    %v1897 = vpow.pop %v1896
    %v1898 = vmul.f32 %v1745, 1.442695
    %v1899 = vpow.pop %v1898
    %v1900 = vmul.f32 %v1746, 1.442695
    %v1901 = vpow.pop %v1900
    %v1902 = vmul.f32 %v1747, 1.442695
    %v1903 = vpow.pop %v1902
    %v1904 = vmul.f32 %v1748, 1.442695
    %v1905 = vpow.pop %v1904
    %v1906 = vmul.f32 %v1749, 1.442695
    %v1907 = vpow.pop %v1906
    %v1908 = vmul.f32 %v1750, 1.442695
    %v1909 = vpow.pop %v1908
    %v1910 = vmul.f32 %v1751, 1.442695
    %v1911 = vpow.pop %v1910
    %v1912 = vmul.f32 %v1752, 1.442695
    %v1913 = vpow.pop %v1912
    %v1914 = vmul.f32 %v1753, 1.442695
    %v1915 = vpow.pop %v1914
    %v1916 = vmul.f32 %v1754, 1.442695
    %v1917 = vpow.pop %v1916
    %v1918 = vmul.f32 %v1755, 1.442695
    %v1919 = vpow.pop %v1918
    %v1920 = vmul.f32 %v1756, 1.442695
    %v1921 = vpow.pop %v1920
    %v1922 = vmul.f32 %v1757, 1.442695
    %v1923 = vpow.pop %v1922
    %v1924 = vmul.f32 %v1758, 1.442695
    %v1925 = vpow.pop %v1924
    %v1926 = vmul.f32 %v1759, 1.442695
    %v1927 = vpow.pop %v1926
    %v1928 = vmul.f32 %v1760, 1.442695
    %v1929 = vpow.pop %v1928
    %v1930 = vmul.f32 %v1761, 1.442695
    %v1931 = vpow.pop %v1930
    %v1932 = vmul.f32 %v1762, 1.442695
    %v1933 = vpow.pop %v1932
    %v1934 = vmul.f32 %v1763, 1.442695
    %v1935 = vpow.pop %v1934
    %v1936 = vmul.f32 %v1764, 1.442695
    %v1937 = vpow.pop %v1936
    %v1938 = vmul.f32 %v1765, 1.442695
    %v1939 = vpow.pop %v1938
    %v1940 = vmul.f32 %v1766, 1.442695
    %v1941 = vpow.pop %v1940
    %v1942 = vmul.f32 %v1767, 1.442695
    %v1943 = vpow.pop %v1942
    %v1944 = vmul.f32 %v1768, 1.442695
    %v1945 = vpow.pop %v1944
    %v1946 = vmul.f32 %v1769, 1.442695
    %v1947 = vpow.pop %v1946
    %v1948 = vmul.f32 %v1770, 1.442695
    %v1949 = vpow.pop %v1948
    %v1950 = vmul.f32 %v1771, 1.442695
    %v1951 = vpow.pop %v1950
    %v1952 = vmul.f32 %v1772, 1.442695
    %v1953 = vpow.pop %v1952
    %v1954 = vmul.f32 %v1773, 1.442695
    %v1955 = vpow.pop %v1954
    %v1956 = vmul.f32 %v1774, 1.442695
    %v1957 = vpow.pop %v1956
    %v1958 = vmul.f32 %v1775, 1.442695
    %v1959 = vpow.pop %v1958
    %v1960 = vmul.f32 %v1776, 1.442695
    %v1961 = vpow.pop %v1960
    %v1962 = vmul.f32 %v1777, 1.442695
    %v1963 = vpow.pop %v1962
    %v1964 = vmul.f32 %v1778, 1.442695
    %v1965 = vpow.pop %v1964
    %v1966 = vmul.f32 %v1779, 1.442695
    %v1967 = vpow.pop %v1966
    %v1968 = vmul.f32 %v1780, 1.442695
    %v1969 = vpow.pop %v1968
    %v1970 = vmul.f32 %v1781, 1.442695
    %v1971 = vpow.pop %v1970
    %v1972 = vmul.f32 %v1782, 1.442695
    %v1973 = vpow.pop %v1972
    %v1974 = vmul.f32 %v1783, 1.442695
    %v1975 = vpow.pop %v1974
    %v1976 = vadd.f32 %v1785, 1.0
    %v1977 = vadd.f32 %v1787, 1.0
    %v1978 = vadd.f32 %v1789, 1.0
    %v1979 = vadd.f32 %v1791, 1.0
    %v1980 = vadd.f32 %v1793, 1.0
    %v1981 = vadd.f32 %v1795, 1.0
    %v1982 = vadd.f32 %v1797, 1.0
    %v1983 = vadd.f32 %v1799, 1.0
    %v1984 = vadd.f32 %v1801, 1.0
    %v1985 = vadd.f32 %v1803, 1.0
    %v1986 = vadd.f32 %v1805, 1.0
    %v1987 = vadd.f32 %v1807, 1.0
    %v1988 = vadd.f32 %v1809, 1.0
    %v1989 = vadd.f32 %v1811, 1.0
    %v1990 = vadd.f32 %v1813, 1.0
    %v1991 = vadd.f32 %v1815, 1.0
    %v1992 = vadd.f32 %v1817, 1.0
    %v1993 = vadd.f32 %v1819, 1.0
    %v1994 = vadd.f32 %v1821, 1.0
    %v1995 = vadd.f32 %v1823, 1.0
    %v1996 = vadd.f32 %v1825, 1.0
    %v1997 = vadd.f32 %v1827, 1.0
    %v1998 = vadd.f32 %v1829, 1.0
    %v1999 = vadd.f32 %v1831, 1.0
    %v2000 = vadd.f32 %v1833, 1.0
    %v2001 = vadd.f32 %v1835, 1.0
    %v2002 = vadd.f32 %v1837, 1.0
    %v2003 = vadd.f32 %v1839, 1.0
    %v2004 = vadd.f32 %v1841, 1.0
    %v2005 = vadd.f32 %v1843, 1.0
    %v2006 = vadd.f32 %v1845, 1.0
    %v2007 = vadd.f32 %v1847, 1.0
    %v2008 = vadd.f32 %v1849, 1.0
    %v2009 = vadd.f32 %v1851, 1.0
    %v2010 = vadd.f32 %v1853, 1.0
    %v2011 = vadd.f32 %v1855, 1.0
    %v2012 = vadd.f32 %v1857, 1.0
    %v2013 = vadd.f32 %v1859, 1.0
    %v2014 = vadd.f32 %v1861, 1.0
    %v2015 = vadd.f32 %v1863, 1.0
    %v2016 = vadd.f32 %v1865, 1.0
    %v2017 = vadd.f32 %v1867, 1.0
    %v2018 = vadd.f32 %v1869, 1.0
    %v2019 = vadd.f32 %v1871, 1.0
    %v2020 = vadd.f32 %v1873, 1.0
    %v2021 = vadd.f32 %v1875, 1.0
    %v2022 = vadd.f32 %v1877, 1.0
    %v2023 = vadd.f32 %v1879, 1.0
    %v2024 = vadd.f32 %v1881, 1.0
    %v2025 = vadd.f32 %v1883, 1.0
    %v2026 = vadd.f32 %v1885, 1.0
    %v2027 = vadd.f32 %v1887, 1.0
    %v2028 = vadd.f32 %v1889, 1.0
    %v2029 = vadd.f32 %v1891, 1.0
    %v2030 = vadd.f32 %v1893, 1.0
    %v2031 = vadd.f32 %v1895, 1.0
    %v2032 = vadd.f32 %v1897, 1.0
    %v2033 = vadd.f32 %v1899, 1.0
    %v2034 = vadd.f32 %v1901, 1.0
    %v2035 = vadd.f32 %v1903, 1.0
    %v2036 = vadd.f32 %v1905, 1.0
    %v2037 = vadd.f32 %v1907, 1.0
    %v2038 = vadd.f32 %v1909, 1.0
    %v2039 = vadd.f32 %v1911, 1.0
    %v2040 = vadd.f32 %v1913, 1.0
    %v2041 = vadd.f32 %v1915, 1.0
    %v2042 = vadd.f32 %v1917, 1.0
    %v2043 = vadd.f32 %v1919, 1.0
    %v2044 = vadd.f32 %v1921, 1.0
    %v2045 = vadd.f32 %v1923, 1.0
    %v2046 = vadd.f32 %v1925, 1.0
    %v2047 = vadd.f32 %v1927, 1.0
    %v2048 = vadd.f32 %v1929, 1.0
    %v2049 = vadd.f32 %v1931, 1.0
    %v2050 = vadd.f32 %v1933, 1.0
    %v2051 = vadd.f32 %v1935, 1.0
    %v2052 = vadd.f32 %v1937, 1.0
    %v2053 = vadd.f32 %v1939, 1.0
    %v2054 = vadd.f32 %v1941, 1.0
    %v2055 = vadd.f32 %v1943, 1.0
    %v2056 = vadd.f32 %v1945, 1.0
    %v2057 = vadd.f32 %v1947, 1.0
    %v2058 = vadd.f32 %v1949, 1.0
    %v2059 = vadd.f32 %v1951, 1.0
    %v2060 = vadd.f32 %v1953, 1.0
    %v2061 = vadd.f32 %v1955, 1.0
    %v2062 = vadd.f32 %v1957, 1.0
    %v2063 = vadd.f32 %v1959, 1.0
    %v2064 = vadd.f32 %v1961, 1.0
    %v2065 = vadd.f32 %v1963, 1.0
    %v2066 = vadd.f32 %v1965, 1.0
    %v2067 = vadd.f32 %v1967, 1.0
    %v2068 = vadd.f32 %v1969, 1.0
    %v2069 = vadd.f32 %v1971, 1.0
    %v2070 = vadd.f32 %v1973, 1.0
    %v2071 = vadd.f32 %v1975, 1.0
    %v2072 = vrcp.pop %v1976
    %v2073 = vmul.f32 1.0, %v2072
    %v2074 = vrcp.pop %v1977
    %v2075 = vmul.f32 1.0, %v2074
    %v2076 = vrcp.pop %v1978
    %v2077 = vmul.f32 1.0, %v2076
    %v2078 = vrcp.pop %v1979
    %v2079 = vmul.f32 1.0, %v2078
    %v2080 = vrcp.pop %v1980
    %v2081 = vmul.f32 1.0, %v2080
    %v2082 = vrcp.pop %v1981
    %v2083 = vmul.f32 1.0, %v2082
    %v2084 = vrcp.pop %v1982
    %v2085 = vmul.f32 1.0, %v2084
    %v2086 = vrcp.pop %v1983
    %v2087 = vmul.f32 1.0, %v2086
    %v2088 = vrcp.pop %v1984
    %v2089 = vmul.f32 1.0, %v2088
    %v2090 = vrcp.pop %v1985
    %v2091 = vmul.f32 1.0, %v2090
    %v2092 = vrcp.pop %v1986
    %v2093 = vmul.f32 1.0, %v2092
    %v2094 = vrcp.pop %v1987
    %v2095 = vmul.f32 1.0, %v2094
    %v2096 = vrcp.pop %v1988
    %v2097 = vmul.f32 1.0, %v2096
    %v2098 = vrcp.pop %v1989
    %v2099 = vmul.f32 1.0, %v2098
    %v2100 = vrcp.pop %v1990
    %v2101 = vmul.f32 1.0, %v2100
    %v2102 = vrcp.pop %v1991
    %v2103 = vmul.f32 1.0, %v2102
    %v2104 = vrcp.pop %v1992
    %v2105 = vmul.f32 1.0, %v2104
    %v2106 = vrcp.pop %v1993
    %v2107 = vmul.f32 1.0, %v2106
    %v2108 = vrcp.pop %v1994
    %v2109 = vmul.f32 1.0, %v2108
    %v2110 = vrcp.pop %v1995
    %v2111 = vmul.f32 1.0, %v2110
    %v2112 = vrcp.pop %v1996
    %v2113 = vmul.f32 1.0, %v2112
    %v2114 = vrcp.pop %v1997
    %v2115 = vmul.f32 1.0, %v2114
    %v2116 = vrcp.pop %v1998
    %v2117 = vmul.f32 1.0, %v2116
    %v2118 = vrcp.pop %v1999
    %v2119 = vmul.f32 1.0, %v2118
    %v2120 = vrcp.pop %v2000
    %v2121 = vmul.f32 1.0, %v2120
    %v2122 = vrcp.pop %v2001
    %v2123 = vmul.f32 1.0, %v2122
    %v2124 = vrcp.pop %v2002
    %v2125 = vmul.f32 1.0, %v2124
    %v2126 = vrcp.pop %v2003
    %v2127 = vmul.f32 1.0, %v2126
    %v2128 = vrcp.pop %v2004
    %v2129 = vmul.f32 1.0, %v2128
    %v2130 = vrcp.pop %v2005
    %v2131 = vmul.f32 1.0, %v2130
    %v2132 = vrcp.pop %v2006
    %v2133 = vmul.f32 1.0, %v2132
    %v2134 = vrcp.pop %v2007
    %v2135 = vmul.f32 1.0, %v2134
    %v2136 = vrcp.pop %v2008
    %v2137 = vmul.f32 1.0, %v2136
    %v2138 = vrcp.pop %v2009
    %v2139 = vmul.f32 1.0, %v2138
    %v2140 = vrcp.pop %v2010
    %v2141 = vmul.f32 1.0, %v2140
    %v2142 = vrcp.pop %v2011
    %v2143 = vmul.f32 1.0, %v2142
    %v2144 = vrcp.pop %v2012
    %v2145 = vmul.f32 1.0, %v2144
    %v2146 = vrcp.pop %v2013
    %v2147 = vmul.f32 1.0, %v2146
    %v2148 = vrcp.pop %v2014
    %v2149 = vmul.f32 1.0, %v2148
    %v2150 = vrcp.pop %v2015
    %v2151 = vmul.f32 1.0, %v2150
    %v2152 = vrcp.pop %v2016
    %v2153 = vmul.f32 1.0, %v2152
    %v2154 = vrcp.pop %v2017
    %v2155 = vmul.f32 1.0, %v2154
    %v2156 = vrcp.pop %v2018
    %v2157 = vmul.f32 1.0, %v2156
    %v2158 = vrcp.pop %v2019
    %v2159 = vmul.f32 1.0, %v2158
    %v2160 = vrcp.pop %v2020
    %v2161 = vmul.f32 1.0, %v2160
    %v2162 = vrcp.pop %v2021
    %v2163 = vmul.f32 1.0, %v2162
    %v2164 = vrcp.pop %v2022
    %v2165 = vmul.f32 1.0, %v2164
    %v2166 = vrcp.pop %v2023
    %v2167 = vmul.f32 1.0, %v2166
    %v2168 = vrcp.pop %v2024
    %v2169 = vmul.f32 1.0, %v2168
    %v2170 = vrcp.pop %v2025
    %v2171 = vmul.f32 1.0, %v2170
    %v2172 = vrcp.pop %v2026
    %v2173 = vmul.f32 1.0, %v2172
    %v2174 = vrcp.pop %v2027
    %v2175 = vmul.f32 1.0, %v2174
    %v2176 = vrcp.pop %v2028
    %v2177 = vmul.f32 1.0, %v2176
    %v2178 = vrcp.pop %v2029
    %v2179 = vmul.f32 1.0, %v2178
    %v2180 = vrcp.pop %v2030
    %v2181 = vmul.f32 1.0, %v2180
    %v2182 = vrcp.pop %v2031
    %v2183 = vmul.f32 1.0, %v2182
    %v2184 = vrcp.pop %v2032
    %v2185 = vmul.f32 1.0, %v2184
    %v2186 = vrcp.pop %v2033
    %v2187 = vmul.f32 1.0, %v2186
    %v2188 = vrcp.pop %v2034
    %v2189 = vmul.f32 1.0, %v2188
    %v2190 = vrcp.pop %v2035
    %v2191 = vmul.f32 1.0, %v2190
    %v2192 = vrcp.pop %v2036
    %v2193 = vmul.f32 1.0, %v2192
    %v2194 = vrcp.pop %v2037
    %v2195 = vmul.f32 1.0, %v2194
    %v2196 = vrcp.pop %v2038
    %v2197 = vmul.f32 1.0, %v2196
    %v2198 = vrcp.pop %v2039
    %v2199 = vmul.f32 1.0, %v2198
    %v2200 = vrcp.pop %v2040
    %v2201 = vmul.f32 1.0, %v2200
    %v2202 = vrcp.pop %v2041
    %v2203 = vmul.f32 1.0, %v2202
    %v2204 = vrcp.pop %v2042
    %v2205 = vmul.f32 1.0, %v2204
    %v2206 = vrcp.pop %v2043
    %v2207 = vmul.f32 1.0, %v2206
    %v2208 = vrcp.pop %v2044
    %v2209 = vmul.f32 1.0, %v2208
    %v2210 = vrcp.pop %v2045
    %v2211 = vmul.f32 1.0, %v2210
    %v2212 = vrcp.pop %v2046
    %v2213 = vmul.f32 1.0, %v2212
    %v2214 = vrcp.pop %v2047
    %v2215 = vmul.f32 1.0, %v2214
    %v2216 = vrcp.pop %v2048
    %v2217 = vmul.f32 1.0, %v2216
    %v2218 = vrcp.pop %v2049
    %v2219 = vmul.f32 1.0, %v2218
    %v2220 = vrcp.pop %v2050
    %v2221 = vmul.f32 1.0, %v2220
    %v2222 = vrcp.pop %v2051
    %v2223 = vmul.f32 1.0, %v2222
    %v2224 = vrcp.pop %v2052
    %v2225 = vmul.f32 1.0, %v2224
    %v2226 = vrcp.pop %v2053
    %v2227 = vmul.f32 1.0, %v2226
    %v2228 = vrcp.pop %v2054
    %v2229 = vmul.f32 1.0, %v2228
    %v2230 = vrcp.pop %v2055
    %v2231 = vmul.f32 1.0, %v2230
    %v2232 = vrcp.pop %v2056
    %v2233 = vmul.f32 1.0, %v2232
    %v2234 = vrcp.pop %v2057
    %v2235 = vmul.f32 1.0, %v2234
    %v2236 = vrcp.pop %v2058
    %v2237 = vmul.f32 1.0, %v2236
    %v2238 = vrcp.pop %v2059
    %v2239 = vmul.f32 1.0, %v2238
    %v2240 = vrcp.pop %v2060
    %v2241 = vmul.f32 1.0, %v2240
    %v2242 = vrcp.pop %v2061
    %v2243 = vmul.f32 1.0, %v2242
    %v2244 = vrcp.pop %v2062
    %v2245 = vmul.f32 1.0, %v2244
    %v2246 = vrcp.pop %v2063
    %v2247 = vmul.f32 1.0, %v2246
    %v2248 = vrcp.pop %v2064
    %v2249 = vmul.f32 1.0, %v2248
    %v2250 = vrcp.pop %v2065
    %v2251 = vmul.f32 1.0, %v2250
    %v2252 = vrcp.pop %v2066
    %v2253 = vmul.f32 1.0, %v2252
    %v2254 = vrcp.pop %v2067
    %v2255 = vmul.f32 1.0, %v2254
    %v2256 = vrcp.pop %v2068
    %v2257 = vmul.f32 1.0, %v2256
    %v2258 = vrcp.pop %v2069
    %v2259 = vmul.f32 1.0, %v2258
    %v2260 = vrcp.pop %v2070
    %v2261 = vmul.f32 1.0, %v2260
    %v2262 = vrcp.pop %v2071
    %v2263 = vmul.f32 1.0, %v2262
    %v2264 = vmul.f32 %v1369, %v2073
    %v2265 = vmul.f32 %v1371, %v2075
    %v2266 = vmul.f32 %v1562, %v2077
    %v2267 = vmul.f32 %v1373, %v2079
    %v2268 = vmul.f32 %v1375, %v2081
    %v2269 = vmul.f32 %v1565, %v2083
    %v2270 = vmul.f32 %v1379, %v2085
    %v2271 = vmul.f32 %v1381, %v2087
    %v2272 = vmul.f32 %v1570, %v2089
    %v2273 = vmul.f32 %v1383, %v2091
    %v2274 = vmul.f32 %v1385, %v2093
    %v2275 = vmul.f32 %v1573, %v2095
    %v2276 = vmul.f32 %v1389, %v2097
    %v2277 = vmul.f32 %v1391, %v2099
    %v2278 = vmul.f32 %v1578, %v2101
    %v2279 = vmul.f32 %v1393, %v2103
    %v2280 = vmul.f32 %v1395, %v2105
    %v2281 = vmul.f32 %v1581, %v2107
    %v2282 = vmul.f32 %v1399, %v2109
    %v2283 = vmul.f32 %v1401, %v2111
    %v2284 = vmul.f32 %v1586, %v2113
    %v2285 = vmul.f32 %v1403, %v2115
    %v2286 = vmul.f32 %v1405, %v2117
    %v2287 = vmul.f32 %v1589, %v2119
    %v2288 = vmul.f32 %v1409, %v2121
    %v2289 = vmul.f32 %v1411, %v2123
    %v2290 = vmul.f32 %v1594, %v2125
    %v2291 = vmul.f32 %v1413, %v2127
    %v2292 = vmul.f32 %v1415, %v2129
    %v2293 = vmul.f32 %v1597, %v2131
    %v2294 = vmul.f32 %v1419, %v2133
    %v2295 = vmul.f32 %v1421, %v2135
    %v2296 = vmul.f32 %v1602, %v2137
    %v2297 = vmul.f32 %v1423, %v2139
    %v2298 = vmul.f32 %v1425, %v2141
    %v2299 = vmul.f32 %v1605, %v2143
    %v2300 = vmul.f32 %v1429, %v2145
    %v2301 = vmul.f32 %v1431, %v2147
    %v2302 = vmul.f32 %v1610, %v2149
    %v2303 = vmul.f32 %v1433, %v2151
    %v2304 = vmul.f32 %v1435, %v2153
    %v2305 = vmul.f32 %v1613, %v2155
    %v2306 = vmul.f32 %v1439, %v2157
    %v2307 = vmul.f32 %v1441, %v2159
    %v2308 = vmul.f32 %v1618, %v2161
    %v2309 = vmul.f32 %v1443, %v2163
    %v2310 = vmul.f32 %v1445, %v2165
    %v2311 = vmul.f32 %v1621, %v2167
    %v2312 = vmul.f32 %v1449, %v2169
    %v2313 = vmul.f32 %v1451, %v2171
    %v2314 = vmul.f32 %v1626, %v2173
    %v2315 = vmul.f32 %v1453, %v2175
    %v2316 = vmul.f32 %v1455, %v2177
    %v2317 = vmul.f32 %v1629, %v2179
    %v2318 = vmul.f32 %v1459, %v2181
    %v2319 = vmul.f32 %v1461, %v2183
    %v2320 = vmul.f32 %v1634, %v2185
    %v2321 = vmul.f32 %v1463, %v2187
    %v2322 = vmul.f32 %v1465, %v2189
    %v2323 = vmul.f32 %v1637, %v2191
    %v2324 = vmul.f32 %v1469, %v2193
    %v2325 = vmul.f32 %v1471, %v2195
    %v2326 = vmul.f32 %v1642, %v2197
    %v2327 = vmul.f32 %v1473, %v2199
    %v2328 = vmul.f32 %v1475, %v2201
    %v2329 = vmul.f32 %v1645, %v2203
    %v2330 = vmul.f32 %v1479, %v2205
    %v2331 = vmul.f32 %v1481, %v2207
    %v2332 = vmul.f32 %v1650, %v2209
    %v2333 = vmul.f32 %v1483, %v2211
    %v2334 = vmul.f32 %v1485, %v2213
    %v2335 = vmul.f32 %v1653, %v2215
    %v2336 = vmul.f32 %v1489, %v2217
    %v2337 = vmul.f32 %v1491, %v2219
    %v2338 = vmul.f32 %v1658, %v2221
    %v2339 = vmul.f32 %v1493, %v2223
    %v2340 = vmul.f32 %v1495, %v2225
    %v2341 = vmul.f32 %v1661, %v2227
    %v2342 = vmul.f32 %v1499, %v2229
    %v2343 = vmul.f32 %v1501, %v2231
    %v2344 = vmul.f32 %v1666, %v2233
    %v2345 = vmul.f32 %v1503, %v2235
    %v2346 = vmul.f32 %v1505, %v2237
    %v2347 = vmul.f32 %v1669, %v2239
    %v2348 = vmul.f32 %v1509, %v2241
    %v2349 = vmul.f32 %v1511, %v2243
    %v2350 = vmul.f32 %v1674, %v2245
    %v2351 = vmul.f32 %v1513, %v2247
    %v2352 = vmul.f32 %v1515, %v2249
    %v2353 = vmul.f32 %v1677, %v2251
    %v2354 = vmul.f32 %v1519, %v2253
    %v2355 = vmul.f32 %v1521, %v2255
    %v2356 = vmul.f32 %v1682, %v2257
    %v2357 = vmul.f32 %v1523, %v2259
    %v2358 = vmul.f32 %v1525, %v2261
    %v2359 = vmul.f32 %v1685, %v2263
    %v2360 = vld [vmem:[%s2] sm:$0x7]
    %v2361 = vld [vmem:[%s3] sm:$0x7]
    %v2362 = vadd.f32 %v2264, %v2265
    %v2363 = vadd.f32 %v2362, %v2266
    %2364 = vadd.xlane.f32.xlu0 %v2363
    %v2365 = vpop.xlane.xlu0 %2364
    %v2366 = vadd.f32 %v2267, %v2268
    %v2367 = vadd.f32 %v2366, %v2269
    %2368 = vadd.xlane.f32.xlu0 %v2367
    %v2369 = vpop.xlane.xlu0 %2368
    %v2370 = vadd.f32 %v2270, %v2271
    %v2371 = vadd.f32 %v2370, %v2272
    %2372 = vadd.xlane.f32.xlu0 %v2371
    %v2373 = vpop.xlane.xlu0 %2372
    %v2374 = vadd.f32 %v2273, %v2274
    %v2375 = vadd.f32 %v2374, %v2275
    %2376 = vadd.xlane.f32.xlu0 %v2375
    %v2377 = vpop.xlane.xlu0 %2376
    %v2378 = vadd.f32 %v2276, %v2277
    %v2379 = vadd.f32 %v2378, %v2278
    %2380 = vadd.xlane.f32.xlu0 %v2379
    %v2381 = vpop.xlane.xlu0 %2380
    %v2382 = vadd.f32 %v2279, %v2280
    %v2383 = vadd.f32 %v2382, %v2281
    %2384 = vadd.xlane.f32.xlu0 %v2383
    %v2385 = vpop.xlane.xlu0 %2384
    %v2386 = vadd.f32 %v2282, %v2283
    %v2387 = vadd.f32 %v2386, %v2284
    %2388 = vadd.xlane.f32.xlu0 %v2387
    %v2389 = vpop.xlane.xlu0 %2388
    %v2390 = vadd.f32 %v2285, %v2286
    %v2391 = vadd.f32 %v2390, %v2287
    %2392 = vadd.xlane.f32.xlu0 %v2391
    %v2393 = vpop.xlane.xlu0 %2392
    %v2394 = vadd.f32 %v2288, %v2289
    %v2395 = vadd.f32 %v2394, %v2290
    %2396 = vadd.xlane.f32.xlu0 %v2395
    %v2397 = vpop.xlane.xlu0 %2396
    %v2398 = vadd.f32 %v2291, %v2292
    %v2399 = vadd.f32 %v2398, %v2293
    %2400 = vadd.xlane.f32.xlu0 %v2399
    %v2401 = vpop.xlane.xlu0 %2400
    %v2402 = vadd.f32 %v2294, %v2295
    %v2403 = vadd.f32 %v2402, %v2296
    %2404 = vadd.xlane.f32.xlu0 %v2403
    %v2405 = vpop.xlane.xlu0 %2404
    %v2406 = vadd.f32 %v2297, %v2298
    %v2407 = vadd.f32 %v2406, %v2299
    %2408 = vadd.xlane.f32.xlu0 %v2407
    %v2409 = vpop.xlane.xlu0 %2408
    %v2410 = vadd.f32 %v2300, %v2301
    %v2411 = vadd.f32 %v2410, %v2302
    %2412 = vadd.xlane.f32.xlu0 %v2411
    %v2413 = vpop.xlane.xlu0 %2412
    %v2414 = vadd.f32 %v2303, %v2304
    %v2415 = vadd.f32 %v2414, %v2305
    %2416 = vadd.xlane.f32.xlu0 %v2415
    %v2417 = vpop.xlane.xlu0 %2416
    %v2418 = vadd.f32 %v2306, %v2307
    %v2419 = vadd.f32 %v2418, %v2308
    %2420 = vadd.xlane.f32.xlu0 %v2419
    %v2421 = vpop.xlane.xlu0 %2420
    %v2422 = vadd.f32 %v2309, %v2310
    %v2423 = vadd.f32 %v2422, %v2311
    %2424 = vadd.xlane.f32.xlu0 %v2423
    %v2425 = vpop.xlane.xlu0 %2424
    %v2426 = vadd.f32 %v2312, %v2313
    %v2427 = vadd.f32 %v2426, %v2314
    %2428 = vadd.xlane.f32.xlu0 %v2427
    %v2429 = vpop.xlane.xlu0 %2428
    %v2430 = vadd.f32 %v2315, %v2316
    %v2431 = vadd.f32 %v2430, %v2317
    %2432 = vadd.xlane.f32.xlu0 %v2431
    %v2433 = vpop.xlane.xlu0 %2432
    %v2434 = vadd.f32 %v2318, %v2319
    %v2435 = vadd.f32 %v2434, %v2320
    %2436 = vadd.xlane.f32.xlu0 %v2435
    %v2437 = vpop.xlane.xlu0 %2436
    %v2438 = vadd.f32 %v2321, %v2322
    %v2439 = vadd.f32 %v2438, %v2323
    %2440 = vadd.xlane.f32.xlu0 %v2439
    %v2441 = vpop.xlane.xlu0 %2440
    %v2442 = vadd.f32 %v2324, %v2325
    %v2443 = vadd.f32 %v2442, %v2326
    %2444 = vadd.xlane.f32.xlu0 %v2443
    %v2445 = vpop.xlane.xlu0 %2444
    %v2446 = vadd.f32 %v2327, %v2328
    %v2447 = vadd.f32 %v2446, %v2329
    %2448 = vadd.xlane.f32.xlu0 %v2447
    %v2449 = vpop.xlane.xlu0 %2448
    %v2450 = vadd.f32 %v2330, %v2331
    %v2451 = vadd.f32 %v2450, %v2332
    %2452 = vadd.xlane.f32.xlu0 %v2451
    %v2453 = vpop.xlane.xlu0 %2452
    %v2454 = vadd.f32 %v2333, %v2334
    %v2455 = vadd.f32 %v2454, %v2335
    %2456 = vadd.xlane.f32.xlu0 %v2455
    %v2457 = vpop.xlane.xlu0 %2456
    %v2458 = vadd.f32 %v2336, %v2337
    %v2459 = vadd.f32 %v2458, %v2338
    %2460 = vadd.xlane.f32.xlu0 %v2459
    %v2461 = vpop.xlane.xlu0 %2460
    %v2462 = vadd.f32 %v2339, %v2340
    %v2463 = vadd.f32 %v2462, %v2341
    %2464 = vadd.xlane.f32.xlu0 %v2463
    %v2465 = vpop.xlane.xlu0 %2464
    %v2466 = vadd.f32 %v2342, %v2343
    %v2467 = vadd.f32 %v2466, %v2344
    %2468 = vadd.xlane.f32.xlu0 %v2467
    %v2469 = vpop.xlane.xlu0 %2468
    %v2470 = vadd.f32 %v2345, %v2346
    %v2471 = vadd.f32 %v2470, %v2347
    %2472 = vadd.xlane.f32.xlu0 %v2471
    %v2473 = vpop.xlane.xlu0 %2472
    %v2474 = vadd.f32 %v2348, %v2349
    %v2475 = vadd.f32 %v2474, %v2350
    %2476 = vadd.xlane.f32.xlu0 %v2475
    %v2477 = vpop.xlane.xlu0 %2476
    %v2478 = vadd.f32 %v2351, %v2352
    %v2479 = vadd.f32 %v2478, %v2353
    %2480 = vadd.xlane.f32.xlu0 %v2479
    %v2481 = vpop.xlane.xlu0 %2480
    %v2482 = vadd.f32 %v2354, %v2355
    %v2483 = vadd.f32 %v2482, %v2356
    %2484 = vadd.xlane.f32.xlu0 %v2483
    %v2485 = vpop.xlane.xlu0 %2484
    %v2486 = vadd.f32 %v2357, %v2358
    %v2487 = vadd.f32 %v2486, %v2359
    %2488 = vadd.xlane.f32.xlu0 %v2487
    %v2489 = vpop.xlane.xlu0 %2488
    %v2490 = vmul.f32 %v2365, 0.010416667
    %v2491 = vmul.f32 %v2369, 0.010416667
    %v2492 = vmul.f32 %v2373, 0.010416667
    %v2493 = vmul.f32 %v2377, 0.010416667
    %v2494 = vmul.f32 %v2381, 0.010416667
    %v2495 = vmul.f32 %v2385, 0.010416667
    %v2496 = vmul.f32 %v2389, 0.010416667
    %v2497 = vmul.f32 %v2393, 0.010416667
    %v2498 = vmul.f32 %v2397, 0.010416667
    %v2499 = vmul.f32 %v2401, 0.010416667
    %v2500 = vmul.f32 %v2405, 0.010416667
    %v2501 = vmul.f32 %v2409, 0.010416667
    %v2502 = vmul.f32 %v2413, 0.010416667
    %v2503 = vmul.f32 %v2417, 0.010416667
    %v2504 = vmul.f32 %v2421, 0.010416667
    %v2505 = vmul.f32 %v2425, 0.010416667
    %v2506 = vmul.f32 %v2429, 0.010416667
    %v2507 = vmul.f32 %v2433, 0.010416667
    %v2508 = vmul.f32 %v2437, 0.010416667
    %v2509 = vmul.f32 %v2441, 0.010416667
    %v2510 = vmul.f32 %v2445, 0.010416667
    %v2511 = vmul.f32 %v2449, 0.010416667
    %v2512 = vmul.f32 %v2453, 0.010416667
    %v2513 = vmul.f32 %v2457, 0.010416667
    %v2514 = vmul.f32 %v2461, 0.010416667
    %v2515 = vmul.f32 %v2465, 0.010416667
    %v2516 = vmul.f32 %v2469, 0.010416667
    %v2517 = vmul.f32 %v2473, 0.010416667
    %v2518 = vmul.f32 %v2477, 0.010416667
    %v2519 = vmul.f32 %v2481, 0.010416667
    %v2520 = vmul.f32 %v2485, 0.010416667
    %v2521 = vmul.f32 %v2489, 0.010416667
    %v2522 = vmul.f32 %v2264, %v2264
    %v2523 = vmul.f32 %v2265, %v2265
    %v2524 = vmul.f32 %v2266, %v2266
    %v2525 = vmul.f32 %v2267, %v2267
    %v2526 = vmul.f32 %v2268, %v2268
    %v2527 = vmul.f32 %v2269, %v2269
    %v2528 = vmul.f32 %v2270, %v2270
    %v2529 = vmul.f32 %v2271, %v2271
    %v2530 = vmul.f32 %v2272, %v2272
    %v2531 = vmul.f32 %v2273, %v2273
    %v2532 = vmul.f32 %v2274, %v2274
    %v2533 = vmul.f32 %v2275, %v2275
    %v2534 = vmul.f32 %v2276, %v2276
    %v2535 = vmul.f32 %v2277, %v2277
    %v2536 = vmul.f32 %v2278, %v2278
    %v2537 = vmul.f32 %v2279, %v2279
    %v2538 = vmul.f32 %v2280, %v2280
    %v2539 = vmul.f32 %v2281, %v2281
    %v2540 = vmul.f32 %v2282, %v2282
    %v2541 = vmul.f32 %v2283, %v2283
    %v2542 = vmul.f32 %v2284, %v2284
    %v2543 = vmul.f32 %v2285, %v2285
    %v2544 = vmul.f32 %v2286, %v2286
    %v2545 = vmul.f32 %v2287, %v2287
    %v2546 = vmul.f32 %v2288, %v2288
    %v2547 = vmul.f32 %v2289, %v2289
    %v2548 = vmul.f32 %v2290, %v2290
    %v2549 = vmul.f32 %v2291, %v2291
    %v2550 = vmul.f32 %v2292, %v2292
    %v2551 = vmul.f32 %v2293, %v2293
    %v2552 = vmul.f32 %v2294, %v2294
    %v2553 = vmul.f32 %v2295, %v2295
    %v2554 = vmul.f32 %v2296, %v2296
    %v2555 = vmul.f32 %v2297, %v2297
    %v2556 = vmul.f32 %v2298, %v2298
    %v2557 = vmul.f32 %v2299, %v2299
    %v2558 = vmul.f32 %v2300, %v2300
    %v2559 = vmul.f32 %v2301, %v2301
    %v2560 = vmul.f32 %v2302, %v2302
    %v2561 = vmul.f32 %v2303, %v2303
    %v2562 = vmul.f32 %v2304, %v2304
    %v2563 = vmul.f32 %v2305, %v2305
    %v2564 = vmul.f32 %v2306, %v2306
    %v2565 = vmul.f32 %v2307, %v2307
    %v2566 = vmul.f32 %v2308, %v2308
    %v2567 = vmul.f32 %v2309, %v2309
    %v2568 = vmul.f32 %v2310, %v2310
    %v2569 = vmul.f32 %v2311, %v2311
    %v2570 = vmul.f32 %v2312, %v2312
    %v2571 = vmul.f32 %v2313, %v2313
    %v2572 = vmul.f32 %v2314, %v2314
    %v2573 = vmul.f32 %v2315, %v2315
    %v2574 = vmul.f32 %v2316, %v2316
    %v2575 = vmul.f32 %v2317, %v2317
    %v2576 = vmul.f32 %v2318, %v2318
    %v2577 = vmul.f32 %v2319, %v2319
    %v2578 = vmul.f32 %v2320, %v2320
    %v2579 = vmul.f32 %v2321, %v2321
    %v2580 = vmul.f32 %v2322, %v2322
    %v2581 = vmul.f32 %v2323, %v2323
    %v2582 = vmul.f32 %v2324, %v2324
    %v2583 = vmul.f32 %v2325, %v2325
    %v2584 = vmul.f32 %v2326, %v2326
    %v2585 = vmul.f32 %v2327, %v2327
    %v2586 = vmul.f32 %v2328, %v2328
    %v2587 = vmul.f32 %v2329, %v2329
    %v2588 = vmul.f32 %v2330, %v2330
    %v2589 = vmul.f32 %v2331, %v2331
    %v2590 = vmul.f32 %v2332, %v2332
    %v2591 = vmul.f32 %v2333, %v2333
    %v2592 = vmul.f32 %v2334, %v2334
    %v2593 = vmul.f32 %v2335, %v2335
    %v2594 = vmul.f32 %v2336, %v2336
    %v2595 = vmul.f32 %v2337, %v2337
    %v2596 = vmul.f32 %v2338, %v2338
    %v2597 = vmul.f32 %v2339, %v2339
    %v2598 = vmul.f32 %v2340, %v2340
    %v2599 = vmul.f32 %v2341, %v2341
    %v2600 = vmul.f32 %v2342, %v2342
    %v2601 = vmul.f32 %v2343, %v2343
    %v2602 = vmul.f32 %v2344, %v2344
    %v2603 = vmul.f32 %v2345, %v2345
    %v2604 = vmul.f32 %v2346, %v2346
    %v2605 = vmul.f32 %v2347, %v2347
    %v2606 = vmul.f32 %v2348, %v2348
    %v2607 = vmul.f32 %v2349, %v2349
    %v2608 = vmul.f32 %v2350, %v2350
    %v2609 = vmul.f32 %v2351, %v2351
    %v2610 = vmul.f32 %v2352, %v2352
    %v2611 = vmul.f32 %v2353, %v2353
    %v2612 = vmul.f32 %v2354, %v2354
    %v2613 = vmul.f32 %v2355, %v2355
    %v2614 = vmul.f32 %v2356, %v2356
    %v2615 = vmul.f32 %v2357, %v2357
    %v2616 = vmul.f32 %v2358, %v2358
    %v2617 = vmul.f32 %v2359, %v2359
    %v2618 = vadd.f32 %v2522, %v2523
    %v2619 = vadd.f32 %v2618, %v2524
    %2620 = vadd.xlane.f32.xlu0 %v2619
    %v2621 = vpop.xlane.xlu0 %2620
    %v2622 = vadd.f32 %v2525, %v2526
    %v2623 = vadd.f32 %v2622, %v2527
    %2624 = vadd.xlane.f32.xlu0 %v2623
    %v2625 = vpop.xlane.xlu0 %2624
    %v2626 = vadd.f32 %v2528, %v2529
    %v2627 = vadd.f32 %v2626, %v2530
    %2628 = vadd.xlane.f32.xlu0 %v2627
    %v2629 = vpop.xlane.xlu0 %2628
    %v2630 = vadd.f32 %v2531, %v2532
    %v2631 = vadd.f32 %v2630, %v2533
    %2632 = vadd.xlane.f32.xlu0 %v2631
    %v2633 = vpop.xlane.xlu0 %2632
    %v2634 = vadd.f32 %v2534, %v2535
    %v2635 = vadd.f32 %v2634, %v2536
    %2636 = vadd.xlane.f32.xlu0 %v2635
    %v2637 = vpop.xlane.xlu0 %2636
    %v2638 = vadd.f32 %v2537, %v2538
    %v2639 = vadd.f32 %v2638, %v2539
    %2640 = vadd.xlane.f32.xlu0 %v2639
    %v2641 = vpop.xlane.xlu0 %2640
    %v2642 = vadd.f32 %v2540, %v2541
    %v2643 = vadd.f32 %v2642, %v2542
    %2644 = vadd.xlane.f32.xlu0 %v2643
    %v2645 = vpop.xlane.xlu0 %2644
    %v2646 = vadd.f32 %v2543, %v2544
    %v2647 = vadd.f32 %v2646, %v2545
    %2648 = vadd.xlane.f32.xlu0 %v2647
    %v2649 = vpop.xlane.xlu0 %2648
    %v2650 = vadd.f32 %v2546, %v2547
    %v2651 = vadd.f32 %v2650, %v2548
    %2652 = vadd.xlane.f32.xlu0 %v2651
    %v2653 = vpop.xlane.xlu0 %2652
    %v2654 = vadd.f32 %v2549, %v2550
    %v2655 = vadd.f32 %v2654, %v2551
    %2656 = vadd.xlane.f32.xlu0 %v2655
    %v2657 = vpop.xlane.xlu0 %2656
    %v2658 = vadd.f32 %v2552, %v2553
    %v2659 = vadd.f32 %v2658, %v2554
    %2660 = vadd.xlane.f32.xlu0 %v2659
    %v2661 = vpop.xlane.xlu0 %2660
    %v2662 = vadd.f32 %v2555, %v2556
    %v2663 = vadd.f32 %v2662, %v2557
    %2664 = vadd.xlane.f32.xlu0 %v2663
    %v2665 = vpop.xlane.xlu0 %2664
    %v2666 = vadd.f32 %v2558, %v2559
    %v2667 = vadd.f32 %v2666, %v2560
    %2668 = vadd.xlane.f32.xlu0 %v2667
    %v2669 = vpop.xlane.xlu0 %2668
    %v2670 = vadd.f32 %v2561, %v2562
    %v2671 = vadd.f32 %v2670, %v2563
    %2672 = vadd.xlane.f32.xlu0 %v2671
    %v2673 = vpop.xlane.xlu0 %2672
    %v2674 = vadd.f32 %v2564, %v2565
    %v2675 = vadd.f32 %v2674, %v2566
    %2676 = vadd.xlane.f32.xlu0 %v2675
    %v2677 = vpop.xlane.xlu0 %2676
    %v2678 = vadd.f32 %v2567, %v2568
    %v2679 = vadd.f32 %v2678, %v2569
    %2680 = vadd.xlane.f32.xlu0 %v2679
    %v2681 = vpop.xlane.xlu0 %2680
    %v2682 = vadd.f32 %v2570, %v2571
    %v2683 = vadd.f32 %v2682, %v2572
    %2684 = vadd.xlane.f32.xlu0 %v2683
    %v2685 = vpop.xlane.xlu0 %2684
    %v2686 = vadd.f32 %v2573, %v2574
    %v2687 = vadd.f32 %v2686, %v2575
    %2688 = vadd.xlane.f32.xlu0 %v2687
    %v2689 = vpop.xlane.xlu0 %2688
    %v2690 = vadd.f32 %v2576, %v2577
    %v2691 = vadd.f32 %v2690, %v2578
    %2692 = vadd.xlane.f32.xlu0 %v2691
    %v2693 = vpop.xlane.xlu0 %2692
    %v2694 = vadd.f32 %v2579, %v2580
    %v2695 = vadd.f32 %v2694, %v2581
    %2696 = vadd.xlane.f32.xlu0 %v2695
    %v2697 = vpop.xlane.xlu0 %2696
    %v2698 = vadd.f32 %v2582, %v2583
    %v2699 = vadd.f32 %v2698, %v2584
    %2700 = vadd.xlane.f32.xlu0 %v2699
    %v2701 = vpop.xlane.xlu0 %2700
    %v2702 = vadd.f32 %v2585, %v2586
    %v2703 = vadd.f32 %v2702, %v2587
    %2704 = vadd.xlane.f32.xlu0 %v2703
    %v2705 = vpop.xlane.xlu0 %2704
    %v2706 = vadd.f32 %v2588, %v2589
    %v2707 = vadd.f32 %v2706, %v2590
    %2708 = vadd.xlane.f32.xlu0 %v2707
    %v2709 = vpop.xlane.xlu0 %2708
    %v2710 = vadd.f32 %v2591, %v2592
    %v2711 = vadd.f32 %v2710, %v2593
    %2712 = vadd.xlane.f32.xlu0 %v2711
    %v2713 = vpop.xlane.xlu0 %2712
    %v2714 = vadd.f32 %v2594, %v2595
    %v2715 = vadd.f32 %v2714, %v2596
    %2716 = vadd.xlane.f32.xlu0 %v2715
    %v2717 = vpop.xlane.xlu0 %2716
    %v2718 = vadd.f32 %v2597, %v2598
    %v2719 = vadd.f32 %v2718, %v2599
    %2720 = vadd.xlane.f32.xlu0 %v2719
    %v2721 = vpop.xlane.xlu0 %2720
    %v2722 = vadd.f32 %v2600, %v2601
    %v2723 = vadd.f32 %v2722, %v2602
    %2724 = vadd.xlane.f32.xlu0 %v2723
    %v2725 = vpop.xlane.xlu0 %2724
    %v2726 = vadd.f32 %v2603, %v2604
    %v2727 = vadd.f32 %v2726, %v2605
    %2728 = vadd.xlane.f32.xlu0 %v2727
    %v2729 = vpop.xlane.xlu0 %2728
    %v2730 = vadd.f32 %v2606, %v2607
    %v2731 = vadd.f32 %v2730, %v2608
    %2732 = vadd.xlane.f32.xlu0 %v2731
    %v2733 = vpop.xlane.xlu0 %2732
    %v2734 = vadd.f32 %v2609, %v2610
    %v2735 = vadd.f32 %v2734, %v2611
    %2736 = vadd.xlane.f32.xlu0 %v2735
    %v2737 = vpop.xlane.xlu0 %2736
    %v2738 = vadd.f32 %v2612, %v2613
    %v2739 = vadd.f32 %v2738, %v2614
    %2740 = vadd.xlane.f32.xlu0 %v2739
    %v2741 = vpop.xlane.xlu0 %2740
    %v2742 = vadd.f32 %v2615, %v2616
    %v2743 = vadd.f32 %v2742, %v2617
    %2744 = vadd.xlane.f32.xlu0 %v2743
    %v2745 = vpop.xlane.xlu0 %2744
    %v2746 = vmul.f32 %v2621, 0.010416667
    %v2747 = vmul.f32 %v2625, 0.010416667
    %v2748 = vmul.f32 %v2629, 0.010416667
    %v2749 = vmul.f32 %v2633, 0.010416667
    %v2750 = vmul.f32 %v2637, 0.010416667
    %v2751 = vmul.f32 %v2641, 0.010416667
    %v2752 = vmul.f32 %v2645, 0.010416667
    %v2753 = vmul.f32 %v2649, 0.010416667
    %v2754 = vmul.f32 %v2653, 0.010416667
    %v2755 = vmul.f32 %v2657, 0.010416667
    %v2756 = vmul.f32 %v2661, 0.010416667
    %v2757 = vmul.f32 %v2665, 0.010416667
    %v2758 = vmul.f32 %v2669, 0.010416667
    %v2759 = vmul.f32 %v2673, 0.010416667
    %v2760 = vmul.f32 %v2677, 0.010416667
    %v2761 = vmul.f32 %v2681, 0.010416667
    %v2762 = vmul.f32 %v2685, 0.010416667
    %v2763 = vmul.f32 %v2689, 0.010416667
    %v2764 = vmul.f32 %v2693, 0.010416667
    %v2765 = vmul.f32 %v2697, 0.010416667
    %v2766 = vmul.f32 %v2701, 0.010416667
    %v2767 = vmul.f32 %v2705, 0.010416667
    %v2768 = vmul.f32 %v2709, 0.010416667
    %v2769 = vmul.f32 %v2713, 0.010416667
    %v2770 = vmul.f32 %v2717, 0.010416667
    %v2771 = vmul.f32 %v2721, 0.010416667
    %v2772 = vmul.f32 %v2725, 0.010416667
    %v2773 = vmul.f32 %v2729, 0.010416667
    %v2774 = vmul.f32 %v2733, 0.010416667
    %v2775 = vmul.f32 %v2737, 0.010416667
    %v2776 = vmul.f32 %v2741, 0.010416667
    %v2777 = vmul.f32 %v2745, 0.010416667
    %v2778 = vmul.f32 %v2490, %v2490
    %v2779 = vmul.f32 %v2491, %v2491
    %v2780 = vmul.f32 %v2492, %v2492
    %v2781 = vmul.f32 %v2493, %v2493
    %v2782 = vmul.f32 %v2494, %v2494
    %v2783 = vmul.f32 %v2495, %v2495
    %v2784 = vmul.f32 %v2496, %v2496
    %v2785 = vmul.f32 %v2497, %v2497
    %v2786 = vmul.f32 %v2498, %v2498
    %v2787 = vmul.f32 %v2499, %v2499
    %v2788 = vmul.f32 %v2500, %v2500
    %v2789 = vmul.f32 %v2501, %v2501
    %v2790 = vmul.f32 %v2502, %v2502
    %v2791 = vmul.f32 %v2503, %v2503
    %v2792 = vmul.f32 %v2504, %v2504
    %v2793 = vmul.f32 %v2505, %v2505
    %v2794 = vmul.f32 %v2506, %v2506
    %v2795 = vmul.f32 %v2507, %v2507
    %v2796 = vmul.f32 %v2508, %v2508
    %v2797 = vmul.f32 %v2509, %v2509
    %v2798 = vmul.f32 %v2510, %v2510
    %v2799 = vmul.f32 %v2511, %v2511
    %v2800 = vmul.f32 %v2512, %v2512
    %v2801 = vmul.f32 %v2513, %v2513
    %v2802 = vmul.f32 %v2514, %v2514
    %v2803 = vmul.f32 %v2515, %v2515
    %v2804 = vmul.f32 %v2516, %v2516
    %v2805 = vmul.f32 %v2517, %v2517
    %v2806 = vmul.f32 %v2518, %v2518
    %v2807 = vmul.f32 %v2519, %v2519
    %v2808 = vmul.f32 %v2520, %v2520
    %v2809 = vmul.f32 %v2521, %v2521
    %v2810 = vsub.f32 %v2746, %v2778
    %v2811 = vsub.f32 %v2747, %v2779
    %v2812 = vsub.f32 %v2748, %v2780
    %v2813 = vsub.f32 %v2749, %v2781
    %v2814 = vsub.f32 %v2750, %v2782
    %v2815 = vsub.f32 %v2751, %v2783
    %v2816 = vsub.f32 %v2752, %v2784
    %v2817 = vsub.f32 %v2753, %v2785
    %v2818 = vsub.f32 %v2754, %v2786
    %v2819 = vsub.f32 %v2755, %v2787
    %v2820 = vsub.f32 %v2756, %v2788
    %v2821 = vsub.f32 %v2757, %v2789
    %v2822 = vsub.f32 %v2758, %v2790
    %v2823 = vsub.f32 %v2759, %v2791
    %v2824 = vsub.f32 %v2760, %v2792
    %v2825 = vsub.f32 %v2761, %v2793
    %v2826 = vsub.f32 %v2762, %v2794
    %v2827 = vsub.f32 %v2763, %v2795
    %v2828 = vsub.f32 %v2764, %v2796
    %v2829 = vsub.f32 %v2765, %v2797
    %v2830 = vsub.f32 %v2766, %v2798
    %v2831 = vsub.f32 %v2767, %v2799
    %v2832 = vsub.f32 %v2768, %v2800
    %v2833 = vsub.f32 %v2769, %v2801
    %v2834 = vsub.f32 %v2770, %v2802
    %v2835 = vsub.f32 %v2771, %v2803
    %v2836 = vsub.f32 %v2772, %v2804
    %v2837 = vsub.f32 %v2773, %v2805
    %v2838 = vsub.f32 %v2774, %v2806
    %v2839 = vsub.f32 %v2775, %v2807
    %v2840 = vsub.f32 %v2776, %v2808
    %v2841 = vsub.f32 %v2777, %v2809
    %v2842 = vsub.f32 %v2264, %v2490
    %v2843 = vsub.f32 %v2265, %v2490
    %v2844 = vsub.f32 %v2266, %v2490
    %v2845 = vsub.f32 %v2267, %v2491
    %v2846 = vsub.f32 %v2268, %v2491
    %v2847 = vsub.f32 %v2269, %v2491
    %v2848 = vsub.f32 %v2270, %v2492
    %v2849 = vsub.f32 %v2271, %v2492
    %v2850 = vsub.f32 %v2272, %v2492
    %v2851 = vsub.f32 %v2273, %v2493
    %v2852 = vsub.f32 %v2274, %v2493
    %v2853 = vsub.f32 %v2275, %v2493
    %v2854 = vsub.f32 %v2276, %v2494
    %v2855 = vsub.f32 %v2277, %v2494
    %v2856 = vsub.f32 %v2278, %v2494
    %v2857 = vsub.f32 %v2279, %v2495
    %v2858 = vsub.f32 %v2280, %v2495
    %v2859 = vsub.f32 %v2281, %v2495
    %v2860 = vsub.f32 %v2282, %v2496
    %v2861 = vsub.f32 %v2283, %v2496
    %v2862 = vsub.f32 %v2284, %v2496
    %v2863 = vsub.f32 %v2285, %v2497
    %v2864 = vsub.f32 %v2286, %v2497
    %v2865 = vsub.f32 %v2287, %v2497
    %v2866 = vsub.f32 %v2288, %v2498
    %v2867 = vsub.f32 %v2289, %v2498
    %v2868 = vsub.f32 %v2290, %v2498
    %v2869 = vsub.f32 %v2291, %v2499
    %v2870 = vsub.f32 %v2292, %v2499
    %v2871 = vsub.f32 %v2293, %v2499
    %v2872 = vsub.f32 %v2294, %v2500
    %v2873 = vsub.f32 %v2295, %v2500
    %v2874 = vsub.f32 %v2296, %v2500
    %v2875 = vsub.f32 %v2297, %v2501
    %v2876 = vsub.f32 %v2298, %v2501
    %v2877 = vsub.f32 %v2299, %v2501
    %v2878 = vsub.f32 %v2300, %v2502
    %v2879 = vsub.f32 %v2301, %v2502
    %v2880 = vsub.f32 %v2302, %v2502
    %v2881 = vsub.f32 %v2303, %v2503
    %v2882 = vsub.f32 %v2304, %v2503
    %v2883 = vsub.f32 %v2305, %v2503
    %v2884 = vsub.f32 %v2306, %v2504
    %v2885 = vsub.f32 %v2307, %v2504
    %v2886 = vsub.f32 %v2308, %v2504
    %v2887 = vsub.f32 %v2309, %v2505
    %v2888 = vsub.f32 %v2310, %v2505
    %v2889 = vsub.f32 %v2311, %v2505
    %v2890 = vsub.f32 %v2312, %v2506
    %v2891 = vsub.f32 %v2313, %v2506
    %v2892 = vsub.f32 %v2314, %v2506
    %v2893 = vsub.f32 %v2315, %v2507
    %v2894 = vsub.f32 %v2316, %v2507
    %v2895 = vsub.f32 %v2317, %v2507
    %v2896 = vsub.f32 %v2318, %v2508
    %v2897 = vsub.f32 %v2319, %v2508
    %v2898 = vsub.f32 %v2320, %v2508
    %v2899 = vsub.f32 %v2321, %v2509
    %v2900 = vsub.f32 %v2322, %v2509
    %v2901 = vsub.f32 %v2323, %v2509
    %v2902 = vsub.f32 %v2324, %v2510
    %v2903 = vsub.f32 %v2325, %v2510
    %v2904 = vsub.f32 %v2326, %v2510
    %v2905 = vsub.f32 %v2327, %v2511
    %v2906 = vsub.f32 %v2328, %v2511
    %v2907 = vsub.f32 %v2329, %v2511
    %v2908 = vsub.f32 %v2330, %v2512
    %v2909 = vsub.f32 %v2331, %v2512
    %v2910 = vsub.f32 %v2332, %v2512
    %v2911 = vsub.f32 %v2333, %v2513
    %v2912 = vsub.f32 %v2334, %v2513
    %v2913 = vsub.f32 %v2335, %v2513
    %v2914 = vsub.f32 %v2336, %v2514
    %v2915 = vsub.f32 %v2337, %v2514
    %v2916 = vsub.f32 %v2338, %v2514
    %v2917 = vsub.f32 %v2339, %v2515
    %v2918 = vsub.f32 %v2340, %v2515
    %v2919 = vsub.f32 %v2341, %v2515
    %v2920 = vsub.f32 %v2342, %v2516
    %v2921 = vsub.f32 %v2343, %v2516
    %v2922 = vsub.f32 %v2344, %v2516
    %v2923 = vsub.f32 %v2345, %v2517
    %v2924 = vsub.f32 %v2346, %v2517
    %v2925 = vsub.f32 %v2347, %v2517
    %v2926 = vsub.f32 %v2348, %v2518
    %v2927 = vsub.f32 %v2349, %v2518
    %v2928 = vsub.f32 %v2350, %v2518
    %v2929 = vsub.f32 %v2351, %v2519
    %v2930 = vsub.f32 %v2352, %v2519
    %v2931 = vsub.f32 %v2353, %v2519
    %v2932 = vsub.f32 %v2354, %v2520
    %v2933 = vsub.f32 %v2355, %v2520
    %v2934 = vsub.f32 %v2356, %v2520
    %v2935 = vsub.f32 %v2357, %v2521
    %v2936 = vsub.f32 %v2358, %v2521
    %v2937 = vsub.f32 %v2359, %v2521
    %v2938 = vadd.f32 %v2810, 1e-05
    %v2939 = vadd.f32 %v2811, 1e-05
    %v2940 = vadd.f32 %v2812, 1e-05
    %v2941 = vadd.f32 %v2813, 1e-05
    %v2942 = vadd.f32 %v2814, 1e-05
    %v2943 = vadd.f32 %v2815, 1e-05
    %v2944 = vadd.f32 %v2816, 1e-05
    %v2945 = vadd.f32 %v2817, 1e-05
    %v2946 = vadd.f32 %v2818, 1e-05
    %v2947 = vadd.f32 %v2819, 1e-05
    %v2948 = vadd.f32 %v2820, 1e-05
    %v2949 = vadd.f32 %v2821, 1e-05
    %v2950 = vadd.f32 %v2822, 1e-05
    %v2951 = vadd.f32 %v2823, 1e-05
    %v2952 = vadd.f32 %v2824, 1e-05
    %v2953 = vadd.f32 %v2825, 1e-05
    %v2954 = vadd.f32 %v2826, 1e-05
    %v2955 = vadd.f32 %v2827, 1e-05
    %v2956 = vadd.f32 %v2828, 1e-05
    %v2957 = vadd.f32 %v2829, 1e-05
    %v2958 = vadd.f32 %v2830, 1e-05
    %v2959 = vadd.f32 %v2831, 1e-05
    %v2960 = vadd.f32 %v2832, 1e-05
    %v2961 = vadd.f32 %v2833, 1e-05
    %v2962 = vadd.f32 %v2834, 1e-05
    %v2963 = vadd.f32 %v2835, 1e-05
    %v2964 = vadd.f32 %v2836, 1e-05
    %v2965 = vadd.f32 %v2837, 1e-05
    %v2966 = vadd.f32 %v2838, 1e-05
    %v2967 = vadd.f32 %v2839, 1e-05
    %v2968 = vadd.f32 %v2840, 1e-05
    %v2969 = vadd.f32 %v2841, 1e-05
    %v2970 = vrsqrt.pop %v2938
    %v2971 = vrsqrt.pop %v2939
    %v2972 = vrsqrt.pop %v2940
    %v2973 = vrsqrt.pop %v2941
    %v2974 = vrsqrt.pop %v2942
    %v2975 = vrsqrt.pop %v2943
    %v2976 = vrsqrt.pop %v2944
    %v2977 = vrsqrt.pop %v2945
    %v2978 = vrsqrt.pop %v2946
    %v2979 = vrsqrt.pop %v2947
    %v2980 = vrsqrt.pop %v2948
    %v2981 = vrsqrt.pop %v2949
    %v2982 = vrsqrt.pop %v2950
    %v2983 = vrsqrt.pop %v2951
    %v2984 = vrsqrt.pop %v2952
    %v2985 = vrsqrt.pop %v2953
    %v2986 = vrsqrt.pop %v2954
    %v2987 = vrsqrt.pop %v2955
    %v2988 = vrsqrt.pop %v2956
    %v2989 = vrsqrt.pop %v2957
    %v2990 = vrsqrt.pop %v2958
    %v2991 = vrsqrt.pop %v2959
    %v2992 = vrsqrt.pop %v2960
    %v2993 = vrsqrt.pop %v2961
    %v2994 = vrsqrt.pop %v2962
    %v2995 = vrsqrt.pop %v2963
    %v2996 = vrsqrt.pop %v2964
    %v2997 = vrsqrt.pop %v2965
    %v2998 = vrsqrt.pop %v2966
    %v2999 = vrsqrt.pop %v2967
    %v3000 = vrsqrt.pop %v2968
    %v3001 = vrsqrt.pop %v2969
    %v3002 = vmul.f32 %v2842, %v2970
    %v3003 = vmul.f32 %v2843, %v2970
    %v3004 = vmul.f32 %v2844, %v2970
    %v3005 = vmul.f32 %v2845, %v2971
    %v3006 = vmul.f32 %v2846, %v2971
    %v3007 = vmul.f32 %v2847, %v2971
    %v3008 = vmul.f32 %v2848, %v2972
    %v3009 = vmul.f32 %v2849, %v2972
    %v3010 = vmul.f32 %v2850, %v2972
    %v3011 = vmul.f32 %v2851, %v2973
    %v3012 = vmul.f32 %v2852, %v2973
    %v3013 = vmul.f32 %v2853, %v2973
    %v3014 = vmul.f32 %v2854, %v2974
    %v3015 = vmul.f32 %v2855, %v2974
    %v3016 = vmul.f32 %v2856, %v2974
    %v3017 = vmul.f32 %v2857, %v2975
    %v3018 = vmul.f32 %v2858, %v2975
    %v3019 = vmul.f32 %v2859, %v2975
    %v3020 = vmul.f32 %v2860, %v2976
    %v3021 = vmul.f32 %v2861, %v2976
    %v3022 = vmul.f32 %v2862, %v2976
    %v3023 = vmul.f32 %v2863, %v2977
    %v3024 = vmul.f32 %v2864, %v2977
    %v3025 = vmul.f32 %v2865, %v2977
    %v3026 = vmul.f32 %v2866, %v2978
    %v3027 = vmul.f32 %v2867, %v2978
    %v3028 = vmul.f32 %v2868, %v2978
    %v3029 = vmul.f32 %v2869, %v2979
    %v3030 = vmul.f32 %v2870, %v2979
    %v3031 = vmul.f32 %v2871, %v2979
    %v3032 = vmul.f32 %v2872, %v2980
    %v3033 = vmul.f32 %v2873, %v2980
    %v3034 = vmul.f32 %v2874, %v2980
    %v3035 = vmul.f32 %v2875, %v2981
    %v3036 = vmul.f32 %v2876, %v2981
    %v3037 = vmul.f32 %v2877, %v2981
    %v3038 = vmul.f32 %v2878, %v2982
    %v3039 = vmul.f32 %v2879, %v2982
    %v3040 = vmul.f32 %v2880, %v2982
    %v3041 = vmul.f32 %v2881, %v2983
    %v3042 = vmul.f32 %v2882, %v2983
    %v3043 = vmul.f32 %v2883, %v2983
    %v3044 = vmul.f32 %v2884, %v2984
    %v3045 = vmul.f32 %v2885, %v2984
    %v3046 = vmul.f32 %v2886, %v2984
    %v3047 = vmul.f32 %v2887, %v2985
    %v3048 = vmul.f32 %v2888, %v2985
    %v3049 = vmul.f32 %v2889, %v2985
    %v3050 = vmul.f32 %v2890, %v2986
    %v3051 = vmul.f32 %v2891, %v2986
    %v3052 = vmul.f32 %v2892, %v2986
    %v3053 = vmul.f32 %v2893, %v2987
    %v3054 = vmul.f32 %v2894, %v2987
    %v3055 = vmul.f32 %v2895, %v2987
    %v3056 = vmul.f32 %v2896, %v2988
    %v3057 = vmul.f32 %v2897, %v2988
    %v3058 = vmul.f32 %v2898, %v2988
    %v3059 = vmul.f32 %v2899, %v2989
    %v3060 = vmul.f32 %v2900, %v2989
    %v3061 = vmul.f32 %v2901, %v2989
    %v3062 = vmul.f32 %v2902, %v2990
    %v3063 = vmul.f32 %v2903, %v2990
    %v3064 = vmul.f32 %v2904, %v2990
    %v3065 = vmul.f32 %v2905, %v2991
    %v3066 = vmul.f32 %v2906, %v2991
    %v3067 = vmul.f32 %v2907, %v2991
    %v3068 = vmul.f32 %v2908, %v2992
    %v3069 = vmul.f32 %v2909, %v2992
    %v3070 = vmul.f32 %v2910, %v2992
    %v3071 = vmul.f32 %v2911, %v2993
    %v3072 = vmul.f32 %v2912, %v2993
    %v3073 = vmul.f32 %v2913, %v2993
    %v3074 = vmul.f32 %v2914, %v2994
    %v3075 = vmul.f32 %v2915, %v2994
    %v3076 = vmul.f32 %v2916, %v2994
    %v3077 = vmul.f32 %v2917, %v2995
    %v3078 = vmul.f32 %v2918, %v2995
    %v3079 = vmul.f32 %v2919, %v2995
    %v3080 = vmul.f32 %v2920, %v2996
    %v3081 = vmul.f32 %v2921, %v2996
    %v3082 = vmul.f32 %v2922, %v2996
    %v3083 = vmul.f32 %v2923, %v2997
    %v3084 = vmul.f32 %v2924, %v2997
    %v3085 = vmul.f32 %v2925, %v2997
    %v3086 = vmul.f32 %v2926, %v2998
    %v3087 = vmul.f32 %v2927, %v2998
    %v3088 = vmul.f32 %v2928, %v2998
    %v3089 = vmul.f32 %v2929, %v2999
    %v3090 = vmul.f32 %v2930, %v2999
    %v3091 = vmul.f32 %v2931, %v2999
    %v3092 = vmul.f32 %v2932, %v3000
    %v3093 = vmul.f32 %v2933, %v3000
    %v3094 = vmul.f32 %v2934, %v3000
    %v3095 = vmul.f32 %v2935, %v3001
    %v3096 = vmul.f32 %v2936, %v3001
    %v3097 = vmul.f32 %v2937, %v3001
    %v3099 = vlaneseq
    %v3100 = vshrl.u32 %v3099, 7
    %v3101 = vsub.s32 0, %v3100
    %v3102 = vrot.slane %v2360, %v3101
    %v3103 = vlaneseq
    %v3104 = vshrl.u32 %v3103, 7
    %v3105 = vsub.s32 1, %v3104
    %v3106 = vrot.slane %v2360, %v3105
    %v3107 = vlaneseq
    %v3108 = vshrl.u32 %v3107, 7
    %v3109 = vsub.s32 2, %v3108
    %v3110 = vrot.slane %v2360, %v3109
    %v3114 = vmul.f32 %v3002, %v3102
    %v3115 = vmul.f32 %v3003, %v3106
    %v3116 = vmul.f32 %v3004, %v3110
    %v3117 = vmul.f32 %v3005, %v3102
    %v3118 = vmul.f32 %v3006, %v3106
    %v3119 = vmul.f32 %v3007, %v3110
    %v3120 = vmul.f32 %v3008, %v3102
    %v3121 = vmul.f32 %v3009, %v3106
    %v3122 = vmul.f32 %v3010, %v3110
    %v3123 = vmul.f32 %v3011, %v3102
    %v3124 = vmul.f32 %v3012, %v3106
    %v3125 = vmul.f32 %v3013, %v3110
    %v3126 = vmul.f32 %v3014, %v3102
    %v3127 = vmul.f32 %v3015, %v3106
    %v3128 = vmul.f32 %v3016, %v3110
    %v3129 = vmul.f32 %v3017, %v3102
    %v3130 = vmul.f32 %v3018, %v3106
    %v3131 = vmul.f32 %v3019, %v3110
    %v3132 = vmul.f32 %v3020, %v3102
    %v3133 = vmul.f32 %v3021, %v3106
    %v3134 = vmul.f32 %v3022, %v3110
    %v3135 = vmul.f32 %v3023, %v3102
    %v3136 = vmul.f32 %v3024, %v3106
    %v3137 = vmul.f32 %v3025, %v3110
    %v3138 = vmul.f32 %v3026, %v3102
    %v3139 = vmul.f32 %v3027, %v3106
    %v3140 = vmul.f32 %v3028, %v3110
    %v3141 = vmul.f32 %v3029, %v3102
    %v3142 = vmul.f32 %v3030, %v3106
    %v3143 = vmul.f32 %v3031, %v3110
    %v3144 = vmul.f32 %v3032, %v3102
    %v3145 = vmul.f32 %v3033, %v3106
    %v3146 = vmul.f32 %v3034, %v3110
    %v3147 = vmul.f32 %v3035, %v3102
    %v3148 = vmul.f32 %v3036, %v3106
    %v3149 = vmul.f32 %v3037, %v3110
    %v3150 = vmul.f32 %v3038, %v3102
    %v3151 = vmul.f32 %v3039, %v3106
    %v3152 = vmul.f32 %v3040, %v3110
    %v3153 = vmul.f32 %v3041, %v3102
    %v3154 = vmul.f32 %v3042, %v3106
    %v3155 = vmul.f32 %v3043, %v3110
    %v3156 = vmul.f32 %v3044, %v3102
    %v3157 = vmul.f32 %v3045, %v3106
    %v3158 = vmul.f32 %v3046, %v3110
    %v3159 = vmul.f32 %v3047, %v3102
    %v3160 = vmul.f32 %v3048, %v3106
    %v3161 = vmul.f32 %v3049, %v3110
    %v3162 = vmul.f32 %v3050, %v3102
    %v3163 = vmul.f32 %v3051, %v3106
    %v3164 = vmul.f32 %v3052, %v3110
    %v3165 = vmul.f32 %v3053, %v3102
    %v3166 = vmul.f32 %v3054, %v3106
    %v3167 = vmul.f32 %v3055, %v3110
    %v3168 = vmul.f32 %v3056, %v3102
    %v3169 = vmul.f32 %v3057, %v3106
    %v3170 = vmul.f32 %v3058, %v3110
    %v3171 = vmul.f32 %v3059, %v3102
    %v3172 = vmul.f32 %v3060, %v3106
    %v3173 = vmul.f32 %v3061, %v3110
    %v3174 = vmul.f32 %v3062, %v3102
    %v3175 = vmul.f32 %v3063, %v3106
    %v3176 = vmul.f32 %v3064, %v3110
    %v3177 = vmul.f32 %v3065, %v3102
    %v3178 = vmul.f32 %v3066, %v3106
    %v3179 = vmul.f32 %v3067, %v3110
    %v3180 = vmul.f32 %v3068, %v3102
    %v3181 = vmul.f32 %v3069, %v3106
    %v3182 = vmul.f32 %v3070, %v3110
    %v3183 = vmul.f32 %v3071, %v3102
    %v3184 = vmul.f32 %v3072, %v3106
    %v3185 = vmul.f32 %v3073, %v3110
    %v3186 = vmul.f32 %v3074, %v3102
    %v3187 = vmul.f32 %v3075, %v3106
    %v3188 = vmul.f32 %v3076, %v3110
    %v3189 = vmul.f32 %v3077, %v3102
    %v3190 = vmul.f32 %v3078, %v3106
    %v3191 = vmul.f32 %v3079, %v3110
    %v3192 = vmul.f32 %v3080, %v3102
    %v3193 = vmul.f32 %v3081, %v3106
    %v3194 = vmul.f32 %v3082, %v3110
    %v3195 = vmul.f32 %v3083, %v3102
    %v3196 = vmul.f32 %v3084, %v3106
    %v3197 = vmul.f32 %v3085, %v3110
    %v3198 = vmul.f32 %v3086, %v3102
    %v3199 = vmul.f32 %v3087, %v3106
    %v3200 = vmul.f32 %v3088, %v3110
    %v3201 = vmul.f32 %v3089, %v3102
    %v3202 = vmul.f32 %v3090, %v3106
    %v3203 = vmul.f32 %v3091, %v3110
    %v3204 = vmul.f32 %v3092, %v3102
    %v3205 = vmul.f32 %v3093, %v3106
    %v3206 = vmul.f32 %v3094, %v3110
    %v3207 = vmul.f32 %v3095, %v3102
    %v3208 = vmul.f32 %v3096, %v3106
    %v3209 = vmul.f32 %v3097, %v3110
    %v3211 = vlaneseq
    %v3212 = vshrl.u32 %v3211, 7
    %v3213 = vsub.s32 0, %v3212
    %v3214 = vrot.slane %v2361, %v3213
    %v3215 = vlaneseq
    %v3216 = vshrl.u32 %v3215, 7
    %v3217 = vsub.s32 1, %v3216
    %v3218 = vrot.slane %v2361, %v3217
    %v3219 = vlaneseq
    %v3220 = vshrl.u32 %v3219, 7
    %v3221 = vsub.s32 2, %v3220
    %v3222 = vrot.slane %v2361, %v3221
    %v3226 = vadd.f32 %v3114, %v3214
    %v3227 = vadd.f32 %v3115, %v3218
    %v3228 = vadd.f32 %v3116, %v3222
    %v3229 = vadd.f32 %v3117, %v3214
    %v3230 = vadd.f32 %v3118, %v3218
    %v3231 = vadd.f32 %v3119, %v3222
    %v3232 = vadd.f32 %v3120, %v3214
    %v3233 = vadd.f32 %v3121, %v3218
    %v3234 = vadd.f32 %v3122, %v3222
    %v3235 = vadd.f32 %v3123, %v3214
    %v3236 = vadd.f32 %v3124, %v3218
    %v3237 = vadd.f32 %v3125, %v3222
    %v3238 = vadd.f32 %v3126, %v3214
    %v3239 = vadd.f32 %v3127, %v3218
    %v3240 = vadd.f32 %v3128, %v3222
    %v3241 = vadd.f32 %v3129, %v3214
    %v3242 = vadd.f32 %v3130, %v3218
    %v3243 = vadd.f32 %v3131, %v3222
    %v3244 = vadd.f32 %v3132, %v3214
    %v3245 = vadd.f32 %v3133, %v3218
    %v3246 = vadd.f32 %v3134, %v3222
    %v3247 = vadd.f32 %v3135, %v3214
    %v3248 = vadd.f32 %v3136, %v3218
    %v3249 = vadd.f32 %v3137, %v3222
    %v3250 = vadd.f32 %v3138, %v3214
    %v3251 = vadd.f32 %v3139, %v3218
    %v3252 = vadd.f32 %v3140, %v3222
    %v3253 = vadd.f32 %v3141, %v3214
    %v3254 = vadd.f32 %v3142, %v3218
    %v3255 = vadd.f32 %v3143, %v3222
    %v3256 = vadd.f32 %v3144, %v3214
    %v3257 = vadd.f32 %v3145, %v3218
    %v3258 = vadd.f32 %v3146, %v3222
    %v3259 = vadd.f32 %v3147, %v3214
    %v3260 = vadd.f32 %v3148, %v3218
    %v3261 = vadd.f32 %v3149, %v3222
    %v3262 = vadd.f32 %v3150, %v3214
    %v3263 = vadd.f32 %v3151, %v3218
    %v3264 = vadd.f32 %v3152, %v3222
    %v3265 = vadd.f32 %v3153, %v3214
    %v3266 = vadd.f32 %v3154, %v3218
    %v3267 = vadd.f32 %v3155, %v3222
    %v3268 = vadd.f32 %v3156, %v3214
    %v3269 = vadd.f32 %v3157, %v3218
    %v3270 = vadd.f32 %v3158, %v3222
    %v3271 = vadd.f32 %v3159, %v3214
    %v3272 = vadd.f32 %v3160, %v3218
    %v3273 = vadd.f32 %v3161, %v3222
    %v3274 = vadd.f32 %v3162, %v3214
    %v3275 = vadd.f32 %v3163, %v3218
    %v3276 = vadd.f32 %v3164, %v3222
    %v3277 = vadd.f32 %v3165, %v3214
    %v3278 = vadd.f32 %v3166, %v3218
    %v3279 = vadd.f32 %v3167, %v3222
    %v3280 = vadd.f32 %v3168, %v3214
    %v3281 = vadd.f32 %v3169, %v3218
    %v3282 = vadd.f32 %v3170, %v3222
    %v3283 = vadd.f32 %v3171, %v3214
    %v3284 = vadd.f32 %v3172, %v3218
    %v3285 = vadd.f32 %v3173, %v3222
    %v3286 = vadd.f32 %v3174, %v3214
    %v3287 = vadd.f32 %v3175, %v3218
    %v3288 = vadd.f32 %v3176, %v3222
    %v3289 = vadd.f32 %v3177, %v3214
    %v3290 = vadd.f32 %v3178, %v3218
    %v3291 = vadd.f32 %v3179, %v3222
    %v3292 = vadd.f32 %v3180, %v3214
    %v3293 = vadd.f32 %v3181, %v3218
    %v3294 = vadd.f32 %v3182, %v3222
    %v3295 = vadd.f32 %v3183, %v3214
    %v3296 = vadd.f32 %v3184, %v3218
    %v3297 = vadd.f32 %v3185, %v3222
    %v3298 = vadd.f32 %v3186, %v3214
    %v3299 = vadd.f32 %v3187, %v3218
    %v3300 = vadd.f32 %v3188, %v3222
    %v3301 = vadd.f32 %v3189, %v3214
    %v3302 = vadd.f32 %v3190, %v3218
    %v3303 = vadd.f32 %v3191, %v3222
    %v3304 = vadd.f32 %v3192, %v3214
    %v3305 = vadd.f32 %v3193, %v3218
    %v3306 = vadd.f32 %v3194, %v3222
    %v3307 = vadd.f32 %v3195, %v3214
    %v3308 = vadd.f32 %v3196, %v3218
    %v3309 = vadd.f32 %v3197, %v3222
    %v3310 = vadd.f32 %v3198, %v3214
    %v3311 = vadd.f32 %v3199, %v3218
    %v3312 = vadd.f32 %v3200, %v3222
    %v3313 = vadd.f32 %v3201, %v3214
    %v3314 = vadd.f32 %v3202, %v3218
    %v3315 = vadd.f32 %v3203, %v3222
    %v3316 = vadd.f32 %v3204, %v3214
    %v3317 = vadd.f32 %v3205, %v3218
    %v3318 = vadd.f32 %v3206, %v3222
    %v3319 = vadd.f32 %v3207, %v3214
    %v3320 = vadd.f32 %v3208, %v3218
    %v3321 = vadd.f32 %v3209, %v3222
    %v3322 = vadd.f32 %v3226, %v3227
    %v3323 = vadd.f32 %v3229, %v3230
    %v3324 = vadd.f32 %v3232, %v3233
    %v3325 = vadd.f32 %v3235, %v3236
    %v3326 = vadd.f32 %v3238, %v3239
    %v3327 = vadd.f32 %v3241, %v3242
    %v3328 = vadd.f32 %v3244, %v3245
    %v3329 = vadd.f32 %v3247, %v3248
    %v3330 = vadd.f32 %v3250, %v3251
    %v3331 = vadd.f32 %v3253, %v3254
    %v3332 = vadd.f32 %v3256, %v3257
    %v3333 = vadd.f32 %v3259, %v3260
    %v3334 = vadd.f32 %v3262, %v3263
    %v3335 = vadd.f32 %v3265, %v3266
    %v3336 = vadd.f32 %v3268, %v3269
    %v3337 = vadd.f32 %v3271, %v3272
    %v3338 = vadd.f32 %v3274, %v3275
    %v3339 = vadd.f32 %v3277, %v3278
    %v3340 = vadd.f32 %v3280, %v3281
    %v3341 = vadd.f32 %v3283, %v3284
    %v3342 = vadd.f32 %v3286, %v3287
    %v3343 = vadd.f32 %v3289, %v3290
    %v3344 = vadd.f32 %v3292, %v3293
    %v3345 = vadd.f32 %v3295, %v3296
    %v3346 = vadd.f32 %v3298, %v3299
    %v3347 = vadd.f32 %v3301, %v3302
    %v3348 = vadd.f32 %v3304, %v3305
    %v3349 = vadd.f32 %v3307, %v3308
    %v3350 = vadd.f32 %v3310, %v3311
    %v3351 = vadd.f32 %v3313, %v3314
    %v3352 = vadd.f32 %v3316, %v3317
    %v3353 = vadd.f32 %v3319, %v3320
    %v3354 = vadd.f32 %v3322, %v3228
    %v3355 = vadd.f32 %v3323, %v3231
    %v3356 = vadd.f32 %v3324, %v3234
    %v3357 = vadd.f32 %v3325, %v3237
    %v3358 = vadd.f32 %v3326, %v3240
    %v3359 = vadd.f32 %v3327, %v3243
    %v3360 = vadd.f32 %v3328, %v3246
    %v3361 = vadd.f32 %v3329, %v3249
    %v3362 = vadd.f32 %v3330, %v3252
    %v3363 = vadd.f32 %v3331, %v3255
    %v3364 = vadd.f32 %v3332, %v3258
    %v3365 = vadd.f32 %v3333, %v3261
    %v3366 = vadd.f32 %v3334, %v3264
    %v3367 = vadd.f32 %v3335, %v3267
    %v3368 = vadd.f32 %v3336, %v3270
    %v3369 = vadd.f32 %v3337, %v3273
    %v3370 = vadd.f32 %v3338, %v3276
    %v3371 = vadd.f32 %v3339, %v3279
    %v3372 = vadd.f32 %v3340, %v3282
    %v3373 = vadd.f32 %v3341, %v3285
    %v3374 = vadd.f32 %v3342, %v3288
    %v3375 = vadd.f32 %v3343, %v3291
    %v3376 = vadd.f32 %v3344, %v3294
    %v3377 = vadd.f32 %v3345, %v3297
    %v3378 = vadd.f32 %v3346, %v3300
    %v3379 = vadd.f32 %v3347, %v3303
    %v3380 = vadd.f32 %v3348, %v3306
    %v3381 = vadd.f32 %v3349, %v3309
    %v3382 = vadd.f32 %v3350, %v3312
    %v3383 = vadd.f32 %v3351, %v3315
    %v3384 = vadd.f32 %v3352, %v3318
    %v3385 = vadd.f32 %v3353, %v3321
    %v3386 = vmul.f32 %v3354, 0.33333334
    %v3387 = vmul.f32 %v3355, 0.33333334
    %v3388 = vmul.f32 %v3356, 0.33333334
    %v3389 = vmul.f32 %v3357, 0.33333334
    %v3390 = vmul.f32 %v3358, 0.33333334
    %v3391 = vmul.f32 %v3359, 0.33333334
    %v3392 = vmul.f32 %v3360, 0.33333334
    %v3393 = vmul.f32 %v3361, 0.33333334
    %v3394 = vmul.f32 %v3362, 0.33333334
    %v3395 = vmul.f32 %v3363, 0.33333334
    %v3396 = vmul.f32 %v3364, 0.33333334
    %v3397 = vmul.f32 %v3365, 0.33333334
    %v3398 = vmul.f32 %v3366, 0.33333334
    %v3399 = vmul.f32 %v3367, 0.33333334
    %v3400 = vmul.f32 %v3368, 0.33333334
    %v3401 = vmul.f32 %v3369, 0.33333334
    %v3402 = vmul.f32 %v3370, 0.33333334
    %v3403 = vmul.f32 %v3371, 0.33333334
    %v3404 = vmul.f32 %v3372, 0.33333334
    %v3405 = vmul.f32 %v3373, 0.33333334
    %v3406 = vmul.f32 %v3374, 0.33333334
    %v3407 = vmul.f32 %v3375, 0.33333334
    %v3408 = vmul.f32 %v3376, 0.33333334
    %v3409 = vmul.f32 %v3377, 0.33333334
    %v3410 = vmul.f32 %v3378, 0.33333334
    %v3411 = vmul.f32 %v3379, 0.33333334
    %v3412 = vmul.f32 %v3380, 0.33333334
    %v3413 = vmul.f32 %v3381, 0.33333334
    %v3414 = vmul.f32 %v3382, 0.33333334
    %v3415 = vmul.f32 %v3383, 0.33333334
    %v3416 = vmul.f32 %v3384, 0.33333334
    %v3417 = vmul.f32 %v3385, 0.33333334
    %v3418 = vmul.f32 %v3386, %v1142
    %v3419 = vmul.f32 %v3387, %v1143
    %v3420 = vmul.f32 %v3388, %v1144
    %v3421 = vmul.f32 %v3389, %v1145
    %v3422 = vmul.f32 %v3390, %v1146
    %v3423 = vmul.f32 %v3391, %v1147
    %v3424 = vmul.f32 %v3392, %v1148
    %v3425 = vmul.f32 %v3393, %v1149
    %v3426 = vmul.f32 %v3394, %v1150
    %v3427 = vmul.f32 %v3395, %v1151
    %v3428 = vmul.f32 %v3396, %v1152
    %v3429 = vmul.f32 %v3397, %v1153
    %v3430 = vmul.f32 %v3398, %v1154
    %v3431 = vmul.f32 %v3399, %v1155
    %v3432 = vmul.f32 %v3400, %v1156
    %v3433 = vmul.f32 %v3401, %v1157
    %v3434 = vmul.f32 %v3402, %v1158
    %v3435 = vmul.f32 %v3403, %v1159
    %v3436 = vmul.f32 %v3404, %v1160
    %v3437 = vmul.f32 %v3405, %v1161
    %v3438 = vmul.f32 %v3406, %v1162
    %v3439 = vmul.f32 %v3407, %v1163
    %v3440 = vmul.f32 %v3408, %v1164
    %v3441 = vmul.f32 %v3409, %v1165
    %v3442 = vmul.f32 %v3410, %v1166
    %v3443 = vmul.f32 %v3411, %v1167
    %v3444 = vmul.f32 %v3412, %v1168
    %v3445 = vmul.f32 %v3413, %v1169
    %v3446 = vmul.f32 %v3414, %v1170
    %v3447 = vmul.f32 %v3415, %v1171
    %v3448 = vmul.f32 %v3416, %v1172
    %v3449 = vmul.f32 %v3417, %v1173
    %v3450 = vpack.c.bf16 %v3419, %v3418
    %v3451 = vpack.c.bf16 %v3421, %v3420
    %v3452 = vpack.c.bf16 %v3423, %v3422
    %v3453 = vpack.c.bf16 %v3425, %v3424
    %v3454 = vpack.c.bf16 %v3427, %v3426
    %v3455 = vpack.c.bf16 %v3429, %v3428
    %v3456 = vpack.c.bf16 %v3431, %v3430
    %v3457 = vpack.c.bf16 %v3433, %v3432
    %v3458 = vpack.c.bf16 %v3435, %v3434
    %v3459 = vpack.c.bf16 %v3437, %v3436
    %v3460 = vpack.c.bf16 %v3439, %v3438
    %v3461 = vpack.c.bf16 %v3441, %v3440
    %v3462 = vpack.c.bf16 %v3443, %v3442
    %v3463 = vpack.c.bf16 %v3445, %v3444
    %v3464 = vpack.c.bf16 %v3447, %v3446
    %v3465 = vpack.c.bf16 %v3449, %v3448
    %v3466 = vld [vmem:[#allocation9] sm:$0xf]
    %v3467 = vld [vmem:[#allocation9 + $0x4] sm:$0xf]
    %v3468 = vld [vmem:[#allocation9 + $0x8] sm:$0xf]
    %v3469 = vld [vmem:[#allocation9 + $0xc] sm:$0xf]
    %v3470 = vld [vmem:[#allocation9 + $0x10] sm:$0xf]
    %v3471 = vld [vmem:[#allocation9 + $0x14] sm:$0xf]
    %v3472 = vld [vmem:[#allocation9 + $0x18] sm:$0xf]
    %v3473 = vld [vmem:[#allocation9 + $0x1c] sm:$0xf]
    %v3474 = vld [vmem:[#allocation9 + $0x20] sm:$0xf]
    %v3475 = vld [vmem:[#allocation9 + $0x24] sm:$0xf]
    %v3476 = vld [vmem:[#allocation9 + $0x28] sm:$0xf]
    %v3477 = vld [vmem:[#allocation9 + $0x2c] sm:$0xf]
    %v3478 = vld [vmem:[#allocation9 + $0x30] sm:$0xf]
    %v3479 = vld [vmem:[#allocation9 + $0x34] sm:$0xf]
    %v3480 = vld [vmem:[#allocation9 + $0x38] sm:$0xf]
    %v3481 = vld [vmem:[#allocation9 + $0x3c] sm:$0xf]
    %v3482 = vld [vmem:[%s8] sm:$0x1]
    %v3484 = vlaneseq
    %v3485 = vshrl.u32 %v3484, 7
    %v3486 = vsub.s32 0, %v3485
    %v3487 = vrot.slane %v3482, %v3486
    %v3505 = vunpack.c.l.b16 %v3466
    %v3506 = vunpack.c.l.b16 %v3467
    %v3507 = vunpack.c.l.b16 %v3468
    %v3508 = vunpack.c.l.b16 %v3469
    %v3509 = vunpack.c.l.b16 %v3470
    %v3510 = vunpack.c.l.b16 %v3471
    %v3511 = vunpack.c.l.b16 %v3472
    %v3512 = vunpack.c.l.b16 %v3473
    %v3513 = vunpack.c.l.b16 %v3474
    %v3514 = vunpack.c.l.b16 %v3475
    %v3515 = vunpack.c.l.b16 %v3476
    %v3516 = vunpack.c.l.b16 %v3477
    %v3517 = vunpack.c.l.b16 %v3478
    %v3518 = vunpack.c.l.b16 %v3479
    %v3519 = vunpack.c.l.b16 %v3480
    %v3520 = vunpack.c.l.b16 %v3481
    %v3521 = vpack.c.b16 %v3506, %v3505
    %v3522 = vpack.c.b16 %v3508, %v3507
    %v3523 = vpack.c.b16 %v3510, %v3509
    %v3524 = vpack.c.b16 %v3512, %v3511
    %v3525 = vpack.c.b16 %v3514, %v3513
    %v3526 = vpack.c.b16 %v3516, %v3515
    %v3527 = vpack.c.b16 %v3518, %v3517
    %v3528 = vpack.c.b16 %v3520, %v3519
    %3537 = vmatprep.subr.bf16.mxu0 0
    %3538 = vmatpush1.bf16.msra.mxu0 %v3521
    %3539 = vmatprep.subr.bf16.mxu0 0
    %3540 = vmatpush1.bf16.msra.mxu0 %v3522
    %3541 = vmatprep.subr.bf16.mxu0 0
    %3542 = vmatpush1.bf16.msra.mxu0 %v3523
    %3543 = vmatprep.subr.bf16.mxu0 0
    %3544 = vmatpush1.bf16.msra.mxu0 %v3524
    %3545 = vmatprep.subr.bf16.mxu0 0
    %3546 = vmatpush1.bf16.msra.mxu0 %v3525
    %3547 = vmatprep.subr.bf16.mxu0 0
    %3548 = vmatpush1.bf16.msra.mxu0 %v3526
    %3549 = vmatprep.subr.bf16.mxu0 0
    %3550 = vmatpush1.bf16.msra.mxu0 %v3527
    %3551 = vmatprep.subr.bf16.mxu0 0
    %3552 = vmatpush1.bf16.msra.mxu0 %v3528
    %3553 = vmatprep.subr.bf16.mxu0 0
    %3554 = vmatpush1.bf16.msra.mxu0 0
    %3555 = vmatprep.subr.bf16.mxu0 0
    %3556 = vmatpush1.bf16.msra.mxu0 0
    %3557 = vmatprep.subr.bf16.mxu0 0
    %3558 = vmatpush1.bf16.msra.mxu0 0
    %3559 = vmatprep.subr.bf16.mxu0 0
    %3560 = vmatpush1.bf16.msra.mxu0 0
    %3561 = vmatprep.subr.bf16.mxu0 0
    %3562 = vmatpush1.bf16.msra.mxu0 0
    %3563 = vmatprep.subr.bf16.mxu0 0
    %3564 = vmatpush1.bf16.msra.mxu0 0
    %3565 = vmatprep.subr.bf16.mxu0 0
    %3566 = vmatpush1.bf16.msra.mxu0 0
    %3567 = vmatprep.subr.bf16.mxu0 0
    %3568 = vmatpush1.bf16.msra.mxu0 0
    %3569 = vmatprep.mubr.bf16.mxu0 0
    %3570 = vmatmul.mubr.bf16.gmra.mrb[0].mxu0 %v3450
    %v3571 = vpop.f32.mrb[0].mxu0
    %v3572 = vadd.f32 %v3487, %v3571
    %v3573 = vpop.f32.mrb[0].mxu0
    %v3574 = vpop.f32.mrb[0].mxu0
    %v3575 = vadd.f32 %v3487, %v3574
    %v3576 = vpop.f32.mrb[0].mxu0
    %3577 = vmatprep.mubr.bf16.mxu0 0
    %3578 = vmatmul.mubr.bf16.gmra.mrb[0].mxu0 %v3451
    %v3579 = vpop.f32.mrb[0].mxu0
    %v3580 = vadd.f32 %v3487, %v3579
    %v3581 = vpop.f32.mrb[0].mxu0
    %v3582 = vpop.f32.mrb[0].mxu0
    %v3583 = vadd.f32 %v3487, %v3582
    %v3584 = vpop.f32.mrb[0].mxu0
    %3585 = vmatprep.mubr.bf16.mxu0 0
    %3586 = vmatmul.mubr.bf16.gmra.mrb[0].mxu0 %v3452
    %v3587 = vpop.f32.mrb[0].mxu0
    %v3588 = vadd.f32 %v3487, %v3587
    %v3589 = vpop.f32.mrb[0].mxu0
    %v3590 = vpop.f32.mrb[0].mxu0
    %v3591 = vadd.f32 %v3487, %v3590
    %v3592 = vpop.f32.mrb[0].mxu0
    %3593 = vmatprep.mubr.bf16.mxu0 0
    %3594 = vmatmul.mubr.bf16.gmra.mrb[0].mxu0 %v3453
    %v3595 = vpop.f32.mrb[0].mxu0
    %v3596 = vadd.f32 %v3487, %v3595
    %v3597 = vpop.f32.mrb[0].mxu0
    %v3598 = vpop.f32.mrb[0].mxu0
    %v3599 = vadd.f32 %v3487, %v3598
    %v3600 = vpop.f32.mrb[0].mxu0
    %3601 = vmatprep.mubr.bf16.mxu0 0
    %3602 = vmatmul.mubr.bf16.gmra.mrb[0].mxu0 %v3454
    %v3603 = vpop.f32.mrb[0].mxu0
    %v3604 = vadd.f32 %v3487, %v3603
    %v3605 = vpop.f32.mrb[0].mxu0
    %v3606 = vpop.f32.mrb[0].mxu0
    %v3607 = vadd.f32 %v3487, %v3606
    %v3608 = vpop.f32.mrb[0].mxu0
    %3609 = vmatprep.mubr.bf16.mxu0 0
    %3610 = vmatmul.mubr.bf16.gmra.mrb[0].mxu0 %v3455
    %v3611 = vpop.f32.mrb[0].mxu0
    %v3612 = vadd.f32 %v3487, %v3611
    %v3613 = vpop.f32.mrb[0].mxu0
    %v3614 = vpop.f32.mrb[0].mxu0
    %v3615 = vadd.f32 %v3487, %v3614
    %v3616 = vpop.f32.mrb[0].mxu0
    %3617 = vmatprep.mubr.bf16.mxu0 0
    %3618 = vmatmul.mubr.bf16.gmra.mrb[0].mxu0 %v3456
    %v3619 = vpop.f32.mrb[0].mxu0
    %v3620 = vadd.f32 %v3487, %v3619
    %v3621 = vpop.f32.mrb[0].mxu0
    %v3622 = vpop.f32.mrb[0].mxu0
    %v3623 = vadd.f32 %v3487, %v3622
    %v3624 = vpop.f32.mrb[0].mxu0
    %3625 = vmatprep.mubr.bf16.mxu0 0
    %3626 = vmatmul.mubr.bf16.gmra.mrb[0].mxu0 %v3457
    %v3627 = vpop.f32.mrb[0].mxu0
    %v3628 = vadd.f32 %v3487, %v3627
    %v3629 = vpop.f32.mrb[0].mxu0
    %v3630 = vpop.f32.mrb[0].mxu0
    %v3631 = vadd.f32 %v3487, %v3630
    %v3632 = vpop.f32.mrb[0].mxu0
    %3633 = vmatprep.mubr.bf16.mxu0 0
    %3634 = vmatmul.mubr.bf16.gmra.mrb[0].mxu0 %v3458
    %v3635 = vpop.f32.mrb[0].mxu0
    %v3636 = vadd.f32 %v3487, %v3635
    %v3637 = vpop.f32.mrb[0].mxu0
    %v3638 = vpop.f32.mrb[0].mxu0
    %v3639 = vadd.f32 %v3487, %v3638
    %v3640 = vpop.f32.mrb[0].mxu0
    %3641 = vmatprep.mubr.bf16.mxu0 0
    %3642 = vmatmul.mubr.bf16.gmra.mrb[0].mxu0 %v3459
    %v3643 = vpop.f32.mrb[0].mxu0
    %v3644 = vadd.f32 %v3487, %v3643
    %v3645 = vpop.f32.mrb[0].mxu0
    %v3646 = vpop.f32.mrb[0].mxu0
    %v3647 = vadd.f32 %v3487, %v3646
    %v3648 = vpop.f32.mrb[0].mxu0
    %3649 = vmatprep.mubr.bf16.mxu0 0
    %3650 = vmatmul.mubr.bf16.gmra.mrb[0].mxu0 %v3460
    %v3651 = vpop.f32.mrb[0].mxu0
    %v3652 = vadd.f32 %v3487, %v3651
    %v3653 = vpop.f32.mrb[0].mxu0
    %v3654 = vpop.f32.mrb[0].mxu0
    %v3655 = vadd.f32 %v3487, %v3654
    %v3656 = vpop.f32.mrb[0].mxu0
    %3657 = vmatprep.mubr.bf16.mxu0 0
    %3658 = vmatmul.mubr.bf16.gmra.mrb[0].mxu0 %v3461
    %v3659 = vpop.f32.mrb[0].mxu0
    %v3660 = vadd.f32 %v3487, %v3659
    %v3661 = vpop.f32.mrb[0].mxu0
    %v3662 = vpop.f32.mrb[0].mxu0
    %v3663 = vadd.f32 %v3487, %v3662
    %v3664 = vpop.f32.mrb[0].mxu0
    %3665 = vmatprep.mubr.bf16.mxu0 0
    %3666 = vmatmul.mubr.bf16.gmra.mrb[0].mxu0 %v3462
    %v3667 = vpop.f32.mrb[0].mxu0
    %v3668 = vadd.f32 %v3487, %v3667
    %v3669 = vpop.f32.mrb[0].mxu0
    %v3670 = vpop.f32.mrb[0].mxu0
    %v3671 = vadd.f32 %v3487, %v3670
    %v3672 = vpop.f32.mrb[0].mxu0
    %3673 = vmatprep.mubr.bf16.mxu0 0
    %3674 = vmatmul.mubr.bf16.gmra.mrb[0].mxu0 %v3463
    %v3675 = vpop.f32.mrb[0].mxu0
    %v3676 = vadd.f32 %v3487, %v3675
    %v3677 = vpop.f32.mrb[0].mxu0
    %v3678 = vpop.f32.mrb[0].mxu0
    %v3679 = vadd.f32 %v3487, %v3678
    %v3680 = vpop.f32.mrb[0].mxu0
    %3681 = vmatprep.mubr.bf16.mxu0 0
    %3682 = vmatmul.mubr.bf16.gmra.mrb[0].mxu0 %v3464
    %v3683 = vpop.f32.mrb[0].mxu0
    %v3684 = vadd.f32 %v3487, %v3683
    %v3685 = vpop.f32.mrb[0].mxu0
    %v3686 = vpop.f32.mrb[0].mxu0
    %v3687 = vadd.f32 %v3487, %v3686
    %v3688 = vpop.f32.mrb[0].mxu0
    %3689 = vmatprep.mubr.bf16.mxu0 0
    %3690 = vmatmul.mubr.bf16.gmra.mrb[0].mxu0 %v3465
    %v3691 = vpop.f32.mrb[0].mxu0
    %v3692 = vadd.f32 %v3487, %v3691
    %v3693 = vpop.f32.mrb[0].mxu0
    %v3694 = vpop.f32.mrb[0].mxu0
    %v3695 = vadd.f32 %v3487, %v3694
    %v3696 = vpop.f32.mrb[0].mxu0
    %3697 = vdwg.mxu0
    %v3698 = vxor.u32 %v3572, 2147483648
    %v3699 = vxor.u32 %v3575, 2147483648
    %v3700 = vxor.u32 %v3580, 2147483648
    %v3701 = vxor.u32 %v3583, 2147483648
    %v3702 = vxor.u32 %v3588, 2147483648
    %v3703 = vxor.u32 %v3591, 2147483648
    %v3704 = vxor.u32 %v3596, 2147483648
    %v3705 = vxor.u32 %v3599, 2147483648
    %v3706 = vxor.u32 %v3604, 2147483648
    %v3707 = vxor.u32 %v3607, 2147483648
    %v3708 = vxor.u32 %v3612, 2147483648
    %v3709 = vxor.u32 %v3615, 2147483648
    %v3710 = vxor.u32 %v3620, 2147483648
    %v3711 = vxor.u32 %v3623, 2147483648
    %v3712 = vxor.u32 %v3628, 2147483648
    %v3713 = vxor.u32 %v3631, 2147483648
    %v3714 = vxor.u32 %v3636, 2147483648
    %v3715 = vxor.u32 %v3639, 2147483648
    %v3716 = vxor.u32 %v3644, 2147483648
    %v3717 = vxor.u32 %v3647, 2147483648
    %v3718 = vxor.u32 %v3652, 2147483648
    %v3719 = vxor.u32 %v3655, 2147483648
    %v3720 = vxor.u32 %v3660, 2147483648
    %v3721 = vxor.u32 %v3663, 2147483648
    %v3722 = vxor.u32 %v3668, 2147483648
    %v3723 = vxor.u32 %v3671, 2147483648
    %v3724 = vxor.u32 %v3676, 2147483648
    %v3725 = vxor.u32 %v3679, 2147483648
    %v3726 = vxor.u32 %v3684, 2147483648
    %v3727 = vxor.u32 %v3687, 2147483648
    %v3728 = vxor.u32 %v3692, 2147483648
    %v3729 = vxor.u32 %v3695, 2147483648
    %v3730 = vmul.f32 %v3698, 1.442695
    %v3731 = vpow.pop %v3730
    %v3732 = vmul.f32 %v3699, 1.442695
    %v3733 = vpow.pop %v3732
    %v3734 = vmul.f32 %v3700, 1.442695
    %v3735 = vpow.pop %v3734
    %v3736 = vmul.f32 %v3701, 1.442695
    %v3737 = vpow.pop %v3736
    %v3738 = vmul.f32 %v3702, 1.442695
    %v3739 = vpow.pop %v3738
    %v3740 = vmul.f32 %v3703, 1.442695
    %v3741 = vpow.pop %v3740
    %v3742 = vmul.f32 %v3704, 1.442695
    %v3743 = vpow.pop %v3742
    %v3744 = vmul.f32 %v3705, 1.442695
    %v3745 = vpow.pop %v3744
    %v3746 = vmul.f32 %v3706, 1.442695
    %v3747 = vpow.pop %v3746
    %v3748 = vmul.f32 %v3707, 1.442695
    %v3749 = vpow.pop %v3748
    %v3750 = vmul.f32 %v3708, 1.442695
    %v3751 = vpow.pop %v3750
    %v3752 = vmul.f32 %v3709, 1.442695
    %v3753 = vpow.pop %v3752
    %v3754 = vmul.f32 %v3710, 1.442695
    %v3755 = vpow.pop %v3754
    %v3756 = vmul.f32 %v3711, 1.442695
    %v3757 = vpow.pop %v3756
    %v3758 = vmul.f32 %v3712, 1.442695
    %v3759 = vpow.pop %v3758
    %v3760 = vmul.f32 %v3713, 1.442695
    %v3761 = vpow.pop %v3760
    %v3762 = vmul.f32 %v3714, 1.442695
    %v3763 = vpow.pop %v3762
    %v3764 = vmul.f32 %v3715, 1.442695
    %v3765 = vpow.pop %v3764
    %v3766 = vmul.f32 %v3716, 1.442695
    %v3767 = vpow.pop %v3766
    %v3768 = vmul.f32 %v3717, 1.442695
    %v3769 = vpow.pop %v3768
    %v3770 = vmul.f32 %v3718, 1.442695
    %v3771 = vpow.pop %v3770
    %v3772 = vmul.f32 %v3719, 1.442695
    %v3773 = vpow.pop %v3772
    %v3774 = vmul.f32 %v3720, 1.442695
    %v3775 = vpow.pop %v3774
    %v3776 = vmul.f32 %v3721, 1.442695
    %v3777 = vpow.pop %v3776
    %v3778 = vmul.f32 %v3722, 1.442695
    %v3779 = vpow.pop %v3778
    %v3780 = vmul.f32 %v3723, 1.442695
    %v3781 = vpow.pop %v3780
    %v3782 = vmul.f32 %v3724, 1.442695
    %v3783 = vpow.pop %v3782
    %v3784 = vmul.f32 %v3725, 1.442695
    %v3785 = vpow.pop %v3784
    %v3786 = vmul.f32 %v3726, 1.442695
    %v3787 = vpow.pop %v3786
    %v3788 = vmul.f32 %v3727, 1.442695
    %v3789 = vpow.pop %v3788
    %v3790 = vmul.f32 %v3728, 1.442695
    %v3791 = vpow.pop %v3790
    %v3792 = vmul.f32 %v3729, 1.442695
    %v3793 = vpow.pop %v3792
    %v3794 = vadd.f32 %v3731, 1.0
    %v3795 = vadd.f32 %v3733, 1.0
    %v3796 = vadd.f32 %v3735, 1.0
    %v3797 = vadd.f32 %v3737, 1.0
    %v3798 = vadd.f32 %v3739, 1.0
    %v3799 = vadd.f32 %v3741, 1.0
    %v3800 = vadd.f32 %v3743, 1.0
    %v3801 = vadd.f32 %v3745, 1.0
    %v3802 = vadd.f32 %v3747, 1.0
    %v3803 = vadd.f32 %v3749, 1.0
    %v3804 = vadd.f32 %v3751, 1.0
    %v3805 = vadd.f32 %v3753, 1.0
    %v3806 = vadd.f32 %v3755, 1.0
    %v3807 = vadd.f32 %v3757, 1.0
    %v3808 = vadd.f32 %v3759, 1.0
    %v3809 = vadd.f32 %v3761, 1.0
    %v3810 = vadd.f32 %v3763, 1.0
    %v3811 = vadd.f32 %v3765, 1.0
    %v3812 = vadd.f32 %v3767, 1.0
    %v3813 = vadd.f32 %v3769, 1.0
    %v3814 = vadd.f32 %v3771, 1.0
    %v3815 = vadd.f32 %v3773, 1.0
    %v3816 = vadd.f32 %v3775, 1.0
    %v3817 = vadd.f32 %v3777, 1.0
    %v3818 = vadd.f32 %v3779, 1.0
    %v3819 = vadd.f32 %v3781, 1.0
    %v3820 = vadd.f32 %v3783, 1.0
    %v3821 = vadd.f32 %v3785, 1.0
    %v3822 = vadd.f32 %v3787, 1.0
    %v3823 = vadd.f32 %v3789, 1.0
    %v3824 = vadd.f32 %v3791, 1.0
    %v3825 = vadd.f32 %v3793, 1.0
    %v3826 = vrcp.pop %v3794
    %v3827 = vmul.f32 1.0, %v3826
    %v3828 = vrcp.pop %v3795
    %v3829 = vmul.f32 1.0, %v3828
    %v3830 = vrcp.pop %v3796
    %v3831 = vmul.f32 1.0, %v3830
    %v3832 = vrcp.pop %v3797
    %v3833 = vmul.f32 1.0, %v3832
    %v3834 = vrcp.pop %v3798
    %v3835 = vmul.f32 1.0, %v3834
    %v3836 = vrcp.pop %v3799
    %v3837 = vmul.f32 1.0, %v3836
    %v3838 = vrcp.pop %v3800
    %v3839 = vmul.f32 1.0, %v3838
    %v3840 = vrcp.pop %v3801
    %v3841 = vmul.f32 1.0, %v3840
    %v3842 = vrcp.pop %v3802
    %v3843 = vmul.f32 1.0, %v3842
    %v3844 = vrcp.pop %v3803
    %v3845 = vmul.f32 1.0, %v3844
    %v3846 = vrcp.pop %v3804
    %v3847 = vmul.f32 1.0, %v3846
    %v3848 = vrcp.pop %v3805
    %v3849 = vmul.f32 1.0, %v3848
    %v3850 = vrcp.pop %v3806
    %v3851 = vmul.f32 1.0, %v3850
    %v3852 = vrcp.pop %v3807
    %v3853 = vmul.f32 1.0, %v3852
    %v3854 = vrcp.pop %v3808
    %v3855 = vmul.f32 1.0, %v3854
    %v3856 = vrcp.pop %v3809
    %v3857 = vmul.f32 1.0, %v3856
    %v3858 = vrcp.pop %v3810
    %v3859 = vmul.f32 1.0, %v3858
    %v3860 = vrcp.pop %v3811
    %v3861 = vmul.f32 1.0, %v3860
    %v3862 = vrcp.pop %v3812
    %v3863 = vmul.f32 1.0, %v3862
    %v3864 = vrcp.pop %v3813
    %v3865 = vmul.f32 1.0, %v3864
    %v3866 = vrcp.pop %v3814
    %v3867 = vmul.f32 1.0, %v3866
    %v3868 = vrcp.pop %v3815
    %v3869 = vmul.f32 1.0, %v3868
    %v3870 = vrcp.pop %v3816
    %v3871 = vmul.f32 1.0, %v3870
    %v3872 = vrcp.pop %v3817
    %v3873 = vmul.f32 1.0, %v3872
    %v3874 = vrcp.pop %v3818
    %v3875 = vmul.f32 1.0, %v3874
    %v3876 = vrcp.pop %v3819
    %v3877 = vmul.f32 1.0, %v3876
    %v3878 = vrcp.pop %v3820
    %v3879 = vmul.f32 1.0, %v3878
    %v3880 = vrcp.pop %v3821
    %v3881 = vmul.f32 1.0, %v3880
    %v3882 = vrcp.pop %v3822
    %v3883 = vmul.f32 1.0, %v3882
    %v3884 = vrcp.pop %v3823
    %v3885 = vmul.f32 1.0, %v3884
    %v3886 = vrcp.pop %v3824
    %v3887 = vmul.f32 1.0, %v3886
    %v3888 = vrcp.pop %v3825
    %v3889 = vmul.f32 1.0, %v3888
    %v3890 = vmul.f32 %v3572, %v3827
    %v3891 = vmul.f32 %v3575, %v3829
    %v3892 = vmul.f32 %v3580, %v3831
    %v3893 = vmul.f32 %v3583, %v3833
    %v3894 = vmul.f32 %v3588, %v3835
    %v3895 = vmul.f32 %v3591, %v3837
    %v3896 = vmul.f32 %v3596, %v3839
    %v3897 = vmul.f32 %v3599, %v3841
    %v3898 = vmul.f32 %v3604, %v3843
    %v3899 = vmul.f32 %v3607, %v3845
    %v3900 = vmul.f32 %v3612, %v3847
    %v3901 = vmul.f32 %v3615, %v3849
    %v3902 = vmul.f32 %v3620, %v3851
    %v3903 = vmul.f32 %v3623, %v3853
    %v3904 = vmul.f32 %v3628, %v3855
    %v3905 = vmul.f32 %v3631, %v3857
    %v3906 = vmul.f32 %v3636, %v3859
    %v3907 = vmul.f32 %v3639, %v3861
    %v3908 = vmul.f32 %v3644, %v3863
    %v3909 = vmul.f32 %v3647, %v3865
    %v3910 = vmul.f32 %v3652, %v3867
    %v3911 = vmul.f32 %v3655, %v3869
    %v3912 = vmul.f32 %v3660, %v3871
    %v3913 = vmul.f32 %v3663, %v3873
    %v3914 = vmul.f32 %v3668, %v3875
    %v3915 = vmul.f32 %v3671, %v3877
    %v3916 = vmul.f32 %v3676, %v3879
    %v3917 = vmul.f32 %v3679, %v3881
    %v3918 = vmul.f32 %v3684, %v3883
    %v3919 = vmul.f32 %v3687, %v3885
    %v3920 = vmul.f32 %v3692, %v3887
    %v3921 = vmul.f32 %v3695, %v3889
    %v3922 = vld [vmem:[%s9] sm:$0x1]
    %v3923 = vld [vmem:[%s10] sm:$0x1]
    %3924 = vadd.xlane.f32.xlu0 %v3890
    %v3925 = vpop.xlane.xlu0 %3924
    %3926 = vadd.xlane.f32.xlu0 %v3891
    %v3927 = vpop.xlane.xlu0 %3926
    %3928 = vadd.xlane.f32.xlu0 %v3892
    %v3929 = vpop.xlane.xlu0 %3928
    %3930 = vadd.xlane.f32.xlu0 %v3893
    %v3931 = vpop.xlane.xlu0 %3930
    %3932 = vadd.xlane.f32.xlu0 %v3894
    %v3933 = vpop.xlane.xlu0 %3932
    %3934 = vadd.xlane.f32.xlu0 %v3895
    %v3935 = vpop.xlane.xlu0 %3934
    %3936 = vadd.xlane.f32.xlu0 %v3896
    %v3937 = vpop.xlane.xlu0 %3936
    %3938 = vadd.xlane.f32.xlu0 %v3897
    %v3939 = vpop.xlane.xlu0 %3938
    %3940 = vadd.xlane.f32.xlu0 %v3898
    %v3941 = vpop.xlane.xlu0 %3940
    %3942 = vadd.xlane.f32.xlu0 %v3899
    %v3943 = vpop.xlane.xlu0 %3942
    %3944 = vadd.xlane.f32.xlu0 %v3900
    %v3945 = vpop.xlane.xlu0 %3944
    %3946 = vadd.xlane.f32.xlu0 %v3901
    %v3947 = vpop.xlane.xlu0 %3946
    %3948 = vadd.xlane.f32.xlu0 %v3902
    %v3949 = vpop.xlane.xlu0 %3948
    %3950 = vadd.xlane.f32.xlu0 %v3903
    %v3951 = vpop.xlane.xlu0 %3950
    %3952 = vadd.xlane.f32.xlu0 %v3904
    %v3953 = vpop.xlane.xlu0 %3952
    %3954 = vadd.xlane.f32.xlu0 %v3905
    %v3955 = vpop.xlane.xlu0 %3954
    %3956 = vadd.xlane.f32.xlu0 %v3906
    %v3957 = vpop.xlane.xlu0 %3956
    %3958 = vadd.xlane.f32.xlu0 %v3907
    %v3959 = vpop.xlane.xlu0 %3958
    %3960 = vadd.xlane.f32.xlu0 %v3908
    %v3961 = vpop.xlane.xlu0 %3960
    %3962 = vadd.xlane.f32.xlu0 %v3909
    %v3963 = vpop.xlane.xlu0 %3962
    %3964 = vadd.xlane.f32.xlu0 %v3910
    %v3965 = vpop.xlane.xlu0 %3964
    %3966 = vadd.xlane.f32.xlu0 %v3911
    %v3967 = vpop.xlane.xlu0 %3966
    %3968 = vadd.xlane.f32.xlu0 %v3912
    %v3969 = vpop.xlane.xlu0 %3968
    %3970 = vadd.xlane.f32.xlu0 %v3913
    %v3971 = vpop.xlane.xlu0 %3970
    %3972 = vadd.xlane.f32.xlu0 %v3914
    %v3973 = vpop.xlane.xlu0 %3972
    %3974 = vadd.xlane.f32.xlu0 %v3915
    %v3975 = vpop.xlane.xlu0 %3974
    %3976 = vadd.xlane.f32.xlu0 %v3916
    %v3977 = vpop.xlane.xlu0 %3976
    %3978 = vadd.xlane.f32.xlu0 %v3917
    %v3979 = vpop.xlane.xlu0 %3978
    %3980 = vadd.xlane.f32.xlu0 %v3918
    %v3981 = vpop.xlane.xlu0 %3980
    %3982 = vadd.xlane.f32.xlu0 %v3919
    %v3983 = vpop.xlane.xlu0 %3982
    %3984 = vadd.xlane.f32.xlu0 %v3920
    %v3985 = vpop.xlane.xlu0 %3984
    %3986 = vadd.xlane.f32.xlu0 %v3921
    %v3987 = vpop.xlane.xlu0 %3986
    %v3988 = vmul.f32 %v3925, 0.03125
    %v3989 = vmul.f32 %v3927, 0.03125
    %v3990 = vmul.f32 %v3929, 0.03125
    %v3991 = vmul.f32 %v3931, 0.03125
    %v3992 = vmul.f32 %v3933, 0.03125
    %v3993 = vmul.f32 %v3935, 0.03125
    %v3994 = vmul.f32 %v3937, 0.03125
    %v3995 = vmul.f32 %v3939, 0.03125
    %v3996 = vmul.f32 %v3941, 0.03125
    %v3997 = vmul.f32 %v3943, 0.03125
    %v3998 = vmul.f32 %v3945, 0.03125
    %v3999 = vmul.f32 %v3947, 0.03125
    %v4000 = vmul.f32 %v3949, 0.03125
    %v4001 = vmul.f32 %v3951, 0.03125
    %v4002 = vmul.f32 %v3953, 0.03125
    %v4003 = vmul.f32 %v3955, 0.03125
    %v4004 = vmul.f32 %v3957, 0.03125
    %v4005 = vmul.f32 %v3959, 0.03125
    %v4006 = vmul.f32 %v3961, 0.03125
    %v4007 = vmul.f32 %v3963, 0.03125
    %v4008 = vmul.f32 %v3965, 0.03125
    %v4009 = vmul.f32 %v3967, 0.03125
    %v4010 = vmul.f32 %v3969, 0.03125
    %v4011 = vmul.f32 %v3971, 0.03125
    %v4012 = vmul.f32 %v3973, 0.03125
    %v4013 = vmul.f32 %v3975, 0.03125
    %v4014 = vmul.f32 %v3977, 0.03125
    %v4015 = vmul.f32 %v3979, 0.03125
    %v4016 = vmul.f32 %v3981, 0.03125
    %v4017 = vmul.f32 %v3983, 0.03125
    %v4018 = vmul.f32 %v3985, 0.03125
    %v4019 = vmul.f32 %v3987, 0.03125
    %v4020 = vmul.f32 %v3890, %v3890
    %v4021 = vmul.f32 %v3891, %v3891
    %v4022 = vmul.f32 %v3892, %v3892
    %v4023 = vmul.f32 %v3893, %v3893
    %v4024 = vmul.f32 %v3894, %v3894
    %v4025 = vmul.f32 %v3895, %v3895
    %v4026 = vmul.f32 %v3896, %v3896
    %v4027 = vmul.f32 %v3897, %v3897
    %v4028 = vmul.f32 %v3898, %v3898
    %v4029 = vmul.f32 %v3899, %v3899
    %v4030 = vmul.f32 %v3900, %v3900
    %v4031 = vmul.f32 %v3901, %v3901
    %v4032 = vmul.f32 %v3902, %v3902
    %v4033 = vmul.f32 %v3903, %v3903
    %v4034 = vmul.f32 %v3904, %v3904
    %v4035 = vmul.f32 %v3905, %v3905
    %v4036 = vmul.f32 %v3906, %v3906
    %v4037 = vmul.f32 %v3907, %v3907
    %v4038 = vmul.f32 %v3908, %v3908
    %v4039 = vmul.f32 %v3909, %v3909
    %v4040 = vmul.f32 %v3910, %v3910
    %v4041 = vmul.f32 %v3911, %v3911
    %v4042 = vmul.f32 %v3912, %v3912
    %v4043 = vmul.f32 %v3913, %v3913
    %v4044 = vmul.f32 %v3914, %v3914
    %v4045 = vmul.f32 %v3915, %v3915
    %v4046 = vmul.f32 %v3916, %v3916
    %v4047 = vmul.f32 %v3917, %v3917
    %v4048 = vmul.f32 %v3918, %v3918
    %v4049 = vmul.f32 %v3919, %v3919
    %v4050 = vmul.f32 %v3920, %v3920
    %v4051 = vmul.f32 %v3921, %v3921
    %4052 = vadd.xlane.f32.xlu0 %v4020
    %v4053 = vpop.xlane.xlu0 %4052
    %4054 = vadd.xlane.f32.xlu0 %v4021
    %v4055 = vpop.xlane.xlu0 %4054
    %4056 = vadd.xlane.f32.xlu0 %v4022
    %v4057 = vpop.xlane.xlu0 %4056
    %4058 = vadd.xlane.f32.xlu0 %v4023
    %v4059 = vpop.xlane.xlu0 %4058
    %4060 = vadd.xlane.f32.xlu0 %v4024
    %v4061 = vpop.xlane.xlu0 %4060
    %4062 = vadd.xlane.f32.xlu0 %v4025
    %v4063 = vpop.xlane.xlu0 %4062
    %4064 = vadd.xlane.f32.xlu0 %v4026
    %v4065 = vpop.xlane.xlu0 %4064
    %4066 = vadd.xlane.f32.xlu0 %v4027
    %v4067 = vpop.xlane.xlu0 %4066
    %4068 = vadd.xlane.f32.xlu0 %v4028
    %v4069 = vpop.xlane.xlu0 %4068
    %4070 = vadd.xlane.f32.xlu0 %v4029
    %v4071 = vpop.xlane.xlu0 %4070
    %4072 = vadd.xlane.f32.xlu0 %v4030
    %v4073 = vpop.xlane.xlu0 %4072
    %4074 = vadd.xlane.f32.xlu0 %v4031
    %v4075 = vpop.xlane.xlu0 %4074
    %4076 = vadd.xlane.f32.xlu0 %v4032
    %v4077 = vpop.xlane.xlu0 %4076
    %4078 = vadd.xlane.f32.xlu0 %v4033
    %v4079 = vpop.xlane.xlu0 %4078
    %4080 = vadd.xlane.f32.xlu0 %v4034
    %v4081 = vpop.xlane.xlu0 %4080
    %4082 = vadd.xlane.f32.xlu0 %v4035
    %v4083 = vpop.xlane.xlu0 %4082
    %4084 = vadd.xlane.f32.xlu0 %v4036
    %v4085 = vpop.xlane.xlu0 %4084
    %4086 = vadd.xlane.f32.xlu0 %v4037
    %v4087 = vpop.xlane.xlu0 %4086
    %4088 = vadd.xlane.f32.xlu0 %v4038
    %v4089 = vpop.xlane.xlu0 %4088
    %4090 = vadd.xlane.f32.xlu0 %v4039
    %v4091 = vpop.xlane.xlu0 %4090
    %4092 = vadd.xlane.f32.xlu0 %v4040
    %v4093 = vpop.xlane.xlu0 %4092
    %4094 = vadd.xlane.f32.xlu0 %v4041
    %v4095 = vpop.xlane.xlu0 %4094
    %4096 = vadd.xlane.f32.xlu0 %v4042
    %v4097 = vpop.xlane.xlu0 %4096
    %4098 = vadd.xlane.f32.xlu0 %v4043
    %v4099 = vpop.xlane.xlu0 %4098
    %4100 = vadd.xlane.f32.xlu0 %v4044
    %v4101 = vpop.xlane.xlu0 %4100
    %4102 = vadd.xlane.f32.xlu0 %v4045
    %v4103 = vpop.xlane.xlu0 %4102
    %4104 = vadd.xlane.f32.xlu0 %v4046
    %v4105 = vpop.xlane.xlu0 %4104
    %4106 = vadd.xlane.f32.xlu0 %v4047
    %v4107 = vpop.xlane.xlu0 %4106
    %4108 = vadd.xlane.f32.xlu0 %v4048
    %v4109 = vpop.xlane.xlu0 %4108
    %4110 = vadd.xlane.f32.xlu0 %v4049
    %v4111 = vpop.xlane.xlu0 %4110
    %4112 = vadd.xlane.f32.xlu0 %v4050
    %v4113 = vpop.xlane.xlu0 %4112
    %4114 = vadd.xlane.f32.xlu0 %v4051
    %v4115 = vpop.xlane.xlu0 %4114
    %v4116 = vmul.f32 %v4053, 0.03125
    %v4117 = vmul.f32 %v4055, 0.03125
    %v4118 = vmul.f32 %v4057, 0.03125
    %v4119 = vmul.f32 %v4059, 0.03125
    %v4120 = vmul.f32 %v4061, 0.03125
    %v4121 = vmul.f32 %v4063, 0.03125
    %v4122 = vmul.f32 %v4065, 0.03125
    %v4123 = vmul.f32 %v4067, 0.03125
    %v4124 = vmul.f32 %v4069, 0.03125
    %v4125 = vmul.f32 %v4071, 0.03125
    %v4126 = vmul.f32 %v4073, 0.03125
    %v4127 = vmul.f32 %v4075, 0.03125
    %v4128 = vmul.f32 %v4077, 0.03125
    %v4129 = vmul.f32 %v4079, 0.03125
    %v4130 = vmul.f32 %v4081, 0.03125
    %v4131 = vmul.f32 %v4083, 0.03125
    %v4132 = vmul.f32 %v4085, 0.03125
    %v4133 = vmul.f32 %v4087, 0.03125
    %v4134 = vmul.f32 %v4089, 0.03125
    %v4135 = vmul.f32 %v4091, 0.03125
    %v4136 = vmul.f32 %v4093, 0.03125
    %v4137 = vmul.f32 %v4095, 0.03125
    %v4138 = vmul.f32 %v4097, 0.03125
    %v4139 = vmul.f32 %v4099, 0.03125
    %v4140 = vmul.f32 %v4101, 0.03125
    %v4141 = vmul.f32 %v4103, 0.03125
    %v4142 = vmul.f32 %v4105, 0.03125
    %v4143 = vmul.f32 %v4107, 0.03125
    %v4144 = vmul.f32 %v4109, 0.03125
    %v4145 = vmul.f32 %v4111, 0.03125
    %v4146 = vmul.f32 %v4113, 0.03125
    %v4147 = vmul.f32 %v4115, 0.03125
    %v4148 = vmul.f32 %v3988, %v3988
    %v4149 = vmul.f32 %v3989, %v3989
    %v4150 = vmul.f32 %v3990, %v3990
    %v4151 = vmul.f32 %v3991, %v3991
    %v4152 = vmul.f32 %v3992, %v3992
    %v4153 = vmul.f32 %v3993, %v3993
    %v4154 = vmul.f32 %v3994, %v3994
    %v4155 = vmul.f32 %v3995, %v3995
    %v4156 = vmul.f32 %v3996, %v3996
    %v4157 = vmul.f32 %v3997, %v3997
    %v4158 = vmul.f32 %v3998, %v3998
    %v4159 = vmul.f32 %v3999, %v3999
    %v4160 = vmul.f32 %v4000, %v4000
    %v4161 = vmul.f32 %v4001, %v4001
    %v4162 = vmul.f32 %v4002, %v4002
    %v4163 = vmul.f32 %v4003, %v4003
    %v4164 = vmul.f32 %v4004, %v4004
    %v4165 = vmul.f32 %v4005, %v4005
    %v4166 = vmul.f32 %v4006, %v4006
    %v4167 = vmul.f32 %v4007, %v4007
    %v4168 = vmul.f32 %v4008, %v4008
    %v4169 = vmul.f32 %v4009, %v4009
    %v4170 = vmul.f32 %v4010, %v4010
    %v4171 = vmul.f32 %v4011, %v4011
    %v4172 = vmul.f32 %v4012, %v4012
    %v4173 = vmul.f32 %v4013, %v4013
    %v4174 = vmul.f32 %v4014, %v4014
    %v4175 = vmul.f32 %v4015, %v4015
    %v4176 = vmul.f32 %v4016, %v4016
    %v4177 = vmul.f32 %v4017, %v4017
    %v4178 = vmul.f32 %v4018, %v4018
    %v4179 = vmul.f32 %v4019, %v4019
    %v4180 = vsub.f32 %v4116, %v4148
    %v4181 = vsub.f32 %v4117, %v4149
    %v4182 = vsub.f32 %v4118, %v4150
    %v4183 = vsub.f32 %v4119, %v4151
    %v4184 = vsub.f32 %v4120, %v4152
    %v4185 = vsub.f32 %v4121, %v4153
    %v4186 = vsub.f32 %v4122, %v4154
    %v4187 = vsub.f32 %v4123, %v4155
    %v4188 = vsub.f32 %v4124, %v4156
    %v4189 = vsub.f32 %v4125, %v4157
    %v4190 = vsub.f32 %v4126, %v4158
    %v4191 = vsub.f32 %v4127, %v4159
    %v4192 = vsub.f32 %v4128, %v4160
    %v4193 = vsub.f32 %v4129, %v4161
    %v4194 = vsub.f32 %v4130, %v4162
    %v4195 = vsub.f32 %v4131, %v4163
    %v4196 = vsub.f32 %v4132, %v4164
    %v4197 = vsub.f32 %v4133, %v4165
    %v4198 = vsub.f32 %v4134, %v4166
    %v4199 = vsub.f32 %v4135, %v4167
    %v4200 = vsub.f32 %v4136, %v4168
    %v4201 = vsub.f32 %v4137, %v4169
    %v4202 = vsub.f32 %v4138, %v4170
    %v4203 = vsub.f32 %v4139, %v4171
    %v4204 = vsub.f32 %v4140, %v4172
    %v4205 = vsub.f32 %v4141, %v4173
    %v4206 = vsub.f32 %v4142, %v4174
    %v4207 = vsub.f32 %v4143, %v4175
    %v4208 = vsub.f32 %v4144, %v4176
    %v4209 = vsub.f32 %v4145, %v4177
    %v4210 = vsub.f32 %v4146, %v4178
    %v4211 = vsub.f32 %v4147, %v4179
    %v4212 = vsub.f32 %v3890, %v3988
    %v4213 = vsub.f32 %v3891, %v3989
    %v4214 = vsub.f32 %v3892, %v3990
    %v4215 = vsub.f32 %v3893, %v3991
    %v4216 = vsub.f32 %v3894, %v3992
    %v4217 = vsub.f32 %v3895, %v3993
    %v4218 = vsub.f32 %v3896, %v3994
    %v4219 = vsub.f32 %v3897, %v3995
    %v4220 = vsub.f32 %v3898, %v3996
    %v4221 = vsub.f32 %v3899, %v3997
    %v4222 = vsub.f32 %v3900, %v3998
    %v4223 = vsub.f32 %v3901, %v3999
    %v4224 = vsub.f32 %v3902, %v4000
    %v4225 = vsub.f32 %v3903, %v4001
    %v4226 = vsub.f32 %v3904, %v4002
    %v4227 = vsub.f32 %v3905, %v4003
    %v4228 = vsub.f32 %v3906, %v4004
    %v4229 = vsub.f32 %v3907, %v4005
    %v4230 = vsub.f32 %v3908, %v4006
    %v4231 = vsub.f32 %v3909, %v4007
    %v4232 = vsub.f32 %v3910, %v4008
    %v4233 = vsub.f32 %v3911, %v4009
    %v4234 = vsub.f32 %v3912, %v4010
    %v4235 = vsub.f32 %v3913, %v4011
    %v4236 = vsub.f32 %v3914, %v4012
    %v4237 = vsub.f32 %v3915, %v4013
    %v4238 = vsub.f32 %v3916, %v4014
    %v4239 = vsub.f32 %v3917, %v4015
    %v4240 = vsub.f32 %v3918, %v4016
    %v4241 = vsub.f32 %v3919, %v4017
    %v4242 = vsub.f32 %v3920, %v4018
    %v4243 = vsub.f32 %v3921, %v4019
    %v4244 = vadd.f32 %v4180, 1e-05
    %v4245 = vadd.f32 %v4181, 1e-05
    %v4246 = vadd.f32 %v4182, 1e-05
    %v4247 = vadd.f32 %v4183, 1e-05
    %v4248 = vadd.f32 %v4184, 1e-05
    %v4249 = vadd.f32 %v4185, 1e-05
    %v4250 = vadd.f32 %v4186, 1e-05
    %v4251 = vadd.f32 %v4187, 1e-05
    %v4252 = vadd.f32 %v4188, 1e-05
    %v4253 = vadd.f32 %v4189, 1e-05
    %v4254 = vadd.f32 %v4190, 1e-05
    %v4255 = vadd.f32 %v4191, 1e-05
    %v4256 = vadd.f32 %v4192, 1e-05
    %v4257 = vadd.f32 %v4193, 1e-05
    %v4258 = vadd.f32 %v4194, 1e-05
    %v4259 = vadd.f32 %v4195, 1e-05
    %v4260 = vadd.f32 %v4196, 1e-05
    %v4261 = vadd.f32 %v4197, 1e-05
    %v4262 = vadd.f32 %v4198, 1e-05
    %v4263 = vadd.f32 %v4199, 1e-05
    %v4264 = vadd.f32 %v4200, 1e-05
    %v4265 = vadd.f32 %v4201, 1e-05
    %v4266 = vadd.f32 %v4202, 1e-05
    %v4267 = vadd.f32 %v4203, 1e-05
    %v4268 = vadd.f32 %v4204, 1e-05
    %v4269 = vadd.f32 %v4205, 1e-05
    %v4270 = vadd.f32 %v4206, 1e-05
    %v4271 = vadd.f32 %v4207, 1e-05
    %v4272 = vadd.f32 %v4208, 1e-05
    %v4273 = vadd.f32 %v4209, 1e-05
    %v4274 = vadd.f32 %v4210, 1e-05
    %v4275 = vadd.f32 %v4211, 1e-05
    %v4276 = vrsqrt.pop %v4244
    %v4277 = vrsqrt.pop %v4245
    %v4278 = vrsqrt.pop %v4246
    %v4279 = vrsqrt.pop %v4247
    %v4280 = vrsqrt.pop %v4248
    %v4281 = vrsqrt.pop %v4249
    %v4282 = vrsqrt.pop %v4250
    %v4283 = vrsqrt.pop %v4251
    %v4284 = vrsqrt.pop %v4252
    %v4285 = vrsqrt.pop %v4253
    %v4286 = vrsqrt.pop %v4254
    %v4287 = vrsqrt.pop %v4255
    %v4288 = vrsqrt.pop %v4256
    %v4289 = vrsqrt.pop %v4257
    %v4290 = vrsqrt.pop %v4258
    %v4291 = vrsqrt.pop %v4259
    %v4292 = vrsqrt.pop %v4260
    %v4293 = vrsqrt.pop %v4261
    %v4294 = vrsqrt.pop %v4262
    %v4295 = vrsqrt.pop %v4263
    %v4296 = vrsqrt.pop %v4264
    %v4297 = vrsqrt.pop %v4265
    %v4298 = vrsqrt.pop %v4266
    %v4299 = vrsqrt.pop %v4267
    %v4300 = vrsqrt.pop %v4268
    %v4301 = vrsqrt.pop %v4269
    %v4302 = vrsqrt.pop %v4270
    %v4303 = vrsqrt.pop %v4271
    %v4304 = vrsqrt.pop %v4272
    %v4305 = vrsqrt.pop %v4273
    %v4306 = vrsqrt.pop %v4274
    %v4307 = vrsqrt.pop %v4275
    %v4308 = vmul.f32 %v4212, %v4276
    %v4309 = vmul.f32 %v4213, %v4277
    %v4310 = vmul.f32 %v4214, %v4278
    %v4311 = vmul.f32 %v4215, %v4279
    %v4312 = vmul.f32 %v4216, %v4280
    %v4313 = vmul.f32 %v4217, %v4281
    %v4314 = vmul.f32 %v4218, %v4282
    %v4315 = vmul.f32 %v4219, %v4283
    %v4316 = vmul.f32 %v4220, %v4284
    %v4317 = vmul.f32 %v4221, %v4285
    %v4318 = vmul.f32 %v4222, %v4286
    %v4319 = vmul.f32 %v4223, %v4287
    %v4320 = vmul.f32 %v4224, %v4288
    %v4321 = vmul.f32 %v4225, %v4289
    %v4322 = vmul.f32 %v4226, %v4290
    %v4323 = vmul.f32 %v4227, %v4291
    %v4324 = vmul.f32 %v4228, %v4292
    %v4325 = vmul.f32 %v4229, %v4293
    %v4326 = vmul.f32 %v4230, %v4294
    %v4327 = vmul.f32 %v4231, %v4295
    %v4328 = vmul.f32 %v4232, %v4296
    %v4329 = vmul.f32 %v4233, %v4297
    %v4330 = vmul.f32 %v4234, %v4298
    %v4331 = vmul.f32 %v4235, %v4299
    %v4332 = vmul.f32 %v4236, %v4300
    %v4333 = vmul.f32 %v4237, %v4301
    %v4334 = vmul.f32 %v4238, %v4302
    %v4335 = vmul.f32 %v4239, %v4303
    %v4336 = vmul.f32 %v4240, %v4304
    %v4337 = vmul.f32 %v4241, %v4305
    %v4338 = vmul.f32 %v4242, %v4306
    %v4339 = vmul.f32 %v4243, %v4307
    %v4341 = vlaneseq
    %v4342 = vshrl.u32 %v4341, 7
    %v4343 = vsub.s32 0, %v4342
    %v4344 = vrot.slane %v3922, %v4343
    %v4346 = vmul.f32 %v4308, %v4344
    %v4347 = vmul.f32 %v4309, %v4344
    %v4348 = vmul.f32 %v4310, %v4344
    %v4349 = vmul.f32 %v4311, %v4344
    %v4350 = vmul.f32 %v4312, %v4344
    %v4351 = vmul.f32 %v4313, %v4344
    %v4352 = vmul.f32 %v4314, %v4344
    %v4353 = vmul.f32 %v4315, %v4344
    %v4354 = vmul.f32 %v4316, %v4344
    %v4355 = vmul.f32 %v4317, %v4344
    %v4356 = vmul.f32 %v4318, %v4344
    %v4357 = vmul.f32 %v4319, %v4344
    %v4358 = vmul.f32 %v4320, %v4344
    %v4359 = vmul.f32 %v4321, %v4344
    %v4360 = vmul.f32 %v4322, %v4344
    %v4361 = vmul.f32 %v4323, %v4344
    %v4362 = vmul.f32 %v4324, %v4344
    %v4363 = vmul.f32 %v4325, %v4344
    %v4364 = vmul.f32 %v4326, %v4344
    %v4365 = vmul.f32 %v4327, %v4344
    %v4366 = vmul.f32 %v4328, %v4344
    %v4367 = vmul.f32 %v4329, %v4344
    %v4368 = vmul.f32 %v4330, %v4344
    %v4369 = vmul.f32 %v4331, %v4344
    %v4370 = vmul.f32 %v4332, %v4344
    %v4371 = vmul.f32 %v4333, %v4344
    %v4372 = vmul.f32 %v4334, %v4344
    %v4373 = vmul.f32 %v4335, %v4344
    %v4374 = vmul.f32 %v4336, %v4344
    %v4375 = vmul.f32 %v4337, %v4344
    %v4376 = vmul.f32 %v4338, %v4344
    %v4377 = vmul.f32 %v4339, %v4344
    %v4379 = vlaneseq
    %v4380 = vshrl.u32 %v4379, 7
    %v4381 = vsub.s32 0, %v4380
    %v4382 = vrot.slane %v3923, %v4381
    %v4384 = vadd.f32 %v4346, %v4382
    %v4385 = vadd.f32 %v4347, %v4382
    %v4386 = vadd.f32 %v4348, %v4382
    %v4387 = vadd.f32 %v4349, %v4382
    %v4388 = vadd.f32 %v4350, %v4382
    %v4389 = vadd.f32 %v4351, %v4382
    %v4390 = vadd.f32 %v4352, %v4382
    %v4391 = vadd.f32 %v4353, %v4382
    %v4392 = vadd.f32 %v4354, %v4382
    %v4393 = vadd.f32 %v4355, %v4382
    %v4394 = vadd.f32 %v4356, %v4382
    %v4395 = vadd.f32 %v4357, %v4382
    %v4396 = vadd.f32 %v4358, %v4382
    %v4397 = vadd.f32 %v4359, %v4382
    %v4398 = vadd.f32 %v4360, %v4382
    %v4399 = vadd.f32 %v4361, %v4382
    %v4400 = vadd.f32 %v4362, %v4382
    %v4401 = vadd.f32 %v4363, %v4382
    %v4402 = vadd.f32 %v4364, %v4382
    %v4403 = vadd.f32 %v4365, %v4382
    %v4404 = vadd.f32 %v4366, %v4382
    %v4405 = vadd.f32 %v4367, %v4382
    %v4406 = vadd.f32 %v4368, %v4382
    %v4407 = vadd.f32 %v4369, %v4382
    %v4408 = vadd.f32 %v4370, %v4382
    %v4409 = vadd.f32 %v4371, %v4382
    %v4410 = vadd.f32 %v4372, %v4382
    %v4411 = vadd.f32 %v4373, %v4382
    %v4412 = vadd.f32 %v4374, %v4382
    %v4413 = vadd.f32 %v4375, %v4382
    %v4414 = vadd.f32 %v4376, %v4382
    %v4415 = vadd.f32 %v4377, %v4382
    %v4416 = vld [vmem:[%s11] sm:$0x1]
    %v4417 = vpack.c.bf16 %v4385, %v4384
    %v4418 = vpack.c.bf16 %v4387, %v4386
    %v4419 = vpack.c.bf16 %v4389, %v4388
    %v4420 = vpack.c.bf16 %v4391, %v4390
    %v4421 = vpack.c.bf16 %v4393, %v4392
    %v4422 = vpack.c.bf16 %v4395, %v4394
    %v4423 = vpack.c.bf16 %v4397, %v4396
    %v4424 = vpack.c.bf16 %v4399, %v4398
    %v4425 = vpack.c.bf16 %v4401, %v4400
    %v4426 = vpack.c.bf16 %v4403, %v4402
    %v4427 = vpack.c.bf16 %v4405, %v4404
    %v4428 = vpack.c.bf16 %v4407, %v4406
    %v4429 = vpack.c.bf16 %v4409, %v4408
    %v4430 = vpack.c.bf16 %v4411, %v4410
    %v4431 = vpack.c.bf16 %v4413, %v4412
    %v4432 = vpack.c.bf16 %v4415, %v4414
    %v4433 = vld [vmem:[#allocation2] sm:$0x1]
    %4435 = vset.pattern.permute.xlu0 0
    %4436 = vperm.xlu0 %4435, %v4433
    %v4437 = vpop.permute.xlu0 %4436
    %v4439 = vlaneseq
    %v4440 = vshrl.u32 %v4439, 7
    %v4441 = vsub.s32 0, %v4440
    %v4442 = vrot.slane %v4437, %v4441
    %4443 = vmatprep.subr.bf16.mxu0 0
    %4444 = vmatpush1.bf16.xpose.msra.mxu0 %v4417
    %4445 = vmatprep.subr.bf16.mxu0 0
    %4446 = vmatpush1.bf16.xpose.msra.mxu0 %v4418
    %4447 = vmatprep.subr.bf16.mxu0 0
    %4448 = vmatpush1.bf16.xpose.msra.mxu0 %v4419
    %4449 = vmatprep.subr.bf16.mxu0 0
    %4450 = vmatpush1.bf16.xpose.msra.mxu0 %v4420
    %4451 = vmatprep.subr.bf16.mxu0 0
    %4452 = vmatpush1.bf16.xpose.msra.mxu0 %v4421
    %4453 = vmatprep.subr.bf16.mxu0 0
    %4454 = vmatpush1.bf16.xpose.msra.mxu0 %v4422
    %4455 = vmatprep.subr.bf16.mxu0 0
    %4456 = vmatpush1.bf16.xpose.msra.mxu0 %v4423
    %4457 = vmatprep.subr.bf16.mxu0 0
    %4458 = vmatpush1.bf16.xpose.msra.mxu0 %v4424
    %4459 = vmatprep.subr.bf16.mxu0 0
    %4460 = vmatpush1.bf16.xpose.msra.mxu0 %v4425
    %4461 = vmatprep.subr.bf16.mxu0 0
    %4462 = vmatpush1.bf16.xpose.msra.mxu0 %v4426
    %4463 = vmatprep.subr.bf16.mxu0 0
    %4464 = vmatpush1.bf16.xpose.msra.mxu0 %v4427
    %4465 = vmatprep.subr.bf16.mxu0 0
    %4466 = vmatpush1.bf16.xpose.msra.mxu0 %v4428
    %4467 = vmatprep.subr.bf16.mxu0 0
    %4468 = vmatpush1.bf16.xpose.msra.mxu0 %v4429
    %4469 = vmatprep.subr.bf16.mxu0 0
    %4470 = vmatpush1.bf16.xpose.msra.mxu0 %v4430
    %4471 = vmatprep.subr.bf16.mxu0 0
    %4472 = vmatpush1.bf16.xpose.msra.mxu0 %v4431
    %4473 = vmatprep.subr.bf16.mxu0 0
    %4474 = vmatpush1.bf16.xpose.msra.mxu0 %v4432
    %4475 = vmatprep.mubr.bf16.mxu0 0
    %4476 = vmatmul.mubr.bf16.gmra.mrb[0].mxu0 %v4416
    %v4477 = vpop.f32.mrb[0].mxu0
    %v4478 = vadd.f32 %v4442, %v4477
    %v4479 = vpop.f32.mrb[0].mxu0
    %v4480 = vadd.f32 %v4442, %v4479
    %v4481 = vpop.f32.mrb[0].mxu0
    %v4482 = vpop.f32.mrb[0].mxu0
    %4483 = vdwg.mxu0
    %v4486 = vcombine.low %v4478, %v4480
    %v4488 = vunpack.c.l.s4 1966171168
    %v4489 = vunpack.c.0.s8 %v4488
    %v4490 = vlaneseq
    %v4491 = vshrl.u32 %v4490, 7
    %v4492 = vsub.s32 %v4489, %v4491
    %v4493 = vrot.slane %v4486, %v4492
    %v4495 = vunpack.c.l.s4 1966171168
    %v4496 = vunpack.c.0.s8 %v4495
    %v4497 = vlaneseq
    %v4498 = vshrl.u32 %v4497, 7
    %v4499 = vsub.s32 %v4496, %v4498
    %v4500 = vrot.slane %v4493, %v4499
    %v4502 = vlaneseq
    %vm4503 = vcmp.ge.s32.totalorder %v4502, 0
    %vm4504 = vcmp.lt.s32.totalorder %v4502, 256
    %vm4505 = vmand %vm4503, %vm4504
    %4506 = vst.msk [vmem:[#allocation11] sm:$0x3] %vm4505, %v4500
    // Predicated region
    $region70: #{tpu_custom_call.1} parent=1 // pred_check
      _
    $region71: #{tpu_custom_call.1} parent=1 // pred_check_branch
      %4508 = sbr.rel (0) target = $region73
    $region72: #{tpu_custom_call.1} parent=1 // pred_region
      %s4510 = ssub.s32 32, 32
      %4511 = vsyncadd [#allocation5], %s4510
      %s4513 = sshll.u32 [#allocation11], 4
      %s4514 = int_to_ptr.vmem [resolvable:$true] %s4513
      %4516 = dma.vmem_to_hbm [thread:$0]  %s4514, 32, %s13, [#allocation5]
    $region73: #{tpu_custom_call.1} parent=1 // pred_fallthru
      _
    // Predicated region
    $region74: #{tpu_custom_call.1} parent=1 // pred_check
      _
    $region75: #{tpu_custom_call.1} parent=1 // pred_check_branch
      %4518 = sbr.rel (0) target = $region77
    $region76: #{tpu_custom_call.1} parent=1 // pred_region
      %4519 = dma.done [#allocation5], 32
    $region77: #{tpu_custom_call.1} parent=1 // pred_fallthru
      _
    %4520 = vsyncpa [#allocation4], 1
    %4521 = vsyncpa [#allocation7], 1
    %4522 = vsyncpa [#allocation10], 1
    %4523 = vsyncpa [#allocation5], 1

</llo_original>
